<compile_context>
chip_gen: v5e
topology: v5e:2x2
jax: 0.10.0
libtpu: 0.0.40
codegen_flags: <defaults>
</compile_context>

<pallas_src>
import numpy as np

import jax
import jax.numpy as jnp
from jax.experimental import pallas as pl
from jax.experimental.pallas import tpu as pltpu


# -----------------------------------------------------------------------------
# Scaled-down VGG16 config (channels /8, spatial 32, classes 10, fc 128)
# -----------------------------------------------------------------------------
VGG16_CFG = (8, 8, "M", 16, 16, "M", 32, 32, 32, "M",
             64, 64, 64, "M", 64, 64, 64, "M")
N_BATCH, C_IN, HW = 2, 3, 32
C_IN_PAD = 4                  # input channels zero-padded to a lane-dense 128
CLASS_NUM, FC_DIM = 10, 128
FLAT_DIM = 64                 # 64 channels x 1x1 spatial after 5 pools
OUT_PAD = 128                 # logits padded to a full lane, sliced in wrapper
W_SLAB = 256                  # lane width of the packed conv-weight slabs
N_EARLY = 5                   # layers 1..5 auto-DMA; 6..13 manually prefetched


def _conv_layer_cfg():
    layers = []
    c, s = C_IN, HW
    for i, v in enumerate(VGG16_CFG):
        if v == "M":
            continue
        pool = (i + 1 < len(VGG16_CFG)) and VGG16_CFG[i + 1] == "M"
        layers.append(dict(cin=c, cout=v, size=s, pool=pool))
        c = v
        if pool:
            s //= 2
    return tuple(layers)


LAYERS = _conv_layer_cfg()     # 13 conv layers


def _conv_meta():
    """Static per-layer metadata: slab placement, matmul dims, pool info."""
    metas, off_e, off_l = [], 0, 0
    for li, cfg in enumerate(LAYERS):
        size, cout, pool = cfg["size"], cfg["cout"], cfg["pool"]
        cin = C_IN_PAD if li == 0 else cfg["cin"]
        rows, late = 3 * size * cin, li >= N_EARLY
        metas.append(dict(size=size, cin=cin, cout=cout, pool=pool, late=late,
                          row=(off_l if late else off_e), rows=rows,
                          width=size * cout, half=(size // 2) * cout,
                          bias_row=li))
        if late:
            off_l += rows
        else:
            off_e += rows
    return tuple(metas), off_e, off_l


CONV_META, EARLY_ROWS, LATE_ROWS = _conv_meta()
N_CONV = len(CONV_META)


# -----------------------------------------------------------------------------
# Fused VGG kernel (one grid step == `bpg` batch elements folded into M)
# -----------------------------------------------------------------------------
def make_vgg_kernel(bpg):
    def kernel(x_ref, w_early_ref, w_late_hbm, w_fc_ref, bias_ref, out_ref,
               w_late_vmem, dma_sem, tap_ref, stage_ref):
        # Manual prefetch of the late-layer weight slab (overlaps layers 1..5).
        late_cp = pltpu.make_async_copy(w_late_hbm, w_late_vmem, dma_sem)
        late_cp.start()

        feat = None
        for li, m in enumerate(CONV_META):
            H, cout, pool = m["size"], m["cout"], m["pool"]
            width, half = m["width"], m["half"]
            wc = H * m["cin"]
            R = bpg * H

            if li == N_EARLY:
                late_cp.wait()
            w_ref = w_late_vmem if m["late"] else w_early_ref
            wl = w_ref[m["row"]:m["row"] + m["rows"], 0:width]       # bf16

            # The tap already has the 3 dy row-shifted views as lane blocks.
            if li == 0:
                tap = (x_ref[0] if bpg == 1 else
                       jnp.concatenate([x_ref[b] for b in range(bpg)], axis=0))
            else:
                tap = tap_ref[0:R, 0:3 * wc]

            acc = jnp.dot(tap.astype(jnp.bfloat16), wl,
                          preferred_element_type=jnp.float32)        # (R, width)

            bias = bias_ref[m["bias_row"]:m["bias_row"] + 1,
                            0:(half if pool else width)]
            if pool:
                Ho = H // 2
                # Weight columns grouped [even-x | odd-x] => horizontal pool is
                # one elementwise max; bias/ReLU commute with it (per-channel).
                h = jnp.maximum(acc[:, 0:half], acc[:, half:2 * half])
                h = jnp.maximum(h + bias, 0.0)
                # Vertical pool, vectorized: dense store + stride-2 sublane
                # reads of an f32 staging buffer + one maximum.
                stage_ref[0:R, 0:half] = h
                act = jnp.maximum(
                    stage_ref[pl.ds(0, bpg * Ho, 2), pl.ds(0, half)],
                    stage_ref[pl.ds(1, bpg * Ho, 2), pl.ds(0, half)])
                Hn, Wn = Ho, half
            else:
                act = jnp.maximum(acc + bias, 0.0)
                Hn, Wn = H, width

            if li + 1 < N_CONV:
                # Write the NEXT layer's tap directly: three dy-shifted copies
                # plus the 'same' zero border rows (all dense f32 stores).
                zrow = jnp.zeros((1, Wn), jnp.float32)
                for b in range(bpg):
                    a = act[b * Hn:(b + 1) * Hn, :]
                    base = b * Hn
                    tap_ref[base:base + Hn, Wn:2 * Wn] = a                  # dy=1
                    tap_ref[base + 1:base + Hn, 0:Wn] = a[0:Hn - 1, :]      # dy=0
                    tap_ref[base:base + 1, 0:Wn] = zrow
                    tap_ref[base:base + Hn - 1, 2 * Wn:3 * Wn] = a[1:Hn, :]  # dy=2
                    tap_ref[base + Hn - 1:base + Hn, 2 * Wn:3 * Wn] = zrow
            else:
                feat = act                       # (bpg, 64), flatten is trivial

        # ----- classifier -----
        # TODO(synk): nn.Dropout(p=0.5) is treated as eval-mode identity.
        h0 = feat.astype(jnp.bfloat16)
        h1 = jnp.dot(h0, w_fc_ref[0:FLAT_DIM, :],
                     preferred_element_type=jnp.float32)
        h1 = jnp.maximum(h1 + bias_ref[N_CONV:N_CONV + 1, 0:FC_DIM], 0.0)
        h2 = jnp.dot(h1.astype(jnp.bfloat16),
                     w_fc_ref[FLAT_DIM:FLAT_DIM + FC_DIM, :],
                     preferred_element_type=jnp.float32)
        h2 = jnp.maximum(h2 + bias_ref[N_CONV + 1:N_CONV + 2, 0:FC_DIM], 0.0)
        logits = jnp.dot(h2.astype(jnp.bfloat16),
                         w_fc_ref[FLAT_DIM + FC_DIM:FLAT_DIM + 2 * FC_DIM, :],
                         preferred_element_type=jnp.float32)
        logits = logits + bias_ref[N_CONV + 2:N_CONV + 3, 0:OUT_PAD]
        for b in range(bpg):
            out_ref[b, 0:1, :] = logits[b:b + 1, :]

    return kernel


# -----------------------------------------------------------------------------
# Parameters: plain VGG weights + host-side one-time prepacking
# -----------------------------------------------------------------------------
def init_vgg_params(key):
    """Xavier-uniform weights; small random biases so the bias path is actually
    exercised by the numerical self-check (the PyTorch module zeros them)."""
    params = {"convs": [], "fcs": []}
    c = C_IN
    for v in VGG16_CFG:
        if v == "M":
            continue
        key, kw, kb = jax.random.split(key, 3)
        limit = (6.0 / (9 * c + 9 * v)) ** 0.5
        w = jax.random.uniform(kw, (3, 3, c, v), jnp.float32, -limit, limit)
        b = 0.05 * jax.random.normal(kb, (v,), jnp.float32)
        params["convs"].append((w, b))
        c = v
    for din, dout in [(FLAT_DIM, FC_DIM), (FC_DIM, FC_DIM), (FC_DIM, CLASS_NUM)]:
        key, kw, kb = jax.random.split(key, 3)
        limit = (6.0 / (din + dout)) ** 0.5
        w = jax.random.uniform(kw, (din, dout), jnp.float32, -limit, limit)
        b = 0.05 * jax.random.normal(kb, (dout,), jnp.float32)
        params["fcs"].append((w, b))
    return params


def prepack_params(params):
    """Lower each 3x3 conv to a block-Toeplitz matrix (dx taps + width-wise
    zero padding baked in, pre-pool output columns grouped [even-x | odd-x]),
    coalesce everything into 3 weight slabs (early / late / fc, bf16) and one
    f32 bias slab.  Done once on the host."""
    early = np.zeros((EARLY_ROWS, W_SLAB), np.float32)
    late = np.zeros((LATE_ROWS, W_SLAB), np.float32)
    bias_rows = np.zeros((N_CONV + 3, W_SLAB), np.float32)

    for li, (m, (w, b)) in enumerate(zip(CONV_META, params["convs"])):
        size, cin, cout, pool = m["size"], m["cin"], m["cout"], m["pool"]
        wn = np.asarray(w, np.float32)                       # (3, 3, Cin, Cout)
        if wn.shape[2] < cin:                                # pad Cin 3 -> 4
            wn = np.pad(wn, ((0, 0), (0, 0), (0, cin - wn.shape[2]), (0, 0)))
        groups = ([range(0, size, 2), range(1, size, 2)] if pool
                  else [range(size)])
        lowered = np.zeros((m["rows"], W_SLAB), np.float32)
        col = 0
        for g in groups:
            for j, xo in enumerate(g):
                for dy in range(3):
                    for dx in range(3):
                        xin = xo + dx - 1
                        if 0 <= xin < size:
                            r = dy * size * cin + xin * cin
                            c = col + j * cout
                            lowered[r:r + cin, c:c + cout] = wn[dy, dx]
            col += len(g) * cout
        dst = late if m["late"] else early
        dst[m["row"]:m["row"] + m["rows"], :] = lowered
        reps = size // 2 if pool else size
        bt = np.tile(np.asarray(b, np.float32), reps)
        bias_rows[li, :bt.shape[0]] = bt

    fc_blocks = []
    for i, (w, b) in enumerate(params["fcs"]):
        wn = np.asarray(w, np.float32)
        if wn.shape[1] < FC_DIM:                             # pad logits 10->128
            wn = np.pad(wn, ((0, 0), (0, FC_DIM - wn.shape[1])))
        fc_blocks.append(wn)
        bn = np.asarray(b, np.float32)
        bias_rows[N_CONV + i, :bn.shape[0]] = bn

    return dict(
        w_early=jnp.asarray(early, dtype=jnp.bfloat16),
        w_late=jnp.asarray(late, dtype=jnp.bfloat16),
        w_fc=jnp.asarray(np.concatenate(fc_blocks, 0), dtype=jnp.bfloat16),
        bias=jnp.asarray(bias_rows),
    )


# -----------------------------------------------------------------------------
# Forward pass: one fused pallas_call
# -----------------------------------------------------------------------------
def _batch_per_step(n):
    """Fold the whole batch into the matmul M dim on single-TC chips; keep the
    batch as a 'parallel' grid axis on v7x (2 TensorCores)."""
    try:
        kind = jax.devices()[0].device_kind.lower()
    except Exception:
        kind = ""
    two_tc = ("v7" in kind) or ("7x" in kind)
    bpg = 1 if (two_tc and n > 1) else n
    while n % bpg:
        bpg -= 1
    return bpg


def vgg_forward(packed, x_nchw):
    n = x_nchw.shape[0]
    bpg = _batch_per_step(n)

    # NCHW -> NHWC, zero-pad Cin 3->4 (lane-dense 128), and im2row the three dy
    # taps on the host so layer 1 uses the same single-matmul path.
    x = jnp.transpose(x_nchw, (0, 2, 3, 1))
    x = jnp.pad(x, ((0, 0), (0, 0), (0, 0), (0, C_IN_PAD - C_IN)))
    x = x.reshape(n, HW, HW * C_IN_PAD)
    xp = jnp.pad(x, ((0, 0), (1, 1), (0, 0)))                   # (N, 34, 128)
    x_tap = jnp.concatenate(
        [xp[:, 0:HW], xp[:, 1:HW + 1], xp[:, 2:HW + 2]], axis=-1)  # (N, 32, 384)

    in_specs = [
        pl.BlockSpec((bpg, HW, 3 * HW * C_IN_PAD), lambda b: (b, 0, 0)),
        pl.BlockSpec(packed["w_early"].shape, lambda b: (0, 0)),
        pl.BlockSpec(memory_space=pl.ANY),            # late weights: manual DMA
        pl.BlockSpec(packed["w_fc"].shape, lambda b: (0, 0)),
        pl.BlockSpec(packed["bias"].shape, lambda b: (0, 0)),
    ]
    scratch_shapes = [
        pltpu.VMEM((LATE_ROWS, W_SLAB), jnp.bfloat16),    # late-weight landing
        pltpu.SemaphoreType.DMA,                          # its completion sem
        pltpu.VMEM((bpg * HW, 3 * W_SLAB), jnp.float32),  # reused tap staging
        pltpu.VMEM((bpg * HW, 128), jnp.float32),         # pre-pool staging
    ]

    out = pl.pallas_call(
        make_vgg_kernel(bpg),
        out_shape=jax.ShapeDtypeStruct((n, 1, OUT_PAD), jnp.float32),
        grid=(n // bpg,),
        in_specs=in_specs,
        out_specs=pl.BlockSpec((bpg, 1, OUT_PAD), lambda b: (b, 0, 0)),
        scratch_shapes=scratch_shapes,
        compiler_params=pltpu.CompilerParams(
            dimension_semantics=("parallel",),
            vmem_limit_bytes=32 * 1024 * 1024),
    )(x_tap, packed["w_early"], packed["w_late"], packed["w_fc"], packed["bias"])
    return out[:, 0, :CLASS_NUM]


# -----------------------------------------------------------------------------
# Pure-JAX reference (f32) for a numerical self-check
# -----------------------------------------------------------------------------
def vgg_reference(params, x_nchw):
    x = jnp.transpose(x_nchw, (0, 2, 3, 1))
    ci = 0
    for v in VGG16_CFG:
        if v == "M":
            x = jax.lax.reduce_window(x, -jnp.inf, jax.lax.max,
                                      (1, 2, 2, 1), (1, 2, 2, 1), "VALID")
        else:
            w, b = params["convs"][ci]
            x = jax.lax.conv_general_dilated(
                x, w, (1, 1), "SAME",
                dimension_numbers=("NHWC", "HWIO", "NHWC"))
            x = jnp.maximum(x + b, 0.0)
            ci += 1
    x = jnp.transpose(x, (0, 3, 1, 2)).reshape(x.shape[0], -1)
    for i, (w, b) in enumerate(params["fcs"]):
        x = x @ w + b
        if i < 2:
            x = jnp.maximum(x, 0.0)
    return x


if __name__ == "__main__":
    key = jax.random.PRNGKey(0)
    key, kx = jax.random.split(key)
    x = jax.random.normal(kx, (N_BATCH, C_IN, HW, HW), jnp.float32)

    params = init_vgg_params(key)
    packed = prepack_params(params)          # one-time host-side weight lowering

    fwd = jax.jit(vgg_forward)
    out = jax.block_until_ready(fwd(packed, x))

    assert out.shape == (N_BATCH, CLASS_NUM), out.shape
    assert bool(jnp.all(jnp.isfinite(out)))

    # Loose tolerance: kernel uses bf16 matmul operands with f32 accumulation.
    ref = jax.jit(vgg_reference)(params, x)
    max_err = float(jnp.max(jnp.abs(out - ref)))
    assert bool(jnp.allclose(out, ref, rtol=5e-2, atol=5e-2)), max_err

    print("KERNEL_OK")
</pallas_src>

<mosaic_0001>
module attributes {stable_mosaic.version = 11 : i64} {
  func.func @kernel(%arg0: i32, %arg1: memref<2x32x384xf32, #tpu.memory_space<vmem>>, %arg2: memref<2688x256xbf16, #tpu.memory_space<vmem>>, %arg3: memref<4608x256xbf16, #tpu.memory_space<any>>, %arg4: memref<320x128xbf16, #tpu.memory_space<vmem>>, %arg5: memref<16x256xf32, #tpu.memory_space<vmem>>, %arg6: memref<2x1x128xf32, #tpu.memory_space<vmem>>, %arg7: memref<4608x256xbf16, #tpu.memory_space<vmem>>, %arg8: memref<!tpu.dma_semaphore, #tpu.memory_space<semaphore_mem>>, %arg9: memref<64x768xf32, #tpu.memory_space<vmem>>, %arg10: memref<64x128xf32, #tpu.memory_space<vmem>>) attributes {dimension_semantics = [#tpu.dimension_semantics<parallel>], iteration_bounds = array<i64: 1>, scalar_prefetch = 0 : i64, scratch_operands = 4 : i64, tpu.core_type = #tpu.core_type<tc>, window_params = [{transform_indices = @transform_0, window_bounds = array<i64: 2, 32, 384>}, {pipeline_mode = #tpu.pipeline_mode<synchronous>, transform_indices = @transform_1, window_bounds = array<i64: 2688, 256>}, {}, {pipeline_mode = #tpu.pipeline_mode<synchronous>, transform_indices = @transform_3, window_bounds = array<i64: 320, 128>}, {pipeline_mode = #tpu.pipeline_mode<synchronous>, transform_indices = @transform_4, window_bounds = array<i64: 16, 256>}, {transform_indices = @transform_5, window_bounds = array<i64: 2, 1, 128>}]} {
    tpu.enqueue_dma source(%arg3 : memref<4608x256xbf16, #tpu.memory_space<any>>) target(%arg7 : memref<4608x256xbf16, #tpu.memory_space<vmem>>) target_semaphore(%arg8 : memref<!tpu.dma_semaphore, #tpu.memory_space<semaphore_mem>>)
    %c0 = arith.constant 0 : index
    %c0_0 = arith.constant 0 : index
    %0 = vector.load %arg2[%c0, %c0_0] : memref<2688x256xbf16, #tpu.memory_space<vmem>>, vector<384x256xbf16>
    %c0_1 = arith.constant 0 : index
    %c0_2 = arith.constant 0 : index
    %c0_3 = arith.constant 0 : index
    %1 = vector.load %arg1[%c0_1, %c0_2, %c0_3] : memref<2x32x384xf32, #tpu.memory_space<vmem>>, vector<1x32x384xf32>
    %2 = vector.shape_cast %1 : vector<1x32x384xf32> to vector<32x384xf32>
    %c1 = arith.constant 1 : index
    %c0_4 = arith.constant 0 : index
    %c0_5 = arith.constant 0 : index
    %3 = vector.load %arg1[%c1, %c0_4, %c0_5] : memref<2x32x384xf32, #tpu.memory_space<vmem>>, vector<1x32x384xf32>
    %4 = vector.shape_cast %3 : vector<1x32x384xf32> to vector<32x384xf32>
    %5 = tpu.concatenate %2, %4 in 0 : vector<32x384xf32>, vector<32x384xf32> -> vector<64x384xf32>
    %6 = arith.truncf %5 : vector<64x384xf32> to vector<64x384xbf16>
    %cst = arith.constant dense<0.000000e+00> : vector<64x256xf32>
    %7 = tpu.matmul %6, %0, %cst {dimension_numbers = #tpu.dot_dimension_numbers<[1], [0], [0], [1], [0, 0, 1, 1], [], []>} : vector<64x384xbf16>, vector<384x256xbf16>, vector<64x256xf32> -> vector<64x256xf32>
    %c0_6 = arith.constant 0 : index
    %c0_7 = arith.constant 0 : index
    %8 = vector.load %arg5[%c0_6, %c0_7] : memref<16x256xf32, #tpu.memory_space<vmem>>, vector<1x256xf32>
    %9 = vector.broadcast %8 : vector<1x256xf32> to vector<64x256xf32>
    %10 = arith.addf %7, %9 : vector<64x256xf32>
    %cst_8 = arith.constant 0.000000e+00 : f32
    %11 = vector.broadcast %cst_8 : f32 to vector<64x256xf32>
    %12 = arith.maximumf %10, %11 : vector<64x256xf32>
    %cst_9 = arith.constant 0.000000e+00 : f32
    %13 = vector.broadcast %cst_9 : f32 to vector<1x256xf32>
    %14 = vector.extract_strided_slice %12 {offsets = [0, 0], sizes = [32, 256], strides = [1, 1]} : vector<64x256xf32> to vector<32x256xf32>
    %c0_10 = arith.constant 0 : index
    %c256 = arith.constant 256 : index
    %15 = vector.load %arg9[%c0_10, %c256] : memref<64x768xf32, #tpu.memory_space<vmem>>, vector<32x256xf32>
    tpu.vector_store %arg9[%c0_10, %c256], %14 {strides = array<i32>} : memref<64x768xf32, #tpu.memory_space<vmem>>, vector<32x256xf32>,
    %16 = vector.extract_strided_slice %14 {offsets = [0, 0], sizes = [31, 256], strides = [1, 1]} : vector<32x256xf32> to vector<31x256xf32>
    %c1_11 = arith.constant 1 : index
    %c0_12 = arith.constant 0 : index
    %17 = vector.load %arg9[%c1_11, %c0_12] : memref<64x768xf32, #tpu.memory_space<vmem>>, vector<31x256xf32>
    tpu.vector_store %arg9[%c1_11, %c0_12], %16 {strides = array<i32>} : memref<64x768xf32, #tpu.memory_space<vmem>>, vector<31x256xf32>,
    %c0_13 = arith.constant 0 : index
    %c0_14 = arith.constant 0 : index
    %18 = vector.load %arg9[%c0_13, %c0_14] : memref<64x768xf32, #tpu.memory_space<vmem>>, vector<1x256xf32>
    tpu.vector_store %arg9[%c0_13, %c0_14], %13 {strides = array<i32>} : memref<64x768xf32, #tpu.memory_space<vmem>>, vector<1x256xf32>,
    %19 = vector.extract_strided_slice %14 {offsets = [1, 0], sizes = [31, 256], strides = [1, 1]} : vector<32x256xf32> to vector<31x256xf32>
    %c0_15 = arith.constant 0 : index
    %c512 = arith.constant 512 : index
    %20 = vector.load %arg9[%c0_15, %c512] : memref<64x768xf32, #tpu.memory_space<vmem>>, vector<31x256xf32>
    tpu.vector_store %arg9[%c0_15, %c512], %19 {strides = array<i32>} : memref<64x768xf32, #tpu.memory_space<vmem>>, vector<31x256xf32>,
    %c31 = arith.constant 31 : index
    %c512_16 = arith.constant 512 : index
    %21 = vector.load %arg9[%c31, %c512_16] : memref<64x768xf32, #tpu.memory_space<vmem>>, vector<1x256xf32>
    tpu.vector_store %arg9[%c31, %c512_16], %13 {strides = array<i32>} : memref<64x768xf32, #tpu.memory_space<vmem>>, vector<1x256xf32>,
    %22 = vector.extract_strided_slice %12 {offsets = [32, 0], sizes = [32, 256], strides = [1, 1]} : vector<64x256xf32> to vector<32x256xf32>
    %c32 = arith.constant 32 : index
    %c256_17 = arith.constant 256 : index
    %23 = vector.load %arg9[%c32, %c256_17] : memref<64x768xf32, #tpu.memory_space<vmem>>, vector<32x256xf32>
    tpu.vector_store %arg9[%c32, %c256_17], %22 {strides = array<i32>} : memref<64x768xf32, #tpu.memory_space<vmem>>, vector<32x256xf32>,
    %24 = vector.extract_strided_slice %22 {offsets = [0, 0], sizes = [31, 256], strides = [1, 1]} : vector<32x256xf32> to vector<31x256xf32>
    %c33 = arith.constant 33 : index
    %c0_18 = arith.constant 0 : index
    %25 = vector.load %arg9[%c33, %c0_18] : memref<64x768xf32, #tpu.memory_space<vmem>>, vector<31x256xf32>
    tpu.vector_store %arg9[%c33, %c0_18], %24 {strides = array<i32>} : memref<64x768xf32, #tpu.memory_space<vmem>>, vector<31x256xf32>,
    %c32_19 = arith.constant 32 : index
    %c0_20 = arith.constant 0 : index
    %26 = vector.load %arg9[%c32_19, %c0_20] : memref<64x768xf32, #tpu.memory_space<vmem>>, vector<1x256xf32>
    tpu.vector_store %arg9[%c32_19, %c0_20], %13 {strides = array<i32>} : memref<64x768xf32, #tpu.memory_space<vmem>>, vector<1x256xf32>,
    %27 = vector.extract_strided_slice %22 {offsets = [1, 0], sizes = [31, 256], strides = [1, 1]} : vector<32x256xf32> to vector<31x256xf32>
    %c32_21 = arith.constant 32 : index
    %c512_22 = arith.constant 512 : index
    %28 = vector.load %arg9[%c32_21, %c512_22] : memref<64x768xf32, #tpu.memory_space<vmem>>, vector<31x256xf32>
    tpu.vector_store %arg9[%c32_21, %c512_22], %27 {strides = array<i32>} : memref<64x768xf32, #tpu.memory_space<vmem>>, vector<31x256xf32>,
    %c63 = arith.constant 63 : index
    %c512_23 = arith.constant 512 : index
    %29 = vector.load %arg9[%c63, %c512_23] : memref<64x768xf32, #tpu.memory_space<vmem>>, vector<1x256xf32>
    tpu.vector_store %arg9[%c63, %c512_23], %13 {strides = array<i32>} : memref<64x768xf32, #tpu.memory_space<vmem>>, vector<1x256xf32>,
    %c384 = arith.constant 384 : index
    %c0_24 = arith.constant 0 : index
    %30 = vector.load %arg2[%c384, %c0_24] : memref<2688x256xbf16, #tpu.memory_space<vmem>>, vector<768x256xbf16>
    %c0_25 = arith.constant 0 : index
    %c0_26 = arith.constant 0 : index
    %31 = vector.load %arg9[%c0_25, %c0_26] : memref<64x768xf32, #tpu.memory_space<vmem>>, vector<64x768xf32>
    %32 = arith.truncf %31 : vector<64x768xf32> to vector<64x768xbf16>
    %cst_27 = arith.constant dense<0.000000e+00> : vector<64x256xf32>
    %33 = tpu.matmul %32, %30, %cst_27 {dimension_numbers = #tpu.dot_dimension_numbers<[1], [0], [0], [1], [0, 0, 1, 1], [], []>} : vector<64x768xbf16>, vector<768x256xbf16>, vector<64x256xf32> -> vector<64x256xf32>
    %c1_28 = arith.constant 1 : index
    %c0_29 = arith.constant 0 : index
    %34 = vector.load %arg5[%c1_28, %c0_29] : memref<16x256xf32, #tpu.memory_space<vmem>>, vector<1x128xf32>
    %35 = vector.extract_strided_slice %33 {offsets = [0, 0], sizes = [64, 128], strides = [1, 1]} : vector<64x256xf32> to vector<64x128xf32>
    %36 = vector.extract_strided_slice %33 {offsets = [0, 128], sizes = [64, 128], strides = [1, 1]} : vector<64x256xf32> to vector<64x128xf32>
    %37 = arith.maximumf %35, %36 : vector<64x128xf32>
    %38 = vector.broadcast %34 : vector<1x128xf32> to vector<64x128xf32>
    %39 = arith.addf %37, %38 : vector<64x128xf32>
    %cst_30 = arith.constant 0.000000e+00 : f32
    %40 = vector.broadcast %cst_30 : f32 to vector<64x128xf32>
    %41 = arith.maximumf %39, %40 : vector<64x128xf32>
    %c0_31 = arith.constant 0 : index
    %c0_32 = arith.constant 0 : index
    %42 = vector.load %arg10[%c0_31, %c0_32] : memref<64x128xf32, #tpu.memory_space<vmem>>, vector<64x128xf32>
    tpu.vector_store %arg10[%c0_31, %c0_32], %41 {strides = array<i32>} : memref<64x128xf32, #tpu.memory_space<vmem>>, vector<64x128xf32>,
    %c0_33 = arith.constant 0 : index
    %c0_34 = arith.constant 0 : index
    %43 = tpu.strided_load %arg10[%c0_33, %c0_34] {strides = array<i32: 2, 1>} : memref<64x128xf32, #tpu.memory_space<vmem>>, vector<32x128xf32>
    %c1_35 = arith.constant 1 : index
    %c0_36 = arith.constant 0 : index
    %44 = tpu.strided_load %arg10[%c1_35, %c0_36] {strides = array<i32: 2, 1>} : memref<64x128xf32, #tpu.memory_space<vmem>>, vector<32x128xf32>
    %45 = arith.maximumf %43, %44 : vector<32x128xf32>
    %cst_37 = arith.constant 0.000000e+00 : f32
    %46 = vector.broadcast %cst_37 : f32 to vector<1x128xf32>
    %47 = vector.extract_strided_slice %45 {offsets = [0, 0], sizes = [16, 128], strides = [1, 1]} : vector<32x128xf32> to vector<16x128xf32>
    %c0_38 = arith.constant 0 : index
    %c128 = arith.constant 128 : index
    %48 = vector.load %arg9[%c0_38, %c128] : memref<64x768xf32, #tpu.memory_space<vmem>>, vector<16x128xf32>
    tpu.vector_store %arg9[%c0_38, %c128], %47 {strides = array<i32>} : memref<64x768xf32, #tpu.memory_space<vmem>>, vector<16x128xf32>,
    %49 = vector.extract_strided_slice %47 {offsets = [0, 0], sizes = [15, 128], strides = [1, 1]} : vector<16x128xf32> to vector<15x128xf32>
    %c1_39 = arith.constant 1 : index
    %c0_40 = arith.constant 0 : index
    %50 = vector.load %arg9[%c1_39, %c0_40] : memref<64x768xf32, #tpu.memory_space<vmem>>, vector<15x128xf32>
    tpu.vector_store %arg9[%c1_39, %c0_40], %49 {strides = array<i32>} : memref<64x768xf32, #tpu.memory_space<vmem>>, vector<15x128xf32>,
    %c0_41 = arith.constant 0 : index
    %c0_42 = arith.constant 0 : index
    %51 = vector.load %arg9[%c0_41, %c0_42] : memref<64x768xf32, #tpu.memory_space<vmem>>, vector<1x128xf32>
    tpu.vector_store %arg9[%c0_41, %c0_42], %46 {strides = array<i32>} : memref<64x768xf32, #tpu.memory_space<vmem>>, vector<1x128xf32>,
    %52 = vector.extract_strided_slice %47 {offsets = [1, 0], sizes = [15, 128], strides = [1, 1]} : vector<16x128xf32> to vector<15x128xf32>
    %c0_43 = arith.constant 0 : index
    %c256_44 = arith.constant 256 : index
    %53 = vector.load %arg9[%c0_43, %c256_44] : memref<64x768xf32, #tpu.memory_space<vmem>>, vector<15x128xf32>
    tpu.vector_store %arg9[%c0_43, %c256_44], %52 {strides = array<i32>} : memref<64x768xf32, #tpu.memory_space<vmem>>, vector<15x128xf32>,
    %c15 = arith.constant 15 : index
    %c256_45 = arith.constant 256 : index
    %54 = vector.load %arg9[%c15, %c256_45] : memref<64x768xf32, #tpu.memory_space<vmem>>, vector<1x128xf32>
    tpu.vector_store %arg9[%c15, %c256_45], %46 {strides = array<i32>} : memref<64x768xf32, #tpu.memory_space<vmem>>, vector<1x128xf32>,
    %55 = vector.extract_strided_slice %45 {offsets = [16, 0], sizes = [16, 128], strides = [1, 1]} : vector<32x128xf32> to vector<16x128xf32>
    %c16 = arith.constant 16 : index
    %c128_46 = arith.constant 128 : index
    %56 = vector.load %arg9[%c16, %c128_46] : memref<64x768xf32, #tpu.memory_space<vmem>>, vector<16x128xf32>
    tpu.vector_store %arg9[%c16, %c128_46], %55 {strides = array<i32>} : memref<64x768xf32, #tpu.memory_space<vmem>>, vector<16x128xf32>,
    %57 = vector.extract_strided_slice %55 {offsets = [0, 0], sizes = [15, 128], strides = [1, 1]} : vector<16x128xf32> to vector<15x128xf32>
    %c17 = arith.constant 17 : index
    %c0_47 = arith.constant 0 : index
    %58 = vector.load %arg9[%c17, %c0_47] : memref<64x768xf32, #tpu.memory_space<vmem>>, vector<15x128xf32>
    tpu.vector_store %arg9[%c17, %c0_47], %57 {strides = array<i32>} : memref<64x768xf32, #tpu.memory_space<vmem>>, vector<15x128xf32>,
    %c16_48 = arith.constant 16 : index
    %c0_49 = arith.constant 0 : index
    %59 = vector.load %arg9[%c16_48, %c0_49] : memref<64x768xf32, #tpu.memory_space<vmem>>, vector<1x128xf32>
    tpu.vector_store %arg9[%c16_48, %c0_49], %46 {strides = array<i32>} : memref<64x768xf32, #tpu.memory_space<vmem>>, vector<1x128xf32>,
    %60 = vector.extract_strided_slice %55 {offsets = [1, 0], sizes = [15, 128], strides = [1, 1]} : vector<16x128xf32> to vector<15x128xf32>
    %c16_50 = arith.constant 16 : index
    %c256_51 = arith.constant 256 : index
    %61 = vector.load %arg9[%c16_50, %c256_51] : memref<64x768xf32, #tpu.memory_space<vmem>>, vector<15x128xf32>
    tpu.vector_store %arg9[%c16_50, %c256_51], %60 {strides = array<i32>} : memref<64x768xf32, #tpu.memory_space<vmem>>, vector<15x128xf32>,
    %c31_52 = arith.constant 31 : index
    %c256_53 = arith.constant 256 : index
    %62 = vector.load %arg9[%c31_52, %c256_53] : memref<64x768xf32, #tpu.memory_space<vmem>>, vector<1x128xf32>
    tpu.vector_store %arg9[%c31_52, %c256_53], %46 {strides = array<i32>} : memref<64x768xf32, #tpu.memory_space<vmem>>, vector<1x128xf32>,
    %c1152 = arith.constant 1152 : index
    %c0_54 = arith.constant 0 : index
    %63 = vector.load %arg2[%c1152, %c0_54] : memref<2688x256xbf16, #tpu.memory_space<vmem>>, vector<384x256xbf16>
    %c0_55 = arith.constant 0 : index
    %c0_56 = arith.constant 0 : index
    %64 = vector.load %arg9[%c0_55, %c0_56] : memref<64x768xf32, #tpu.memory_space<vmem>>, vector<32x384xf32>
    %65 = arith.truncf %64 : vector<32x384xf32> to vector<32x384xbf16>
    %cst_57 = arith.constant dense<0.000000e+00> : vector<32x256xf32>
    %66 = tpu.matmul %65, %63, %cst_57 {dimension_numbers = #tpu.dot_dimension_numbers<[1], [0], [0], [1], [0, 0, 1, 1], [], []>} : vector<32x384xbf16>, vector<384x256xbf16>, vector<32x256xf32> -> vector<32x256xf32>
    %c2 = arith.constant 2 : index
    %c0_58 = arith.constant 0 : index
    %67 = vector.load %arg5[%c2, %c0_58] : memref<16x256xf32, #tpu.memory_space<vmem>>, vector<1x256xf32>
    %68 = vector.broadcast %67 : vector<1x256xf32> to vector<32x256xf32>
    %69 = arith.addf %66, %68 : vector<32x256xf32>
    %cst_59 = arith.constant 0.000000e+00 : f32
    %70 = vector.broadcast %cst_59 : f32 to vector<32x256xf32>
    %71 = arith.maximumf %69, %70 : vector<32x256xf32>
    %cst_60 = arith.constant 0.000000e+00 : f32
    %72 = vector.broadcast %cst_60 : f32 to vector<1x256xf32>
    %73 = vector.extract_strided_slice %71 {offsets = [0, 0], sizes = [16, 256], strides = [1, 1]} : vector<32x256xf32> to vector<16x256xf32>
    %c0_61 = arith.constant 0 : index
    %c256_62 = arith.constant 256 : index
    %74 = vector.load %arg9[%c0_61, %c256_62] : memref<64x768xf32, #tpu.memory_space<vmem>>, vector<16x256xf32>
    tpu.vector_store %arg9[%c0_61, %c256_62], %73 {strides = array<i32>} : memref<64x768xf32, #tpu.memory_space<vmem>>, vector<16x256xf32>,
    %75 = vector.extract_strided_slice %73 {offsets = [0, 0], sizes = [15, 256], strides = [1, 1]} : vector<16x256xf32> to vector<15x256xf32>
    %c1_63 = arith.constant 1 : index
    %c0_64 = arith.constant 0 : index
    %76 = vector.load %arg9[%c1_63, %c0_64] : memref<64x768xf32, #tpu.memory_space<vmem>>, vector<15x256xf32>
    tpu.vector_store %arg9[%c1_63, %c0_64], %75 {strides = array<i32>} : memref<64x768xf32, #tpu.memory_space<vmem>>, vector<15x256xf32>,
    %c0_65 = arith.constant 0 : index
    %c0_66 = arith.constant 0 : index
    %77 = vector.load %arg9[%c0_65, %c0_66] : memref<64x768xf32, #tpu.memory_space<vmem>>, vector<1x256xf32>
    tpu.vector_store %arg9[%c0_65, %c0_66], %72 {strides = array<i32>} : memref<64x768xf32, #tpu.memory_space<vmem>>, vector<1x256xf32>,
    %78 = vector.extract_strided_slice %73 {offsets = [1, 0], sizes = [15, 256], strides = [1, 1]} : vector<16x256xf32> to vector<15x256xf32>
    %c0_67 = arith.constant 0 : index
    %c512_68 = arith.constant 512 : index
    %79 = vector.load %arg9[%c0_67, %c512_68] : memref<64x768xf32, #tpu.memory_space<vmem>>, vector<15x256xf32>
    tpu.vector_store %arg9[%c0_67, %c512_68], %78 {strides = array<i32>} : memref<64x768xf32, #tpu.memory_space<vmem>>, vector<15x256xf32>,
    %c15_69 = arith.constant 15 : index
    %c512_70 = arith.constant 512 : index
    %80 = vector.load %arg9[%c15_69, %c512_70] : memref<64x768xf32, #tpu.memory_space<vmem>>, vector<1x256xf32>
    tpu.vector_store %arg9[%c15_69, %c512_70], %72 {strides = array<i32>} : memref<64x768xf32, #tpu.memory_space<vmem>>, vector<1x256xf32>,
    %81 = vector.extract_strided_slice %71 {offsets = [16, 0], sizes = [16, 256], strides = [1, 1]} : vector<32x256xf32> to vector<16x256xf32>
    %c16_71 = arith.constant 16 : index
    %c256_72 = arith.constant 256 : index
    %82 = vector.load %arg9[%c16_71, %c256_72] : memref<64x768xf32, #tpu.memory_space<vmem>>, vector<16x256xf32>
    tpu.vector_store %arg9[%c16_71, %c256_72], %81 {strides = array<i32>} : memref<64x768xf32, #tpu.memory_space<vmem>>, vector<16x256xf32>,
    %83 = vector.extract_strided_slice %81 {offsets = [0, 0], sizes = [15, 256], strides = [1, 1]} : vector<16x256xf32> to vector<15x256xf32>
    %c17_73 = arith.constant 17 : index
    %c0_74 = arith.constant 0 : index
    %84 = vector.load %arg9[%c17_73, %c0_74] : memref<64x768xf32, #tpu.memory_space<vmem>>, vector<15x256xf32>
    tpu.vector_store %arg9[%c17_73, %c0_74], %83 {strides = array<i32>} : memref<64x768xf32, #tpu.memory_space<vmem>>, vector<15x256xf32>,
    %c16_75 = arith.constant 16 : index
    %c0_76 = arith.constant 0 : index
    %85 = vector.load %arg9[%c16_75, %c0_76] : memref<64x768xf32, #tpu.memory_space<vmem>>, vector<1x256xf32>
    tpu.vector_store %arg9[%c16_75, %c0_76], %72 {strides = array<i32>} : memref<64x768xf32, #tpu.memory_space<vmem>>, vector<1x256xf32>,
    %86 = vector.extract_strided_slice %81 {offsets = [1, 0], sizes = [15, 256], strides = [1, 1]} : vector<16x256xf32> to vector<15x256xf32>
    %c16_77 = arith.constant 16 : index
    %c512_78 = arith.constant 512 : index
    %87 = vector.load %arg9[%c16_77, %c512_78] : memref<64x768xf32, #tpu.memory_space<vmem>>, vector<15x256xf32>
    tpu.vector_store %arg9[%c16_77, %c512_78], %86 {strides = array<i32>} : memref<64x768xf32, #tpu.memory_space<vmem>>, vector<15x256xf32>,
    %c31_79 = arith.constant 31 : index
    %c512_80 = arith.constant 512 : index
    %88 = vector.load %arg9[%c31_79, %c512_80] : memref<64x768xf32, #tpu.memory_space<vmem>>, vector<1x256xf32>
    tpu.vector_store %arg9[%c31_79, %c512_80], %72 {strides = array<i32>} : memref<64x768xf32, #tpu.memory_space<vmem>>, vector<1x256xf32>,
    %c1536 = arith.constant 1536 : index
    %c0_81 = arith.constant 0 : index
    %89 = vector.load %arg2[%c1536, %c0_81] : memref<2688x256xbf16, #tpu.memory_space<vmem>>, vector<768x256xbf16>
    %c0_82 = arith.constant 0 : index
    %c0_83 = arith.constant 0 : index
    %90 = vector.load %arg9[%c0_82, %c0_83] : memref<64x768xf32, #tpu.memory_space<vmem>>, vector<32x768xf32>
    %91 = arith.truncf %90 : vector<32x768xf32> to vector<32x768xbf16>
    %cst_84 = arith.constant dense<0.000000e+00> : vector<32x256xf32>
    %92 = tpu.matmul %91, %89, %cst_84 {dimension_numbers = #tpu.dot_dimension_numbers<[1], [0], [0], [1], [0, 0, 1, 1], [], []>} : vector<32x768xbf16>, vector<768x256xbf16>, vector<32x256xf32> -> vector<32x256xf32>
    %c3 = arith.constant 3 : index
    %c0_85 = arith.constant 0 : index
    %93 = vector.load %arg5[%c3, %c0_85] : memref<16x256xf32, #tpu.memory_space<vmem>>, vector<1x128xf32>
    %94 = vector.extract_strided_slice %92 {offsets = [0, 0], sizes = [32, 128], strides = [1, 1]} : vector<32x256xf32> to vector<32x128xf32>
    %95 = vector.extract_strided_slice %92 {offsets = [0, 128], sizes = [32, 128], strides = [1, 1]} : vector<32x256xf32> to vector<32x128xf32>
    %96 = arith.maximumf %94, %95 : vector<32x128xf32>
    %97 = vector.broadcast %93 : vector<1x128xf32> to vector<32x128xf32>
    %98 = arith.addf %96, %97 : vector<32x128xf32>
    %cst_86 = arith.constant 0.000000e+00 : f32
    %99 = vector.broadcast %cst_86 : f32 to vector<32x128xf32>
    %100 = arith.maximumf %98, %99 : vector<32x128xf32>
    %c0_87 = arith.constant 0 : index
    %c0_88 = arith.constant 0 : index
    %101 = vector.load %arg10[%c0_87, %c0_88] : memref<64x128xf32, #tpu.memory_space<vmem>>, vector<32x128xf32>
    tpu.vector_store %arg10[%c0_87, %c0_88], %100 {strides = array<i32>} : memref<64x128xf32, #tpu.memory_space<vmem>>, vector<32x128xf32>,
    %c0_89 = arith.constant 0 : index
    %c0_90 = arith.constant 0 : index
    %102 = tpu.strided_load %arg10[%c0_89, %c0_90] {strides = array<i32: 2, 1>} : memref<64x128xf32, #tpu.memory_space<vmem>>, vector<16x128xf32>
    %c1_91 = arith.constant 1 : index
    %c0_92 = arith.constant 0 : index
    %103 = tpu.strided_load %arg10[%c1_91, %c0_92] {strides = array<i32: 2, 1>} : memref<64x128xf32, #tpu.memory_space<vmem>>, vector<16x128xf32>
    %104 = arith.maximumf %102, %103 : vector<16x128xf32>
    %cst_93 = arith.constant 0.000000e+00 : f32
    %105 = vector.broadcast %cst_93 : f32 to vector<1x128xf32>
    %106 = vector.extract_strided_slice %104 {offsets = [0, 0], sizes = [8, 128], strides = [1, 1]} : vector<16x128xf32> to vector<8x128xf32>
    %c0_94 = arith.constant 0 : index
    %c128_95 = arith.constant 128 : index
    %107 = vector.load %arg9[%c0_94, %c128_95] : memref<64x768xf32, #tpu.memory_space<vmem>>, vector<8x128xf32>
    tpu.vector_store %arg9[%c0_94, %c128_95], %106 {strides = array<i32>} : memref<64x768xf32, #tpu.memory_space<vmem>>, vector<8x128xf32>,
    %108 = vector.extract_strided_slice %106 {offsets = [0, 0], sizes = [7, 128], strides = [1, 1]} : vector<8x128xf32> to vector<7x128xf32>
    %c1_96 = arith.constant 1 : index
    %c0_97 = arith.constant 0 : index
    %109 = vector.load %arg9[%c1_96, %c0_97] : memref<64x768xf32, #tpu.memory_space<vmem>>, vector<7x128xf32>
    tpu.vector_store %arg9[%c1_96, %c0_97], %108 {strides = array<i32>} : memref<64x768xf32, #tpu.memory_space<vmem>>, vector<7x128xf32>,
    %c0_98 = arith.constant 0 : index
    %c0_99 = arith.constant 0 : index
    %110 = vector.load %arg9[%c0_98, %c0_99] : memref<64x768xf32, #tpu.memory_space<vmem>>, vector<1x128xf32>
    tpu.vector_store %arg9[%c0_98, %c0_99], %105 {strides = array<i32>} : memref<64x768xf32, #tpu.memory_space<vmem>>, vector<1x128xf32>,
    %111 = vector.extract_strided_slice %106 {offsets = [1, 0], sizes = [7, 128], strides = [1, 1]} : vector<8x128xf32> to vector<7x128xf32>
    %c0_100 = arith.constant 0 : index
    %c256_101 = arith.constant 256 : index
    %112 = vector.load %arg9[%c0_100, %c256_101] : memref<64x768xf32, #tpu.memory_space<vmem>>, vector<7x128xf32>
    tpu.vector_store %arg9[%c0_100, %c256_101], %111 {strides = array<i32>} : memref<64x768xf32, #tpu.memory_space<vmem>>, vector<7x128xf32>,
    %c7 = arith.constant 7 : index
    %c256_102 = arith.constant 256 : index
    %113 = vector.load %arg9[%c7, %c256_102] : memref<64x768xf32, #tpu.memory_space<vmem>>, vector<1x128xf32>
    tpu.vector_store %arg9[%c7, %c256_102], %105 {strides = array<i32>} : memref<64x768xf32, #tpu.memory_space<vmem>>, vector<1x128xf32>,
    %114 = vector.extract_strided_slice %104 {offsets = [8, 0], sizes = [8, 128], strides = [1, 1]} : vector<16x128xf32> to vector<8x128xf32>
    %c8 = arith.constant 8 : index
    %c128_103 = arith.constant 128 : index
    %115 = vector.load %arg9[%c8, %c128_103] : memref<64x768xf32, #tpu.memory_space<vmem>>, vector<8x128xf32>
    tpu.vector_store %arg9[%c8, %c128_103], %114 {strides = array<i32>} : memref<64x768xf32, #tpu.memory_space<vmem>>, vector<8x128xf32>,
    %116 = vector.extract_strided_slice %114 {offsets = [0, 0], sizes = [7, 128], strides = [1, 1]} : vector<8x128xf32> to vector<7x128xf32>
    %c9 = arith.constant 9 : index
    %c0_104 = arith.constant 0 : index
    %117 = vector.load %arg9[%c9, %c0_104] : memref<64x768xf32, #tpu.memory_space<vmem>>, vector<7x128xf32>
    tpu.vector_store %arg9[%c9, %c0_104], %116 {strides = array<i32>} : memref<64x768xf32, #tpu.memory_space<vmem>>, vector<7x128xf32>,
    %c8_105 = arith.constant 8 : index
    %c0_106 = arith.constant 0 : index
    %118 = vector.load %arg9[%c8_105, %c0_106] : memref<64x768xf32, #tpu.memory_space<vmem>>, vector<1x128xf32>
    tpu.vector_store %arg9[%c8_105, %c0_106], %105 {strides = array<i32>} : memref<64x768xf32, #tpu.memory_space<vmem>>, vector<1x128xf32>,
    %119 = vector.extract_strided_slice %114 {offsets = [1, 0], sizes = [7, 128], strides = [1, 1]} : vector<8x128xf32> to vector<7x128xf32>
    %c8_107 = arith.constant 8 : index
    %c256_108 = arith.constant 256 : index
    %120 = vector.load %arg9[%c8_107, %c256_108] : memref<64x768xf32, #tpu.memory_space<vmem>>, vector<7x128xf32>
    tpu.vector_store %arg9[%c8_107, %c256_108], %119 {strides = array<i32>} : memref<64x768xf32, #tpu.memory_space<vmem>>, vector<7x128xf32>,
    %c15_109 = arith.constant 15 : index
    %c256_110 = arith.constant 256 : index
    %121 = vector.load %arg9[%c15_109, %c256_110] : memref<64x768xf32, #tpu.memory_space<vmem>>, vector<1x128xf32>
    tpu.vector_store %arg9[%c15_109, %c256_110], %105 {strides = array<i32>} : memref<64x768xf32, #tpu.memory_space<vmem>>, vector<1x128xf32>,
    %c2304 = arith.constant 2304 : index
    %c0_111 = arith.constant 0 : index
    %122 = vector.load %arg2[%c2304, %c0_111] : memref<2688x256xbf16, #tpu.memory_space<vmem>>, vector<384x256xbf16>
    %c0_112 = arith.constant 0 : index
    %c0_113 = arith.constant 0 : index
    %123 = vector.load %arg9[%c0_112, %c0_113] : memref<64x768xf32, #tpu.memory_space<vmem>>, vector<16x384xf32>
    %124 = arith.truncf %123 : vector<16x384xf32> to vector<16x384xbf16>
    %cst_114 = arith.constant dense<0.000000e+00> : vector<16x256xf32>
    %125 = tpu.matmul %124, %122, %cst_114 {dimension_numbers = #tpu.dot_dimension_numbers<[1], [0], [0], [1], [0, 0, 1, 1], [], []>} : vector<16x384xbf16>, vector<384x256xbf16>, vector<16x256xf32> -> vector<16x256xf32>
    %c4 = arith.constant 4 : index
    %c0_115 = arith.constant 0 : index
    %126 = vector.load %arg5[%c4, %c0_115] : memref<16x256xf32, #tpu.memory_space<vmem>>, vector<1x256xf32>
    %127 = vector.broadcast %126 : vector<1x256xf32> to vector<16x256xf32>
    %128 = arith.addf %125, %127 : vector<16x256xf32>
    %cst_116 = arith.constant 0.000000e+00 : f32
    %129 = vector.broadcast %cst_116 : f32 to vector<16x256xf32>
    %130 = arith.maximumf %128, %129 : vector<16x256xf32>
    %cst_117 = arith.constant 0.000000e+00 : f32
    %131 = vector.broadcast %cst_117 : f32 to vector<1x256xf32>
    %132 = vector.extract_strided_slice %130 {offsets = [0, 0], sizes = [8, 256], strides = [1, 1]} : vector<16x256xf32> to vector<8x256xf32>
    %c0_118 = arith.constant 0 : index
    %c256_119 = arith.constant 256 : index
    %133 = vector.load %arg9[%c0_118, %c256_119] : memref<64x768xf32, #tpu.memory_space<vmem>>, vector<8x256xf32>
    tpu.vector_store %arg9[%c0_118, %c256_119], %132 {strides = array<i32>} : memref<64x768xf32, #tpu.memory_space<vmem>>, vector<8x256xf32>,
    %134 = vector.extract_strided_slice %132 {offsets = [0, 0], sizes = [7, 256], strides = [1, 1]} : vector<8x256xf32> to vector<7x256xf32>
    %c1_120 = arith.constant 1 : index
    %c0_121 = arith.constant 0 : index
    %135 = vector.load %arg9[%c1_120, %c0_121] : memref<64x768xf32, #tpu.memory_space<vmem>>, vector<7x256xf32>
    tpu.vector_store %arg9[%c1_120, %c0_121], %134 {strides = array<i32>} : memref<64x768xf32, #tpu.memory_space<vmem>>, vector<7x256xf32>,
    %c0_122 = arith.constant 0 : index
    %c0_123 = arith.constant 0 : index
    %136 = vector.load %arg9[%c0_122, %c0_123] : memref<64x768xf32, #tpu.memory_space<vmem>>, vector<1x256xf32>
    tpu.vector_store %arg9[%c0_122, %c0_123], %131 {strides = array<i32>} : memref<64x768xf32, #tpu.memory_space<vmem>>, vector<1x256xf32>,
    %137 = vector.extract_strided_slice %132 {offsets = [1, 0], sizes = [7, 256], strides = [1, 1]} : vector<8x256xf32> to vector<7x256xf32>
    %c0_124 = arith.constant 0 : index
    %c512_125 = arith.constant 512 : index
    %138 = vector.load %arg9[%c0_124, %c512_125] : memref<64x768xf32, #tpu.memory_space<vmem>>, vector<7x256xf32>
    tpu.vector_store %arg9[%c0_124, %c512_125], %137 {strides = array<i32>} : memref<64x768xf32, #tpu.memory_space<vmem>>, vector<7x256xf32>,
    %c7_126 = arith.constant 7 : index
    %c512_127 = arith.constant 512 : index
    %139 = vector.load %arg9[%c7_126, %c512_127] : memref<64x768xf32, #tpu.memory_space<vmem>>, vector<1x256xf32>
    tpu.vector_store %arg9[%c7_126, %c512_127], %131 {strides = array<i32>} : memref<64x768xf32, #tpu.memory_space<vmem>>, vector<1x256xf32>,
    %140 = vector.extract_strided_slice %130 {offsets = [8, 0], sizes = [8, 256], strides = [1, 1]} : vector<16x256xf32> to vector<8x256xf32>
    %c8_128 = arith.constant 8 : index
    %c256_129 = arith.constant 256 : index
    %141 = vector.load %arg9[%c8_128, %c256_129] : memref<64x768xf32, #tpu.memory_space<vmem>>, vector<8x256xf32>
    tpu.vector_store %arg9[%c8_128, %c256_129], %140 {strides = array<i32>} : memref<64x768xf32, #tpu.memory_space<vmem>>, vector<8x256xf32>,
    %142 = vector.extract_strided_slice %140 {offsets = [0, 0], sizes = [7, 256], strides = [1, 1]} : vector<8x256xf32> to vector<7x256xf32>
    %c9_130 = arith.constant 9 : index
    %c0_131 = arith.constant 0 : index
    %143 = vector.load %arg9[%c9_130, %c0_131] : memref<64x768xf32, #tpu.memory_space<vmem>>, vector<7x256xf32>
    tpu.vector_store %arg9[%c9_130, %c0_131], %142 {strides = array<i32>} : memref<64x768xf32, #tpu.memory_space<vmem>>, vector<7x256xf32>,
    %c8_132 = arith.constant 8 : index
    %c0_133 = arith.constant 0 : index
    %144 = vector.load %arg9[%c8_132, %c0_133] : memref<64x768xf32, #tpu.memory_space<vmem>>, vector<1x256xf32>
    tpu.vector_store %arg9[%c8_132, %c0_133], %131 {strides = array<i32>} : memref<64x768xf32, #tpu.memory_space<vmem>>, vector<1x256xf32>,
    %145 = vector.extract_strided_slice %140 {offsets = [1, 0], sizes = [7, 256], strides = [1, 1]} : vector<8x256xf32> to vector<7x256xf32>
    %c8_134 = arith.constant 8 : index
    %c512_135 = arith.constant 512 : index
    %146 = vector.load %arg9[%c8_134, %c512_135] : memref<64x768xf32, #tpu.memory_space<vmem>>, vector<7x256xf32>
    tpu.vector_store %arg9[%c8_134, %c512_135], %145 {strides = array<i32>} : memref<64x768xf32, #tpu.memory_space<vmem>>, vector<7x256xf32>,
    %c15_136 = arith.constant 15 : index
    %c512_137 = arith.constant 512 : index
    %147 = vector.load %arg9[%c15_136, %c512_137] : memref<64x768xf32, #tpu.memory_space<vmem>>, vector<1x256xf32>
    tpu.vector_store %arg9[%c15_136, %c512_137], %131 {strides = array<i32>} : memref<64x768xf32, #tpu.memory_space<vmem>>, vector<1x256xf32>,
    tpu.wait_dma2 semaphore(%arg8 : memref<!tpu.dma_semaphore, #tpu.memory_space<semaphore_mem>>) src(%arg3 : memref<4608x256xbf16, #tpu.memory_space<any>>) dst(%arg7 : memref<4608x256xbf16, #tpu.memory_space<vmem>>)
    %c0_138 = arith.constant 0 : index
    %c0_139 = arith.constant 0 : index
    %148 = vector.load %arg7[%c0_138, %c0_139] : memref<4608x256xbf16, #tpu.memory_space<vmem>>, vector<768x256xbf16>
    %c0_140 = arith.constant 0 : index
    %c0_141 = arith.constant 0 : index
    %149 = vector.load %arg9[%c0_140, %c0_141] : memref<64x768xf32, #tpu.memory_space<vmem>>, vector<16x768xf32>
    %150 = arith.truncf %149 : vector<16x768xf32> to vector<16x768xbf16>
    %cst_142 = arith.constant dense<0.000000e+00> : vector<16x256xf32>
    %151 = tpu.matmul %150, %148, %cst_142 {dimension_numbers = #tpu.dot_dimension_numbers<[1], [0], [0], [1], [0, 0, 1, 1], [], []>} : vector<16x768xbf16>, vector<768x256xbf16>, vector<16x256xf32> -> vector<16x256xf32>
    %c5 = arith.constant 5 : index
    %c0_143 = arith.constant 0 : index
    %152 = vector.load %arg5[%c5, %c0_143] : memref<16x256xf32, #tpu.memory_space<vmem>>, vector<1x256xf32>
    %153 = vector.broadcast %152 : vector<1x256xf32> to vector<16x256xf32>
    %154 = arith.addf %151, %153 : vector<16x256xf32>
    %cst_144 = arith.constant 0.000000e+00 : f32
    %155 = vector.broadcast %cst_144 : f32 to vector<16x256xf32>
    %156 = arith.maximumf %154, %155 : vector<16x256xf32>
    %cst_145 = arith.constant 0.000000e+00 : f32
    %157 = vector.broadcast %cst_145 : f32 to vector<1x256xf32>
    %158 = vector.extract_strided_slice %156 {offsets = [0, 0], sizes = [8, 256], strides = [1, 1]} : vector<16x256xf32> to vector<8x256xf32>
    %c0_146 = arith.constant 0 : index
    %c256_147 = arith.constant 256 : index
    %159 = vector.load %arg9[%c0_146, %c256_147] : memref<64x768xf32, #tpu.memory_space<vmem>>, vector<8x256xf32>
    tpu.vector_store %arg9[%c0_146, %c256_147], %158 {strides = array<i32>} : memref<64x768xf32, #tpu.memory_space<vmem>>, vector<8x256xf32>,
    %160 = vector.extract_strided_slice %158 {offsets = [0, 0], sizes = [7, 256], strides = [1, 1]} : vector<8x256xf32> to vector<7x256xf32>
    %c1_148 = arith.constant 1 : index
    %c0_149 = arith.constant 0 : index
    %161 = vector.load %arg9[%c1_148, %c0_149] : memref<64x768xf32, #tpu.memory_space<vmem>>, vector<7x256xf32>
    tpu.vector_store %arg9[%c1_148, %c0_149], %160 {strides = array<i32>} : memref<64x768xf32, #tpu.memory_space<vmem>>, vector<7x256xf32>,
    %c0_150 = arith.constant 0 : index
    %c0_151 = arith.constant 0 : index
    %162 = vector.load %arg9[%c0_150, %c0_151] : memref<64x768xf32, #tpu.memory_space<vmem>>, vector<1x256xf32>
    tpu.vector_store %arg9[%c0_150, %c0_151], %157 {strides = array<i32>} : memref<64x768xf32, #tpu.memory_space<vmem>>, vector<1x256xf32>,
    %163 = vector.extract_strided_slice %158 {offsets = [1, 0], sizes = [7, 256], strides = [1, 1]} : vector<8x256xf32> to vector<7x256xf32>
    %c0_152 = arith.constant 0 : index
    %c512_153 = arith.constant 512 : index
    %164 = vector.load %arg9[%c0_152, %c512_153] : memref<64x768xf32, #tpu.memory_space<vmem>>, vector<7x256xf32>
    tpu.vector_store %arg9[%c0_152, %c512_153], %163 {strides = array<i32>} : memref<64x768xf32, #tpu.memory_space<vmem>>, vector<7x256xf32>,
    %c7_154 = arith.constant 7 : index
    %c512_155 = arith.constant 512 : index
    %165 = vector.load %arg9[%c7_154, %c512_155] : memref<64x768xf32, #tpu.memory_space<vmem>>, vector<1x256xf32>
    tpu.vector_store %arg9[%c7_154, %c512_155], %157 {strides = array<i32>} : memref<64x768xf32, #tpu.memory_space<vmem>>, vector<1x256xf32>,
    %166 = vector.extract_strided_slice %156 {offsets = [8, 0], sizes = [8, 256], strides = [1, 1]} : vector<16x256xf32> to vector<8x256xf32>
    %c8_156 = arith.constant 8 : index
    %c256_157 = arith.constant 256 : index
    %167 = vector.load %arg9[%c8_156, %c256_157] : memref<64x768xf32, #tpu.memory_space<vmem>>, vector<8x256xf32>
    tpu.vector_store %arg9[%c8_156, %c256_157], %166 {strides = array<i32>} : memref<64x768xf32, #tpu.memory_space<vmem>>, vector<8x256xf32>,
    %168 = vector.extract_strided_slice %166 {offsets = [0, 0], sizes = [7, 256], strides = [1, 1]} : vector<8x256xf32> to vector<7x256xf32>
    %c9_158 = arith.constant 9 : index
    %c0_159 = arith.constant 0 : index
    %169 = vector.load %arg9[%c9_158, %c0_159] : memref<64x768xf32, #tpu.memory_space<vmem>>, vector<7x256xf32>
    tpu.vector_store %arg9[%c9_158, %c0_159], %168 {strides = array<i32>} : memref<64x768xf32, #tpu.memory_space<vmem>>, vector<7x256xf32>,
    %c8_160 = arith.constant 8 : index
    %c0_161 = arith.constant 0 : index
    %170 = vector.load %arg9[%c8_160, %c0_161] : memref<64x768xf32, #tpu.memory_space<vmem>>, vector<1x256xf32>
    tpu.vector_store %arg9[%c8_160, %c0_161], %157 {strides = array<i32>} : memref<64x768xf32, #tpu.memory_space<vmem>>, vector<1x256xf32>,
    %171 = vector.extract_strided_slice %166 {offsets = [1, 0], sizes = [7, 256], strides = [1, 1]} : vector<8x256xf32> to vector<7x256xf32>
    %c8_162 = arith.constant 8 : index
    %c512_163 = arith.constant 512 : index
    %172 = vector.load %arg9[%c8_162, %c512_163] : memref<64x768xf32, #tpu.memory_space<vmem>>, vector<7x256xf32>
    tpu.vector_store %arg9[%c8_162, %c512_163], %171 {strides = array<i32>} : memref<64x768xf32, #tpu.memory_space<vmem>>, vector<7x256xf32>,
    %c15_164 = arith.constant 15 : index
    %c512_165 = arith.constant 512 : index
    %173 = vector.load %arg9[%c15_164, %c512_165] : memref<64x768xf32, #tpu.memory_space<vmem>>, vector<1x256xf32>
    tpu.vector_store %arg9[%c15_164, %c512_165], %157 {strides = array<i32>} : memref<64x768xf32, #tpu.memory_space<vmem>>, vector<1x256xf32>,
    %c768 = arith.constant 768 : index
    %c0_166 = arith.constant 0 : index
    %174 = vector.load %arg7[%c768, %c0_166] : memref<4608x256xbf16, #tpu.memory_space<vmem>>, vector<768x256xbf16>
    %c0_167 = arith.constant 0 : index
    %c0_168 = arith.constant 0 : index
    %175 = vector.load %arg9[%c0_167, %c0_168] : memref<64x768xf32, #tpu.memory_space<vmem>>, vector<16x768xf32>
    %176 = arith.truncf %175 : vector<16x768xf32> to vector<16x768xbf16>
    %cst_169 = arith.constant dense<0.000000e+00> : vector<16x256xf32>
    %177 = tpu.matmul %176, %174, %cst_169 {dimension_numbers = #tpu.dot_dimension_numbers<[1], [0], [0], [1], [0, 0, 1, 1], [], []>} : vector<16x768xbf16>, vector<768x256xbf16>, vector<16x256xf32> -> vector<16x256xf32>
    %c6 = arith.constant 6 : index
    %c0_170 = arith.constant 0 : index
    %178 = vector.load %arg5[%c6, %c0_170] : memref<16x256xf32, #tpu.memory_space<vmem>>, vector<1x128xf32>
    %179 = vector.extract_strided_slice %177 {offsets = [0, 0], sizes = [16, 128], strides = [1, 1]} : vector<16x256xf32> to vector<16x128xf32>
    %180 = vector.extract_strided_slice %177 {offsets = [0, 128], sizes = [16, 128], strides = [1, 1]} : vector<16x256xf32> to vector<16x128xf32>
    %181 = arith.maximumf %179, %180 : vector<16x128xf32>
    %182 = vector.broadcast %178 : vector<1x128xf32> to vector<16x128xf32>
    %183 = arith.addf %181, %182 : vector<16x128xf32>
    %cst_171 = arith.constant 0.000000e+00 : f32
    %184 = vector.broadcast %cst_171 : f32 to vector<16x128xf32>
    %185 = arith.maximumf %183, %184 : vector<16x128xf32>
    %c0_172 = arith.constant 0 : index
    %c0_173 = arith.constant 0 : index
    %186 = vector.load %arg10[%c0_172, %c0_173] : memref<64x128xf32, #tpu.memory_space<vmem>>, vector<16x128xf32>
    tpu.vector_store %arg10[%c0_172, %c0_173], %185 {strides = array<i32>} : memref<64x128xf32, #tpu.memory_space<vmem>>, vector<16x128xf32>,
    %c0_174 = arith.constant 0 : index
    %c0_175 = arith.constant 0 : index
    %187 = tpu.strided_load %arg10[%c0_174, %c0_175] {strides = array<i32: 2, 1>} : memref<64x128xf32, #tpu.memory_space<vmem>>, vector<8x128xf32>
    %c1_176 = arith.constant 1 : index
    %c0_177 = arith.constant 0 : index
    %188 = tpu.strided_load %arg10[%c1_176, %c0_177] {strides = array<i32: 2, 1>} : memref<64x128xf32, #tpu.memory_space<vmem>>, vector<8x128xf32>
    %189 = arith.maximumf %187, %188 : vector<8x128xf32>
    %cst_178 = arith.constant 0.000000e+00 : f32
    %190 = vector.broadcast %cst_178 : f32 to vector<1x128xf32>
    %191 = vector.extract_strided_slice %189 {offsets = [0, 0], sizes = [4, 128], strides = [1, 1]} : vector<8x128xf32> to vector<4x128xf32>
    %c0_179 = arith.constant 0 : index
    %c128_180 = arith.constant 128 : index
    %192 = vector.load %arg9[%c0_179, %c128_180] : memref<64x768xf32, #tpu.memory_space<vmem>>, vector<4x128xf32>
    tpu.vector_store %arg9[%c0_179, %c128_180], %191 {strides = array<i32>} : memref<64x768xf32, #tpu.memory_space<vmem>>, vector<4x128xf32>,
    %193 = vector.extract_strided_slice %191 {offsets = [0, 0], sizes = [3, 128], strides = [1, 1]} : vector<4x128xf32> to vector<3x128xf32>
    %c1_181 = arith.constant 1 : index
    %c0_182 = arith.constant 0 : index
    %194 = vector.load %arg9[%c1_181, %c0_182] : memref<64x768xf32, #tpu.memory_space<vmem>>, vector<3x128xf32>
    tpu.vector_store %arg9[%c1_181, %c0_182], %193 {strides = array<i32>} : memref<64x768xf32, #tpu.memory_space<vmem>>, vector<3x128xf32>,
    %c0_183 = arith.constant 0 : index
    %c0_184 = arith.constant 0 : index
    %195 = vector.load %arg9[%c0_183, %c0_184] : memref<64x768xf32, #tpu.memory_space<vmem>>, vector<1x128xf32>
    tpu.vector_store %arg9[%c0_183, %c0_184], %190 {strides = array<i32>} : memref<64x768xf32, #tpu.memory_space<vmem>>, vector<1x128xf32>,
    %196 = vector.extract_strided_slice %191 {offsets = [1, 0], sizes = [3, 128], strides = [1, 1]} : vector<4x128xf32> to vector<3x128xf32>
    %c0_185 = arith.constant 0 : index
    %c256_186 = arith.constant 256 : index
    %197 = vector.load %arg9[%c0_185, %c256_186] : memref<64x768xf32, #tpu.memory_space<vmem>>, vector<3x128xf32>
    tpu.vector_store %arg9[%c0_185, %c256_186], %196 {strides = array<i32>} : memref<64x768xf32, #tpu.memory_space<vmem>>, vector<3x128xf32>,
    %c3_187 = arith.constant 3 : index
    %c256_188 = arith.constant 256 : index
    %198 = vector.load %arg9[%c3_187, %c256_188] : memref<64x768xf32, #tpu.memory_space<vmem>>, vector<1x128xf32>
    tpu.vector_store %arg9[%c3_187, %c256_188], %190 {strides = array<i32>} : memref<64x768xf32, #tpu.memory_space<vmem>>, vector<1x128xf32>,
    %199 = vector.extract_strided_slice %189 {offsets = [4, 0], sizes = [4, 128], strides = [1, 1]} : vector<8x128xf32> to vector<4x128xf32>
    %c4_189 = arith.constant 4 : index
    %c128_190 = arith.constant 128 : index
    %200 = vector.load %arg9[%c4_189, %c128_190] : memref<64x768xf32, #tpu.memory_space<vmem>>, vector<4x128xf32>
    tpu.vector_store %arg9[%c4_189, %c128_190], %199 {strides = array<i32>} : memref<64x768xf32, #tpu.memory_space<vmem>>, vector<4x128xf32>,
    %201 = vector.extract_strided_slice %199 {offsets = [0, 0], sizes = [3, 128], strides = [1, 1]} : vector<4x128xf32> to vector<3x128xf32>
    %c5_191 = arith.constant 5 : index
    %c0_192 = arith.constant 0 : index
    %202 = vector.load %arg9[%c5_191, %c0_192] : memref<64x768xf32, #tpu.memory_space<vmem>>, vector<3x128xf32>
    tpu.vector_store %arg9[%c5_191, %c0_192], %201 {strides = array<i32>} : memref<64x768xf32, #tpu.memory_space<vmem>>, vector<3x128xf32>,
    %c4_193 = arith.constant 4 : index
    %c0_194 = arith.constant 0 : index
    %203 = vector.load %arg9[%c4_193, %c0_194] : memref<64x768xf32, #tpu.memory_space<vmem>>, vector<1x128xf32>
    tpu.vector_store %arg9[%c4_193, %c0_194], %190 {strides = array<i32>} : memref<64x768xf32, #tpu.memory_space<vmem>>, vector<1x128xf32>,
    %204 = vector.extract_strided_slice %199 {offsets = [1, 0], sizes = [3, 128], strides = [1, 1]} : vector<4x128xf32> to vector<3x128xf32>
    %c4_195 = arith.constant 4 : index
    %c256_196 = arith.constant 256 : index
    %205 = vector.load %arg9[%c4_195, %c256_196] : memref<64x768xf32, #tpu.memory_space<vmem>>, vector<3x128xf32>
    tpu.vector_store %arg9[%c4_195, %c256_196], %204 {strides = array<i32>} : memref<64x768xf32, #tpu.memory_space<vmem>>, vector<3x128xf32>,
    %c7_197 = arith.constant 7 : index
    %c256_198 = arith.constant 256 : index
    %206 = vector.load %arg9[%c7_197, %c256_198] : memref<64x768xf32, #tpu.memory_space<vmem>>, vector<1x128xf32>
    tpu.vector_store %arg9[%c7_197, %c256_198], %190 {strides = array<i32>} : memref<64x768xf32, #tpu.memory_space<vmem>>, vector<1x128xf32>,
    %c1536_199 = arith.constant 1536 : index
    %c0_200 = arith.constant 0 : index
    %207 = vector.load %arg7[%c1536_199, %c0_200] : memref<4608x256xbf16, #tpu.memory_space<vmem>>, vector<384x256xbf16>
    %c0_201 = arith.constant 0 : index
    %c0_202 = arith.constant 0 : index
    %208 = vector.load %arg9[%c0_201, %c0_202] : memref<64x768xf32, #tpu.memory_space<vmem>>, vector<8x384xf32>
    %209 = arith.truncf %208 : vector<8x384xf32> to vector<8x384xbf16>
    %cst_203 = arith.constant dense<0.000000e+00> : vector<8x256xf32>
    %210 = tpu.matmul %209, %207, %cst_203 {dimension_numbers = #tpu.dot_dimension_numbers<[1], [0], [0], [1], [0, 0, 1, 1], [], []>} : vector<8x384xbf16>, vector<384x256xbf16>, vector<8x256xf32> -> vector<8x256xf32>
    %c7_204 = arith.constant 7 : index
    %c0_205 = arith.constant 0 : index
    %211 = vector.load %arg5[%c7_204, %c0_205] : memref<16x256xf32, #tpu.memory_space<vmem>>, vector<1x256xf32>
    %212 = vector.broadcast %211 : vector<1x256xf32> to vector<8x256xf32>
    %213 = arith.addf %210, %212 : vector<8x256xf32>
    %cst_206 = arith.constant 0.000000e+00 : f32
    %214 = vector.broadcast %cst_206 : f32 to vector<8x256xf32>
    %215 = arith.maximumf %213, %214 : vector<8x256xf32>
    %cst_207 = arith.constant 0.000000e+00 : f32
    %216 = vector.broadcast %cst_207 : f32 to vector<1x256xf32>
    %217 = vector.extract_strided_slice %215 {offsets = [0, 0], sizes = [4, 256], strides = [1, 1]} : vector<8x256xf32> to vector<4x256xf32>
    %c0_208 = arith.constant 0 : index
    %c256_209 = arith.constant 256 : index
    %218 = vector.load %arg9[%c0_208, %c256_209] : memref<64x768xf32, #tpu.memory_space<vmem>>, vector<4x256xf32>
    tpu.vector_store %arg9[%c0_208, %c256_209], %217 {strides = array<i32>} : memref<64x768xf32, #tpu.memory_space<vmem>>, vector<4x256xf32>,
    %219 = vector.extract_strided_slice %217 {offsets = [0, 0], sizes = [3, 256], strides = [1, 1]} : vector<4x256xf32> to vector<3x256xf32>
    %c1_210 = arith.constant 1 : index
    %c0_211 = arith.constant 0 : index
    %220 = vector.load %arg9[%c1_210, %c0_211] : memref<64x768xf32, #tpu.memory_space<vmem>>, vector<3x256xf32>
    tpu.vector_store %arg9[%c1_210, %c0_211], %219 {strides = array<i32>} : memref<64x768xf32, #tpu.memory_space<vmem>>, vector<3x256xf32>,
    %c0_212 = arith.constant 0 : index
    %c0_213 = arith.constant 0 : index
    %221 = vector.load %arg9[%c0_212, %c0_213] : memref<64x768xf32, #tpu.memory_space<vmem>>, vector<1x256xf32>
    tpu.vector_store %arg9[%c0_212, %c0_213], %216 {strides = array<i32>} : memref<64x768xf32, #tpu.memory_space<vmem>>, vector<1x256xf32>,
    %222 = vector.extract_strided_slice %217 {offsets = [1, 0], sizes = [3, 256], strides = [1, 1]} : vector<4x256xf32> to vector<3x256xf32>
    %c0_214 = arith.constant 0 : index
    %c512_215 = arith.constant 512 : index
    %223 = vector.load %arg9[%c0_214, %c512_215] : memref<64x768xf32, #tpu.memory_space<vmem>>, vector<3x256xf32>
    tpu.vector_store %arg9[%c0_214, %c512_215], %222 {strides = array<i32>} : memref<64x768xf32, #tpu.memory_space<vmem>>, vector<3x256xf32>,
    %c3_216 = arith.constant 3 : index
    %c512_217 = arith.constant 512 : index
    %224 = vector.load %arg9[%c3_216, %c512_217] : memref<64x768xf32, #tpu.memory_space<vmem>>, vector<1x256xf32>
    tpu.vector_store %arg9[%c3_216, %c512_217], %216 {strides = array<i32>} : memref<64x768xf32, #tpu.memory_space<vmem>>, vector<1x256xf32>,
    %225 = vector.extract_strided_slice %215 {offsets = [4, 0], sizes = [4, 256], strides = [1, 1]} : vector<8x256xf32> to vector<4x256xf32>
    %c4_218 = arith.constant 4 : index
    %c256_219 = arith.constant 256 : index
    %226 = vector.load %arg9[%c4_218, %c256_219] : memref<64x768xf32, #tpu.memory_space<vmem>>, vector<4x256xf32>
    tpu.vector_store %arg9[%c4_218, %c256_219], %225 {strides = array<i32>} : memref<64x768xf32, #tpu.memory_space<vmem>>, vector<4x256xf32>,
    %227 = vector.extract_strided_slice %225 {offsets = [0, 0], sizes = [3, 256], strides = [1, 1]} : vector<4x256xf32> to vector<3x256xf32>
    %c5_220 = arith.constant 5 : index
    %c0_221 = arith.constant 0 : index
    %228 = vector.load %arg9[%c5_220, %c0_221] : memref<64x768xf32, #tpu.memory_space<vmem>>, vector<3x256xf32>
    tpu.vector_store %arg9[%c5_220, %c0_221], %227 {strides = array<i32>} : memref<64x768xf32, #tpu.memory_space<vmem>>, vector<3x256xf32>,
    %c4_222 = arith.constant 4 : index
    %c0_223 = arith.constant 0 : index
    %229 = vector.load %arg9[%c4_222, %c0_223] : memref<64x768xf32, #tpu.memory_space<vmem>>, vector<1x256xf32>
    tpu.vector_store %arg9[%c4_222, %c0_223], %216 {strides = array<i32>} : memref<64x768xf32, #tpu.memory_space<vmem>>, vector<1x256xf32>,
    %230 = vector.extract_strided_slice %225 {offsets = [1, 0], sizes = [3, 256], strides = [1, 1]} : vector<4x256xf32> to vector<3x256xf32>
    %c4_224 = arith.constant 4 : index
    %c512_225 = arith.constant 512 : index
    %231 = vector.load %arg9[%c4_224, %c512_225] : memref<64x768xf32, #tpu.memory_space<vmem>>, vector<3x256xf32>
    tpu.vector_store %arg9[%c4_224, %c512_225], %230 {strides = array<i32>} : memref<64x768xf32, #tpu.memory_space<vmem>>, vector<3x256xf32>,
    %c7_226 = arith.constant 7 : index
    %c512_227 = arith.constant 512 : index
    %232 = vector.load %arg9[%c7_226, %c512_227] : memref<64x768xf32, #tpu.memory_space<vmem>>, vector<1x256xf32>
    tpu.vector_store %arg9[%c7_226, %c512_227], %216 {strides = array<i32>} : memref<64x768xf32, #tpu.memory_space<vmem>>, vector<1x256xf32>,
    %c1920 = arith.constant 1920 : index
    %c0_228 = arith.constant 0 : index
    %233 = vector.load %arg7[%c1920, %c0_228] : memref<4608x256xbf16, #tpu.memory_space<vmem>>, vector<768x256xbf16>
    %c0_229 = arith.constant 0 : index
    %c0_230 = arith.constant 0 : index
    %234 = vector.load %arg9[%c0_229, %c0_230] : memref<64x768xf32, #tpu.memory_space<vmem>>, vector<8x768xf32>
    %235 = arith.truncf %234 : vector<8x768xf32> to vector<8x768xbf16>
    %cst_231 = arith.constant dense<0.000000e+00> : vector<8x256xf32>
    %236 = tpu.matmul %235, %233, %cst_231 {dimension_numbers = #tpu.dot_dimension_numbers<[1], [0], [0], [1], [0, 0, 1, 1], [], []>} : vector<8x768xbf16>, vector<768x256xbf16>, vector<8x256xf32> -> vector<8x256xf32>
    %c8_232 = arith.constant 8 : index
    %c0_233 = arith.constant 0 : index
    %237 = vector.load %arg5[%c8_232, %c0_233] : memref<16x256xf32, #tpu.memory_space<vmem>>, vector<1x256xf32>
    %238 = vector.broadcast %237 : vector<1x256xf32> to vector<8x256xf32>
    %239 = arith.addf %236, %238 : vector<8x256xf32>
    %cst_234 = arith.constant 0.000000e+00 : f32
    %240 = vector.broadcast %cst_234 : f32 to vector<8x256xf32>
    %241 = arith.maximumf %239, %240 : vector<8x256xf32>
    %cst_235 = arith.constant 0.000000e+00 : f32
    %242 = vector.broadcast %cst_235 : f32 to vector<1x256xf32>
    %243 = vector.extract_strided_slice %241 {offsets = [0, 0], sizes = [4, 256], strides = [1, 1]} : vector<8x256xf32> to vector<4x256xf32>
    %c0_236 = arith.constant 0 : index
    %c256_237 = arith.constant 256 : index
    %244 = vector.load %arg9[%c0_236, %c256_237] : memref<64x768xf32, #tpu.memory_space<vmem>>, vector<4x256xf32>
    tpu.vector_store %arg9[%c0_236, %c256_237], %243 {strides = array<i32>} : memref<64x768xf32, #tpu.memory_space<vmem>>, vector<4x256xf32>,
    %245 = vector.extract_strided_slice %243 {offsets = [0, 0], sizes = [3, 256], strides = [1, 1]} : vector<4x256xf32> to vector<3x256xf32>
    %c1_238 = arith.constant 1 : index
    %c0_239 = arith.constant 0 : index
    %246 = vector.load %arg9[%c1_238, %c0_239] : memref<64x768xf32, #tpu.memory_space<vmem>>, vector<3x256xf32>
    tpu.vector_store %arg9[%c1_238, %c0_239], %245 {strides = array<i32>} : memref<64x768xf32, #tpu.memory_space<vmem>>, vector<3x256xf32>,
    %c0_240 = arith.constant 0 : index
    %c0_241 = arith.constant 0 : index
    %247 = vector.load %arg9[%c0_240, %c0_241] : memref<64x768xf32, #tpu.memory_space<vmem>>, vector<1x256xf32>
    tpu.vector_store %arg9[%c0_240, %c0_241], %242 {strides = array<i32>} : memref<64x768xf32, #tpu.memory_space<vmem>>, vector<1x256xf32>,
    %248 = vector.extract_strided_slice %243 {offsets = [1, 0], sizes = [3, 256], strides = [1, 1]} : vector<4x256xf32> to vector<3x256xf32>
    %c0_242 = arith.constant 0 : index
    %c512_243 = arith.constant 512 : index
    %249 = vector.load %arg9[%c0_242, %c512_243] : memref<64x768xf32, #tpu.memory_space<vmem>>, vector<3x256xf32>
    tpu.vector_store %arg9[%c0_242, %c512_243], %248 {strides = array<i32>} : memref<64x768xf32, #tpu.memory_space<vmem>>, vector<3x256xf32>,
    %c3_244 = arith.constant 3 : index
    %c512_245 = arith.constant 512 : index
    %250 = vector.load %arg9[%c3_244, %c512_245] : memref<64x768xf32, #tpu.memory_space<vmem>>, vector<1x256xf32>
    tpu.vector_store %arg9[%c3_244, %c512_245], %242 {strides = array<i32>} : memref<64x768xf32, #tpu.memory_space<vmem>>, vector<1x256xf32>,
    %251 = vector.extract_strided_slice %241 {offsets = [4, 0], sizes = [4, 256], strides = [1, 1]} : vector<8x256xf32> to vector<4x256xf32>
    %c4_246 = arith.constant 4 : index
    %c256_247 = arith.constant 256 : index
    %252 = vector.load %arg9[%c4_246, %c256_247] : memref<64x768xf32, #tpu.memory_space<vmem>>, vector<4x256xf32>
    tpu.vector_store %arg9[%c4_246, %c256_247], %251 {strides = array<i32>} : memref<64x768xf32, #tpu.memory_space<vmem>>, vector<4x256xf32>,
    %253 = vector.extract_strided_slice %251 {offsets = [0, 0], sizes = [3, 256], strides = [1, 1]} : vector<4x256xf32> to vector<3x256xf32>
    %c5_248 = arith.constant 5 : index
    %c0_249 = arith.constant 0 : index
    %254 = vector.load %arg9[%c5_248, %c0_249] : memref<64x768xf32, #tpu.memory_space<vmem>>, vector<3x256xf32>
    tpu.vector_store %arg9[%c5_248, %c0_249], %253 {strides = array<i32>} : memref<64x768xf32, #tpu.memory_space<vmem>>, vector<3x256xf32>,
    %c4_250 = arith.constant 4 : index
    %c0_251 = arith.constant 0 : index
    %255 = vector.load %arg9[%c4_250, %c0_251] : memref<64x768xf32, #tpu.memory_space<vmem>>, vector<1x256xf32>
    tpu.vector_store %arg9[%c4_250, %c0_251], %242 {strides = array<i32>} : memref<64x768xf32, #tpu.memory_space<vmem>>, vector<1x256xf32>,
    %256 = vector.extract_strided_slice %251 {offsets = [1, 0], sizes = [3, 256], strides = [1, 1]} : vector<4x256xf32> to vector<3x256xf32>
    %c4_252 = arith.constant 4 : index
    %c512_253 = arith.constant 512 : index
    %257 = vector.load %arg9[%c4_252, %c512_253] : memref<64x768xf32, #tpu.memory_space<vmem>>, vector<3x256xf32>
    tpu.vector_store %arg9[%c4_252, %c512_253], %256 {strides = array<i32>} : memref<64x768xf32, #tpu.memory_space<vmem>>, vector<3x256xf32>,
    %c7_254 = arith.constant 7 : index
    %c512_255 = arith.constant 512 : index
    %258 = vector.load %arg9[%c7_254, %c512_255] : memref<64x768xf32, #tpu.memory_space<vmem>>, vector<1x256xf32>
    tpu.vector_store %arg9[%c7_254, %c512_255], %242 {strides = array<i32>} : memref<64x768xf32, #tpu.memory_space<vmem>>, vector<1x256xf32>,
    %c2688 = arith.constant 2688 : index
    %c0_256 = arith.constant 0 : index
    %259 = vector.load %arg7[%c2688, %c0_256] : memref<4608x256xbf16, #tpu.memory_space<vmem>>, vector<768x256xbf16>
    %c0_257 = arith.constant 0 : index
    %c0_258 = arith.constant 0 : index
    %260 = vector.load %arg9[%c0_257, %c0_258] : memref<64x768xf32, #tpu.memory_space<vmem>>, vector<8x768xf32>
    %261 = arith.truncf %260 : vector<8x768xf32> to vector<8x768xbf16>
    %cst_259 = arith.constant dense<0.000000e+00> : vector<8x256xf32>
    %262 = tpu.matmul %261, %259, %cst_259 {dimension_numbers = #tpu.dot_dimension_numbers<[1], [0], [0], [1], [0, 0, 1, 1], [], []>} : vector<8x768xbf16>, vector<768x256xbf16>, vector<8x256xf32> -> vector<8x256xf32>
    %c9_260 = arith.constant 9 : index
    %c0_261 = arith.constant 0 : index
    %263 = vector.load %arg5[%c9_260, %c0_261] : memref<16x256xf32, #tpu.memory_space<vmem>>, vector<1x128xf32>
    %264 = vector.extract_strided_slice %262 {offsets = [0, 0], sizes = [8, 128], strides = [1, 1]} : vector<8x256xf32> to vector<8x128xf32>
    %265 = vector.extract_strided_slice %262 {offsets = [0, 128], sizes = [8, 128], strides = [1, 1]} : vector<8x256xf32> to vector<8x128xf32>
    %266 = arith.maximumf %264, %265 : vector<8x128xf32>
    %267 = vector.broadcast %263 : vector<1x128xf32> to vector<8x128xf32>
    %268 = arith.addf %266, %267 : vector<8x128xf32>
    %cst_262 = arith.constant 0.000000e+00 : f32
    %269 = vector.broadcast %cst_262 : f32 to vector<8x128xf32>
    %270 = arith.maximumf %268, %269 : vector<8x128xf32>
    %c0_263 = arith.constant 0 : index
    %c0_264 = arith.constant 0 : index
    %271 = vector.load %arg10[%c0_263, %c0_264] : memref<64x128xf32, #tpu.memory_space<vmem>>, vector<8x128xf32>
    tpu.vector_store %arg10[%c0_263, %c0_264], %270 {strides = array<i32>} : memref<64x128xf32, #tpu.memory_space<vmem>>, vector<8x128xf32>,
    %c0_265 = arith.constant 0 : index
    %c0_266 = arith.constant 0 : index
    %272 = tpu.strided_load %arg10[%c0_265, %c0_266] {strides = array<i32: 2, 1>} : memref<64x128xf32, #tpu.memory_space<vmem>>, vector<4x128xf32>
    %c1_267 = arith.constant 1 : index
    %c0_268 = arith.constant 0 : index
    %273 = tpu.strided_load %arg10[%c1_267, %c0_268] {strides = array<i32: 2, 1>} : memref<64x128xf32, #tpu.memory_space<vmem>>, vector<4x128xf32>
    %274 = arith.maximumf %272, %273 : vector<4x128xf32>
    %cst_269 = arith.constant 0.000000e+00 : f32
    %275 = vector.broadcast %cst_269 : f32 to vector<1x128xf32>
    %276 = vector.extract_strided_slice %274 {offsets = [0, 0], sizes = [2, 128], strides = [1, 1]} : vector<4x128xf32> to vector<2x128xf32>
    %c0_270 = arith.constant 0 : index
    %c128_271 = arith.constant 128 : index
    %277 = vector.load %arg9[%c0_270, %c128_271] : memref<64x768xf32, #tpu.memory_space<vmem>>, vector<2x128xf32>
    tpu.vector_store %arg9[%c0_270, %c128_271], %276 {strides = array<i32>} : memref<64x768xf32, #tpu.memory_space<vmem>>, vector<2x128xf32>,
    %278 = vector.extract_strided_slice %276 {offsets = [0, 0], sizes = [1, 128], strides = [1, 1]} : vector<2x128xf32> to vector<1x128xf32>
    %c1_272 = arith.constant 1 : index
    %c0_273 = arith.constant 0 : index
    %279 = vector.load %arg9[%c1_272, %c0_273] : memref<64x768xf32, #tpu.memory_space<vmem>>, vector<1x128xf32>
    tpu.vector_store %arg9[%c1_272, %c0_273], %278 {strides = array<i32>} : memref<64x768xf32, #tpu.memory_space<vmem>>, vector<1x128xf32>,
    %c0_274 = arith.constant 0 : index
    %c0_275 = arith.constant 0 : index
    %280 = vector.load %arg9[%c0_274, %c0_275] : memref<64x768xf32, #tpu.memory_space<vmem>>, vector<1x128xf32>
    tpu.vector_store %arg9[%c0_274, %c0_275], %275 {strides = array<i32>} : memref<64x768xf32, #tpu.memory_space<vmem>>, vector<1x128xf32>,
    %281 = vector.extract_strided_slice %276 {offsets = [1, 0], sizes = [1, 128], strides = [1, 1]} : vector<2x128xf32> to vector<1x128xf32>
    %c0_276 = arith.constant 0 : index
    %c256_277 = arith.constant 256 : index
    %282 = vector.load %arg9[%c0_276, %c256_277] : memref<64x768xf32, #tpu.memory_space<vmem>>, vector<1x128xf32>
    tpu.vector_store %arg9[%c0_276, %c256_277], %281 {strides = array<i32>} : memref<64x768xf32, #tpu.memory_space<vmem>>, vector<1x128xf32>,
    %c1_278 = arith.constant 1 : index
    %c256_279 = arith.constant 256 : index
    %283 = vector.load %arg9[%c1_278, %c256_279] : memref<64x768xf32, #tpu.memory_space<vmem>>, vector<1x128xf32>
    tpu.vector_store %arg9[%c1_278, %c256_279], %275 {strides = array<i32>} : memref<64x768xf32, #tpu.memory_space<vmem>>, vector<1x128xf32>,
    %284 = vector.extract_strided_slice %274 {offsets = [2, 0], sizes = [2, 128], strides = [1, 1]} : vector<4x128xf32> to vector<2x128xf32>
    %c2_280 = arith.constant 2 : index
    %c128_281 = arith.constant 128 : index
    %285 = vector.load %arg9[%c2_280, %c128_281] : memref<64x768xf32, #tpu.memory_space<vmem>>, vector<2x128xf32>
    tpu.vector_store %arg9[%c2_280, %c128_281], %284 {strides = array<i32>} : memref<64x768xf32, #tpu.memory_space<vmem>>, vector<2x128xf32>,
    %286 = vector.extract_strided_slice %284 {offsets = [0, 0], sizes = [1, 128], strides = [1, 1]} : vector<2x128xf32> to vector<1x128xf32>
    %c3_282 = arith.constant 3 : index
    %c0_283 = arith.constant 0 : index
    %287 = vector.load %arg9[%c3_282, %c0_283] : memref<64x768xf32, #tpu.memory_space<vmem>>, vector<1x128xf32>
    tpu.vector_store %arg9[%c3_282, %c0_283], %286 {strides = array<i32>} : memref<64x768xf32, #tpu.memory_space<vmem>>, vector<1x128xf32>,
    %c2_284 = arith.constant 2 : index
    %c0_285 = arith.constant 0 : index
    %288 = vector.load %arg9[%c2_284, %c0_285] : memref<64x768xf32, #tpu.memory_space<vmem>>, vector<1x128xf32>
    tpu.vector_store %arg9[%c2_284, %c0_285], %275 {strides = array<i32>} : memref<64x768xf32, #tpu.memory_space<vmem>>, vector<1x128xf32>,
    %289 = vector.extract_strided_slice %284 {offsets = [1, 0], sizes = [1, 128], strides = [1, 1]} : vector<2x128xf32> to vector<1x128xf32>
    %c2_286 = arith.constant 2 : index
    %c256_287 = arith.constant 256 : index
    %290 = vector.load %arg9[%c2_286, %c256_287] : memref<64x768xf32, #tpu.memory_space<vmem>>, vector<1x128xf32>
    tpu.vector_store %arg9[%c2_286, %c256_287], %289 {strides = array<i32>} : memref<64x768xf32, #tpu.memory_space<vmem>>, vector<1x128xf32>,
    %c3_288 = arith.constant 3 : index
    %c256_289 = arith.constant 256 : index
    %291 = vector.load %arg9[%c3_288, %c256_289] : memref<64x768xf32, #tpu.memory_space<vmem>>, vector<1x128xf32>
    tpu.vector_store %arg9[%c3_288, %c256_289], %275 {strides = array<i32>} : memref<64x768xf32, #tpu.memory_space<vmem>>, vector<1x128xf32>,
    %c3456 = arith.constant 3456 : index
    %c0_290 = arith.constant 0 : index
    %292 = vector.load %arg7[%c3456, %c0_290] : memref<4608x256xbf16, #tpu.memory_space<vmem>>, vector<384x128xbf16>
    %c0_291 = arith.constant 0 : index
    %c0_292 = arith.constant 0 : index
    %293 = vector.load %arg9[%c0_291, %c0_292] : memref<64x768xf32, #tpu.memory_space<vmem>>, vector<4x384xf32>
    %294 = arith.truncf %293 : vector<4x384xf32> to vector<4x384xbf16>
    %cst_293 = arith.constant dense<0.000000e+00> : vector<4x128xf32>
    %295 = tpu.matmul %294, %292, %cst_293 {dimension_numbers = #tpu.dot_dimension_numbers<[1], [0], [0], [1], [0, 0, 1, 1], [], []>} : vector<4x384xbf16>, vector<384x128xbf16>, vector<4x128xf32> -> vector<4x128xf32>
    %c10 = arith.constant 10 : index
    %c0_294 = arith.constant 0 : index
    %296 = vector.load %arg5[%c10, %c0_294] : memref<16x256xf32, #tpu.memory_space<vmem>>, vector<1x128xf32>
    %297 = vector.broadcast %296 : vector<1x128xf32> to vector<4x128xf32>
    %298 = arith.addf %295, %297 : vector<4x128xf32>
    %cst_295 = arith.constant 0.000000e+00 : f32
    %299 = vector.broadcast %cst_295 : f32 to vector<4x128xf32>
    %300 = arith.maximumf %298, %299 : vector<4x128xf32>
    %cst_296 = arith.constant 0.000000e+00 : f32
    %301 = vector.broadcast %cst_296 : f32 to vector<1x128xf32>
    %302 = vector.extract_strided_slice %300 {offsets = [0, 0], sizes = [2, 128], strides = [1, 1]} : vector<4x128xf32> to vector<2x128xf32>
    %c0_297 = arith.constant 0 : index
    %c128_298 = arith.constant 128 : index
    %303 = vector.load %arg9[%c0_297, %c128_298] : memref<64x768xf32, #tpu.memory_space<vmem>>, vector<2x128xf32>
    tpu.vector_store %arg9[%c0_297, %c128_298], %302 {strides = array<i32>} : memref<64x768xf32, #tpu.memory_space<vmem>>, vector<2x128xf32>,
    %304 = vector.extract_strided_slice %302 {offsets = [0, 0], sizes = [1, 128], strides = [1, 1]} : vector<2x128xf32> to vector<1x128xf32>
    %c1_299 = arith.constant 1 : index
    %c0_300 = arith.constant 0 : index
    %305 = vector.load %arg9[%c1_299, %c0_300] : memref<64x768xf32, #tpu.memory_space<vmem>>, vector<1x128xf32>
    tpu.vector_store %arg9[%c1_299, %c0_300], %304 {strides = array<i32>} : memref<64x768xf32, #tpu.memory_space<vmem>>, vector<1x128xf32>,
    %c0_301 = arith.constant 0 : index
    %c0_302 = arith.constant 0 : index
    %306 = vector.load %arg9[%c0_301, %c0_302] : memref<64x768xf32, #tpu.memory_space<vmem>>, vector<1x128xf32>
    tpu.vector_store %arg9[%c0_301, %c0_302], %301 {strides = array<i32>} : memref<64x768xf32, #tpu.memory_space<vmem>>, vector<1x128xf32>,
    %307 = vector.extract_strided_slice %302 {offsets = [1, 0], sizes = [1, 128], strides = [1, 1]} : vector<2x128xf32> to vector<1x128xf32>
    %c0_303 = arith.constant 0 : index
    %c256_304 = arith.constant 256 : index
    %308 = vector.load %arg9[%c0_303, %c256_304] : memref<64x768xf32, #tpu.memory_space<vmem>>, vector<1x128xf32>
    tpu.vector_store %arg9[%c0_303, %c256_304], %307 {strides = array<i32>} : memref<64x768xf32, #tpu.memory_space<vmem>>, vector<1x128xf32>,
    %c1_305 = arith.constant 1 : index
    %c256_306 = arith.constant 256 : index
    %309 = vector.load %arg9[%c1_305, %c256_306] : memref<64x768xf32, #tpu.memory_space<vmem>>, vector<1x128xf32>
    tpu.vector_store %arg9[%c1_305, %c256_306], %301 {strides = array<i32>} : memref<64x768xf32, #tpu.memory_space<vmem>>, vector<1x128xf32>,
    %310 = vector.extract_strided_slice %300 {offsets = [2, 0], sizes = [2, 128], strides = [1, 1]} : vector<4x128xf32> to vector<2x128xf32>
    %c2_307 = arith.constant 2 : index
    %c128_308 = arith.constant 128 : index
    %311 = vector.load %arg9[%c2_307, %c128_308] : memref<64x768xf32, #tpu.memory_space<vmem>>, vector<2x128xf32>
    tpu.vector_store %arg9[%c2_307, %c128_308], %310 {strides = array<i32>} : memref<64x768xf32, #tpu.memory_space<vmem>>, vector<2x128xf32>,
    %312 = vector.extract_strided_slice %310 {offsets = [0, 0], sizes = [1, 128], strides = [1, 1]} : vector<2x128xf32> to vector<1x128xf32>
    %c3_309 = arith.constant 3 : index
    %c0_310 = arith.constant 0 : index
    %313 = vector.load %arg9[%c3_309, %c0_310] : memref<64x768xf32, #tpu.memory_space<vmem>>, vector<1x128xf32>
    tpu.vector_store %arg9[%c3_309, %c0_310], %312 {strides = array<i32>} : memref<64x768xf32, #tpu.memory_space<vmem>>, vector<1x128xf32>,
    %c2_311 = arith.constant 2 : index
    %c0_312 = arith.constant 0 : index
    %314 = vector.load %arg9[%c2_311, %c0_312] : memref<64x768xf32, #tpu.memory_space<vmem>>, vector<1x128xf32>
    tpu.vector_store %arg9[%c2_311, %c0_312], %301 {strides = array<i32>} : memref<64x768xf32, #tpu.memory_space<vmem>>, vector<1x128xf32>,
    %315 = vector.extract_strided_slice %310 {offsets = [1, 0], sizes = [1, 128], strides = [1, 1]} : vector<2x128xf32> to vector<1x128xf32>
    %c2_313 = arith.constant 2 : index
    %c256_314 = arith.constant 256 : index
    %316 = vector.load %arg9[%c2_313, %c256_314] : memref<64x768xf32, #tpu.memory_space<vmem>>, vector<1x128xf32>
    tpu.vector_store %arg9[%c2_313, %c256_314], %315 {strides = array<i32>} : memref<64x768xf32, #tpu.memory_space<vmem>>, vector<1x128xf32>,
    %c3_315 = arith.constant 3 : index
    %c256_316 = arith.constant 256 : index
    %317 = vector.load %arg9[%c3_315, %c256_316] : memref<64x768xf32, #tpu.memory_space<vmem>>, vector<1x128xf32>
    tpu.vector_store %arg9[%c3_315, %c256_316], %301 {strides = array<i32>} : memref<64x768xf32, #tpu.memory_space<vmem>>, vector<1x128xf32>,
    %c3840 = arith.constant 3840 : index
    %c0_317 = arith.constant 0 : index
    %318 = vector.load %arg7[%c3840, %c0_317] : memref<4608x256xbf16, #tpu.memory_space<vmem>>, vector<384x128xbf16>
    %c0_318 = arith.constant 0 : index
    %c0_319 = arith.constant 0 : index
    %319 = vector.load %arg9[%c0_318, %c0_319] : memref<64x768xf32, #tpu.memory_space<vmem>>, vector<4x384xf32>
    %320 = arith.truncf %319 : vector<4x384xf32> to vector<4x384xbf16>
    %cst_320 = arith.constant dense<0.000000e+00> : vector<4x128xf32>
    %321 = tpu.matmul %320, %318, %cst_320 {dimension_numbers = #tpu.dot_dimension_numbers<[1], [0], [0], [1], [0, 0, 1, 1], [], []>} : vector<4x384xbf16>, vector<384x128xbf16>, vector<4x128xf32> -> vector<4x128xf32>
    %c11 = arith.constant 11 : index
    %c0_321 = arith.constant 0 : index
    %322 = vector.load %arg5[%c11, %c0_321] : memref<16x256xf32, #tpu.memory_space<vmem>>, vector<1x128xf32>
    %323 = vector.broadcast %322 : vector<1x128xf32> to vector<4x128xf32>
    %324 = arith.addf %321, %323 : vector<4x128xf32>
    %cst_322 = arith.constant 0.000000e+00 : f32
    %325 = vector.broadcast %cst_322 : f32 to vector<4x128xf32>
    %326 = arith.maximumf %324, %325 : vector<4x128xf32>
    %cst_323 = arith.constant 0.000000e+00 : f32
    %327 = vector.broadcast %cst_323 : f32 to vector<1x128xf32>
    %328 = vector.extract_strided_slice %326 {offsets = [0, 0], sizes = [2, 128], strides = [1, 1]} : vector<4x128xf32> to vector<2x128xf32>
    %c0_324 = arith.constant 0 : index
    %c128_325 = arith.constant 128 : index
    %329 = vector.load %arg9[%c0_324, %c128_325] : memref<64x768xf32, #tpu.memory_space<vmem>>, vector<2x128xf32>
    tpu.vector_store %arg9[%c0_324, %c128_325], %328 {strides = array<i32>} : memref<64x768xf32, #tpu.memory_space<vmem>>, vector<2x128xf32>,
    %330 = vector.extract_strided_slice %328 {offsets = [0, 0], sizes = [1, 128], strides = [1, 1]} : vector<2x128xf32> to vector<1x128xf32>
    %c1_326 = arith.constant 1 : index
    %c0_327 = arith.constant 0 : index
    %331 = vector.load %arg9[%c1_326, %c0_327] : memref<64x768xf32, #tpu.memory_space<vmem>>, vector<1x128xf32>
    tpu.vector_store %arg9[%c1_326, %c0_327], %330 {strides = array<i32>} : memref<64x768xf32, #tpu.memory_space<vmem>>, vector<1x128xf32>,
    %c0_328 = arith.constant 0 : index
    %c0_329 = arith.constant 0 : index
    %332 = vector.load %arg9[%c0_328, %c0_329] : memref<64x768xf32, #tpu.memory_space<vmem>>, vector<1x128xf32>
    tpu.vector_store %arg9[%c0_328, %c0_329], %327 {strides = array<i32>} : memref<64x768xf32, #tpu.memory_space<vmem>>, vector<1x128xf32>,
    %333 = vector.extract_strided_slice %328 {offsets = [1, 0], sizes = [1, 128], strides = [1, 1]} : vector<2x128xf32> to vector<1x128xf32>
    %c0_330 = arith.constant 0 : index
    %c256_331 = arith.constant 256 : index
    %334 = vector.load %arg9[%c0_330, %c256_331] : memref<64x768xf32, #tpu.memory_space<vmem>>, vector<1x128xf32>
    tpu.vector_store %arg9[%c0_330, %c256_331], %333 {strides = array<i32>} : memref<64x768xf32, #tpu.memory_space<vmem>>, vector<1x128xf32>,
    %c1_332 = arith.constant 1 : index
    %c256_333 = arith.constant 256 : index
    %335 = vector.load %arg9[%c1_332, %c256_333] : memref<64x768xf32, #tpu.memory_space<vmem>>, vector<1x128xf32>
    tpu.vector_store %arg9[%c1_332, %c256_333], %327 {strides = array<i32>} : memref<64x768xf32, #tpu.memory_space<vmem>>, vector<1x128xf32>,
    %336 = vector.extract_strided_slice %326 {offsets = [2, 0], sizes = [2, 128], strides = [1, 1]} : vector<4x128xf32> to vector<2x128xf32>
    %c2_334 = arith.constant 2 : index
    %c128_335 = arith.constant 128 : index
    %337 = vector.load %arg9[%c2_334, %c128_335] : memref<64x768xf32, #tpu.memory_space<vmem>>, vector<2x128xf32>
    tpu.vector_store %arg9[%c2_334, %c128_335], %336 {strides = array<i32>} : memref<64x768xf32, #tpu.memory_space<vmem>>, vector<2x128xf32>,
    %338 = vector.extract_strided_slice %336 {offsets = [0, 0], sizes = [1, 128], strides = [1, 1]} : vector<2x128xf32> to vector<1x128xf32>
    %c3_336 = arith.constant 3 : index
    %c0_337 = arith.constant 0 : index
    %339 = vector.load %arg9[%c3_336, %c0_337] : memref<64x768xf32, #tpu.memory_space<vmem>>, vector<1x128xf32>
    tpu.vector_store %arg9[%c3_336, %c0_337], %338 {strides = array<i32>} : memref<64x768xf32, #tpu.memory_space<vmem>>, vector<1x128xf32>,
    %c2_338 = arith.constant 2 : index
    %c0_339 = arith.constant 0 : index
    %340 = vector.load %arg9[%c2_338, %c0_339] : memref<64x768xf32, #tpu.memory_space<vmem>>, vector<1x128xf32>
    tpu.vector_store %arg9[%c2_338, %c0_339], %327 {strides = array<i32>} : memref<64x768xf32, #tpu.memory_space<vmem>>, vector<1x128xf32>,
    %341 = vector.extract_strided_slice %336 {offsets = [1, 0], sizes = [1, 128], strides = [1, 1]} : vector<2x128xf32> to vector<1x128xf32>
    %c2_340 = arith.constant 2 : index
    %c256_341 = arith.constant 256 : index
    %342 = vector.load %arg9[%c2_340, %c256_341] : memref<64x768xf32, #tpu.memory_space<vmem>>, vector<1x128xf32>
    tpu.vector_store %arg9[%c2_340, %c256_341], %341 {strides = array<i32>} : memref<64x768xf32, #tpu.memory_space<vmem>>, vector<1x128xf32>,
    %c3_342 = arith.constant 3 : index
    %c256_343 = arith.constant 256 : index
    %343 = vector.load %arg9[%c3_342, %c256_343] : memref<64x768xf32, #tpu.memory_space<vmem>>, vector<1x128xf32>
    tpu.vector_store %arg9[%c3_342, %c256_343], %327 {strides = array<i32>} : memref<64x768xf32, #tpu.memory_space<vmem>>, vector<1x128xf32>,
    %c4224 = arith.constant 4224 : index
    %c0_344 = arith.constant 0 : index
    %344 = vector.load %arg7[%c4224, %c0_344] : memref<4608x256xbf16, #tpu.memory_space<vmem>>, vector<384x128xbf16>
    %c0_345 = arith.constant 0 : index
    %c0_346 = arith.constant 0 : index
    %345 = vector.load %arg9[%c0_345, %c0_346] : memref<64x768xf32, #tpu.memory_space<vmem>>, vector<4x384xf32>
    %346 = arith.truncf %345 : vector<4x384xf32> to vector<4x384xbf16>
    %cst_347 = arith.constant dense<0.000000e+00> : vector<4x128xf32>
    %347 = tpu.matmul %346, %344, %cst_347 {dimension_numbers = #tpu.dot_dimension_numbers<[1], [0], [0], [1], [0, 0, 1, 1], [], []>} : vector<4x384xbf16>, vector<384x128xbf16>, vector<4x128xf32> -> vector<4x128xf32>
    %c12 = arith.constant 12 : index
    %c0_348 = arith.constant 0 : index
    %348 = vector.load %arg5[%c12, %c0_348] : memref<16x256xf32, #tpu.memory_space<vmem>>, vector<1x64xf32>
    %349 = vector.extract_strided_slice %347 {offsets = [0, 0], sizes = [4, 64], strides = [1, 1]} : vector<4x128xf32> to vector<4x64xf32>
    %350 = vector.extract_strided_slice %347 {offsets = [0, 64], sizes = [4, 64], strides = [1, 1]} : vector<4x128xf32> to vector<4x64xf32>
    %351 = arith.maximumf %349, %350 : vector<4x64xf32>
    %352 = vector.broadcast %348 : vector<1x64xf32> to vector<4x64xf32>
    %353 = arith.addf %351, %352 : vector<4x64xf32>
    %cst_349 = arith.constant 0.000000e+00 : f32
    %354 = vector.broadcast %cst_349 : f32 to vector<4x64xf32>
    %355 = arith.maximumf %353, %354 : vector<4x64xf32>
    %c0_350 = arith.constant 0 : index
    %c0_351 = arith.constant 0 : index
    %356 = vector.load %arg10[%c0_350, %c0_351] : memref<64x128xf32, #tpu.memory_space<vmem>>, vector<4x64xf32>
    tpu.vector_store %arg10[%c0_350, %c0_351], %355 {strides = array<i32>} : memref<64x128xf32, #tpu.memory_space<vmem>>, vector<4x64xf32>,
    %c0_352 = arith.constant 0 : index
    %c0_353 = arith.constant 0 : index
    %357 = tpu.strided_load %arg10[%c0_352, %c0_353] {strides = array<i32: 2, 1>} : memref<64x128xf32, #tpu.memory_space<vmem>>, vector<2x64xf32>
    %c1_354 = arith.constant 1 : index
    %c0_355 = arith.constant 0 : index
    %358 = tpu.strided_load %arg10[%c1_354, %c0_355] {strides = array<i32: 2, 1>} : memref<64x128xf32, #tpu.memory_space<vmem>>, vector<2x64xf32>
    %359 = arith.maximumf %357, %358 : vector<2x64xf32>
    %360 = arith.truncf %359 : vector<2x64xf32> to vector<2x64xbf16>
    %c0_356 = arith.constant 0 : index
    %c0_357 = arith.constant 0 : index
    %361 = vector.load %arg4[%c0_356, %c0_357] : memref<320x128xbf16, #tpu.memory_space<vmem>>, vector<64x128xbf16>
    %cst_358 = arith.constant dense<0.000000e+00> : vector<2x128xf32>
    %362 = tpu.matmul %360, %361, %cst_358 {dimension_numbers = #tpu.dot_dimension_numbers<[1], [0], [0], [1], [0, 0, 1, 1], [], []>} : vector<2x64xbf16>, vector<64x128xbf16>, vector<2x128xf32> -> vector<2x128xf32>
    %c13 = arith.constant 13 : index
    %c0_359 = arith.constant 0 : index
    %363 = vector.load %arg5[%c13, %c0_359] : memref<16x256xf32, #tpu.memory_space<vmem>>, vector<1x128xf32>
    %364 = vector.broadcast %363 : vector<1x128xf32> to vector<2x128xf32>
    %365 = arith.addf %362, %364 : vector<2x128xf32>
    %cst_360 = arith.constant 0.000000e+00 : f32
    %366 = vector.broadcast %cst_360 : f32 to vector<2x128xf32>
    %367 = arith.maximumf %365, %366 : vector<2x128xf32>
    %368 = arith.truncf %367 : vector<2x128xf32> to vector<2x128xbf16>
    %c64 = arith.constant 64 : index
    %c0_361 = arith.constant 0 : index
    %369 = vector.load %arg4[%c64, %c0_361] : memref<320x128xbf16, #tpu.memory_space<vmem>>, vector<128x128xbf16>
    %cst_362 = arith.constant dense<0.000000e+00> : vector<2x128xf32>
    %370 = tpu.matmul %368, %369, %cst_362 {dimension_numbers = #tpu.dot_dimension_numbers<[1], [0], [0], [1], [0, 0, 1, 1], [], []>} : vector<2x128xbf16>, vector<128x128xbf16>, vector<2x128xf32> -> vector<2x128xf32>
    %c14 = arith.constant 14 : index
    %c0_363 = arith.constant 0 : index
    %371 = vector.load %arg5[%c14, %c0_363] : memref<16x256xf32, #tpu.memory_space<vmem>>, vector<1x128xf32>
    %372 = vector.broadcast %371 : vector<1x128xf32> to vector<2x128xf32>
    %373 = arith.addf %370, %372 : vector<2x128xf32>
    %cst_364 = arith.constant 0.000000e+00 : f32
    %374 = vector.broadcast %cst_364 : f32 to vector<2x128xf32>
    %375 = arith.maximumf %373, %374 : vector<2x128xf32>
    %376 = arith.truncf %375 : vector<2x128xf32> to vector<2x128xbf16>
    %c192 = arith.constant 192 : index
    %c0_365 = arith.constant 0 : index
    %377 = vector.load %arg4[%c192, %c0_365] : memref<320x128xbf16, #tpu.memory_space<vmem>>, vector<128x128xbf16>
    %cst_366 = arith.constant dense<0.000000e+00> : vector<2x128xf32>
    %378 = tpu.matmul %376, %377, %cst_366 {dimension_numbers = #tpu.dot_dimension_numbers<[1], [0], [0], [1], [0, 0, 1, 1], [], []>} : vector<2x128xbf16>, vector<128x128xbf16>, vector<2x128xf32> -> vector<2x128xf32>
    %c15_367 = arith.constant 15 : index
    %c0_368 = arith.constant 0 : index
    %379 = vector.load %arg5[%c15_367, %c0_368] : memref<16x256xf32, #tpu.memory_space<vmem>>, vector<1x128xf32>
    %380 = vector.broadcast %379 : vector<1x128xf32> to vector<2x128xf32>
    %381 = arith.addf %378, %380 : vector<2x128xf32>
    %382 = vector.extract_strided_slice %381 {offsets = [0, 0], sizes = [1, 128], strides = [1, 1]} : vector<2x128xf32> to vector<1x128xf32>
    %c0_369 = arith.constant 0 : index
    %c0_370 = arith.constant 0 : index
    %c0_371 = arith.constant 0 : index
    %383 = vector.load %arg6[%c0_369, %c0_370, %c0_371] : memref<2x1x128xf32, #tpu.memory_space<vmem>>, vector<1x1x128xf32>
    %384 = vector.shape_cast %383 : vector<1x1x128xf32> to vector<1x128xf32>
    %385 = vector.shape_cast %382 : vector<1x128xf32> to vector<1x1x128xf32>
    tpu.vector_store %arg6[%c0_369, %c0_370, %c0_371], %385 {strides = array<i32>} : memref<2x1x128xf32, #tpu.memory_space<vmem>>, vector<1x1x128xf32>,
    %386 = vector.extract_strided_slice %381 {offsets = [1, 0], sizes = [1, 128], strides = [1, 1]} : vector<2x128xf32> to vector<1x128xf32>
    %c1_372 = arith.constant 1 : index
    %c0_373 = arith.constant 0 : index
    %c0_374 = arith.constant 0 : index
    %387 = vector.load %arg6[%c1_372, %c0_373, %c0_374] : memref<2x1x128xf32, #tpu.memory_space<vmem>>, vector<1x1x128xf32>
    %388 = vector.shape_cast %387 : vector<1x1x128xf32> to vector<1x128xf32>
    %389 = vector.shape_cast %386 : vector<1x128xf32> to vector<1x1x128xf32>
    tpu.vector_store %arg6[%c1_372, %c0_373, %c0_374], %389 {strides = array<i32>} : memref<2x1x128xf32, #tpu.memory_space<vmem>>, vector<1x1x128xf32>,
    return
  }
  func.func @transform_0(%arg0: i32) -> (i32, i32, i32) {
    %c0_i32 = arith.constant 0 : i32
    %c0_i32_0 = arith.constant 0 : i32
    %c0_i32_1 = arith.constant 0 : i32
    return %arg0, %c0_i32, %c0_i32_0 : i32, i32, i32
  }
  func.func @transform_1(%arg0: i32) -> (i32, i32) {
    %c0_i32 = arith.constant 0 : i32
    %c0_i32_0 = arith.constant 0 : i32
    %c0_i32_1 = arith.constant 0 : i32
    return %c0_i32, %c0_i32_0 : i32, i32
  }
  func.func @transform_3(%arg0: i32) -> (i32, i32) {
    %c0_i32 = arith.constant 0 : i32
    %c0_i32_0 = arith.constant 0 : i32
    %c0_i32_1 = arith.constant 0 : i32
    return %c0_i32, %c0_i32_0 : i32, i32
  }
  func.func @transform_4(%arg0: i32) -> (i32, i32) {
    %c0_i32 = arith.constant 0 : i32
    %c0_i32_0 = arith.constant 0 : i32
    %c0_i32_1 = arith.constant 0 : i32
    return %c0_i32, %c0_i32_0 : i32, i32
  }
  func.func @transform_5(%arg0: i32) -> (i32, i32, i32) {
    %c0_i32 = arith.constant 0 : i32
    %c0_i32_0 = arith.constant 0 : i32
    %c0_i32_1 = arith.constant 0 : i32
    return %arg0, %c0_i32, %c0_i32_0 : i32, i32, i32
  }
}

</mosaic_0001>

<llo_original>
// kernel: vgg_forward.1
$region0: #{vgg_forward.1}
  #allocation0 [shape = 'u32[]', space=smem, size = 0x4, offset = 0x4, fixed_abs, tag = 'smem constant byte address 0x4 - core index']
  #allocation1 [shape = 'u32[72,128]{1,0:T(1,128)}', space=vmem, size = 0x9000, scoped, tag = 'internal scratch']
  #allocation2 [shape = 'bf16[4608,256]{1,0:T(8,128)(2,1)}', space=vmem, size = 0x240000, scoped, tag = 'scratch operand']
  #allocation3 [shape = 's32[1]{0}', space=sflag, size = 0x4, scoped, tag = 'scratch operand']
  #allocation4 [shape = 'f32[64,768]{1,0:T(8,128)}', space=vmem, size = 0x30000, scoped, tag = 'scratch operand']
  #allocation5 [shape = 'f32[64,128]{1,0:T(8,128)}', space=vmem, size = 0x8000, scoped, tag = 'scratch operand']
  #allocation13 [shape = 's32[]', space=sflag, size = 0x4, offset = 0, fixed_abs, tag = 'sflag constant byte address 0x0 - dummy sync flag']
  #allocation14 [shape = 's32[]', space=sflag, size = 0x4, offset = 0, fixed_abs, tag = 'sflag constant byte address 0x0 - dummy sync flag']
  #allocation15 [shape = 'u32[]', space=smem, size = 0x4, offset = 0x44, fixed_abs, tag = 'smem constant byte address 0x44 - assertion arg 0']
  #allocation16 [shape = 'u32[]', space=smem, size = 0x4, offset = 0x48, fixed_abs, tag = 'smem constant byte address 0x48 - assertion arg 1']
  %s0 = inlined_call_operand.vmem [shape: f32[2,32,384], index: 0, kind: input, shape index: {}]
  %s1 = inlined_call_operand.hbm [shape: bf16[2688,256], index: 1, kind: input, shape index: {}]
  %s2 = inlined_call_operand.hbm [shape: bf16[4608,256], index: 2, kind: input, shape index: {}]
  %s3 = inlined_call_operand.hbm [shape: bf16[320,128], index: 3, kind: input, shape index: {}]
  %s4 = inlined_call_operand.hbm [shape: f32[16,256], index: 4, kind: input, shape index: {}]
  %s5 = inlined_call_operand.hbm [shape: f32[2,1,128], index: 5, kind: output, shape index: {}]
  %s6 = sld [smem:[#allocation0]]
  $region42: #{vgg_forward.1} parent=0
    _
  %s8 = ssub.s32 1, %s6
  %s9 = scalar_select 0, %s8, %s6
  $region1: #{vgg_forward.1} parent=0
    #allocation6 [shape = 'u8[1376256]{0}', space=vmem, size = 0x150000, scoped, tag = 'input window, operand 1, single buffered']
    #allocation7 [shape = 's32[1]{0}', space=sflag, size = 0x4, scoped, tag = 'scoped memory for vgg_forward.1']
    #allocation8 [shape = 's32[1]{0}', space=sflag, size = 0x4, scoped, tag = 'scoped memory for vgg_forward.1']
    #allocation9 [shape = 'u8[81920]{0}', space=vmem, size = 0x14000, scoped, tag = 'input window, operand 3, single buffered']
    #allocation10 [shape = 's32[1]{0}', space=sflag, size = 0x4, scoped, tag = 'scoped memory for vgg_forward.1']
    #allocation11 [shape = 'u8[16384]{0}', space=vmem, size = 0x4000, scoped, tag = 'input window, operand 4, single buffered']
    #allocation12 [shape = 'u8[1024]{0}', space=vmem, size = 0x400, scoped, tag = 'output window, operand 0, single buffered']
    %10 = vsyncpa [#allocation7], 0
    %11 = vsyncpa [#allocation10], 0
    %12 = vsyncpa [#allocation8], 0
    // Predicated region
    $region2: #{vgg_forward.1} parent=1 // pred_check
      _
    $region3: #{vgg_forward.1} parent=1 // pred_check_branch
      %14 = sbr.rel (0) target = $region5
    $region4: #{vgg_forward.1} parent=1 // pred_region
      _
    $region5: #{vgg_forward.1} parent=1 // pred_fallthru
      _
    // Predicated region
    $region6: #{vgg_forward.1} parent=1 // pred_check
      _
    $region7: #{vgg_forward.1} parent=1 // pred_check_branch
      %16 = sbr.rel (0) target = $region9
    $region8: #{vgg_forward.1} parent=1 // pred_region
      %18 = vsyncadd [#allocation7], 0
      %s19 = sshll.u32 %s1, 4
      %s20 = int_to_ptr.hbm [resolvable:$true] %s19
      %s21 = sshll.u32 [#allocation6], 4
      %s22 = int_to_ptr.vmem [resolvable:$true] %s21
      %27 = dma.hbm_to_vmem [thread:$0]  %s20, 43008, %s22, [#allocation7], 128, 128, 8
    $region9: #{vgg_forward.1} parent=1 // pred_fallthru
      _
    // Predicated region
    $region10: #{vgg_forward.1} parent=1 // pred_check
      _
    $region11: #{vgg_forward.1} parent=1 // pred_check_branch
      %29 = sbr.rel (0) target = $region13
    $region12: #{vgg_forward.1} parent=1 // pred_region
      %31 = vsyncadd [#allocation10], 0
      %s32 = sshll.u32 %s3, 4
      %s33 = int_to_ptr.hbm [resolvable:$true] %s32
      %s34 = sshll.u32 [#allocation9], 4
      %s35 = int_to_ptr.vmem [resolvable:$true] %s34
      %40 = dma.hbm_to_vmem [thread:$0]  %s33, 2560, %s35, [#allocation10], 64, 64, 4
    $region13: #{vgg_forward.1} parent=1 // pred_fallthru
      _
    // Predicated region
    $region14: #{vgg_forward.1} parent=1 // pred_check
      _
    $region15: #{vgg_forward.1} parent=1 // pred_check_branch
      %42 = sbr.rel (0) target = $region17
    $region16: #{vgg_forward.1} parent=1 // pred_region
      %44 = vsyncadd [#allocation10], 0
      %s45 = sshll.u32 %s4, 4
      %s46 = int_to_ptr.hbm [resolvable:$true] %s45
      %s47 = sshll.u32 [#allocation11], 4
      %s48 = int_to_ptr.vmem [resolvable:$true] %s47
      %53 = dma.hbm_to_vmem [thread:$0]  %s46, 512, %s48, [#allocation10], 256, 256, 16
    $region17: #{vgg_forward.1} parent=1 // pred_fallthru
      _
    // Predicated region
    $region18: #{vgg_forward.1} parent=1 // pred_check
      _
    $region19: #{vgg_forward.1} parent=1 // pred_check_branch
      %55 = sbr.rel (0) target = $region21
    $region20: #{vgg_forward.1} parent=1 // pred_region
      %57 = dma.done [#allocation7], 43008
    $region21: #{vgg_forward.1} parent=1 // pred_fallthru
      _
    // Predicated region
    $region22: #{vgg_forward.1} parent=1 // pred_check
      _
    $region23: #{vgg_forward.1} parent=1 // pred_check_branch
      %59 = sbr.rel (0) target = $region25
    $region24: #{vgg_forward.1} parent=1 // pred_region
      %61 = dma.done [#allocation10], 2560
    $region25: #{vgg_forward.1} parent=1 // pred_fallthru
      _
    // Predicated region
    $region26: #{vgg_forward.1} parent=1 // pred_check
      _
    $region27: #{vgg_forward.1} parent=1 // pred_check_branch
      %63 = sbr.rel (0) target = $region29
    $region28: #{vgg_forward.1} parent=1 // pred_region
      %65 = dma.done [#allocation10], 512
    $region29: #{vgg_forward.1} parent=1 // pred_fallthru
      _
    // Predicated region
    $region30: #{vgg_forward.1} parent=1 // pred_check
      _
    $region31: #{vgg_forward.1} parent=1 // pred_check_branch
      %68 = sbr.rel target = $region33
    $region32: #{vgg_forward.1} parent=1 // pred_region
      %69 = sst [smem:[#allocation15]] [#allocation14]
      %70 = sst [smem:[#allocation16]] [#allocation13]
    $region33: #{vgg_forward.1} parent=1 // pred_fallthru
      _
    %72 = shalt.err (0)
    %s74 = sshll.u32 %s2, 4
    %s75 = int_to_ptr.hbm [resolvable:$true] %s74
    %s76 = sshll.u32 [#allocation2], 4
    %s77 = int_to_ptr.vmem [resolvable:$true] %s76
    %79 = dma.hbm_to_vmem [thread:$0]  %s75, 73728, %s77, [#allocation3]
    %v80 = vld [vmem:[#allocation6] sm:$0xff]
    %v81 = vld [vmem:[#allocation6 + $0x8] sm:$0xff]
    %v82 = vld [vmem:[#allocation6 + $0x10] sm:$0xff]
    %v83 = vld [vmem:[#allocation6 + $0x18] sm:$0xff]
    %v84 = vld [vmem:[#allocation6 + $0x20] sm:$0xff]
    %v85 = vld [vmem:[#allocation6 + $0x28] sm:$0xff]
    %v86 = vld [vmem:[#allocation6 + $0x30] sm:$0xff]
    %v87 = vld [vmem:[#allocation6 + $0x38] sm:$0xff]
    %v88 = vld [vmem:[#allocation6 + $0x40] sm:$0xff]
    %v89 = vld [vmem:[#allocation6 + $0x48] sm:$0xff]
    %v90 = vld [vmem:[#allocation6 + $0x50] sm:$0xff]
    %v91 = vld [vmem:[#allocation6 + $0x58] sm:$0xff]
    %v92 = vld [vmem:[#allocation6 + $0x60] sm:$0xff]
    %v93 = vld [vmem:[#allocation6 + $0x68] sm:$0xff]
    %v94 = vld [vmem:[#allocation6 + $0x70] sm:$0xff]
    %v95 = vld [vmem:[#allocation6 + $0x78] sm:$0xff]
    %v96 = vld [vmem:[#allocation6 + $0x80] sm:$0xff]
    %v97 = vld [vmem:[#allocation6 + $0x88] sm:$0xff]
    %v98 = vld [vmem:[#allocation6 + $0x90] sm:$0xff]
    %v99 = vld [vmem:[#allocation6 + $0x98] sm:$0xff]
    %v100 = vld [vmem:[#allocation6 + $0xa0] sm:$0xff]
    %v101 = vld [vmem:[#allocation6 + $0xa8] sm:$0xff]
    %v102 = vld [vmem:[#allocation6 + $0xb0] sm:$0xff]
    %v103 = vld [vmem:[#allocation6 + $0xb8] sm:$0xff]
    %v104 = vld [vmem:[#allocation6 + $0xc0] sm:$0xff]
    %v105 = vld [vmem:[#allocation6 + $0xc8] sm:$0xff]
    %v106 = vld [vmem:[#allocation6 + $0xd0] sm:$0xff]
    %v107 = vld [vmem:[#allocation6 + $0xd8] sm:$0xff]
    %v108 = vld [vmem:[#allocation6 + $0xe0] sm:$0xff]
    %v109 = vld [vmem:[#allocation6 + $0xe8] sm:$0xff]
    %v110 = vld [vmem:[#allocation6 + $0xf0] sm:$0xff]
    %v111 = vld [vmem:[#allocation6 + $0xf8] sm:$0xff]
    %v112 = vld [vmem:[#allocation6 + $0x100] sm:$0xff]
    %v113 = vld [vmem:[#allocation6 + $0x108] sm:$0xff]
    %v114 = vld [vmem:[#allocation6 + $0x110] sm:$0xff]
    %v115 = vld [vmem:[#allocation6 + $0x118] sm:$0xff]
    %v116 = vld [vmem:[#allocation6 + $0x120] sm:$0xff]
    %v117 = vld [vmem:[#allocation6 + $0x128] sm:$0xff]
    %v118 = vld [vmem:[#allocation6 + $0x130] sm:$0xff]
    %v119 = vld [vmem:[#allocation6 + $0x138] sm:$0xff]
    %v120 = vld [vmem:[#allocation6 + $0x140] sm:$0xff]
    %v121 = vld [vmem:[#allocation6 + $0x148] sm:$0xff]
    %v122 = vld [vmem:[#allocation6 + $0x150] sm:$0xff]
    %v123 = vld [vmem:[#allocation6 + $0x158] sm:$0xff]
    %v124 = vld [vmem:[#allocation6 + $0x160] sm:$0xff]
    %v125 = vld [vmem:[#allocation6 + $0x168] sm:$0xff]
    %v126 = vld [vmem:[#allocation6 + $0x170] sm:$0xff]
    %v127 = vld [vmem:[#allocation6 + $0x178] sm:$0xff]
    %v128 = vld [vmem:[%s0] sm:$0xff]
    %v129 = vld [vmem:[%s0 + $0x8] sm:$0xff]
    %v130 = vld [vmem:[%s0 + $0x10] sm:$0xff]
    %v131 = vld [vmem:[%s0 + $0x18] sm:$0xff]
    %v132 = vld [vmem:[%s0 + $0x20] sm:$0xff]
    %v133 = vld [vmem:[%s0 + $0x28] sm:$0xff]
    %v134 = vld [vmem:[%s0 + $0x30] sm:$0xff]
    %v135 = vld [vmem:[%s0 + $0x38] sm:$0xff]
    %v136 = vld [vmem:[%s0 + $0x40] sm:$0xff]
    %v137 = vld [vmem:[%s0 + $0x48] sm:$0xff]
    %v138 = vld [vmem:[%s0 + $0x50] sm:$0xff]
    %v139 = vld [vmem:[%s0 + $0x58] sm:$0xff]
    %s140 = scalar_lea.vmem %s0, 96
    %v141 = vld [vmem:[%s140] sm:$0xff]
    %v142 = vld [vmem:[%s140 + $0x8] sm:$0xff]
    %v143 = vld [vmem:[%s140 + $0x10] sm:$0xff]
    %v144 = vld [vmem:[%s140 + $0x18] sm:$0xff]
    %v145 = vld [vmem:[%s140 + $0x20] sm:$0xff]
    %v146 = vld [vmem:[%s140 + $0x28] sm:$0xff]
    %v147 = vld [vmem:[%s140 + $0x30] sm:$0xff]
    %v148 = vld [vmem:[%s140 + $0x38] sm:$0xff]
    %v149 = vld [vmem:[%s140 + $0x40] sm:$0xff]
    %v150 = vld [vmem:[%s140 + $0x48] sm:$0xff]
    %v151 = vld [vmem:[%s140 + $0x50] sm:$0xff]
    %v152 = vld [vmem:[%s140 + $0x58] sm:$0xff]
    %v153 = vpack.c.bf16 %v131, %v128
    %v154 = vpack.c.bf16 %v132, %v129
    %v155 = vpack.c.bf16 %v133, %v130
    %v156 = vpack.c.bf16 %v137, %v134
    %v157 = vpack.c.bf16 %v138, %v135
    %v158 = vpack.c.bf16 %v139, %v136
    %v159 = vpack.c.bf16 %v144, %v141
    %v160 = vpack.c.bf16 %v145, %v142
    %v161 = vpack.c.bf16 %v146, %v143
    %v162 = vpack.c.bf16 %v150, %v147
    %v163 = vpack.c.bf16 %v151, %v148
    %v164 = vpack.c.bf16 %v152, %v149
    %v165 = vld [vmem:[#allocation11] ss:$8 sm:$0x3]
    %v167 = vperm.slane %v165, 0
    %v168 = vperm.slane %v165, 1
    %v219 = vunpack.c.l.b16 %v80
    %v220 = vunpack.c.h.b16 %v80
    %v221 = vunpack.c.l.b16 %v81
    %v222 = vunpack.c.h.b16 %v81
    %v223 = vunpack.c.l.b16 %v82
    %v224 = vunpack.c.h.b16 %v82
    %v225 = vunpack.c.l.b16 %v83
    %v226 = vunpack.c.h.b16 %v83
    %v227 = vunpack.c.l.b16 %v84
    %v228 = vunpack.c.h.b16 %v84
    %v229 = vunpack.c.l.b16 %v85
    %v230 = vunpack.c.h.b16 %v85
    %v231 = vunpack.c.l.b16 %v86
    %v232 = vunpack.c.h.b16 %v86
    %v233 = vunpack.c.l.b16 %v87
    %v234 = vunpack.c.h.b16 %v87
    %v235 = vunpack.c.l.b16 %v88
    %v236 = vunpack.c.h.b16 %v88
    %v237 = vunpack.c.l.b16 %v89
    %v238 = vunpack.c.h.b16 %v89
    %v239 = vunpack.c.l.b16 %v90
    %v240 = vunpack.c.h.b16 %v90
    %v241 = vunpack.c.l.b16 %v91
    %v242 = vunpack.c.h.b16 %v91
    %v243 = vunpack.c.l.b16 %v92
    %v244 = vunpack.c.h.b16 %v92
    %v245 = vunpack.c.l.b16 %v93
    %v246 = vunpack.c.h.b16 %v93
    %v247 = vunpack.c.l.b16 %v94
    %v248 = vunpack.c.h.b16 %v94
    %v249 = vunpack.c.l.b16 %v95
    %v250 = vunpack.c.h.b16 %v95
    %v251 = vunpack.c.l.b16 %v96
    %v252 = vunpack.c.h.b16 %v96
    %v253 = vunpack.c.l.b16 %v97
    %v254 = vunpack.c.h.b16 %v97
    %v255 = vunpack.c.l.b16 %v98
    %v256 = vunpack.c.h.b16 %v98
    %v257 = vunpack.c.l.b16 %v99
    %v258 = vunpack.c.h.b16 %v99
    %v259 = vunpack.c.l.b16 %v100
    %v260 = vunpack.c.h.b16 %v100
    %v261 = vunpack.c.l.b16 %v101
    %v262 = vunpack.c.h.b16 %v101
    %v263 = vunpack.c.l.b16 %v102
    %v264 = vunpack.c.h.b16 %v102
    %v265 = vunpack.c.l.b16 %v103
    %v266 = vunpack.c.h.b16 %v103
    %v267 = vunpack.c.l.b16 %v104
    %v268 = vunpack.c.h.b16 %v104
    %v269 = vunpack.c.l.b16 %v105
    %v270 = vunpack.c.h.b16 %v105
    %v271 = vunpack.c.l.b16 %v106
    %v272 = vunpack.c.h.b16 %v106
    %v273 = vunpack.c.l.b16 %v107
    %v274 = vunpack.c.h.b16 %v107
    %v275 = vunpack.c.l.b16 %v108
    %v276 = vunpack.c.h.b16 %v108
    %v277 = vunpack.c.l.b16 %v109
    %v278 = vunpack.c.h.b16 %v109
    %v279 = vunpack.c.l.b16 %v110
    %v280 = vunpack.c.h.b16 %v110
    %v281 = vunpack.c.l.b16 %v111
    %v282 = vunpack.c.h.b16 %v111
    %v283 = vunpack.c.l.b16 %v112
    %v284 = vunpack.c.h.b16 %v112
    %v285 = vunpack.c.l.b16 %v113
    %v286 = vunpack.c.h.b16 %v113
    %v287 = vunpack.c.l.b16 %v114
    %v288 = vunpack.c.h.b16 %v114
    %v289 = vunpack.c.l.b16 %v115
    %v290 = vunpack.c.h.b16 %v115
    %v291 = vunpack.c.l.b16 %v116
    %v292 = vunpack.c.h.b16 %v116
    %v293 = vunpack.c.l.b16 %v117
    %v294 = vunpack.c.h.b16 %v117
    %v295 = vunpack.c.l.b16 %v118
    %v296 = vunpack.c.h.b16 %v118
    %v297 = vunpack.c.l.b16 %v119
    %v298 = vunpack.c.h.b16 %v119
    %v299 = vunpack.c.l.b16 %v120
    %v300 = vunpack.c.h.b16 %v120
    %v301 = vunpack.c.l.b16 %v121
    %v302 = vunpack.c.h.b16 %v121
    %v303 = vunpack.c.l.b16 %v122
    %v304 = vunpack.c.h.b16 %v122
    %v305 = vunpack.c.l.b16 %v123
    %v306 = vunpack.c.h.b16 %v123
    %v307 = vunpack.c.l.b16 %v124
    %v308 = vunpack.c.h.b16 %v124
    %v309 = vunpack.c.l.b16 %v125
    %v310 = vunpack.c.h.b16 %v125
    %v311 = vunpack.c.l.b16 %v126
    %v312 = vunpack.c.h.b16 %v126
    %v313 = vunpack.c.l.b16 %v127
    %v314 = vunpack.c.h.b16 %v127
    %v315 = vpack.c.b16 %v221, %v219
    %v316 = vpack.c.b16 %v222, %v220
    %v317 = vpack.c.b16 %v225, %v223
    %v318 = vpack.c.b16 %v226, %v224
    %v319 = vpack.c.b16 %v229, %v227
    %v320 = vpack.c.b16 %v230, %v228
    %v321 = vpack.c.b16 %v233, %v231
    %v322 = vpack.c.b16 %v234, %v232
    %v323 = vpack.c.b16 %v237, %v235
    %v324 = vpack.c.b16 %v238, %v236
    %v325 = vpack.c.b16 %v241, %v239
    %v326 = vpack.c.b16 %v242, %v240
    %v327 = vpack.c.b16 %v245, %v243
    %v328 = vpack.c.b16 %v246, %v244
    %v329 = vpack.c.b16 %v249, %v247
    %v330 = vpack.c.b16 %v250, %v248
    %v331 = vpack.c.b16 %v253, %v251
    %v332 = vpack.c.b16 %v254, %v252
    %v333 = vpack.c.b16 %v257, %v255
    %v334 = vpack.c.b16 %v258, %v256
    %v335 = vpack.c.b16 %v261, %v259
    %v336 = vpack.c.b16 %v262, %v260
    %v337 = vpack.c.b16 %v265, %v263
    %v338 = vpack.c.b16 %v266, %v264
    %v339 = vpack.c.b16 %v269, %v267
    %v340 = vpack.c.b16 %v270, %v268
    %v341 = vpack.c.b16 %v273, %v271
    %v342 = vpack.c.b16 %v274, %v272
    %v343 = vpack.c.b16 %v277, %v275
    %v344 = vpack.c.b16 %v278, %v276
    %v345 = vpack.c.b16 %v281, %v279
    %v346 = vpack.c.b16 %v282, %v280
    %v347 = vpack.c.b16 %v285, %v283
    %v348 = vpack.c.b16 %v286, %v284
    %v349 = vpack.c.b16 %v289, %v287
    %v350 = vpack.c.b16 %v290, %v288
    %v351 = vpack.c.b16 %v293, %v291
    %v352 = vpack.c.b16 %v294, %v292
    %v353 = vpack.c.b16 %v297, %v295
    %v354 = vpack.c.b16 %v298, %v296
    %v355 = vpack.c.b16 %v301, %v299
    %v356 = vpack.c.b16 %v302, %v300
    %v357 = vpack.c.b16 %v305, %v303
    %v358 = vpack.c.b16 %v306, %v304
    %v359 = vpack.c.b16 %v309, %v307
    %v360 = vpack.c.b16 %v310, %v308
    %v361 = vpack.c.b16 %v313, %v311
    %v362 = vpack.c.b16 %v314, %v312
    %411 = vmatpush.bf16.msra.mxu0 %v329
    %412 = vmatpush.bf16.msra.mxu0 %v327
    %413 = vmatpush.bf16.msra.mxu0 %v325
    %414 = vmatpush.bf16.msra.mxu0 %v323
    %415 = vmatpush.bf16.msra.mxu0 %v321
    %416 = vmatpush.bf16.msra.mxu0 %v319
    %417 = vmatpush.bf16.msra.mxu0 %v317
    %418 = vmatpush.bf16.msra.mxu0 %v315
    %419 = vmatmul.bf16.gmra.mxu0 %v153
    %v420 = vpop.f32.mrf.mxu0
    %v421 = vadd.f32 %v167, %v420
    %v422 = vpop.f32.mrf.mxu0
    %v423 = vadd.f32 %v167, %v422
    %424 = vmatmul.bf16.gmra.mxu0 %v156
    %v425 = vpop.f32.mrf.mxu0
    %v426 = vadd.f32 %v167, %v425
    %v427 = vpop.f32.mrf.mxu0
    %v428 = vadd.f32 %v167, %v427
    %429 = vmatmul.bf16.gmra.mxu0 %v159
    %v430 = vpop.f32.mrf.mxu0
    %v431 = vadd.f32 %v167, %v430
    %v432 = vpop.f32.mrf.mxu0
    %v433 = vadd.f32 %v167, %v432
    %434 = vmatmul.bf16.gmra.mxu0 %v162
    %v435 = vpop.f32.mrf.mxu0
    %v436 = vadd.f32 %v167, %v435
    %v437 = vpop.f32.mrf.mxu0
    %v438 = vadd.f32 %v167, %v437
    %439 = vdwg.mxu0
    %440 = vmatpush.bf16.msra.mxu0 %v345
    %441 = vmatpush.bf16.msra.mxu0 %v343
    %442 = vmatpush.bf16.msra.mxu0 %v341
    %443 = vmatpush.bf16.msra.mxu0 %v339
    %444 = vmatpush.bf16.msra.mxu0 %v337
    %445 = vmatpush.bf16.msra.mxu0 %v335
    %446 = vmatpush.bf16.msra.mxu0 %v333
    %447 = vmatpush.bf16.msra.mxu0 %v331
    %448 = vmatmul.bf16.gmra.mxu0 %v154
    %v449 = vpop.f32.mrf.mxu0
    %v450 = vadd.f32 %v421, %v449
    %v451 = vpop.f32.mrf.mxu0
    %v452 = vadd.f32 %v423, %v451
    %453 = vmatmul.bf16.gmra.mxu0 %v157
    %v454 = vpop.f32.mrf.mxu0
    %v455 = vadd.f32 %v426, %v454
    %v456 = vpop.f32.mrf.mxu0
    %v457 = vadd.f32 %v428, %v456
    %458 = vmatmul.bf16.gmra.mxu0 %v160
    %v459 = vpop.f32.mrf.mxu0
    %v460 = vadd.f32 %v431, %v459
    %v461 = vpop.f32.mrf.mxu0
    %v462 = vadd.f32 %v433, %v461
    %463 = vmatmul.bf16.gmra.mxu0 %v163
    %v464 = vpop.f32.mrf.mxu0
    %v465 = vadd.f32 %v436, %v464
    %v466 = vpop.f32.mrf.mxu0
    %v467 = vadd.f32 %v438, %v466
    %468 = vdwg.mxu0
    %469 = vmatpush.bf16.msra.mxu0 %v361
    %470 = vmatpush.bf16.msra.mxu0 %v359
    %471 = vmatpush.bf16.msra.mxu0 %v357
    %472 = vmatpush.bf16.msra.mxu0 %v355
    %473 = vmatpush.bf16.msra.mxu0 %v353
    %474 = vmatpush.bf16.msra.mxu0 %v351
    %475 = vmatpush.bf16.msra.mxu0 %v349
    %476 = vmatpush.bf16.msra.mxu0 %v347
    %477 = vmatmul.bf16.gmra.mxu0 %v155
    %v478 = vpop.f32.mrf.mxu0
    %v479 = vadd.f32 %v450, %v478
    %v480 = vpop.f32.mrf.mxu0
    %v481 = vadd.f32 %v452, %v480
    %482 = vmatmul.bf16.gmra.mxu0 %v158
    %v483 = vpop.f32.mrf.mxu0
    %v484 = vadd.f32 %v455, %v483
    %v485 = vpop.f32.mrf.mxu0
    %v486 = vadd.f32 %v457, %v485
    %487 = vmatmul.bf16.gmra.mxu0 %v161
    %v488 = vpop.f32.mrf.mxu0
    %v489 = vadd.f32 %v460, %v488
    %v490 = vpop.f32.mrf.mxu0
    %v491 = vadd.f32 %v462, %v490
    %492 = vmatmul.bf16.gmra.mxu0 %v164
    %v493 = vpop.f32.mrf.mxu0
    %v494 = vadd.f32 %v465, %v493
    %v495 = vpop.f32.mrf.mxu0
    %v496 = vadd.f32 %v467, %v495
    %497 = vdwg.mxu0
    %498 = vmatpush.bf16.msra.mxu0 %v330
    %499 = vmatpush.bf16.msra.mxu0 %v328
    %500 = vmatpush.bf16.msra.mxu0 %v326
    %501 = vmatpush.bf16.msra.mxu0 %v324
    %502 = vmatpush.bf16.msra.mxu0 %v322
    %503 = vmatpush.bf16.msra.mxu0 %v320
    %504 = vmatpush.bf16.msra.mxu0 %v318
    %505 = vmatpush.bf16.msra.mxu0 %v316
    %506 = vmatmul.bf16.gmra.mxu0 %v153
    %v507 = vpop.f32.mrf.mxu0
    %v508 = vadd.f32 %v168, %v507
    %v509 = vpop.f32.mrf.mxu0
    %v510 = vadd.f32 %v168, %v509
    %511 = vmatmul.bf16.gmra.mxu0 %v156
    %v512 = vpop.f32.mrf.mxu0
    %v513 = vadd.f32 %v168, %v512
    %v514 = vpop.f32.mrf.mxu0
    %v515 = vadd.f32 %v168, %v514
    %516 = vmatmul.bf16.gmra.mxu0 %v159
    %v517 = vpop.f32.mrf.mxu0
    %v518 = vadd.f32 %v168, %v517
    %v519 = vpop.f32.mrf.mxu0
    %v520 = vadd.f32 %v168, %v519
    %521 = vmatmul.bf16.gmra.mxu0 %v162
    %v522 = vpop.f32.mrf.mxu0
    %v523 = vadd.f32 %v168, %v522
    %v524 = vpop.f32.mrf.mxu0
    %v525 = vadd.f32 %v168, %v524
    %526 = vdwg.mxu0
    %527 = vmatpush.bf16.msra.mxu0 %v346
    %528 = vmatpush.bf16.msra.mxu0 %v344
    %529 = vmatpush.bf16.msra.mxu0 %v342
    %530 = vmatpush.bf16.msra.mxu0 %v340
    %531 = vmatpush.bf16.msra.mxu0 %v338
    %532 = vmatpush.bf16.msra.mxu0 %v336
    %533 = vmatpush.bf16.msra.mxu0 %v334
    %534 = vmatpush.bf16.msra.mxu0 %v332
    %535 = vmatmul.bf16.gmra.mxu0 %v154
    %v536 = vpop.f32.mrf.mxu0
    %v537 = vadd.f32 %v508, %v536
    %v538 = vpop.f32.mrf.mxu0
    %v539 = vadd.f32 %v510, %v538
    %540 = vmatmul.bf16.gmra.mxu0 %v157
    %v541 = vpop.f32.mrf.mxu0
    %v542 = vadd.f32 %v513, %v541
    %v543 = vpop.f32.mrf.mxu0
    %v544 = vadd.f32 %v515, %v543
    %545 = vmatmul.bf16.gmra.mxu0 %v160
    %v546 = vpop.f32.mrf.mxu0
    %v547 = vadd.f32 %v518, %v546
    %v548 = vpop.f32.mrf.mxu0
    %v549 = vadd.f32 %v520, %v548
    %550 = vmatmul.bf16.gmra.mxu0 %v163
    %v551 = vpop.f32.mrf.mxu0
    %v552 = vadd.f32 %v523, %v551
    %v553 = vpop.f32.mrf.mxu0
    %v554 = vadd.f32 %v525, %v553
    %555 = vdwg.mxu0
    %556 = vmatpush.bf16.msra.mxu0 %v362
    %557 = vmatpush.bf16.msra.mxu0 %v360
    %558 = vmatpush.bf16.msra.mxu0 %v358
    %559 = vmatpush.bf16.msra.mxu0 %v356
    %560 = vmatpush.bf16.msra.mxu0 %v354
    %561 = vmatpush.bf16.msra.mxu0 %v352
    %562 = vmatpush.bf16.msra.mxu0 %v350
    %563 = vmatpush.bf16.msra.mxu0 %v348
    %564 = vmatmul.bf16.gmra.mxu0 %v155
    %v565 = vpop.f32.mrf.mxu0
    %v566 = vadd.f32 %v537, %v565
    %v567 = vpop.f32.mrf.mxu0
    %v568 = vadd.f32 %v539, %v567
    %569 = vmatmul.bf16.gmra.mxu0 %v158
    %v570 = vpop.f32.mrf.mxu0
    %v571 = vadd.f32 %v542, %v570
    %v572 = vpop.f32.mrf.mxu0
    %v573 = vadd.f32 %v544, %v572
    %574 = vmatmul.bf16.gmra.mxu0 %v161
    %v575 = vpop.f32.mrf.mxu0
    %v576 = vadd.f32 %v547, %v575
    %v577 = vpop.f32.mrf.mxu0
    %v578 = vadd.f32 %v549, %v577
    %579 = vmatmul.bf16.gmra.mxu0 %v164
    %v580 = vpop.f32.mrf.mxu0
    %v581 = vadd.f32 %v552, %v580
    %v582 = vpop.f32.mrf.mxu0
    %v583 = vadd.f32 %v554, %v582
    %584 = vdwg.mxu0
    %v585 = vmax.f32 %v479, 0.0
    %v586 = vmax.f32 %v566, 0.0
    %v587 = vmax.f32 %v481, 0.0
    %v588 = vmax.f32 %v568, 0.0
    %v589 = vmax.f32 %v484, 0.0
    %v590 = vmax.f32 %v571, 0.0
    %v591 = vmax.f32 %v486, 0.0
    %v592 = vmax.f32 %v573, 0.0
    %v593 = vmax.f32 %v489, 0.0
    %v594 = vmax.f32 %v576, 0.0
    %v595 = vmax.f32 %v491, 0.0
    %v596 = vmax.f32 %v578, 0.0
    %v597 = vmax.f32 %v494, 0.0
    %v598 = vmax.f32 %v581, 0.0
    %v599 = vmax.f32 %v496, 0.0
    %v600 = vmax.f32 %v583, 0.0
    %601 = vst [vmem:[#allocation4 + $0x10] sm:$0xff] %v585
    %602 = vst [vmem:[#allocation4 + $0x18] sm:$0xff] %v586
    %603 = vst [vmem:[#allocation4 + $0x40] sm:$0xff] %v587
    %604 = vst [vmem:[#allocation4 + $0x48] sm:$0xff] %v588
    %605 = vst [vmem:[#allocation4 + $0x70] sm:$0xff] %v589
    %606 = vst [vmem:[#allocation4 + $0x78] sm:$0xff] %v590
    %607 = vst [vmem:[#allocation4 + $0xa0] sm:$0xff] %v591
    %608 = vst [vmem:[#allocation4 + $0xa8] sm:$0xff] %v592
    %vm617 = vcmask 1040384
    %v618 = vrot.slane %v585, 7
    %v619 = vrot.slane %v586, 7
    %v620 = vrot.slane %v587, 7
    %v621 = vsel %vm617, %v618, %v620
    %v622 = vrot.slane %v588, 7
    %v623 = vsel %vm617, %v619, %v622
    %v624 = vrot.slane %v589, 7
    %v625 = vsel %vm617, %v620, %v624
    %v626 = vrot.slane %v590, 7
    %v627 = vsel %vm617, %v622, %v626
    %v628 = vrot.slane %v591, 7
    %v629 = vsel %vm617, %v624, %v628
    %v630 = vrot.slane %v592, 7
    %v631 = vsel %vm617, %v626, %v630
    %640 = vst [vmem:[#allocation4] sm:$0xfe] %v618
    %641 = vst [vmem:[#allocation4 + $0x8] sm:$0xfe] %v619
    %642 = vst [vmem:[#allocation4 + $0x30] sm:$0xff] %v621
    %643 = vst [vmem:[#allocation4 + $0x38] sm:$0xff] %v623
    %644 = vst [vmem:[#allocation4 + $0x60] sm:$0xff] %v625
    %645 = vst [vmem:[#allocation4 + $0x68] sm:$0xff] %v627
    %646 = vst [vmem:[#allocation4 + $0x90] sm:$0xff] %v629
    %647 = vst [vmem:[#allocation4 + $0x98] sm:$0xff] %v631
    %v648 = vlaneseq
    %vm649 = vcmp.ge.s32.totalorder %v648, 0
    %vm650 = vcmp.lt.s32.totalorder %v648, 256
    %vm651 = vmand %vm649, %vm650
    %652 = vst.msk [vmem:[#allocation4] ss:$8 sm:$0x3] %vm651, 0.0
    %653 = vst.msk [vmem:[#allocation4] ss:$8 sm:$0x0] %vm651, 0.0
    %vm654 = vcmask 1046528
    %v655 = vrot.slane %v585, 1
    %v656 = vrot.slane %v587, 1
    %v657 = vsel %vm654, %v655, %v656
    %v658 = vrot.slane %v586, 1
    %v659 = vrot.slane %v588, 1
    %v660 = vsel %vm654, %v658, %v659
    %v661 = vrot.slane %v589, 1
    %v662 = vsel %vm654, %v656, %v661
    %v663 = vrot.slane %v590, 1
    %v664 = vsel %vm654, %v659, %v663
    %v665 = vrot.slane %v591, 1
    %v666 = vsel %vm654, %v661, %v665
    %v667 = vrot.slane %v592, 1
    %v668 = vsel %vm654, %v663, %v667
    %677 = vst [vmem:[#allocation4 + $0x20] sm:$0xff] %v657
    %678 = vst [vmem:[#allocation4 + $0x28] sm:$0xff] %v660
    %679 = vst [vmem:[#allocation4 + $0x50] sm:$0xff] %v662
    %680 = vst [vmem:[#allocation4 + $0x58] sm:$0xff] %v664
    %681 = vst [vmem:[#allocation4 + $0x80] sm:$0xff] %v666
    %682 = vst [vmem:[#allocation4 + $0x88] sm:$0xff] %v668
    %683 = vst [vmem:[#allocation4 + $0xb0] sm:$0x7f] %v665
    %684 = vst [vmem:[#allocation4 + $0xb8] sm:$0x7f] %v667
    %s685 = scalar_lea.vmem [#allocation4], 183
    %686 = vst.msk [vmem:[%s685] ss:$8 sm:$0x3] %vm651, 0.0
    %687 = vst.msk [vmem:[%s685] ss:$8 sm:$0x0] %vm651, 0.0
    %688 = vst [vmem:[#allocation4 + $0xd0] sm:$0xff] %v593
    %689 = vst [vmem:[#allocation4 + $0xd8] sm:$0xff] %v594
    %690 = vst [vmem:[#allocation4 + $0x100] sm:$0xff] %v595
    %691 = vst [vmem:[#allocation4 + $0x108] sm:$0xff] %v596
    %692 = vst [vmem:[#allocation4 + $0x130] sm:$0xff] %v597
    %693 = vst [vmem:[#allocation4 + $0x138] sm:$0xff] %v598
    %694 = vst [vmem:[#allocation4 + $0x160] sm:$0xff] %v599
    %695 = vst [vmem:[#allocation4 + $0x168] sm:$0xff] %v600
    %v704 = vrot.slane %v593, 7
    %v705 = vrot.slane %v594, 7
    %v706 = vrot.slane %v595, 7
    %v707 = vsel %vm617, %v704, %v706
    %v708 = vrot.slane %v596, 7
    %v709 = vsel %vm617, %v705, %v708
    %v710 = vrot.slane %v597, 7
    %v711 = vsel %vm617, %v706, %v710
    %v712 = vrot.slane %v598, 7
    %v713 = vsel %vm617, %v708, %v712
    %v714 = vrot.slane %v599, 7
    %v715 = vsel %vm617, %v710, %v714
    %v716 = vrot.slane %v600, 7
    %v717 = vsel %vm617, %v712, %v716
    %726 = vst [vmem:[#allocation4 + $0xc0] sm:$0xfe] %v704
    %727 = vst [vmem:[#allocation4 + $0xc8] sm:$0xfe] %v705
    %728 = vst [vmem:[#allocation4 + $0xf0] sm:$0xff] %v707
    %729 = vst [vmem:[#allocation4 + $0xf8] sm:$0xff] %v709
    %730 = vst [vmem:[#allocation4 + $0x120] sm:$0xff] %v711
    %731 = vst [vmem:[#allocation4 + $0x128] sm:$0xff] %v713
    %732 = vst [vmem:[#allocation4 + $0x150] sm:$0xff] %v715
    %733 = vst [vmem:[#allocation4 + $0x158] sm:$0xff] %v717
    %s734 = scalar_lea.vmem [#allocation4], 192
    %735 = vst.msk [vmem:[%s734] ss:$8 sm:$0x3] %vm651, 0.0
    %736 = vst.msk [vmem:[%s734] ss:$8 sm:$0x0] %vm651, 0.0
    %v737 = vrot.slane %v593, 1
    %v738 = vrot.slane %v595, 1
    %v739 = vsel %vm654, %v737, %v738
    %v740 = vrot.slane %v594, 1
    %v741 = vrot.slane %v596, 1
    %v742 = vsel %vm654, %v740, %v741
    %v743 = vrot.slane %v597, 1
    %v744 = vsel %vm654, %v738, %v743
    %v745 = vrot.slane %v598, 1
    %v746 = vsel %vm654, %v741, %v745
    %v747 = vrot.slane %v599, 1
    %v748 = vsel %vm654, %v743, %v747
    %v749 = vrot.slane %v600, 1
    %v750 = vsel %vm654, %v745, %v749
    %759 = vst [vmem:[#allocation4 + $0xe0] sm:$0xff] %v739
    %760 = vst [vmem:[#allocation4 + $0xe8] sm:$0xff] %v742
    %761 = vst [vmem:[#allocation4 + $0x110] sm:$0xff] %v744
    %762 = vst [vmem:[#allocation4 + $0x118] sm:$0xff] %v746
    %763 = vst [vmem:[#allocation4 + $0x140] sm:$0xff] %v748
    %764 = vst [vmem:[#allocation4 + $0x148] sm:$0xff] %v750
    %765 = vst [vmem:[#allocation4 + $0x170] sm:$0x7f] %v747
    %766 = vst [vmem:[#allocation4 + $0x178] sm:$0x7f] %v749
    %s767 = scalar_lea.vmem [#allocation4], 375
    %768 = vst.msk [vmem:[%s767] ss:$8 sm:$0x3] %vm651, 0.0
    %769 = vst.msk [vmem:[%s767] ss:$8 sm:$0x0] %vm651, 0.0
    %v770 = vld [vmem:[#allocation6 + $0x180] sm:$0xff]
    %v771 = vld [vmem:[#allocation6 + $0x188] sm:$0xff]
    %v772 = vld [vmem:[#allocation6 + $0x190] sm:$0xff]
    %v773 = vld [vmem:[#allocation6 + $0x198] sm:$0xff]
    %v774 = vld [vmem:[#allocation6 + $0x1a0] sm:$0xff]
    %v775 = vld [vmem:[#allocation6 + $0x1a8] sm:$0xff]
    %v776 = vld [vmem:[#allocation6 + $0x1b0] sm:$0xff]
    %v777 = vld [vmem:[#allocation6 + $0x1b8] sm:$0xff]
    %v778 = vld [vmem:[#allocation6 + $0x1c0] sm:$0xff]
    %v779 = vld [vmem:[#allocation6 + $0x1c8] sm:$0xff]
    %v780 = vld [vmem:[#allocation6 + $0x1d0] sm:$0xff]
    %v781 = vld [vmem:[#allocation6 + $0x1d8] sm:$0xff]
    %v782 = vld [vmem:[#allocation6 + $0x1e0] sm:$0xff]
    %v783 = vld [vmem:[#allocation6 + $0x1e8] sm:$0xff]
    %v784 = vld [vmem:[#allocation6 + $0x1f0] sm:$0xff]
    %v785 = vld [vmem:[#allocation6 + $0x1f8] sm:$0xff]
    %v786 = vld [vmem:[#allocation6 + $0x200] sm:$0xff]
    %v787 = vld [vmem:[#allocation6 + $0x208] sm:$0xff]
    %v788 = vld [vmem:[#allocation6 + $0x210] sm:$0xff]
    %v789 = vld [vmem:[#allocation6 + $0x218] sm:$0xff]
    %v790 = vld [vmem:[#allocation6 + $0x220] sm:$0xff]
    %v791 = vld [vmem:[#allocation6 + $0x228] sm:$0xff]
    %v792 = vld [vmem:[#allocation6 + $0x230] sm:$0xff]
    %v793 = vld [vmem:[#allocation6 + $0x238] sm:$0xff]
    %v794 = vld [vmem:[#allocation6 + $0x240] sm:$0xff]
    %v795 = vld [vmem:[#allocation6 + $0x248] sm:$0xff]
    %v796 = vld [vmem:[#allocation6 + $0x250] sm:$0xff]
    %v797 = vld [vmem:[#allocation6 + $0x258] sm:$0xff]
    %v798 = vld [vmem:[#allocation6 + $0x260] sm:$0xff]
    %v799 = vld [vmem:[#allocation6 + $0x268] sm:$0xff]
    %v800 = vld [vmem:[#allocation6 + $0x270] sm:$0xff]
    %v801 = vld [vmem:[#allocation6 + $0x278] sm:$0xff]
    %v802 = vld [vmem:[#allocation6 + $0x280] sm:$0xff]
    %v803 = vld [vmem:[#allocation6 + $0x288] sm:$0xff]
    %v804 = vld [vmem:[#allocation6 + $0x290] sm:$0xff]
    %v805 = vld [vmem:[#allocation6 + $0x298] sm:$0xff]
    %v806 = vld [vmem:[#allocation6 + $0x2a0] sm:$0xff]
    %v807 = vld [vmem:[#allocation6 + $0x2a8] sm:$0xff]
    %v808 = vld [vmem:[#allocation6 + $0x2b0] sm:$0xff]
    %v809 = vld [vmem:[#allocation6 + $0x2b8] sm:$0xff]
    %v810 = vld [vmem:[#allocation6 + $0x2c0] sm:$0xff]
    %v811 = vld [vmem:[#allocation6 + $0x2c8] sm:$0xff]
    %v812 = vld [vmem:[#allocation6 + $0x2d0] sm:$0xff]
    %v813 = vld [vmem:[#allocation6 + $0x2d8] sm:$0xff]
    %v814 = vld [vmem:[#allocation6 + $0x2e0] sm:$0xff]
    %v815 = vld [vmem:[#allocation6 + $0x2e8] sm:$0xff]
    %v816 = vld [vmem:[#allocation6 + $0x2f0] sm:$0xff]
    %v817 = vld [vmem:[#allocation6 + $0x2f8] sm:$0xff]
    %v818 = vld [vmem:[#allocation6 + $0x300] sm:$0xff]
    %v819 = vld [vmem:[#allocation6 + $0x308] sm:$0xff]
    %v820 = vld [vmem:[#allocation6 + $0x310] sm:$0xff]
    %v821 = vld [vmem:[#allocation6 + $0x318] sm:$0xff]
    %v822 = vld [vmem:[#allocation6 + $0x320] sm:$0xff]
    %v823 = vld [vmem:[#allocation6 + $0x328] sm:$0xff]
    %v824 = vld [vmem:[#allocation6 + $0x330] sm:$0xff]
    %v825 = vld [vmem:[#allocation6 + $0x338] sm:$0xff]
    %v826 = vld [vmem:[#allocation6 + $0x340] sm:$0xff]
    %v827 = vld [vmem:[#allocation6 + $0x348] sm:$0xff]
    %v828 = vld [vmem:[#allocation6 + $0x350] sm:$0xff]
    %v829 = vld [vmem:[#allocation6 + $0x358] sm:$0xff]
    %v830 = vld [vmem:[#allocation6 + $0x360] sm:$0xff]
    %v831 = vld [vmem:[#allocation6 + $0x368] sm:$0xff]
    %v832 = vld [vmem:[#allocation6 + $0x370] sm:$0xff]
    %v833 = vld [vmem:[#allocation6 + $0x378] sm:$0xff]
    %v834 = vld [vmem:[#allocation6 + $0x380] sm:$0xff]
    %v835 = vld [vmem:[#allocation6 + $0x388] sm:$0xff]
    %v836 = vld [vmem:[#allocation6 + $0x390] sm:$0xff]
    %v837 = vld [vmem:[#allocation6 + $0x398] sm:$0xff]
    %v838 = vld [vmem:[#allocation6 + $0x3a0] sm:$0xff]
    %v839 = vld [vmem:[#allocation6 + $0x3a8] sm:$0xff]
    %v840 = vld [vmem:[#allocation6 + $0x3b0] sm:$0xff]
    %v841 = vld [vmem:[#allocation6 + $0x3b8] sm:$0xff]
    %v842 = vld [vmem:[#allocation6 + $0x3c0] sm:$0xff]
    %v843 = vld [vmem:[#allocation6 + $0x3c8] sm:$0xff]
    %v844 = vld [vmem:[#allocation6 + $0x3d0] sm:$0xff]
    %v845 = vld [vmem:[#allocation6 + $0x3d8] sm:$0xff]
    %v846 = vld [vmem:[#allocation6 + $0x3e0] sm:$0xff]
    %v847 = vld [vmem:[#allocation6 + $0x3e8] sm:$0xff]
    %v848 = vld [vmem:[#allocation6 + $0x3f0] sm:$0xff]
    %v849 = vld [vmem:[#allocation6 + $0x3f8] sm:$0xff]
    %v850 = vld [vmem:[#allocation6 + $0x400] sm:$0xff]
    %v851 = vld [vmem:[#allocation6 + $0x408] sm:$0xff]
    %v852 = vld [vmem:[#allocation6 + $0x410] sm:$0xff]
    %v853 = vld [vmem:[#allocation6 + $0x418] sm:$0xff]
    %v854 = vld [vmem:[#allocation6 + $0x420] sm:$0xff]
    %v855 = vld [vmem:[#allocation6 + $0x428] sm:$0xff]
    %v856 = vld [vmem:[#allocation6 + $0x430] sm:$0xff]
    %v857 = vld [vmem:[#allocation6 + $0x438] sm:$0xff]
    %v858 = vld [vmem:[#allocation6 + $0x440] sm:$0xff]
    %v859 = vld [vmem:[#allocation6 + $0x448] sm:$0xff]
    %v860 = vld [vmem:[#allocation6 + $0x450] sm:$0xff]
    %v861 = vld [vmem:[#allocation6 + $0x458] sm:$0xff]
    %v862 = vld [vmem:[#allocation6 + $0x460] sm:$0xff]
    %v863 = vld [vmem:[#allocation6 + $0x468] sm:$0xff]
    %v864 = vld [vmem:[#allocation6 + $0x470] sm:$0xff]
    %v865 = vld [vmem:[#allocation6 + $0x478] sm:$0xff]
    %v866 = vld [vmem:[#allocation4] sm:$0xff]
    %v867 = vld [vmem:[#allocation4 + $0x8] sm:$0xff]
    %v868 = vld [vmem:[#allocation4 + $0x10] sm:$0xff]
    %v869 = vld [vmem:[#allocation4 + $0x18] sm:$0xff]
    %v870 = vld [vmem:[#allocation4 + $0x20] sm:$0xff]
    %v871 = vld [vmem:[#allocation4 + $0x28] sm:$0xff]
    %v872 = vld [vmem:[#allocation4 + $0x30] sm:$0xff]
    %v873 = vld [vmem:[#allocation4 + $0x38] sm:$0xff]
    %v874 = vld [vmem:[#allocation4 + $0x40] sm:$0xff]
    %v875 = vld [vmem:[#allocation4 + $0x48] sm:$0xff]
    %v876 = vld [vmem:[#allocation4 + $0x50] sm:$0xff]
    %v877 = vld [vmem:[#allocation4 + $0x58] sm:$0xff]
    %v878 = vld [vmem:[#allocation4 + $0x60] sm:$0xff]
    %v879 = vld [vmem:[#allocation4 + $0x68] sm:$0xff]
    %v880 = vld [vmem:[#allocation4 + $0x70] sm:$0xff]
    %v881 = vld [vmem:[#allocation4 + $0x78] sm:$0xff]
    %v882 = vld [vmem:[#allocation4 + $0x80] sm:$0xff]
    %v883 = vld [vmem:[#allocation4 + $0x88] sm:$0xff]
    %v884 = vld [vmem:[#allocation4 + $0x90] sm:$0xff]
    %v885 = vld [vmem:[#allocation4 + $0x98] sm:$0xff]
    %v886 = vld [vmem:[#allocation4 + $0xa0] sm:$0xff]
    %v887 = vld [vmem:[#allocation4 + $0xa8] sm:$0xff]
    %v888 = vld [vmem:[#allocation4 + $0xb0] sm:$0xff]
    %v889 = vld [vmem:[#allocation4 + $0xb8] sm:$0xff]
    %v890 = vld [vmem:[#allocation4 + $0xc0] sm:$0xff]
    %v891 = vld [vmem:[#allocation4 + $0xc8] sm:$0xff]
    %v892 = vld [vmem:[#allocation4 + $0xd0] sm:$0xff]
    %v893 = vld [vmem:[#allocation4 + $0xd8] sm:$0xff]
    %v894 = vld [vmem:[#allocation4 + $0xe0] sm:$0xff]
    %v895 = vld [vmem:[#allocation4 + $0xe8] sm:$0xff]
    %v896 = vld [vmem:[#allocation4 + $0xf0] sm:$0xff]
    %v897 = vld [vmem:[#allocation4 + $0xf8] sm:$0xff]
    %v898 = vld [vmem:[#allocation4 + $0x100] sm:$0xff]
    %v899 = vld [vmem:[#allocation4 + $0x108] sm:$0xff]
    %v900 = vld [vmem:[#allocation4 + $0x110] sm:$0xff]
    %v901 = vld [vmem:[#allocation4 + $0x118] sm:$0xff]
    %v902 = vld [vmem:[#allocation4 + $0x120] sm:$0xff]
    %v903 = vld [vmem:[#allocation4 + $0x128] sm:$0xff]
    %v904 = vld [vmem:[#allocation4 + $0x130] sm:$0xff]
    %v905 = vld [vmem:[#allocation4 + $0x138] sm:$0xff]
    %v906 = vld [vmem:[#allocation4 + $0x140] sm:$0xff]
    %v907 = vld [vmem:[#allocation4 + $0x148] sm:$0xff]
    %v908 = vld [vmem:[#allocation4 + $0x150] sm:$0xff]
    %v909 = vld [vmem:[#allocation4 + $0x158] sm:$0xff]
    %v910 = vld [vmem:[#allocation4 + $0x160] sm:$0xff]
    %v911 = vld [vmem:[#allocation4 + $0x168] sm:$0xff]
    %v912 = vld [vmem:[#allocation4 + $0x170] sm:$0xff]
    %v913 = vld [vmem:[#allocation4 + $0x178] sm:$0xff]
    %v914 = vpack.c.bf16 %v872, %v866
    %v915 = vpack.c.bf16 %v873, %v867
    %v916 = vpack.c.bf16 %v874, %v868
    %v917 = vpack.c.bf16 %v875, %v869
    %v918 = vpack.c.bf16 %v876, %v870
    %v919 = vpack.c.bf16 %v877, %v871
    %v920 = vpack.c.bf16 %v884, %v878
    %v921 = vpack.c.bf16 %v885, %v879
    %v922 = vpack.c.bf16 %v886, %v880
    %v923 = vpack.c.bf16 %v887, %v881
    %v924 = vpack.c.bf16 %v888, %v882
    %v925 = vpack.c.bf16 %v889, %v883
    %v926 = vpack.c.bf16 %v896, %v890
    %v927 = vpack.c.bf16 %v897, %v891
    %v928 = vpack.c.bf16 %v898, %v892
    %v929 = vpack.c.bf16 %v899, %v893
    %v930 = vpack.c.bf16 %v900, %v894
    %v931 = vpack.c.bf16 %v901, %v895
    %v932 = vpack.c.bf16 %v908, %v902
    %v933 = vpack.c.bf16 %v909, %v903
    %v934 = vpack.c.bf16 %v910, %v904
    %v935 = vpack.c.bf16 %v911, %v905
    %v936 = vpack.c.bf16 %v912, %v906
    %v937 = vpack.c.bf16 %v913, %v907
    %v1034 = vunpack.c.l.b16 %v770
    %v1035 = vunpack.c.h.b16 %v770
    %v1036 = vunpack.c.l.b16 %v771
    %v1037 = vunpack.c.h.b16 %v771
    %v1038 = vunpack.c.l.b16 %v772
    %v1039 = vunpack.c.h.b16 %v772
    %v1040 = vunpack.c.l.b16 %v773
    %v1041 = vunpack.c.h.b16 %v773
    %v1042 = vunpack.c.l.b16 %v774
    %v1043 = vunpack.c.h.b16 %v774
    %v1044 = vunpack.c.l.b16 %v775
    %v1045 = vunpack.c.h.b16 %v775
    %v1046 = vunpack.c.l.b16 %v776
    %v1047 = vunpack.c.h.b16 %v776
    %v1048 = vunpack.c.l.b16 %v777
    %v1049 = vunpack.c.h.b16 %v777
    %v1050 = vunpack.c.l.b16 %v778
    %v1051 = vunpack.c.h.b16 %v778
    %v1052 = vunpack.c.l.b16 %v779
    %v1053 = vunpack.c.h.b16 %v779
    %v1054 = vunpack.c.l.b16 %v780
    %v1055 = vunpack.c.h.b16 %v780
    %v1056 = vunpack.c.l.b16 %v781
    %v1057 = vunpack.c.h.b16 %v781
    %v1058 = vunpack.c.l.b16 %v782
    %v1059 = vunpack.c.h.b16 %v782
    %v1060 = vunpack.c.l.b16 %v783
    %v1061 = vunpack.c.h.b16 %v783
    %v1062 = vunpack.c.l.b16 %v784
    %v1063 = vunpack.c.h.b16 %v784
    %v1064 = vunpack.c.l.b16 %v785
    %v1065 = vunpack.c.h.b16 %v785
    %v1066 = vunpack.c.l.b16 %v786
    %v1067 = vunpack.c.h.b16 %v786
    %v1068 = vunpack.c.l.b16 %v787
    %v1069 = vunpack.c.h.b16 %v787
    %v1070 = vunpack.c.l.b16 %v788
    %v1071 = vunpack.c.h.b16 %v788
    %v1072 = vunpack.c.l.b16 %v789
    %v1073 = vunpack.c.h.b16 %v789
    %v1074 = vunpack.c.l.b16 %v790
    %v1075 = vunpack.c.h.b16 %v790
    %v1076 = vunpack.c.l.b16 %v791
    %v1077 = vunpack.c.h.b16 %v791
    %v1078 = vunpack.c.l.b16 %v792
    %v1079 = vunpack.c.h.b16 %v792
    %v1080 = vunpack.c.l.b16 %v793
    %v1081 = vunpack.c.h.b16 %v793
    %v1082 = vunpack.c.l.b16 %v794
    %v1083 = vunpack.c.h.b16 %v794
    %v1084 = vunpack.c.l.b16 %v795
    %v1085 = vunpack.c.h.b16 %v795
    %v1086 = vunpack.c.l.b16 %v796
    %v1087 = vunpack.c.h.b16 %v796
    %v1088 = vunpack.c.l.b16 %v797
    %v1089 = vunpack.c.h.b16 %v797
    %v1090 = vunpack.c.l.b16 %v798
    %v1091 = vunpack.c.h.b16 %v798
    %v1092 = vunpack.c.l.b16 %v799
    %v1093 = vunpack.c.h.b16 %v799
    %v1094 = vunpack.c.l.b16 %v800
    %v1095 = vunpack.c.h.b16 %v800
    %v1096 = vunpack.c.l.b16 %v801
    %v1097 = vunpack.c.h.b16 %v801
    %v1098 = vunpack.c.l.b16 %v802
    %v1099 = vunpack.c.h.b16 %v802
    %v1100 = vunpack.c.l.b16 %v803
    %v1101 = vunpack.c.h.b16 %v803
    %v1102 = vunpack.c.l.b16 %v804
    %v1103 = vunpack.c.h.b16 %v804
    %v1104 = vunpack.c.l.b16 %v805
    %v1105 = vunpack.c.h.b16 %v805
    %v1106 = vunpack.c.l.b16 %v806
    %v1107 = vunpack.c.h.b16 %v806
    %v1108 = vunpack.c.l.b16 %v807
    %v1109 = vunpack.c.h.b16 %v807
    %v1110 = vunpack.c.l.b16 %v808
    %v1111 = vunpack.c.h.b16 %v808
    %v1112 = vunpack.c.l.b16 %v809
    %v1113 = vunpack.c.h.b16 %v809
    %v1114 = vunpack.c.l.b16 %v810
    %v1115 = vunpack.c.h.b16 %v810
    %v1116 = vunpack.c.l.b16 %v811
    %v1117 = vunpack.c.h.b16 %v811
    %v1118 = vunpack.c.l.b16 %v812
    %v1119 = vunpack.c.h.b16 %v812
    %v1120 = vunpack.c.l.b16 %v813
    %v1121 = vunpack.c.h.b16 %v813
    %v1122 = vunpack.c.l.b16 %v814
    %v1123 = vunpack.c.h.b16 %v814
    %v1124 = vunpack.c.l.b16 %v815
    %v1125 = vunpack.c.h.b16 %v815
    %v1126 = vunpack.c.l.b16 %v816
    %v1127 = vunpack.c.h.b16 %v816
    %v1128 = vunpack.c.l.b16 %v817
    %v1129 = vunpack.c.h.b16 %v817
    %v1130 = vunpack.c.l.b16 %v818
    %v1131 = vunpack.c.h.b16 %v818
    %v1132 = vunpack.c.l.b16 %v819
    %v1133 = vunpack.c.h.b16 %v819
    %v1134 = vunpack.c.l.b16 %v820
    %v1135 = vunpack.c.h.b16 %v820
    %v1136 = vunpack.c.l.b16 %v821
    %v1137 = vunpack.c.h.b16 %v821
    %v1138 = vunpack.c.l.b16 %v822
    %v1139 = vunpack.c.h.b16 %v822
    %v1140 = vunpack.c.l.b16 %v823
    %v1141 = vunpack.c.h.b16 %v823
    %v1142 = vunpack.c.l.b16 %v824
    %v1143 = vunpack.c.h.b16 %v824
    %v1144 = vunpack.c.l.b16 %v825
    %v1145 = vunpack.c.h.b16 %v825
    %v1146 = vunpack.c.l.b16 %v826
    %v1147 = vunpack.c.h.b16 %v826
    %v1148 = vunpack.c.l.b16 %v827
    %v1149 = vunpack.c.h.b16 %v827
    %v1150 = vunpack.c.l.b16 %v828
    %v1151 = vunpack.c.h.b16 %v828
    %v1152 = vunpack.c.l.b16 %v829
    %v1153 = vunpack.c.h.b16 %v829
    %v1154 = vunpack.c.l.b16 %v830
    %v1155 = vunpack.c.h.b16 %v830
    %v1156 = vunpack.c.l.b16 %v831
    %v1157 = vunpack.c.h.b16 %v831
    %v1158 = vunpack.c.l.b16 %v832
    %v1159 = vunpack.c.h.b16 %v832
    %v1160 = vunpack.c.l.b16 %v833
    %v1161 = vunpack.c.h.b16 %v833
    %v1162 = vunpack.c.l.b16 %v834
    %v1163 = vunpack.c.h.b16 %v834
    %v1164 = vunpack.c.l.b16 %v835
    %v1165 = vunpack.c.h.b16 %v835
    %v1166 = vunpack.c.l.b16 %v836
    %v1167 = vunpack.c.h.b16 %v836
    %v1168 = vunpack.c.l.b16 %v837
    %v1169 = vunpack.c.h.b16 %v837
    %v1170 = vunpack.c.l.b16 %v838
    %v1171 = vunpack.c.h.b16 %v838
    %v1172 = vunpack.c.l.b16 %v839
    %v1173 = vunpack.c.h.b16 %v839
    %v1174 = vunpack.c.l.b16 %v840
    %v1175 = vunpack.c.h.b16 %v840
    %v1176 = vunpack.c.l.b16 %v841
    %v1177 = vunpack.c.h.b16 %v841
    %v1178 = vunpack.c.l.b16 %v842
    %v1179 = vunpack.c.h.b16 %v842
    %v1180 = vunpack.c.l.b16 %v843
    %v1181 = vunpack.c.h.b16 %v843
    %v1182 = vunpack.c.l.b16 %v844
    %v1183 = vunpack.c.h.b16 %v844
    %v1184 = vunpack.c.l.b16 %v845
    %v1185 = vunpack.c.h.b16 %v845
    %v1186 = vunpack.c.l.b16 %v846
    %v1187 = vunpack.c.h.b16 %v846
    %v1188 = vunpack.c.l.b16 %v847
    %v1189 = vunpack.c.h.b16 %v847
    %v1190 = vunpack.c.l.b16 %v848
    %v1191 = vunpack.c.h.b16 %v848
    %v1192 = vunpack.c.l.b16 %v849
    %v1193 = vunpack.c.h.b16 %v849
    %v1194 = vunpack.c.l.b16 %v850
    %v1195 = vunpack.c.h.b16 %v850
    %v1196 = vunpack.c.l.b16 %v851
    %v1197 = vunpack.c.h.b16 %v851
    %v1198 = vunpack.c.l.b16 %v852
    %v1199 = vunpack.c.h.b16 %v852
    %v1200 = vunpack.c.l.b16 %v853
    %v1201 = vunpack.c.h.b16 %v853
    %v1202 = vunpack.c.l.b16 %v854
    %v1203 = vunpack.c.h.b16 %v854
    %v1204 = vunpack.c.l.b16 %v855
    %v1205 = vunpack.c.h.b16 %v855
    %v1206 = vunpack.c.l.b16 %v856
    %v1207 = vunpack.c.h.b16 %v856
    %v1208 = vunpack.c.l.b16 %v857
    %v1209 = vunpack.c.h.b16 %v857
    %v1210 = vunpack.c.l.b16 %v858
    %v1211 = vunpack.c.h.b16 %v858
    %v1212 = vunpack.c.l.b16 %v859
    %v1213 = vunpack.c.h.b16 %v859
    %v1214 = vunpack.c.l.b16 %v860
    %v1215 = vunpack.c.h.b16 %v860
    %v1216 = vunpack.c.l.b16 %v861
    %v1217 = vunpack.c.h.b16 %v861
    %v1218 = vunpack.c.l.b16 %v862
    %v1219 = vunpack.c.h.b16 %v862
    %v1220 = vunpack.c.l.b16 %v863
    %v1221 = vunpack.c.h.b16 %v863
    %v1222 = vunpack.c.l.b16 %v864
    %v1223 = vunpack.c.h.b16 %v864
    %v1224 = vunpack.c.l.b16 %v865
    %v1225 = vunpack.c.h.b16 %v865
    %v1226 = vpack.c.b16 %v1036, %v1034
    %v1227 = vpack.c.b16 %v1037, %v1035
    %v1228 = vpack.c.b16 %v1040, %v1038
    %v1229 = vpack.c.b16 %v1041, %v1039
    %v1230 = vpack.c.b16 %v1044, %v1042
    %v1231 = vpack.c.b16 %v1045, %v1043
    %v1232 = vpack.c.b16 %v1048, %v1046
    %v1233 = vpack.c.b16 %v1049, %v1047
    %v1234 = vpack.c.b16 %v1052, %v1050
    %v1235 = vpack.c.b16 %v1053, %v1051
    %v1236 = vpack.c.b16 %v1056, %v1054
    %v1237 = vpack.c.b16 %v1057, %v1055
    %v1238 = vpack.c.b16 %v1060, %v1058
    %v1239 = vpack.c.b16 %v1061, %v1059
    %v1240 = vpack.c.b16 %v1064, %v1062
    %v1241 = vpack.c.b16 %v1065, %v1063
    %v1242 = vpack.c.b16 %v1068, %v1066
    %v1243 = vpack.c.b16 %v1069, %v1067
    %v1244 = vpack.c.b16 %v1072, %v1070
    %v1245 = vpack.c.b16 %v1073, %v1071
    %v1246 = vpack.c.b16 %v1076, %v1074
    %v1247 = vpack.c.b16 %v1077, %v1075
    %v1248 = vpack.c.b16 %v1080, %v1078
    %v1249 = vpack.c.b16 %v1081, %v1079
    %v1250 = vpack.c.b16 %v1084, %v1082
    %v1251 = vpack.c.b16 %v1085, %v1083
    %v1252 = vpack.c.b16 %v1088, %v1086
    %v1253 = vpack.c.b16 %v1089, %v1087
    %v1254 = vpack.c.b16 %v1092, %v1090
    %v1255 = vpack.c.b16 %v1093, %v1091
    %v1256 = vpack.c.b16 %v1096, %v1094
    %v1257 = vpack.c.b16 %v1097, %v1095
    %v1258 = vpack.c.b16 %v1100, %v1098
    %v1259 = vpack.c.b16 %v1101, %v1099
    %v1260 = vpack.c.b16 %v1104, %v1102
    %v1261 = vpack.c.b16 %v1105, %v1103
    %v1262 = vpack.c.b16 %v1108, %v1106
    %v1263 = vpack.c.b16 %v1109, %v1107
    %v1264 = vpack.c.b16 %v1112, %v1110
    %v1265 = vpack.c.b16 %v1113, %v1111
    %v1266 = vpack.c.b16 %v1116, %v1114
    %v1267 = vpack.c.b16 %v1117, %v1115
    %v1268 = vpack.c.b16 %v1120, %v1118
    %v1269 = vpack.c.b16 %v1121, %v1119
    %v1270 = vpack.c.b16 %v1124, %v1122
    %v1271 = vpack.c.b16 %v1125, %v1123
    %v1272 = vpack.c.b16 %v1128, %v1126
    %v1273 = vpack.c.b16 %v1129, %v1127
    %v1274 = vpack.c.b16 %v1132, %v1130
    %v1275 = vpack.c.b16 %v1133, %v1131
    %v1276 = vpack.c.b16 %v1136, %v1134
    %v1277 = vpack.c.b16 %v1137, %v1135
    %v1278 = vpack.c.b16 %v1140, %v1138
    %v1279 = vpack.c.b16 %v1141, %v1139
    %v1280 = vpack.c.b16 %v1144, %v1142
    %v1281 = vpack.c.b16 %v1145, %v1143
    %v1282 = vpack.c.b16 %v1148, %v1146
    %v1283 = vpack.c.b16 %v1149, %v1147
    %v1284 = vpack.c.b16 %v1152, %v1150
    %v1285 = vpack.c.b16 %v1153, %v1151
    %v1286 = vpack.c.b16 %v1156, %v1154
    %v1287 = vpack.c.b16 %v1157, %v1155
    %v1288 = vpack.c.b16 %v1160, %v1158
    %v1289 = vpack.c.b16 %v1161, %v1159
    %v1290 = vpack.c.b16 %v1164, %v1162
    %v1291 = vpack.c.b16 %v1165, %v1163
    %v1292 = vpack.c.b16 %v1168, %v1166
    %v1293 = vpack.c.b16 %v1169, %v1167
    %v1294 = vpack.c.b16 %v1172, %v1170
    %v1295 = vpack.c.b16 %v1173, %v1171
    %v1296 = vpack.c.b16 %v1176, %v1174
    %v1297 = vpack.c.b16 %v1177, %v1175
    %v1298 = vpack.c.b16 %v1180, %v1178
    %v1299 = vpack.c.b16 %v1181, %v1179
    %v1300 = vpack.c.b16 %v1184, %v1182
    %v1301 = vpack.c.b16 %v1185, %v1183
    %v1302 = vpack.c.b16 %v1188, %v1186
    %v1303 = vpack.c.b16 %v1189, %v1187
    %v1304 = vpack.c.b16 %v1192, %v1190
    %v1305 = vpack.c.b16 %v1193, %v1191
    %v1306 = vpack.c.b16 %v1196, %v1194
    %v1307 = vpack.c.b16 %v1197, %v1195
    %v1308 = vpack.c.b16 %v1200, %v1198
    %v1309 = vpack.c.b16 %v1201, %v1199
    %v1310 = vpack.c.b16 %v1204, %v1202
    %v1311 = vpack.c.b16 %v1205, %v1203
    %v1312 = vpack.c.b16 %v1208, %v1206
    %v1313 = vpack.c.b16 %v1209, %v1207
    %v1314 = vpack.c.b16 %v1212, %v1210
    %v1315 = vpack.c.b16 %v1213, %v1211
    %v1316 = vpack.c.b16 %v1216, %v1214
    %v1317 = vpack.c.b16 %v1217, %v1215
    %v1318 = vpack.c.b16 %v1220, %v1218
    %v1319 = vpack.c.b16 %v1221, %v1219
    %v1320 = vpack.c.b16 %v1224, %v1222
    %v1321 = vpack.c.b16 %v1225, %v1223
    %1418 = vmatpush.bf16.msra.mxu0 %v1240
    %1419 = vmatpush.bf16.msra.mxu0 %v1238
    %1420 = vmatpush.bf16.msra.mxu0 %v1236
    %1421 = vmatpush.bf16.msra.mxu0 %v1234
    %1422 = vmatpush.bf16.msra.mxu0 %v1232
    %1423 = vmatpush.bf16.msra.mxu0 %v1230
    %1424 = vmatpush.bf16.msra.mxu0 %v1228
    %1425 = vmatpush.bf16.msra.mxu0 %v1226
    %1426 = vmatmul.bf16.gmra.mxu0 %v914
    %v1427 = vpop.f32.mrf.mxu0
    %v1428 = vadd.f32 0.0, %v1427
    %v1429 = vpop.f32.mrf.mxu0
    %v1430 = vadd.f32 0.0, %v1429
    %1431 = vmatmul.bf16.gmra.mxu0 %v920
    %v1432 = vpop.f32.mrf.mxu0
    %v1433 = vadd.f32 0.0, %v1432
    %v1434 = vpop.f32.mrf.mxu0
    %v1435 = vadd.f32 0.0, %v1434
    %1436 = vmatmul.bf16.gmra.mxu0 %v926
    %v1437 = vpop.f32.mrf.mxu0
    %v1438 = vadd.f32 0.0, %v1437
    %v1439 = vpop.f32.mrf.mxu0
    %v1440 = vadd.f32 0.0, %v1439
    %1441 = vmatmul.bf16.gmra.mxu0 %v932
    %v1442 = vpop.f32.mrf.mxu0
    %v1443 = vadd.f32 0.0, %v1442
    %v1444 = vpop.f32.mrf.mxu0
    %v1445 = vadd.f32 0.0, %v1444
    %1446 = vdwg.mxu0
    %1447 = vmatpush.bf16.msra.mxu0 %v1256
    %1448 = vmatpush.bf16.msra.mxu0 %v1254
    %1449 = vmatpush.bf16.msra.mxu0 %v1252
    %1450 = vmatpush.bf16.msra.mxu0 %v1250
    %1451 = vmatpush.bf16.msra.mxu0 %v1248
    %1452 = vmatpush.bf16.msra.mxu0 %v1246
    %1453 = vmatpush.bf16.msra.mxu0 %v1244
    %1454 = vmatpush.bf16.msra.mxu0 %v1242
    %1455 = vmatmul.bf16.gmra.mxu0 %v915
    %v1456 = vpop.f32.mrf.mxu0
    %v1457 = vadd.f32 %v1428, %v1456
    %v1458 = vpop.f32.mrf.mxu0
    %v1459 = vadd.f32 %v1430, %v1458
    %1460 = vmatmul.bf16.gmra.mxu0 %v921
    %v1461 = vpop.f32.mrf.mxu0
    %v1462 = vadd.f32 %v1433, %v1461
    %v1463 = vpop.f32.mrf.mxu0
    %v1464 = vadd.f32 %v1435, %v1463
    %1465 = vmatmul.bf16.gmra.mxu0 %v927
    %v1466 = vpop.f32.mrf.mxu0
    %v1467 = vadd.f32 %v1438, %v1466
    %v1468 = vpop.f32.mrf.mxu0
    %v1469 = vadd.f32 %v1440, %v1468
    %1470 = vmatmul.bf16.gmra.mxu0 %v933
    %v1471 = vpop.f32.mrf.mxu0
    %v1472 = vadd.f32 %v1443, %v1471
    %v1473 = vpop.f32.mrf.mxu0
    %v1474 = vadd.f32 %v1445, %v1473
    %1475 = vdwg.mxu0
    %1476 = vmatpush.bf16.msra.mxu0 %v1272
    %1477 = vmatpush.bf16.msra.mxu0 %v1270
    %1478 = vmatpush.bf16.msra.mxu0 %v1268
    %1479 = vmatpush.bf16.msra.mxu0 %v1266
    %1480 = vmatpush.bf16.msra.mxu0 %v1264
    %1481 = vmatpush.bf16.msra.mxu0 %v1262
    %1482 = vmatpush.bf16.msra.mxu0 %v1260
    %1483 = vmatpush.bf16.msra.mxu0 %v1258
    %1484 = vmatmul.bf16.gmra.mxu0 %v916
    %v1485 = vpop.f32.mrf.mxu0
    %v1486 = vadd.f32 %v1457, %v1485
    %v1487 = vpop.f32.mrf.mxu0
    %v1488 = vadd.f32 %v1459, %v1487
    %1489 = vmatmul.bf16.gmra.mxu0 %v922
    %v1490 = vpop.f32.mrf.mxu0
    %v1491 = vadd.f32 %v1462, %v1490
    %v1492 = vpop.f32.mrf.mxu0
    %v1493 = vadd.f32 %v1464, %v1492
    %1494 = vmatmul.bf16.gmra.mxu0 %v928
    %v1495 = vpop.f32.mrf.mxu0
    %v1496 = vadd.f32 %v1467, %v1495
    %v1497 = vpop.f32.mrf.mxu0
    %v1498 = vadd.f32 %v1469, %v1497
    %1499 = vmatmul.bf16.gmra.mxu0 %v934
    %v1500 = vpop.f32.mrf.mxu0
    %v1501 = vadd.f32 %v1472, %v1500
    %v1502 = vpop.f32.mrf.mxu0
    %v1503 = vadd.f32 %v1474, %v1502
    %1504 = vdwg.mxu0
    %1505 = vmatpush.bf16.msra.mxu0 %v1288
    %1506 = vmatpush.bf16.msra.mxu0 %v1286
    %1507 = vmatpush.bf16.msra.mxu0 %v1284
    %1508 = vmatpush.bf16.msra.mxu0 %v1282
    %1509 = vmatpush.bf16.msra.mxu0 %v1280
    %1510 = vmatpush.bf16.msra.mxu0 %v1278
    %1511 = vmatpush.bf16.msra.mxu0 %v1276
    %1512 = vmatpush.bf16.msra.mxu0 %v1274
    %1513 = vmatmul.bf16.gmra.mxu0 %v917
    %v1514 = vpop.f32.mrf.mxu0
    %v1515 = vadd.f32 %v1486, %v1514
    %v1516 = vpop.f32.mrf.mxu0
    %v1517 = vadd.f32 %v1488, %v1516
    %1518 = vmatmul.bf16.gmra.mxu0 %v923
    %v1519 = vpop.f32.mrf.mxu0
    %v1520 = vadd.f32 %v1491, %v1519
    %v1521 = vpop.f32.mrf.mxu0
    %v1522 = vadd.f32 %v1493, %v1521
    %1523 = vmatmul.bf16.gmra.mxu0 %v929
    %v1524 = vpop.f32.mrf.mxu0
    %v1525 = vadd.f32 %v1496, %v1524
    %v1526 = vpop.f32.mrf.mxu0
    %v1527 = vadd.f32 %v1498, %v1526
    %1528 = vmatmul.bf16.gmra.mxu0 %v935
    %v1529 = vpop.f32.mrf.mxu0
    %v1530 = vadd.f32 %v1501, %v1529
    %v1531 = vpop.f32.mrf.mxu0
    %v1532 = vadd.f32 %v1503, %v1531
    %1533 = vdwg.mxu0
    %1534 = vmatpush.bf16.msra.mxu0 %v1304
    %1535 = vmatpush.bf16.msra.mxu0 %v1302
    %1536 = vmatpush.bf16.msra.mxu0 %v1300
    %1537 = vmatpush.bf16.msra.mxu0 %v1298
    %1538 = vmatpush.bf16.msra.mxu0 %v1296
    %1539 = vmatpush.bf16.msra.mxu0 %v1294
    %1540 = vmatpush.bf16.msra.mxu0 %v1292
    %1541 = vmatpush.bf16.msra.mxu0 %v1290
    %1542 = vmatmul.bf16.gmra.mxu0 %v918
    %v1543 = vpop.f32.mrf.mxu0
    %v1544 = vadd.f32 %v1515, %v1543
    %v1545 = vpop.f32.mrf.mxu0
    %v1546 = vadd.f32 %v1517, %v1545
    %1547 = vmatmul.bf16.gmra.mxu0 %v924
    %v1548 = vpop.f32.mrf.mxu0
    %v1549 = vadd.f32 %v1520, %v1548
    %v1550 = vpop.f32.mrf.mxu0
    %v1551 = vadd.f32 %v1522, %v1550
    %1552 = vmatmul.bf16.gmra.mxu0 %v930
    %v1553 = vpop.f32.mrf.mxu0
    %v1554 = vadd.f32 %v1525, %v1553
    %v1555 = vpop.f32.mrf.mxu0
    %v1556 = vadd.f32 %v1527, %v1555
    %1557 = vmatmul.bf16.gmra.mxu0 %v936
    %v1558 = vpop.f32.mrf.mxu0
    %v1559 = vadd.f32 %v1530, %v1558
    %v1560 = vpop.f32.mrf.mxu0
    %v1561 = vadd.f32 %v1532, %v1560
    %1562 = vdwg.mxu0
    %1563 = vmatpush.bf16.msra.mxu0 %v1320
    %1564 = vmatpush.bf16.msra.mxu0 %v1318
    %1565 = vmatpush.bf16.msra.mxu0 %v1316
    %1566 = vmatpush.bf16.msra.mxu0 %v1314
    %1567 = vmatpush.bf16.msra.mxu0 %v1312
    %1568 = vmatpush.bf16.msra.mxu0 %v1310
    %1569 = vmatpush.bf16.msra.mxu0 %v1308
    %1570 = vmatpush.bf16.msra.mxu0 %v1306
    %1571 = vmatmul.bf16.gmra.mxu0 %v919
    %v1572 = vpop.f32.mrf.mxu0
    %v1573 = vadd.f32 %v1544, %v1572
    %v1574 = vpop.f32.mrf.mxu0
    %v1575 = vadd.f32 %v1546, %v1574
    %1576 = vmatmul.bf16.gmra.mxu0 %v925
    %v1577 = vpop.f32.mrf.mxu0
    %v1578 = vadd.f32 %v1549, %v1577
    %v1579 = vpop.f32.mrf.mxu0
    %v1580 = vadd.f32 %v1551, %v1579
    %1581 = vmatmul.bf16.gmra.mxu0 %v931
    %v1582 = vpop.f32.mrf.mxu0
    %v1583 = vadd.f32 %v1554, %v1582
    %v1584 = vpop.f32.mrf.mxu0
    %v1585 = vadd.f32 %v1556, %v1584
    %1586 = vmatmul.bf16.gmra.mxu0 %v937
    %v1587 = vpop.f32.mrf.mxu0
    %v1588 = vadd.f32 %v1559, %v1587
    %v1589 = vpop.f32.mrf.mxu0
    %v1590 = vadd.f32 %v1561, %v1589
    %1591 = vdwg.mxu0
    %1592 = vmatpush.bf16.msra.mxu0 %v1241
    %1593 = vmatpush.bf16.msra.mxu0 %v1239
    %1594 = vmatpush.bf16.msra.mxu0 %v1237
    %1595 = vmatpush.bf16.msra.mxu0 %v1235
    %1596 = vmatpush.bf16.msra.mxu0 %v1233
    %1597 = vmatpush.bf16.msra.mxu0 %v1231
    %1598 = vmatpush.bf16.msra.mxu0 %v1229
    %1599 = vmatpush.bf16.msra.mxu0 %v1227
    %1600 = vmatmul.bf16.gmra.mxu0 %v914
    %v1601 = vpop.f32.mrf.mxu0
    %v1602 = vadd.f32 0.0, %v1601
    %v1603 = vpop.f32.mrf.mxu0
    %v1604 = vadd.f32 0.0, %v1603
    %1605 = vmatmul.bf16.gmra.mxu0 %v920
    %v1606 = vpop.f32.mrf.mxu0
    %v1607 = vadd.f32 0.0, %v1606
    %v1608 = vpop.f32.mrf.mxu0
    %v1609 = vadd.f32 0.0, %v1608
    %1610 = vmatmul.bf16.gmra.mxu0 %v926
    %v1611 = vpop.f32.mrf.mxu0
    %v1612 = vadd.f32 0.0, %v1611
    %v1613 = vpop.f32.mrf.mxu0
    %v1614 = vadd.f32 0.0, %v1613
    %1615 = vmatmul.bf16.gmra.mxu0 %v932
    %v1616 = vpop.f32.mrf.mxu0
    %v1617 = vadd.f32 0.0, %v1616
    %v1618 = vpop.f32.mrf.mxu0
    %v1619 = vadd.f32 0.0, %v1618
    %1620 = vdwg.mxu0
    %1621 = vmatpush.bf16.msra.mxu0 %v1257
    %1622 = vmatpush.bf16.msra.mxu0 %v1255
    %1623 = vmatpush.bf16.msra.mxu0 %v1253
    %1624 = vmatpush.bf16.msra.mxu0 %v1251
    %1625 = vmatpush.bf16.msra.mxu0 %v1249
    %1626 = vmatpush.bf16.msra.mxu0 %v1247
    %1627 = vmatpush.bf16.msra.mxu0 %v1245
    %1628 = vmatpush.bf16.msra.mxu0 %v1243
    %1629 = vmatmul.bf16.gmra.mxu0 %v915
    %v1630 = vpop.f32.mrf.mxu0
    %v1631 = vadd.f32 %v1602, %v1630
    %v1632 = vpop.f32.mrf.mxu0
    %v1633 = vadd.f32 %v1604, %v1632
    %1634 = vmatmul.bf16.gmra.mxu0 %v921
    %v1635 = vpop.f32.mrf.mxu0
    %v1636 = vadd.f32 %v1607, %v1635
    %v1637 = vpop.f32.mrf.mxu0
    %v1638 = vadd.f32 %v1609, %v1637
    %1639 = vmatmul.bf16.gmra.mxu0 %v927
    %v1640 = vpop.f32.mrf.mxu0
    %v1641 = vadd.f32 %v1612, %v1640
    %v1642 = vpop.f32.mrf.mxu0
    %v1643 = vadd.f32 %v1614, %v1642
    %1644 = vmatmul.bf16.gmra.mxu0 %v933
    %v1645 = vpop.f32.mrf.mxu0
    %v1646 = vadd.f32 %v1617, %v1645
    %v1647 = vpop.f32.mrf.mxu0
    %v1648 = vadd.f32 %v1619, %v1647
    %1649 = vdwg.mxu0
    %1650 = vmatpush.bf16.msra.mxu0 %v1273
    %1651 = vmatpush.bf16.msra.mxu0 %v1271
    %1652 = vmatpush.bf16.msra.mxu0 %v1269
    %1653 = vmatpush.bf16.msra.mxu0 %v1267
    %1654 = vmatpush.bf16.msra.mxu0 %v1265
    %1655 = vmatpush.bf16.msra.mxu0 %v1263
    %1656 = vmatpush.bf16.msra.mxu0 %v1261
    %1657 = vmatpush.bf16.msra.mxu0 %v1259
    %1658 = vmatmul.bf16.gmra.mxu0 %v916
    %v1659 = vpop.f32.mrf.mxu0
    %v1660 = vadd.f32 %v1631, %v1659
    %v1661 = vpop.f32.mrf.mxu0
    %v1662 = vadd.f32 %v1633, %v1661
    %1663 = vmatmul.bf16.gmra.mxu0 %v922
    %v1664 = vpop.f32.mrf.mxu0
    %v1665 = vadd.f32 %v1636, %v1664
    %v1666 = vpop.f32.mrf.mxu0
    %v1667 = vadd.f32 %v1638, %v1666
    %1668 = vmatmul.bf16.gmra.mxu0 %v928
    %v1669 = vpop.f32.mrf.mxu0
    %v1670 = vadd.f32 %v1641, %v1669
    %v1671 = vpop.f32.mrf.mxu0
    %v1672 = vadd.f32 %v1643, %v1671
    %1673 = vmatmul.bf16.gmra.mxu0 %v934
    %v1674 = vpop.f32.mrf.mxu0
    %v1675 = vadd.f32 %v1646, %v1674
    %v1676 = vpop.f32.mrf.mxu0
    %v1677 = vadd.f32 %v1648, %v1676
    %1678 = vdwg.mxu0
    %1679 = vmatpush.bf16.msra.mxu0 %v1289
    %1680 = vmatpush.bf16.msra.mxu0 %v1287
    %1681 = vmatpush.bf16.msra.mxu0 %v1285
    %1682 = vmatpush.bf16.msra.mxu0 %v1283
    %1683 = vmatpush.bf16.msra.mxu0 %v1281
    %1684 = vmatpush.bf16.msra.mxu0 %v1279
    %1685 = vmatpush.bf16.msra.mxu0 %v1277
    %1686 = vmatpush.bf16.msra.mxu0 %v1275
    %1687 = vmatmul.bf16.gmra.mxu0 %v917
    %v1688 = vpop.f32.mrf.mxu0
    %v1689 = vadd.f32 %v1660, %v1688
    %v1690 = vpop.f32.mrf.mxu0
    %v1691 = vadd.f32 %v1662, %v1690
    %1692 = vmatmul.bf16.gmra.mxu0 %v923
    %v1693 = vpop.f32.mrf.mxu0
    %v1694 = vadd.f32 %v1665, %v1693
    %v1695 = vpop.f32.mrf.mxu0
    %v1696 = vadd.f32 %v1667, %v1695
    %1697 = vmatmul.bf16.gmra.mxu0 %v929
    %v1698 = vpop.f32.mrf.mxu0
    %v1699 = vadd.f32 %v1670, %v1698
    %v1700 = vpop.f32.mrf.mxu0
    %v1701 = vadd.f32 %v1672, %v1700
    %1702 = vmatmul.bf16.gmra.mxu0 %v935
    %v1703 = vpop.f32.mrf.mxu0
    %v1704 = vadd.f32 %v1675, %v1703
    %v1705 = vpop.f32.mrf.mxu0
    %v1706 = vadd.f32 %v1677, %v1705
    %1707 = vdwg.mxu0
    %1708 = vmatpush.bf16.msra.mxu0 %v1305
    %1709 = vmatpush.bf16.msra.mxu0 %v1303
    %1710 = vmatpush.bf16.msra.mxu0 %v1301
    %1711 = vmatpush.bf16.msra.mxu0 %v1299
    %1712 = vmatpush.bf16.msra.mxu0 %v1297
    %1713 = vmatpush.bf16.msra.mxu0 %v1295
    %1714 = vmatpush.bf16.msra.mxu0 %v1293
    %1715 = vmatpush.bf16.msra.mxu0 %v1291
    %1716 = vmatmul.bf16.gmra.mxu0 %v918
    %v1717 = vpop.f32.mrf.mxu0
    %v1718 = vadd.f32 %v1689, %v1717
    %v1719 = vpop.f32.mrf.mxu0
    %v1720 = vadd.f32 %v1691, %v1719
    %1721 = vmatmul.bf16.gmra.mxu0 %v924
    %v1722 = vpop.f32.mrf.mxu0
    %v1723 = vadd.f32 %v1694, %v1722
    %v1724 = vpop.f32.mrf.mxu0
    %v1725 = vadd.f32 %v1696, %v1724
    %1726 = vmatmul.bf16.gmra.mxu0 %v930
    %v1727 = vpop.f32.mrf.mxu0
    %v1728 = vadd.f32 %v1699, %v1727
    %v1729 = vpop.f32.mrf.mxu0
    %v1730 = vadd.f32 %v1701, %v1729
    %1731 = vmatmul.bf16.gmra.mxu0 %v936
    %v1732 = vpop.f32.mrf.mxu0
    %v1733 = vadd.f32 %v1704, %v1732
    %v1734 = vpop.f32.mrf.mxu0
    %v1735 = vadd.f32 %v1706, %v1734
    %1736 = vdwg.mxu0
    %1737 = vmatpush.bf16.msra.mxu0 %v1321
    %1738 = vmatpush.bf16.msra.mxu0 %v1319
    %1739 = vmatpush.bf16.msra.mxu0 %v1317
    %1740 = vmatpush.bf16.msra.mxu0 %v1315
    %1741 = vmatpush.bf16.msra.mxu0 %v1313
    %1742 = vmatpush.bf16.msra.mxu0 %v1311
    %1743 = vmatpush.bf16.msra.mxu0 %v1309
    %1744 = vmatpush.bf16.msra.mxu0 %v1307
    %1745 = vmatmul.bf16.gmra.mxu0 %v919
    %v1746 = vpop.f32.mrf.mxu0
    %v1747 = vadd.f32 %v1718, %v1746
    %v1748 = vpop.f32.mrf.mxu0
    %v1749 = vadd.f32 %v1720, %v1748
    %1750 = vmatmul.bf16.gmra.mxu0 %v925
    %v1751 = vpop.f32.mrf.mxu0
    %v1752 = vadd.f32 %v1723, %v1751
    %v1753 = vpop.f32.mrf.mxu0
    %v1754 = vadd.f32 %v1725, %v1753
    %1755 = vmatmul.bf16.gmra.mxu0 %v931
    %v1756 = vpop.f32.mrf.mxu0
    %v1757 = vadd.f32 %v1728, %v1756
    %v1758 = vpop.f32.mrf.mxu0
    %v1759 = vadd.f32 %v1730, %v1758
    %1760 = vmatmul.bf16.gmra.mxu0 %v937
    %v1761 = vpop.f32.mrf.mxu0
    %v1762 = vadd.f32 %v1733, %v1761
    %v1763 = vpop.f32.mrf.mxu0
    %v1764 = vadd.f32 %v1735, %v1763
    %1765 = vdwg.mxu0
    %v1766 = vld [vmem:[#allocation11 + $0x1] ss:$0 sm:$0xff]
    %v1767 = vmax.f32 %v1573, %v1747
    %v1768 = vmax.f32 %v1575, %v1749
    %v1769 = vmax.f32 %v1578, %v1752
    %v1770 = vmax.f32 %v1580, %v1754
    %v1771 = vmax.f32 %v1583, %v1757
    %v1772 = vmax.f32 %v1585, %v1759
    %v1773 = vmax.f32 %v1588, %v1762
    %v1774 = vmax.f32 %v1590, %v1764
    %v1775 = vadd.f32 %v1767, %v1766
    %v1776 = vadd.f32 %v1768, %v1766
    %v1777 = vadd.f32 %v1769, %v1766
    %v1778 = vadd.f32 %v1770, %v1766
    %v1779 = vadd.f32 %v1771, %v1766
    %v1780 = vadd.f32 %v1772, %v1766
    %v1781 = vadd.f32 %v1773, %v1766
    %v1782 = vadd.f32 %v1774, %v1766
    %v1783 = vmax.f32 %v1775, 0.0
    %v1784 = vmax.f32 %v1776, 0.0
    %v1785 = vmax.f32 %v1777, 0.0
    %v1786 = vmax.f32 %v1778, 0.0
    %v1787 = vmax.f32 %v1779, 0.0
    %v1788 = vmax.f32 %v1780, 0.0
    %v1789 = vmax.f32 %v1781, 0.0
    %v1790 = vmax.f32 %v1782, 0.0
    %1791 = vst [vmem:[#allocation5] sm:$0xff] %v1783
    %1792 = vst [vmem:[#allocation5 + $0x8] sm:$0xff] %v1784
    %1793 = vst [vmem:[#allocation5 + $0x10] sm:$0xff] %v1785
    %1794 = vst [vmem:[#allocation5 + $0x18] sm:$0xff] %v1786
    %1795 = vst [vmem:[#allocation5 + $0x20] sm:$0xff] %v1787
    %1796 = vst [vmem:[#allocation5 + $0x28] sm:$0xff] %v1788
    %1797 = vst [vmem:[#allocation5 + $0x30] sm:$0xff] %v1789
    %1798 = vst [vmem:[#allocation5 + $0x38] sm:$0xff] %v1790
    %v1799 = vld [vmem:[#allocation5] ss:$2 sm:$0xff]
    %s1800 = scalar_lea.vmem [#allocation5], 16
    %v1801 = vld [vmem:[%s1800] ss:$2 sm:$0xff]
    %s1802 = scalar_lea.vmem [#allocation5], 32
    %v1803 = vld [vmem:[%s1802] ss:$2 sm:$0xff]
    %s1804 = scalar_lea.vmem [#allocation5], 48
    %v1805 = vld [vmem:[%s1804] ss:$2 sm:$0xff]
    %s1806 = scalar_lea.vmem [#allocation5], 1
    %v1807 = vld [vmem:[%s1806] ss:$2 sm:$0xff]
    %s1808 = scalar_lea.vmem [#allocation5], 17
    %v1809 = vld [vmem:[%s1808] ss:$2 sm:$0xff]
    %s1810 = scalar_lea.vmem [#allocation5], 33
    %v1811 = vld [vmem:[%s1810] ss:$2 sm:$0xff]
    %s1812 = scalar_lea.vmem [#allocation5], 49
    %v1813 = vld [vmem:[%s1812] ss:$2 sm:$0xff]
    %v1814 = vmax.f32 %v1799, %v1807
    %v1815 = vmax.f32 %v1801, %v1809
    %v1816 = vmax.f32 %v1803, %v1811
    %v1817 = vmax.f32 %v1805, %v1813
    %1818 = vst [vmem:[#allocation4 + $0x8] sm:$0xff] %v1814
    %1819 = vst [vmem:[#allocation4 + $0x38] sm:$0xff] %v1815
    %v1822 = vrot.slane %v1814, 7
    %v1823 = vrot.slane %v1815, 7
    %v1824 = vsel %vm617, %v1822, %v1823
    %1827 = vst [vmem:[#allocation4] sm:$0xfe] %v1822
    %1828 = vst [vmem:[#allocation4 + $0x30] sm:$0xff] %v1824
    %1829 = vst [vmem:[#allocation4] sm:$0x1] 0.0
    %v1830 = vrot.slane %v1814, 1
    %v1831 = vrot.slane %v1815, 1
    %v1832 = vsel %vm654, %v1830, %v1831
    %1835 = vst [vmem:[#allocation4 + $0x10] sm:$0xff] %v1832
    %1836 = vst [vmem:[#allocation4 + $0x40] sm:$0x7f] %v1831
    %1837 = vst [vmem:[#allocation4 + $0x47] sm:$0x1] 0.0
    %1838 = vst [vmem:[#allocation4 + $0x68] sm:$0xff] %v1816
    %1839 = vst [vmem:[#allocation4 + $0x98] sm:$0xff] %v1817
    %v1842 = vrot.slane %v1816, 7
    %v1843 = vrot.slane %v1817, 7
    %v1844 = vsel %vm617, %v1842, %v1843
    %1847 = vst [vmem:[#allocation4 + $0x60] sm:$0xfe] %v1842
    %1848 = vst [vmem:[#allocation4 + $0x90] sm:$0xff] %v1844
    %1849 = vst [vmem:[#allocation4 + $0x60] sm:$0x1] 0.0
    %v1850 = vrot.slane %v1816, 1
    %v1851 = vrot.slane %v1817, 1
    %v1852 = vsel %vm654, %v1850, %v1851
    %1855 = vst [vmem:[#allocation4 + $0x70] sm:$0xff] %v1852
    %1856 = vst [vmem:[#allocation4 + $0xa0] sm:$0x7f] %v1851
    %1857 = vst [vmem:[#allocation4 + $0xa7] sm:$0x1] 0.0
    %v1858 = vld [vmem:[#allocation6 + $0x480] sm:$0xff]
    %v1859 = vld [vmem:[#allocation6 + $0x488] sm:$0xff]
    %v1860 = vld [vmem:[#allocation6 + $0x490] sm:$0xff]
    %v1861 = vld [vmem:[#allocation6 + $0x498] sm:$0xff]
    %v1862 = vld [vmem:[#allocation6 + $0x4a0] sm:$0xff]
    %v1863 = vld [vmem:[#allocation6 + $0x4a8] sm:$0xff]
    %v1864 = vld [vmem:[#allocation6 + $0x4b0] sm:$0xff]
    %v1865 = vld [vmem:[#allocation6 + $0x4b8] sm:$0xff]
    %v1866 = vld [vmem:[#allocation6 + $0x4c0] sm:$0xff]
    %v1867 = vld [vmem:[#allocation6 + $0x4c8] sm:$0xff]
    %v1868 = vld [vmem:[#allocation6 + $0x4d0] sm:$0xff]
    %v1869 = vld [vmem:[#allocation6 + $0x4d8] sm:$0xff]
    %v1870 = vld [vmem:[#allocation6 + $0x4e0] sm:$0xff]
    %v1871 = vld [vmem:[#allocation6 + $0x4e8] sm:$0xff]
    %v1872 = vld [vmem:[#allocation6 + $0x4f0] sm:$0xff]
    %v1873 = vld [vmem:[#allocation6 + $0x4f8] sm:$0xff]
    %v1874 = vld [vmem:[#allocation6 + $0x500] sm:$0xff]
    %v1875 = vld [vmem:[#allocation6 + $0x508] sm:$0xff]
    %v1876 = vld [vmem:[#allocation6 + $0x510] sm:$0xff]
    %v1877 = vld [vmem:[#allocation6 + $0x518] sm:$0xff]
    %v1878 = vld [vmem:[#allocation6 + $0x520] sm:$0xff]
    %v1879 = vld [vmem:[#allocation6 + $0x528] sm:$0xff]
    %v1880 = vld [vmem:[#allocation6 + $0x530] sm:$0xff]
    %v1881 = vld [vmem:[#allocation6 + $0x538] sm:$0xff]
    %v1882 = vld [vmem:[#allocation6 + $0x540] sm:$0xff]
    %v1883 = vld [vmem:[#allocation6 + $0x548] sm:$0xff]
    %v1884 = vld [vmem:[#allocation6 + $0x550] sm:$0xff]
    %v1885 = vld [vmem:[#allocation6 + $0x558] sm:$0xff]
    %v1886 = vld [vmem:[#allocation6 + $0x560] sm:$0xff]
    %v1887 = vld [vmem:[#allocation6 + $0x568] sm:$0xff]
    %v1888 = vld [vmem:[#allocation6 + $0x570] sm:$0xff]
    %v1889 = vld [vmem:[#allocation6 + $0x578] sm:$0xff]
    %v1890 = vld [vmem:[#allocation6 + $0x580] sm:$0xff]
    %v1891 = vld [vmem:[#allocation6 + $0x588] sm:$0xff]
    %v1892 = vld [vmem:[#allocation6 + $0x590] sm:$0xff]
    %v1893 = vld [vmem:[#allocation6 + $0x598] sm:$0xff]
    %v1894 = vld [vmem:[#allocation6 + $0x5a0] sm:$0xff]
    %v1895 = vld [vmem:[#allocation6 + $0x5a8] sm:$0xff]
    %v1896 = vld [vmem:[#allocation6 + $0x5b0] sm:$0xff]
    %v1897 = vld [vmem:[#allocation6 + $0x5b8] sm:$0xff]
    %v1898 = vld [vmem:[#allocation6 + $0x5c0] sm:$0xff]
    %v1899 = vld [vmem:[#allocation6 + $0x5c8] sm:$0xff]
    %v1900 = vld [vmem:[#allocation6 + $0x5d0] sm:$0xff]
    %v1901 = vld [vmem:[#allocation6 + $0x5d8] sm:$0xff]
    %v1902 = vld [vmem:[#allocation6 + $0x5e0] sm:$0xff]
    %v1903 = vld [vmem:[#allocation6 + $0x5e8] sm:$0xff]
    %v1904 = vld [vmem:[#allocation6 + $0x5f0] sm:$0xff]
    %v1905 = vld [vmem:[#allocation6 + $0x5f8] sm:$0xff]
    %v1906 = vld [vmem:[#allocation4] sm:$0xff]
    %v1907 = vld [vmem:[#allocation4 + $0x8] sm:$0xff]
    %v1908 = vld [vmem:[#allocation4 + $0x10] sm:$0xff]
    %v1909 = vld [vmem:[#allocation4 + $0x30] sm:$0xff]
    %v1910 = vld [vmem:[#allocation4 + $0x38] sm:$0xff]
    %v1911 = vld [vmem:[#allocation4 + $0x40] sm:$0xff]
    %v1912 = vld [vmem:[#allocation4 + $0x60] sm:$0xff]
    %v1913 = vld [vmem:[#allocation4 + $0x68] sm:$0xff]
    %v1914 = vld [vmem:[#allocation4 + $0x70] sm:$0xff]
    %v1915 = vld [vmem:[#allocation4 + $0x90] sm:$0xff]
    %v1916 = vld [vmem:[#allocation4 + $0x98] sm:$0xff]
    %v1917 = vld [vmem:[#allocation4 + $0xa0] sm:$0xff]
    %v1918 = vpack.c.bf16 %v1909, %v1906
    %v1919 = vpack.c.bf16 %v1910, %v1907
    %v1920 = vpack.c.bf16 %v1911, %v1908
    %v1921 = vpack.c.bf16 %v1915, %v1912
    %v1922 = vpack.c.bf16 %v1916, %v1913
    %v1923 = vpack.c.bf16 %v1917, %v1914
    %s1924 = scalar_lea.vmem [#allocation11], 2
    %v1925 = vld [vmem:[%s1924] ss:$8 sm:$0x3]
    %v1927 = vperm.slane %v1925, 0
    %v1928 = vperm.slane %v1925, 1
    %v1979 = vunpack.c.l.b16 %v1858
    %v1980 = vunpack.c.h.b16 %v1858
    %v1981 = vunpack.c.l.b16 %v1859
    %v1982 = vunpack.c.h.b16 %v1859
    %v1983 = vunpack.c.l.b16 %v1860
    %v1984 = vunpack.c.h.b16 %v1860
    %v1985 = vunpack.c.l.b16 %v1861
    %v1986 = vunpack.c.h.b16 %v1861
    %v1987 = vunpack.c.l.b16 %v1862
    %v1988 = vunpack.c.h.b16 %v1862
    %v1989 = vunpack.c.l.b16 %v1863
    %v1990 = vunpack.c.h.b16 %v1863
    %v1991 = vunpack.c.l.b16 %v1864
    %v1992 = vunpack.c.h.b16 %v1864
    %v1993 = vunpack.c.l.b16 %v1865
    %v1994 = vunpack.c.h.b16 %v1865
    %v1995 = vunpack.c.l.b16 %v1866
    %v1996 = vunpack.c.h.b16 %v1866
    %v1997 = vunpack.c.l.b16 %v1867
    %v1998 = vunpack.c.h.b16 %v1867
    %v1999 = vunpack.c.l.b16 %v1868
    %v2000 = vunpack.c.h.b16 %v1868
    %v2001 = vunpack.c.l.b16 %v1869
    %v2002 = vunpack.c.h.b16 %v1869
    %v2003 = vunpack.c.l.b16 %v1870
    %v2004 = vunpack.c.h.b16 %v1870
    %v2005 = vunpack.c.l.b16 %v1871
    %v2006 = vunpack.c.h.b16 %v1871
    %v2007 = vunpack.c.l.b16 %v1872
    %v2008 = vunpack.c.h.b16 %v1872
    %v2009 = vunpack.c.l.b16 %v1873
    %v2010 = vunpack.c.h.b16 %v1873
    %v2011 = vunpack.c.l.b16 %v1874
    %v2012 = vunpack.c.h.b16 %v1874
    %v2013 = vunpack.c.l.b16 %v1875
    %v2014 = vunpack.c.h.b16 %v1875
    %v2015 = vunpack.c.l.b16 %v1876
    %v2016 = vunpack.c.h.b16 %v1876
    %v2017 = vunpack.c.l.b16 %v1877
    %v2018 = vunpack.c.h.b16 %v1877
    %v2019 = vunpack.c.l.b16 %v1878
    %v2020 = vunpack.c.h.b16 %v1878
    %v2021 = vunpack.c.l.b16 %v1879
    %v2022 = vunpack.c.h.b16 %v1879
    %v2023 = vunpack.c.l.b16 %v1880
    %v2024 = vunpack.c.h.b16 %v1880
    %v2025 = vunpack.c.l.b16 %v1881
    %v2026 = vunpack.c.h.b16 %v1881
    %v2027 = vunpack.c.l.b16 %v1882
    %v2028 = vunpack.c.h.b16 %v1882
    %v2029 = vunpack.c.l.b16 %v1883
    %v2030 = vunpack.c.h.b16 %v1883
    %v2031 = vunpack.c.l.b16 %v1884
    %v2032 = vunpack.c.h.b16 %v1884
    %v2033 = vunpack.c.l.b16 %v1885
    %v2034 = vunpack.c.h.b16 %v1885
    %v2035 = vunpack.c.l.b16 %v1886
    %v2036 = vunpack.c.h.b16 %v1886
    %v2037 = vunpack.c.l.b16 %v1887
    %v2038 = vunpack.c.h.b16 %v1887
    %v2039 = vunpack.c.l.b16 %v1888
    %v2040 = vunpack.c.h.b16 %v1888
    %v2041 = vunpack.c.l.b16 %v1889
    %v2042 = vunpack.c.h.b16 %v1889
    %v2043 = vunpack.c.l.b16 %v1890
    %v2044 = vunpack.c.h.b16 %v1890
    %v2045 = vunpack.c.l.b16 %v1891
    %v2046 = vunpack.c.h.b16 %v1891
    %v2047 = vunpack.c.l.b16 %v1892
    %v2048 = vunpack.c.h.b16 %v1892
    %v2049 = vunpack.c.l.b16 %v1893
    %v2050 = vunpack.c.h.b16 %v1893
    %v2051 = vunpack.c.l.b16 %v1894
    %v2052 = vunpack.c.h.b16 %v1894
    %v2053 = vunpack.c.l.b16 %v1895
    %v2054 = vunpack.c.h.b16 %v1895
    %v2055 = vunpack.c.l.b16 %v1896
    %v2056 = vunpack.c.h.b16 %v1896
    %v2057 = vunpack.c.l.b16 %v1897
    %v2058 = vunpack.c.h.b16 %v1897
    %v2059 = vunpack.c.l.b16 %v1898
    %v2060 = vunpack.c.h.b16 %v1898
    %v2061 = vunpack.c.l.b16 %v1899
    %v2062 = vunpack.c.h.b16 %v1899
    %v2063 = vunpack.c.l.b16 %v1900
    %v2064 = vunpack.c.h.b16 %v1900
    %v2065 = vunpack.c.l.b16 %v1901
    %v2066 = vunpack.c.h.b16 %v1901
    %v2067 = vunpack.c.l.b16 %v1902
    %v2068 = vunpack.c.h.b16 %v1902
    %v2069 = vunpack.c.l.b16 %v1903
    %v2070 = vunpack.c.h.b16 %v1903
    %v2071 = vunpack.c.l.b16 %v1904
    %v2072 = vunpack.c.h.b16 %v1904
    %v2073 = vunpack.c.l.b16 %v1905
    %v2074 = vunpack.c.h.b16 %v1905
    %v2075 = vpack.c.b16 %v1981, %v1979
    %v2076 = vpack.c.b16 %v1982, %v1980
    %v2077 = vpack.c.b16 %v1985, %v1983
    %v2078 = vpack.c.b16 %v1986, %v1984
    %v2079 = vpack.c.b16 %v1989, %v1987
    %v2080 = vpack.c.b16 %v1990, %v1988
    %v2081 = vpack.c.b16 %v1993, %v1991
    %v2082 = vpack.c.b16 %v1994, %v1992
    %v2083 = vpack.c.b16 %v1997, %v1995
    %v2084 = vpack.c.b16 %v1998, %v1996
    %v2085 = vpack.c.b16 %v2001, %v1999
    %v2086 = vpack.c.b16 %v2002, %v2000
    %v2087 = vpack.c.b16 %v2005, %v2003
    %v2088 = vpack.c.b16 %v2006, %v2004
    %v2089 = vpack.c.b16 %v2009, %v2007
    %v2090 = vpack.c.b16 %v2010, %v2008
    %v2091 = vpack.c.b16 %v2013, %v2011
    %v2092 = vpack.c.b16 %v2014, %v2012
    %v2093 = vpack.c.b16 %v2017, %v2015
    %v2094 = vpack.c.b16 %v2018, %v2016
    %v2095 = vpack.c.b16 %v2021, %v2019
    %v2096 = vpack.c.b16 %v2022, %v2020
    %v2097 = vpack.c.b16 %v2025, %v2023
    %v2098 = vpack.c.b16 %v2026, %v2024
    %v2099 = vpack.c.b16 %v2029, %v2027
    %v2100 = vpack.c.b16 %v2030, %v2028
    %v2101 = vpack.c.b16 %v2033, %v2031
    %v2102 = vpack.c.b16 %v2034, %v2032
    %v2103 = vpack.c.b16 %v2037, %v2035
    %v2104 = vpack.c.b16 %v2038, %v2036
    %v2105 = vpack.c.b16 %v2041, %v2039
    %v2106 = vpack.c.b16 %v2042, %v2040
    %v2107 = vpack.c.b16 %v2045, %v2043
    %v2108 = vpack.c.b16 %v2046, %v2044
    %v2109 = vpack.c.b16 %v2049, %v2047
    %v2110 = vpack.c.b16 %v2050, %v2048
    %v2111 = vpack.c.b16 %v2053, %v2051
    %v2112 = vpack.c.b16 %v2054, %v2052
    %v2113 = vpack.c.b16 %v2057, %v2055
    %v2114 = vpack.c.b16 %v2058, %v2056
    %v2115 = vpack.c.b16 %v2061, %v2059
    %v2116 = vpack.c.b16 %v2062, %v2060
    %v2117 = vpack.c.b16 %v2065, %v2063
    %v2118 = vpack.c.b16 %v2066, %v2064
    %v2119 = vpack.c.b16 %v2069, %v2067
    %v2120 = vpack.c.b16 %v2070, %v2068
    %v2121 = vpack.c.b16 %v2073, %v2071
    %v2122 = vpack.c.b16 %v2074, %v2072
    %2171 = vmatpush.bf16.msra.mxu0 %v2089
    %2172 = vmatpush.bf16.msra.mxu0 %v2087
    %2173 = vmatpush.bf16.msra.mxu0 %v2085
    %2174 = vmatpush.bf16.msra.mxu0 %v2083
    %2175 = vmatpush.bf16.msra.mxu0 %v2081
    %2176 = vmatpush.bf16.msra.mxu0 %v2079
    %2177 = vmatpush.bf16.msra.mxu0 %v2077
    %2178 = vmatpush.bf16.msra.mxu0 %v2075
    %2179 = vmatmul.bf16.gmra.mxu0 %v1918
    %v2180 = vpop.f32.mrf.mxu0
    %v2181 = vadd.f32 %v1927, %v2180
    %v2182 = vpop.f32.mrf.mxu0
    %v2183 = vadd.f32 %v1927, %v2182
    %2184 = vmatmul.bf16.gmra.mxu0 %v1921
    %v2185 = vpop.f32.mrf.mxu0
    %v2186 = vadd.f32 %v1927, %v2185
    %v2187 = vpop.f32.mrf.mxu0
    %v2188 = vadd.f32 %v1927, %v2187
    %2189 = vdwg.mxu0
    %2190 = vmatpush.bf16.msra.mxu0 %v2105
    %2191 = vmatpush.bf16.msra.mxu0 %v2103
    %2192 = vmatpush.bf16.msra.mxu0 %v2101
    %2193 = vmatpush.bf16.msra.mxu0 %v2099
    %2194 = vmatpush.bf16.msra.mxu0 %v2097
    %2195 = vmatpush.bf16.msra.mxu0 %v2095
    %2196 = vmatpush.bf16.msra.mxu0 %v2093
    %2197 = vmatpush.bf16.msra.mxu0 %v2091
    %2198 = vmatmul.bf16.gmra.mxu0 %v1919
    %v2199 = vpop.f32.mrf.mxu0
    %v2200 = vadd.f32 %v2181, %v2199
    %v2201 = vpop.f32.mrf.mxu0
    %v2202 = vadd.f32 %v2183, %v2201
    %2203 = vmatmul.bf16.gmra.mxu0 %v1922
    %v2204 = vpop.f32.mrf.mxu0
    %v2205 = vadd.f32 %v2186, %v2204
    %v2206 = vpop.f32.mrf.mxu0
    %v2207 = vadd.f32 %v2188, %v2206
    %2208 = vdwg.mxu0
    %2209 = vmatpush.bf16.msra.mxu0 %v2121
    %2210 = vmatpush.bf16.msra.mxu0 %v2119
    %2211 = vmatpush.bf16.msra.mxu0 %v2117
    %2212 = vmatpush.bf16.msra.mxu0 %v2115
    %2213 = vmatpush.bf16.msra.mxu0 %v2113
    %2214 = vmatpush.bf16.msra.mxu0 %v2111
    %2215 = vmatpush.bf16.msra.mxu0 %v2109
    %2216 = vmatpush.bf16.msra.mxu0 %v2107
    %2217 = vmatmul.bf16.gmra.mxu0 %v1920
    %v2218 = vpop.f32.mrf.mxu0
    %v2219 = vadd.f32 %v2200, %v2218
    %v2220 = vpop.f32.mrf.mxu0
    %v2221 = vadd.f32 %v2202, %v2220
    %2222 = vmatmul.bf16.gmra.mxu0 %v1923
    %v2223 = vpop.f32.mrf.mxu0
    %v2224 = vadd.f32 %v2205, %v2223
    %v2225 = vpop.f32.mrf.mxu0
    %v2226 = vadd.f32 %v2207, %v2225
    %2227 = vdwg.mxu0
    %2228 = vmatpush.bf16.msra.mxu0 %v2090
    %2229 = vmatpush.bf16.msra.mxu0 %v2088
    %2230 = vmatpush.bf16.msra.mxu0 %v2086
    %2231 = vmatpush.bf16.msra.mxu0 %v2084
    %2232 = vmatpush.bf16.msra.mxu0 %v2082
    %2233 = vmatpush.bf16.msra.mxu0 %v2080
    %2234 = vmatpush.bf16.msra.mxu0 %v2078
    %2235 = vmatpush.bf16.msra.mxu0 %v2076
    %2236 = vmatmul.bf16.gmra.mxu0 %v1918
    %v2237 = vpop.f32.mrf.mxu0
    %v2238 = vadd.f32 %v1928, %v2237
    %v2239 = vpop.f32.mrf.mxu0
    %v2240 = vadd.f32 %v1928, %v2239
    %2241 = vmatmul.bf16.gmra.mxu0 %v1921
    %v2242 = vpop.f32.mrf.mxu0
    %v2243 = vadd.f32 %v1928, %v2242
    %v2244 = vpop.f32.mrf.mxu0
    %v2245 = vadd.f32 %v1928, %v2244
    %2246 = vdwg.mxu0
    %2247 = vmatpush.bf16.msra.mxu0 %v2106
    %2248 = vmatpush.bf16.msra.mxu0 %v2104
    %2249 = vmatpush.bf16.msra.mxu0 %v2102
    %2250 = vmatpush.bf16.msra.mxu0 %v2100
    %2251 = vmatpush.bf16.msra.mxu0 %v2098
    %2252 = vmatpush.bf16.msra.mxu0 %v2096
    %2253 = vmatpush.bf16.msra.mxu0 %v2094
    %2254 = vmatpush.bf16.msra.mxu0 %v2092
    %2255 = vmatmul.bf16.gmra.mxu0 %v1919
    %v2256 = vpop.f32.mrf.mxu0
    %v2257 = vadd.f32 %v2238, %v2256
    %v2258 = vpop.f32.mrf.mxu0
    %v2259 = vadd.f32 %v2240, %v2258
    %2260 = vmatmul.bf16.gmra.mxu0 %v1922
    %v2261 = vpop.f32.mrf.mxu0
    %v2262 = vadd.f32 %v2243, %v2261
    %v2263 = vpop.f32.mrf.mxu0
    %v2264 = vadd.f32 %v2245, %v2263
    %2265 = vdwg.mxu0
    %2266 = vmatpush.bf16.msra.mxu0 %v2122
    %2267 = vmatpush.bf16.msra.mxu0 %v2120
    %2268 = vmatpush.bf16.msra.mxu0 %v2118
    %2269 = vmatpush.bf16.msra.mxu0 %v2116
    %2270 = vmatpush.bf16.msra.mxu0 %v2114
    %2271 = vmatpush.bf16.msra.mxu0 %v2112
    %2272 = vmatpush.bf16.msra.mxu0 %v2110
    %2273 = vmatpush.bf16.msra.mxu0 %v2108
    %2274 = vmatmul.bf16.gmra.mxu0 %v1920
    %v2275 = vpop.f32.mrf.mxu0
    %v2276 = vadd.f32 %v2257, %v2275
    %v2277 = vpop.f32.mrf.mxu0
    %v2278 = vadd.f32 %v2259, %v2277
    %2279 = vmatmul.bf16.gmra.mxu0 %v1923
    %v2280 = vpop.f32.mrf.mxu0
    %v2281 = vadd.f32 %v2262, %v2280
    %v2282 = vpop.f32.mrf.mxu0
    %v2283 = vadd.f32 %v2264, %v2282
    %2284 = vdwg.mxu0
    %v2285 = vmax.f32 %v2219, 0.0
    %v2286 = vmax.f32 %v2276, 0.0
    %v2287 = vmax.f32 %v2221, 0.0
    %v2288 = vmax.f32 %v2278, 0.0
    %v2289 = vmax.f32 %v2224, 0.0
    %v2290 = vmax.f32 %v2281, 0.0
    %v2291 = vmax.f32 %v2226, 0.0
    %v2292 = vmax.f32 %v2283, 0.0
    %2293 = vst [vmem:[#allocation4 + $0x10] sm:$0xff] %v2285
    %2294 = vst [vmem:[#allocation4 + $0x18] sm:$0xff] %v2286
    %2295 = vst [vmem:[#allocation4 + $0x40] sm:$0xff] %v2287
    %2296 = vst [vmem:[#allocation4 + $0x48] sm:$0xff] %v2288
    %v2301 = vrot.slane %v2285, 7
    %v2302 = vrot.slane %v2286, 7
    %v2303 = vrot.slane %v2287, 7
    %v2304 = vsel %vm617, %v2301, %v2303
    %v2305 = vrot.slane %v2288, 7
    %v2306 = vsel %vm617, %v2302, %v2305
    %2311 = vst [vmem:[#allocation4] sm:$0xfe] %v2301
    %2312 = vst [vmem:[#allocation4 + $0x8] sm:$0xfe] %v2302
    %2313 = vst [vmem:[#allocation4 + $0x30] sm:$0xff] %v2304
    %2314 = vst [vmem:[#allocation4 + $0x38] sm:$0xff] %v2306
    %2315 = vst.msk [vmem:[#allocation4] ss:$8 sm:$0x3] %vm651, 0.0
    %2316 = vst.msk [vmem:[#allocation4] ss:$8 sm:$0x0] %vm651, 0.0
    %v2317 = vrot.slane %v2285, 1
    %v2318 = vrot.slane %v2287, 1
    %v2319 = vsel %vm654, %v2317, %v2318
    %v2320 = vrot.slane %v2286, 1
    %v2321 = vrot.slane %v2288, 1
    %v2322 = vsel %vm654, %v2320, %v2321
    %2327 = vst [vmem:[#allocation4 + $0x20] sm:$0xff] %v2319
    %2328 = vst [vmem:[#allocation4 + $0x28] sm:$0xff] %v2322
    %2329 = vst [vmem:[#allocation4 + $0x50] sm:$0x7f] %v2318
    %2330 = vst [vmem:[#allocation4 + $0x58] sm:$0x7f] %v2321
    %s2331 = scalar_lea.vmem [#allocation4], 87
    %2332 = vst.msk [vmem:[%s2331] ss:$8 sm:$0x3] %vm651, 0.0
    %2333 = vst.msk [vmem:[%s2331] ss:$8 sm:$0x0] %vm651, 0.0
    %2334 = vst [vmem:[#allocation4 + $0x70] sm:$0xff] %v2289
    %2335 = vst [vmem:[#allocation4 + $0x78] sm:$0xff] %v2290
    %2336 = vst [vmem:[#allocation4 + $0xa0] sm:$0xff] %v2291
    %2337 = vst [vmem:[#allocation4 + $0xa8] sm:$0xff] %v2292
    %v2342 = vrot.slane %v2289, 7
    %v2343 = vrot.slane %v2290, 7
    %v2344 = vrot.slane %v2291, 7
    %v2345 = vsel %vm617, %v2342, %v2344
    %v2346 = vrot.slane %v2292, 7
    %v2347 = vsel %vm617, %v2343, %v2346
    %2352 = vst [vmem:[#allocation4 + $0x60] sm:$0xfe] %v2342
    %2353 = vst [vmem:[#allocation4 + $0x68] sm:$0xfe] %v2343
    %2354 = vst [vmem:[#allocation4 + $0x90] sm:$0xff] %v2345
    %2355 = vst [vmem:[#allocation4 + $0x98] sm:$0xff] %v2347
    %s2356 = scalar_lea.vmem [#allocation4], 96
    %2357 = vst.msk [vmem:[%s2356] ss:$8 sm:$0x3] %vm651, 0.0
    %2358 = vst.msk [vmem:[%s2356] ss:$8 sm:$0x0] %vm651, 0.0
    %v2359 = vrot.slane %v2289, 1
    %v2360 = vrot.slane %v2291, 1
    %v2361 = vsel %vm654, %v2359, %v2360
    %v2362 = vrot.slane %v2290, 1
    %v2363 = vrot.slane %v2292, 1
    %v2364 = vsel %vm654, %v2362, %v2363
    %2369 = vst [vmem:[#allocation4 + $0x80] sm:$0xff] %v2361
    %2370 = vst [vmem:[#allocation4 + $0x88] sm:$0xff] %v2364
    %2371 = vst [vmem:[#allocation4 + $0xb0] sm:$0x7f] %v2360
    %2372 = vst [vmem:[#allocation4 + $0xb8] sm:$0x7f] %v2363
    %2373 = vst.msk [vmem:[%s685] ss:$8 sm:$0x3] %vm651, 0.0
    %2374 = vst.msk [vmem:[%s685] ss:$8 sm:$0x0] %vm651, 0.0
    %v2375 = vld [vmem:[#allocation6 + $0x600] sm:$0xff]
    %v2376 = vld [vmem:[#allocation6 + $0x608] sm:$0xff]
    %v2377 = vld [vmem:[#allocation6 + $0x610] sm:$0xff]
    %v2378 = vld [vmem:[#allocation6 + $0x618] sm:$0xff]
    %v2379 = vld [vmem:[#allocation6 + $0x620] sm:$0xff]
    %v2380 = vld [vmem:[#allocation6 + $0x628] sm:$0xff]
    %v2381 = vld [vmem:[#allocation6 + $0x630] sm:$0xff]
    %v2382 = vld [vmem:[#allocation6 + $0x638] sm:$0xff]
    %v2383 = vld [vmem:[#allocation6 + $0x640] sm:$0xff]
    %v2384 = vld [vmem:[#allocation6 + $0x648] sm:$0xff]
    %v2385 = vld [vmem:[#allocation6 + $0x650] sm:$0xff]
    %v2386 = vld [vmem:[#allocation6 + $0x658] sm:$0xff]
    %v2387 = vld [vmem:[#allocation6 + $0x660] sm:$0xff]
    %v2388 = vld [vmem:[#allocation6 + $0x668] sm:$0xff]
    %v2389 = vld [vmem:[#allocation6 + $0x670] sm:$0xff]
    %v2390 = vld [vmem:[#allocation6 + $0x678] sm:$0xff]
    %v2391 = vld [vmem:[#allocation6 + $0x680] sm:$0xff]
    %v2392 = vld [vmem:[#allocation6 + $0x688] sm:$0xff]
    %v2393 = vld [vmem:[#allocation6 + $0x690] sm:$0xff]
    %v2394 = vld [vmem:[#allocation6 + $0x698] sm:$0xff]
    %v2395 = vld [vmem:[#allocation6 + $0x6a0] sm:$0xff]
    %v2396 = vld [vmem:[#allocation6 + $0x6a8] sm:$0xff]
    %v2397 = vld [vmem:[#allocation6 + $0x6b0] sm:$0xff]
    %v2398 = vld [vmem:[#allocation6 + $0x6b8] sm:$0xff]
    %v2399 = vld [vmem:[#allocation6 + $0x6c0] sm:$0xff]
    %v2400 = vld [vmem:[#allocation6 + $0x6c8] sm:$0xff]
    %v2401 = vld [vmem:[#allocation6 + $0x6d0] sm:$0xff]
    %v2402 = vld [vmem:[#allocation6 + $0x6d8] sm:$0xff]
    %v2403 = vld [vmem:[#allocation6 + $0x6e0] sm:$0xff]
    %v2404 = vld [vmem:[#allocation6 + $0x6e8] sm:$0xff]
    %v2405 = vld [vmem:[#allocation6 + $0x6f0] sm:$0xff]
    %v2406 = vld [vmem:[#allocation6 + $0x6f8] sm:$0xff]
    %v2407 = vld [vmem:[#allocation6 + $0x700] sm:$0xff]
    %v2408 = vld [vmem:[#allocation6 + $0x708] sm:$0xff]
    %v2409 = vld [vmem:[#allocation6 + $0x710] sm:$0xff]
    %v2410 = vld [vmem:[#allocation6 + $0x718] sm:$0xff]
    %v2411 = vld [vmem:[#allocation6 + $0x720] sm:$0xff]
    %v2412 = vld [vmem:[#allocation6 + $0x728] sm:$0xff]
    %v2413 = vld [vmem:[#allocation6 + $0x730] sm:$0xff]
    %v2414 = vld [vmem:[#allocation6 + $0x738] sm:$0xff]
    %v2415 = vld [vmem:[#allocation6 + $0x740] sm:$0xff]
    %v2416 = vld [vmem:[#allocation6 + $0x748] sm:$0xff]
    %v2417 = vld [vmem:[#allocation6 + $0x750] sm:$0xff]
    %v2418 = vld [vmem:[#allocation6 + $0x758] sm:$0xff]
    %v2419 = vld [vmem:[#allocation6 + $0x760] sm:$0xff]
    %v2420 = vld [vmem:[#allocation6 + $0x768] sm:$0xff]
    %v2421 = vld [vmem:[#allocation6 + $0x770] sm:$0xff]
    %v2422 = vld [vmem:[#allocation6 + $0x778] sm:$0xff]
    %v2423 = vld [vmem:[#allocation6 + $0x780] sm:$0xff]
    %v2424 = vld [vmem:[#allocation6 + $0x788] sm:$0xff]
    %v2425 = vld [vmem:[#allocation6 + $0x790] sm:$0xff]
    %v2426 = vld [vmem:[#allocation6 + $0x798] sm:$0xff]
    %v2427 = vld [vmem:[#allocation6 + $0x7a0] sm:$0xff]
    %v2428 = vld [vmem:[#allocation6 + $0x7a8] sm:$0xff]
    %v2429 = vld [vmem:[#allocation6 + $0x7b0] sm:$0xff]
    %v2430 = vld [vmem:[#allocation6 + $0x7b8] sm:$0xff]
    %v2431 = vld [vmem:[#allocation6 + $0x7c0] sm:$0xff]
    %v2432 = vld [vmem:[#allocation6 + $0x7c8] sm:$0xff]
    %v2433 = vld [vmem:[#allocation6 + $0x7d0] sm:$0xff]
    %v2434 = vld [vmem:[#allocation6 + $0x7d8] sm:$0xff]
    %v2435 = vld [vmem:[#allocation6 + $0x7e0] sm:$0xff]
    %v2436 = vld [vmem:[#allocation6 + $0x7e8] sm:$0xff]
    %v2437 = vld [vmem:[#allocation6 + $0x7f0] sm:$0xff]
    %v2438 = vld [vmem:[#allocation6 + $0x7f8] sm:$0xff]
    %v2439 = vld [vmem:[#allocation6 + $0x800] sm:$0xff]
    %v2440 = vld [vmem:[#allocation6 + $0x808] sm:$0xff]
    %v2441 = vld [vmem:[#allocation6 + $0x810] sm:$0xff]
    %v2442 = vld [vmem:[#allocation6 + $0x818] sm:$0xff]
    %v2443 = vld [vmem:[#allocation6 + $0x820] sm:$0xff]
    %v2444 = vld [vmem:[#allocation6 + $0x828] sm:$0xff]
    %v2445 = vld [vmem:[#allocation6 + $0x830] sm:$0xff]
    %v2446 = vld [vmem:[#allocation6 + $0x838] sm:$0xff]
    %v2447 = vld [vmem:[#allocation6 + $0x840] sm:$0xff]
    %v2448 = vld [vmem:[#allocation6 + $0x848] sm:$0xff]
    %v2449 = vld [vmem:[#allocation6 + $0x850] sm:$0xff]
    %v2450 = vld [vmem:[#allocation6 + $0x858] sm:$0xff]
    %v2451 = vld [vmem:[#allocation6 + $0x860] sm:$0xff]
    %v2452 = vld [vmem:[#allocation6 + $0x868] sm:$0xff]
    %v2453 = vld [vmem:[#allocation6 + $0x870] sm:$0xff]
    %v2454 = vld [vmem:[#allocation6 + $0x878] sm:$0xff]
    %v2455 = vld [vmem:[#allocation6 + $0x880] sm:$0xff]
    %v2456 = vld [vmem:[#allocation6 + $0x888] sm:$0xff]
    %v2457 = vld [vmem:[#allocation6 + $0x890] sm:$0xff]
    %v2458 = vld [vmem:[#allocation6 + $0x898] sm:$0xff]
    %v2459 = vld [vmem:[#allocation6 + $0x8a0] sm:$0xff]
    %v2460 = vld [vmem:[#allocation6 + $0x8a8] sm:$0xff]
    %v2461 = vld [vmem:[#allocation6 + $0x8b0] sm:$0xff]
    %v2462 = vld [vmem:[#allocation6 + $0x8b8] sm:$0xff]
    %v2463 = vld [vmem:[#allocation6 + $0x8c0] sm:$0xff]
    %v2464 = vld [vmem:[#allocation6 + $0x8c8] sm:$0xff]
    %v2465 = vld [vmem:[#allocation6 + $0x8d0] sm:$0xff]
    %v2466 = vld [vmem:[#allocation6 + $0x8d8] sm:$0xff]
    %v2467 = vld [vmem:[#allocation6 + $0x8e0] sm:$0xff]
    %v2468 = vld [vmem:[#allocation6 + $0x8e8] sm:$0xff]
    %v2469 = vld [vmem:[#allocation6 + $0x8f0] sm:$0xff]
    %v2470 = vld [vmem:[#allocation6 + $0x8f8] sm:$0xff]
    %v2471 = vld [vmem:[#allocation4] sm:$0xff]
    %v2472 = vld [vmem:[#allocation4 + $0x8] sm:$0xff]
    %v2473 = vld [vmem:[#allocation4 + $0x10] sm:$0xff]
    %v2474 = vld [vmem:[#allocation4 + $0x18] sm:$0xff]
    %v2475 = vld [vmem:[#allocation4 + $0x20] sm:$0xff]
    %v2476 = vld [vmem:[#allocation4 + $0x28] sm:$0xff]
    %v2477 = vld [vmem:[#allocation4 + $0x30] sm:$0xff]
    %v2478 = vld [vmem:[#allocation4 + $0x38] sm:$0xff]
    %v2479 = vld [vmem:[#allocation4 + $0x40] sm:$0xff]
    %v2480 = vld [vmem:[#allocation4 + $0x48] sm:$0xff]
    %v2481 = vld [vmem:[#allocation4 + $0x50] sm:$0xff]
    %v2482 = vld [vmem:[#allocation4 + $0x58] sm:$0xff]
    %v2483 = vld [vmem:[#allocation4 + $0x60] sm:$0xff]
    %v2484 = vld [vmem:[#allocation4 + $0x68] sm:$0xff]
    %v2485 = vld [vmem:[#allocation4 + $0x70] sm:$0xff]
    %v2486 = vld [vmem:[#allocation4 + $0x78] sm:$0xff]
    %v2487 = vld [vmem:[#allocation4 + $0x80] sm:$0xff]
    %v2488 = vld [vmem:[#allocation4 + $0x88] sm:$0xff]
    %v2489 = vld [vmem:[#allocation4 + $0x90] sm:$0xff]
    %v2490 = vld [vmem:[#allocation4 + $0x98] sm:$0xff]
    %v2491 = vld [vmem:[#allocation4 + $0xa0] sm:$0xff]
    %v2492 = vld [vmem:[#allocation4 + $0xa8] sm:$0xff]
    %v2493 = vld [vmem:[#allocation4 + $0xb0] sm:$0xff]
    %v2494 = vld [vmem:[#allocation4 + $0xb8] sm:$0xff]
    %v2495 = vpack.c.bf16 %v2477, %v2471
    %v2496 = vpack.c.bf16 %v2478, %v2472
    %v2497 = vpack.c.bf16 %v2479, %v2473
    %v2498 = vpack.c.bf16 %v2480, %v2474
    %v2499 = vpack.c.bf16 %v2481, %v2475
    %v2500 = vpack.c.bf16 %v2482, %v2476
    %v2501 = vpack.c.bf16 %v2489, %v2483
    %v2502 = vpack.c.bf16 %v2490, %v2484
    %v2503 = vpack.c.bf16 %v2491, %v2485
    %v2504 = vpack.c.bf16 %v2492, %v2486
    %v2505 = vpack.c.bf16 %v2493, %v2487
    %v2506 = vpack.c.bf16 %v2494, %v2488
    %v2603 = vunpack.c.l.b16 %v2375
    %v2604 = vunpack.c.h.b16 %v2375
    %v2605 = vunpack.c.l.b16 %v2376
    %v2606 = vunpack.c.h.b16 %v2376
    %v2607 = vunpack.c.l.b16 %v2377
    %v2608 = vunpack.c.h.b16 %v2377
    %v2609 = vunpack.c.l.b16 %v2378
    %v2610 = vunpack.c.h.b16 %v2378
    %v2611 = vunpack.c.l.b16 %v2379
    %v2612 = vunpack.c.h.b16 %v2379
    %v2613 = vunpack.c.l.b16 %v2380
    %v2614 = vunpack.c.h.b16 %v2380
    %v2615 = vunpack.c.l.b16 %v2381
    %v2616 = vunpack.c.h.b16 %v2381
    %v2617 = vunpack.c.l.b16 %v2382
    %v2618 = vunpack.c.h.b16 %v2382
    %v2619 = vunpack.c.l.b16 %v2383
    %v2620 = vunpack.c.h.b16 %v2383
    %v2621 = vunpack.c.l.b16 %v2384
    %v2622 = vunpack.c.h.b16 %v2384
    %v2623 = vunpack.c.l.b16 %v2385
    %v2624 = vunpack.c.h.b16 %v2385
    %v2625 = vunpack.c.l.b16 %v2386
    %v2626 = vunpack.c.h.b16 %v2386
    %v2627 = vunpack.c.l.b16 %v2387
    %v2628 = vunpack.c.h.b16 %v2387
    %v2629 = vunpack.c.l.b16 %v2388
    %v2630 = vunpack.c.h.b16 %v2388
    %v2631 = vunpack.c.l.b16 %v2389
    %v2632 = vunpack.c.h.b16 %v2389
    %v2633 = vunpack.c.l.b16 %v2390
    %v2634 = vunpack.c.h.b16 %v2390
    %v2635 = vunpack.c.l.b16 %v2391
    %v2636 = vunpack.c.h.b16 %v2391
    %v2637 = vunpack.c.l.b16 %v2392
    %v2638 = vunpack.c.h.b16 %v2392
    %v2639 = vunpack.c.l.b16 %v2393
    %v2640 = vunpack.c.h.b16 %v2393
    %v2641 = vunpack.c.l.b16 %v2394
    %v2642 = vunpack.c.h.b16 %v2394
    %v2643 = vunpack.c.l.b16 %v2395
    %v2644 = vunpack.c.h.b16 %v2395
    %v2645 = vunpack.c.l.b16 %v2396
    %v2646 = vunpack.c.h.b16 %v2396
    %v2647 = vunpack.c.l.b16 %v2397
    %v2648 = vunpack.c.h.b16 %v2397
    %v2649 = vunpack.c.l.b16 %v2398
    %v2650 = vunpack.c.h.b16 %v2398
    %v2651 = vunpack.c.l.b16 %v2399
    %v2652 = vunpack.c.h.b16 %v2399
    %v2653 = vunpack.c.l.b16 %v2400
    %v2654 = vunpack.c.h.b16 %v2400
    %v2655 = vunpack.c.l.b16 %v2401
    %v2656 = vunpack.c.h.b16 %v2401
    %v2657 = vunpack.c.l.b16 %v2402
    %v2658 = vunpack.c.h.b16 %v2402
    %v2659 = vunpack.c.l.b16 %v2403
    %v2660 = vunpack.c.h.b16 %v2403
    %v2661 = vunpack.c.l.b16 %v2404
    %v2662 = vunpack.c.h.b16 %v2404
    %v2663 = vunpack.c.l.b16 %v2405
    %v2664 = vunpack.c.h.b16 %v2405
    %v2665 = vunpack.c.l.b16 %v2406
    %v2666 = vunpack.c.h.b16 %v2406
    %v2667 = vunpack.c.l.b16 %v2407
    %v2668 = vunpack.c.h.b16 %v2407
    %v2669 = vunpack.c.l.b16 %v2408
    %v2670 = vunpack.c.h.b16 %v2408
    %v2671 = vunpack.c.l.b16 %v2409
    %v2672 = vunpack.c.h.b16 %v2409
    %v2673 = vunpack.c.l.b16 %v2410
    %v2674 = vunpack.c.h.b16 %v2410
    %v2675 = vunpack.c.l.b16 %v2411
    %v2676 = vunpack.c.h.b16 %v2411
    %v2677 = vunpack.c.l.b16 %v2412
    %v2678 = vunpack.c.h.b16 %v2412
    %v2679 = vunpack.c.l.b16 %v2413
    %v2680 = vunpack.c.h.b16 %v2413
    %v2681 = vunpack.c.l.b16 %v2414
    %v2682 = vunpack.c.h.b16 %v2414
    %v2683 = vunpack.c.l.b16 %v2415
    %v2684 = vunpack.c.h.b16 %v2415
    %v2685 = vunpack.c.l.b16 %v2416
    %v2686 = vunpack.c.h.b16 %v2416
    %v2687 = vunpack.c.l.b16 %v2417
    %v2688 = vunpack.c.h.b16 %v2417
    %v2689 = vunpack.c.l.b16 %v2418
    %v2690 = vunpack.c.h.b16 %v2418
    %v2691 = vunpack.c.l.b16 %v2419
    %v2692 = vunpack.c.h.b16 %v2419
    %v2693 = vunpack.c.l.b16 %v2420
    %v2694 = vunpack.c.h.b16 %v2420
    %v2695 = vunpack.c.l.b16 %v2421
    %v2696 = vunpack.c.h.b16 %v2421
    %v2697 = vunpack.c.l.b16 %v2422
    %v2698 = vunpack.c.h.b16 %v2422
    %v2699 = vunpack.c.l.b16 %v2423
    %v2700 = vunpack.c.h.b16 %v2423
    %v2701 = vunpack.c.l.b16 %v2424
    %v2702 = vunpack.c.h.b16 %v2424
    %v2703 = vunpack.c.l.b16 %v2425
    %v2704 = vunpack.c.h.b16 %v2425
    %v2705 = vunpack.c.l.b16 %v2426
    %v2706 = vunpack.c.h.b16 %v2426
    %v2707 = vunpack.c.l.b16 %v2427
    %v2708 = vunpack.c.h.b16 %v2427
    %v2709 = vunpack.c.l.b16 %v2428
    %v2710 = vunpack.c.h.b16 %v2428
    %v2711 = vunpack.c.l.b16 %v2429
    %v2712 = vunpack.c.h.b16 %v2429
    %v2713 = vunpack.c.l.b16 %v2430
    %v2714 = vunpack.c.h.b16 %v2430
    %v2715 = vunpack.c.l.b16 %v2431
    %v2716 = vunpack.c.h.b16 %v2431
    %v2717 = vunpack.c.l.b16 %v2432
    %v2718 = vunpack.c.h.b16 %v2432
    %v2719 = vunpack.c.l.b16 %v2433
    %v2720 = vunpack.c.h.b16 %v2433
    %v2721 = vunpack.c.l.b16 %v2434
    %v2722 = vunpack.c.h.b16 %v2434
    %v2723 = vunpack.c.l.b16 %v2435
    %v2724 = vunpack.c.h.b16 %v2435
    %v2725 = vunpack.c.l.b16 %v2436
    %v2726 = vunpack.c.h.b16 %v2436
    %v2727 = vunpack.c.l.b16 %v2437
    %v2728 = vunpack.c.h.b16 %v2437
    %v2729 = vunpack.c.l.b16 %v2438
    %v2730 = vunpack.c.h.b16 %v2438
    %v2731 = vunpack.c.l.b16 %v2439
    %v2732 = vunpack.c.h.b16 %v2439
    %v2733 = vunpack.c.l.b16 %v2440
    %v2734 = vunpack.c.h.b16 %v2440
    %v2735 = vunpack.c.l.b16 %v2441
    %v2736 = vunpack.c.h.b16 %v2441
    %v2737 = vunpack.c.l.b16 %v2442
    %v2738 = vunpack.c.h.b16 %v2442
    %v2739 = vunpack.c.l.b16 %v2443
    %v2740 = vunpack.c.h.b16 %v2443
    %v2741 = vunpack.c.l.b16 %v2444
    %v2742 = vunpack.c.h.b16 %v2444
    %v2743 = vunpack.c.l.b16 %v2445
    %v2744 = vunpack.c.h.b16 %v2445
    %v2745 = vunpack.c.l.b16 %v2446
    %v2746 = vunpack.c.h.b16 %v2446
    %v2747 = vunpack.c.l.b16 %v2447
    %v2748 = vunpack.c.h.b16 %v2447
    %v2749 = vunpack.c.l.b16 %v2448
    %v2750 = vunpack.c.h.b16 %v2448
    %v2751 = vunpack.c.l.b16 %v2449
    %v2752 = vunpack.c.h.b16 %v2449
    %v2753 = vunpack.c.l.b16 %v2450
    %v2754 = vunpack.c.h.b16 %v2450
    %v2755 = vunpack.c.l.b16 %v2451
    %v2756 = vunpack.c.h.b16 %v2451
    %v2757 = vunpack.c.l.b16 %v2452
    %v2758 = vunpack.c.h.b16 %v2452
    %v2759 = vunpack.c.l.b16 %v2453
    %v2760 = vunpack.c.h.b16 %v2453
    %v2761 = vunpack.c.l.b16 %v2454
    %v2762 = vunpack.c.h.b16 %v2454
    %v2763 = vunpack.c.l.b16 %v2455
    %v2764 = vunpack.c.h.b16 %v2455
    %v2765 = vunpack.c.l.b16 %v2456
    %v2766 = vunpack.c.h.b16 %v2456
    %v2767 = vunpack.c.l.b16 %v2457
    %v2768 = vunpack.c.h.b16 %v2457
    %v2769 = vunpack.c.l.b16 %v2458
    %v2770 = vunpack.c.h.b16 %v2458
    %v2771 = vunpack.c.l.b16 %v2459
    %v2772 = vunpack.c.h.b16 %v2459
    %v2773 = vunpack.c.l.b16 %v2460
    %v2774 = vunpack.c.h.b16 %v2460
    %v2775 = vunpack.c.l.b16 %v2461
    %v2776 = vunpack.c.h.b16 %v2461
    %v2777 = vunpack.c.l.b16 %v2462
    %v2778 = vunpack.c.h.b16 %v2462
    %v2779 = vunpack.c.l.b16 %v2463
    %v2780 = vunpack.c.h.b16 %v2463
    %v2781 = vunpack.c.l.b16 %v2464
    %v2782 = vunpack.c.h.b16 %v2464
    %v2783 = vunpack.c.l.b16 %v2465
    %v2784 = vunpack.c.h.b16 %v2465
    %v2785 = vunpack.c.l.b16 %v2466
    %v2786 = vunpack.c.h.b16 %v2466
    %v2787 = vunpack.c.l.b16 %v2467
    %v2788 = vunpack.c.h.b16 %v2467
    %v2789 = vunpack.c.l.b16 %v2468
    %v2790 = vunpack.c.h.b16 %v2468
    %v2791 = vunpack.c.l.b16 %v2469
    %v2792 = vunpack.c.h.b16 %v2469
    %v2793 = vunpack.c.l.b16 %v2470
    %v2794 = vunpack.c.h.b16 %v2470
    %v2795 = vpack.c.b16 %v2605, %v2603
    %v2796 = vpack.c.b16 %v2606, %v2604
    %v2797 = vpack.c.b16 %v2609, %v2607
    %v2798 = vpack.c.b16 %v2610, %v2608
    %v2799 = vpack.c.b16 %v2613, %v2611
    %v2800 = vpack.c.b16 %v2614, %v2612
    %v2801 = vpack.c.b16 %v2617, %v2615
    %v2802 = vpack.c.b16 %v2618, %v2616
    %v2803 = vpack.c.b16 %v2621, %v2619
    %v2804 = vpack.c.b16 %v2622, %v2620
    %v2805 = vpack.c.b16 %v2625, %v2623
    %v2806 = vpack.c.b16 %v2626, %v2624
    %v2807 = vpack.c.b16 %v2629, %v2627
    %v2808 = vpack.c.b16 %v2630, %v2628
    %v2809 = vpack.c.b16 %v2633, %v2631
    %v2810 = vpack.c.b16 %v2634, %v2632
    %v2811 = vpack.c.b16 %v2637, %v2635
    %v2812 = vpack.c.b16 %v2638, %v2636
    %v2813 = vpack.c.b16 %v2641, %v2639
    %v2814 = vpack.c.b16 %v2642, %v2640
    %v2815 = vpack.c.b16 %v2645, %v2643
    %v2816 = vpack.c.b16 %v2646, %v2644
    %v2817 = vpack.c.b16 %v2649, %v2647
    %v2818 = vpack.c.b16 %v2650, %v2648
    %v2819 = vpack.c.b16 %v2653, %v2651
    %v2820 = vpack.c.b16 %v2654, %v2652
    %v2821 = vpack.c.b16 %v2657, %v2655
    %v2822 = vpack.c.b16 %v2658, %v2656
    %v2823 = vpack.c.b16 %v2661, %v2659
    %v2824 = vpack.c.b16 %v2662, %v2660
    %v2825 = vpack.c.b16 %v2665, %v2663
    %v2826 = vpack.c.b16 %v2666, %v2664
    %v2827 = vpack.c.b16 %v2669, %v2667
    %v2828 = vpack.c.b16 %v2670, %v2668
    %v2829 = vpack.c.b16 %v2673, %v2671
    %v2830 = vpack.c.b16 %v2674, %v2672
    %v2831 = vpack.c.b16 %v2677, %v2675
    %v2832 = vpack.c.b16 %v2678, %v2676
    %v2833 = vpack.c.b16 %v2681, %v2679
    %v2834 = vpack.c.b16 %v2682, %v2680
    %v2835 = vpack.c.b16 %v2685, %v2683
    %v2836 = vpack.c.b16 %v2686, %v2684
    %v2837 = vpack.c.b16 %v2689, %v2687
    %v2838 = vpack.c.b16 %v2690, %v2688
    %v2839 = vpack.c.b16 %v2693, %v2691
    %v2840 = vpack.c.b16 %v2694, %v2692
    %v2841 = vpack.c.b16 %v2697, %v2695
    %v2842 = vpack.c.b16 %v2698, %v2696
    %v2843 = vpack.c.b16 %v2701, %v2699
    %v2844 = vpack.c.b16 %v2702, %v2700
    %v2845 = vpack.c.b16 %v2705, %v2703
    %v2846 = vpack.c.b16 %v2706, %v2704
    %v2847 = vpack.c.b16 %v2709, %v2707
    %v2848 = vpack.c.b16 %v2710, %v2708
    %v2849 = vpack.c.b16 %v2713, %v2711
    %v2850 = vpack.c.b16 %v2714, %v2712
    %v2851 = vpack.c.b16 %v2717, %v2715
    %v2852 = vpack.c.b16 %v2718, %v2716
    %v2853 = vpack.c.b16 %v2721, %v2719
    %v2854 = vpack.c.b16 %v2722, %v2720
    %v2855 = vpack.c.b16 %v2725, %v2723
    %v2856 = vpack.c.b16 %v2726, %v2724
    %v2857 = vpack.c.b16 %v2729, %v2727
    %v2858 = vpack.c.b16 %v2730, %v2728
    %v2859 = vpack.c.b16 %v2733, %v2731
    %v2860 = vpack.c.b16 %v2734, %v2732
    %v2861 = vpack.c.b16 %v2737, %v2735
    %v2862 = vpack.c.b16 %v2738, %v2736
    %v2863 = vpack.c.b16 %v2741, %v2739
    %v2864 = vpack.c.b16 %v2742, %v2740
    %v2865 = vpack.c.b16 %v2745, %v2743
    %v2866 = vpack.c.b16 %v2746, %v2744
    %v2867 = vpack.c.b16 %v2749, %v2747
    %v2868 = vpack.c.b16 %v2750, %v2748
    %v2869 = vpack.c.b16 %v2753, %v2751
    %v2870 = vpack.c.b16 %v2754, %v2752
    %v2871 = vpack.c.b16 %v2757, %v2755
    %v2872 = vpack.c.b16 %v2758, %v2756
    %v2873 = vpack.c.b16 %v2761, %v2759
    %v2874 = vpack.c.b16 %v2762, %v2760
    %v2875 = vpack.c.b16 %v2765, %v2763
    %v2876 = vpack.c.b16 %v2766, %v2764
    %v2877 = vpack.c.b16 %v2769, %v2767
    %v2878 = vpack.c.b16 %v2770, %v2768
    %v2879 = vpack.c.b16 %v2773, %v2771
    %v2880 = vpack.c.b16 %v2774, %v2772
    %v2881 = vpack.c.b16 %v2777, %v2775
    %v2882 = vpack.c.b16 %v2778, %v2776
    %v2883 = vpack.c.b16 %v2781, %v2779
    %v2884 = vpack.c.b16 %v2782, %v2780
    %v2885 = vpack.c.b16 %v2785, %v2783
    %v2886 = vpack.c.b16 %v2786, %v2784
    %v2887 = vpack.c.b16 %v2789, %v2787
    %v2888 = vpack.c.b16 %v2790, %v2788
    %v2889 = vpack.c.b16 %v2793, %v2791
    %v2890 = vpack.c.b16 %v2794, %v2792
    %2987 = vmatpush.bf16.msra.mxu0 %v2809
    %2988 = vmatpush.bf16.msra.mxu0 %v2807
    %2989 = vmatpush.bf16.msra.mxu0 %v2805
    %2990 = vmatpush.bf16.msra.mxu0 %v2803
    %2991 = vmatpush.bf16.msra.mxu0 %v2801
    %2992 = vmatpush.bf16.msra.mxu0 %v2799
    %2993 = vmatpush.bf16.msra.mxu0 %v2797
    %2994 = vmatpush.bf16.msra.mxu0 %v2795
    %2995 = vmatmul.bf16.gmra.mxu0 %v2495
    %v2996 = vpop.f32.mrf.mxu0
    %v2997 = vadd.f32 0.0, %v2996
    %v2998 = vpop.f32.mrf.mxu0
    %v2999 = vadd.f32 0.0, %v2998
    %3000 = vmatmul.bf16.gmra.mxu0 %v2501
    %v3001 = vpop.f32.mrf.mxu0
    %v3002 = vadd.f32 0.0, %v3001
    %v3003 = vpop.f32.mrf.mxu0
    %v3004 = vadd.f32 0.0, %v3003
    %3005 = vdwg.mxu0
    %3006 = vmatpush.bf16.msra.mxu0 %v2825
    %3007 = vmatpush.bf16.msra.mxu0 %v2823
    %3008 = vmatpush.bf16.msra.mxu0 %v2821
    %3009 = vmatpush.bf16.msra.mxu0 %v2819
    %3010 = vmatpush.bf16.msra.mxu0 %v2817
    %3011 = vmatpush.bf16.msra.mxu0 %v2815
    %3012 = vmatpush.bf16.msra.mxu0 %v2813
    %3013 = vmatpush.bf16.msra.mxu0 %v2811
    %3014 = vmatmul.bf16.gmra.mxu0 %v2496
    %v3015 = vpop.f32.mrf.mxu0
    %v3016 = vadd.f32 %v2997, %v3015
    %v3017 = vpop.f32.mrf.mxu0
    %v3018 = vadd.f32 %v2999, %v3017
    %3019 = vmatmul.bf16.gmra.mxu0 %v2502
    %v3020 = vpop.f32.mrf.mxu0
    %v3021 = vadd.f32 %v3002, %v3020
    %v3022 = vpop.f32.mrf.mxu0
    %v3023 = vadd.f32 %v3004, %v3022
    %3024 = vdwg.mxu0
    %3025 = vmatpush.bf16.msra.mxu0 %v2841
    %3026 = vmatpush.bf16.msra.mxu0 %v2839
    %3027 = vmatpush.bf16.msra.mxu0 %v2837
    %3028 = vmatpush.bf16.msra.mxu0 %v2835
    %3029 = vmatpush.bf16.msra.mxu0 %v2833
    %3030 = vmatpush.bf16.msra.mxu0 %v2831
    %3031 = vmatpush.bf16.msra.mxu0 %v2829
    %3032 = vmatpush.bf16.msra.mxu0 %v2827
    %3033 = vmatmul.bf16.gmra.mxu0 %v2497
    %v3034 = vpop.f32.mrf.mxu0
    %v3035 = vadd.f32 %v3016, %v3034
    %v3036 = vpop.f32.mrf.mxu0
    %v3037 = vadd.f32 %v3018, %v3036
    %3038 = vmatmul.bf16.gmra.mxu0 %v2503
    %v3039 = vpop.f32.mrf.mxu0
    %v3040 = vadd.f32 %v3021, %v3039
    %v3041 = vpop.f32.mrf.mxu0
    %v3042 = vadd.f32 %v3023, %v3041
    %3043 = vdwg.mxu0
    %3044 = vmatpush.bf16.msra.mxu0 %v2857
    %3045 = vmatpush.bf16.msra.mxu0 %v2855
    %3046 = vmatpush.bf16.msra.mxu0 %v2853
    %3047 = vmatpush.bf16.msra.mxu0 %v2851
    %3048 = vmatpush.bf16.msra.mxu0 %v2849
    %3049 = vmatpush.bf16.msra.mxu0 %v2847
    %3050 = vmatpush.bf16.msra.mxu0 %v2845
    %3051 = vmatpush.bf16.msra.mxu0 %v2843
    %3052 = vmatmul.bf16.gmra.mxu0 %v2498
    %v3053 = vpop.f32.mrf.mxu0
    %v3054 = vadd.f32 %v3035, %v3053
    %v3055 = vpop.f32.mrf.mxu0
    %v3056 = vadd.f32 %v3037, %v3055
    %3057 = vmatmul.bf16.gmra.mxu0 %v2504
    %v3058 = vpop.f32.mrf.mxu0
    %v3059 = vadd.f32 %v3040, %v3058
    %v3060 = vpop.f32.mrf.mxu0
    %v3061 = vadd.f32 %v3042, %v3060
    %3062 = vdwg.mxu0
    %3063 = vmatpush.bf16.msra.mxu0 %v2873
    %3064 = vmatpush.bf16.msra.mxu0 %v2871
    %3065 = vmatpush.bf16.msra.mxu0 %v2869
    %3066 = vmatpush.bf16.msra.mxu0 %v2867
    %3067 = vmatpush.bf16.msra.mxu0 %v2865
    %3068 = vmatpush.bf16.msra.mxu0 %v2863
    %3069 = vmatpush.bf16.msra.mxu0 %v2861
    %3070 = vmatpush.bf16.msra.mxu0 %v2859
    %3071 = vmatmul.bf16.gmra.mxu0 %v2499
    %v3072 = vpop.f32.mrf.mxu0
    %v3073 = vadd.f32 %v3054, %v3072
    %v3074 = vpop.f32.mrf.mxu0
    %v3075 = vadd.f32 %v3056, %v3074
    %3076 = vmatmul.bf16.gmra.mxu0 %v2505
    %v3077 = vpop.f32.mrf.mxu0
    %v3078 = vadd.f32 %v3059, %v3077
    %v3079 = vpop.f32.mrf.mxu0
    %v3080 = vadd.f32 %v3061, %v3079
    %3081 = vdwg.mxu0
    %3082 = vmatpush.bf16.msra.mxu0 %v2889
    %3083 = vmatpush.bf16.msra.mxu0 %v2887
    %3084 = vmatpush.bf16.msra.mxu0 %v2885
    %3085 = vmatpush.bf16.msra.mxu0 %v2883
    %3086 = vmatpush.bf16.msra.mxu0 %v2881
    %3087 = vmatpush.bf16.msra.mxu0 %v2879
    %3088 = vmatpush.bf16.msra.mxu0 %v2877
    %3089 = vmatpush.bf16.msra.mxu0 %v2875
    %3090 = vmatmul.bf16.gmra.mxu0 %v2500
    %v3091 = vpop.f32.mrf.mxu0
    %v3092 = vadd.f32 %v3073, %v3091
    %v3093 = vpop.f32.mrf.mxu0
    %v3094 = vadd.f32 %v3075, %v3093
    %3095 = vmatmul.bf16.gmra.mxu0 %v2506
    %v3096 = vpop.f32.mrf.mxu0
    %v3097 = vadd.f32 %v3078, %v3096
    %v3098 = vpop.f32.mrf.mxu0
    %v3099 = vadd.f32 %v3080, %v3098
    %3100 = vdwg.mxu0
    %3101 = vmatpush.bf16.msra.mxu0 %v2810
    %3102 = vmatpush.bf16.msra.mxu0 %v2808
    %3103 = vmatpush.bf16.msra.mxu0 %v2806
    %3104 = vmatpush.bf16.msra.mxu0 %v2804
    %3105 = vmatpush.bf16.msra.mxu0 %v2802
    %3106 = vmatpush.bf16.msra.mxu0 %v2800
    %3107 = vmatpush.bf16.msra.mxu0 %v2798
    %3108 = vmatpush.bf16.msra.mxu0 %v2796
    %3109 = vmatmul.bf16.gmra.mxu0 %v2495
    %v3110 = vpop.f32.mrf.mxu0
    %v3111 = vadd.f32 0.0, %v3110
    %v3112 = vpop.f32.mrf.mxu0
    %v3113 = vadd.f32 0.0, %v3112
    %3114 = vmatmul.bf16.gmra.mxu0 %v2501
    %v3115 = vpop.f32.mrf.mxu0
    %v3116 = vadd.f32 0.0, %v3115
    %v3117 = vpop.f32.mrf.mxu0
    %v3118 = vadd.f32 0.0, %v3117
    %3119 = vdwg.mxu0
    %3120 = vmatpush.bf16.msra.mxu0 %v2826
    %3121 = vmatpush.bf16.msra.mxu0 %v2824
    %3122 = vmatpush.bf16.msra.mxu0 %v2822
    %3123 = vmatpush.bf16.msra.mxu0 %v2820
    %3124 = vmatpush.bf16.msra.mxu0 %v2818
    %3125 = vmatpush.bf16.msra.mxu0 %v2816
    %3126 = vmatpush.bf16.msra.mxu0 %v2814
    %3127 = vmatpush.bf16.msra.mxu0 %v2812
    %3128 = vmatmul.bf16.gmra.mxu0 %v2496
    %v3129 = vpop.f32.mrf.mxu0
    %v3130 = vadd.f32 %v3111, %v3129
    %v3131 = vpop.f32.mrf.mxu0
    %v3132 = vadd.f32 %v3113, %v3131
    %3133 = vmatmul.bf16.gmra.mxu0 %v2502
    %v3134 = vpop.f32.mrf.mxu0
    %v3135 = vadd.f32 %v3116, %v3134
    %v3136 = vpop.f32.mrf.mxu0
    %v3137 = vadd.f32 %v3118, %v3136
    %3138 = vdwg.mxu0
    %3139 = vmatpush.bf16.msra.mxu0 %v2842
    %3140 = vmatpush.bf16.msra.mxu0 %v2840
    %3141 = vmatpush.bf16.msra.mxu0 %v2838
    %3142 = vmatpush.bf16.msra.mxu0 %v2836
    %3143 = vmatpush.bf16.msra.mxu0 %v2834
    %3144 = vmatpush.bf16.msra.mxu0 %v2832
    %3145 = vmatpush.bf16.msra.mxu0 %v2830
    %3146 = vmatpush.bf16.msra.mxu0 %v2828
    %3147 = vmatmul.bf16.gmra.mxu0 %v2497
    %v3148 = vpop.f32.mrf.mxu0
    %v3149 = vadd.f32 %v3130, %v3148
    %v3150 = vpop.f32.mrf.mxu0
    %v3151 = vadd.f32 %v3132, %v3150
    %3152 = vmatmul.bf16.gmra.mxu0 %v2503
    %v3153 = vpop.f32.mrf.mxu0
    %v3154 = vadd.f32 %v3135, %v3153
    %v3155 = vpop.f32.mrf.mxu0
    %v3156 = vadd.f32 %v3137, %v3155
    %3157 = vdwg.mxu0
    %3158 = vmatpush.bf16.msra.mxu0 %v2858
    %3159 = vmatpush.bf16.msra.mxu0 %v2856
    %3160 = vmatpush.bf16.msra.mxu0 %v2854
    %3161 = vmatpush.bf16.msra.mxu0 %v2852
    %3162 = vmatpush.bf16.msra.mxu0 %v2850
    %3163 = vmatpush.bf16.msra.mxu0 %v2848
    %3164 = vmatpush.bf16.msra.mxu0 %v2846
    %3165 = vmatpush.bf16.msra.mxu0 %v2844
    %3166 = vmatmul.bf16.gmra.mxu0 %v2498
    %v3167 = vpop.f32.mrf.mxu0
    %v3168 = vadd.f32 %v3149, %v3167
    %v3169 = vpop.f32.mrf.mxu0
    %v3170 = vadd.f32 %v3151, %v3169
    %3171 = vmatmul.bf16.gmra.mxu0 %v2504
    %v3172 = vpop.f32.mrf.mxu0
    %v3173 = vadd.f32 %v3154, %v3172
    %v3174 = vpop.f32.mrf.mxu0
    %v3175 = vadd.f32 %v3156, %v3174
    %3176 = vdwg.mxu0
    %3177 = vmatpush.bf16.msra.mxu0 %v2874
    %3178 = vmatpush.bf16.msra.mxu0 %v2872
    %3179 = vmatpush.bf16.msra.mxu0 %v2870
    %3180 = vmatpush.bf16.msra.mxu0 %v2868
    %3181 = vmatpush.bf16.msra.mxu0 %v2866
    %3182 = vmatpush.bf16.msra.mxu0 %v2864
    %3183 = vmatpush.bf16.msra.mxu0 %v2862
    %3184 = vmatpush.bf16.msra.mxu0 %v2860
    %3185 = vmatmul.bf16.gmra.mxu0 %v2499
    %v3186 = vpop.f32.mrf.mxu0
    %v3187 = vadd.f32 %v3168, %v3186
    %v3188 = vpop.f32.mrf.mxu0
    %v3189 = vadd.f32 %v3170, %v3188
    %3190 = vmatmul.bf16.gmra.mxu0 %v2505
    %v3191 = vpop.f32.mrf.mxu0
    %v3192 = vadd.f32 %v3173, %v3191
    %v3193 = vpop.f32.mrf.mxu0
    %v3194 = vadd.f32 %v3175, %v3193
    %3195 = vdwg.mxu0
    %3196 = vmatpush.bf16.msra.mxu0 %v2890
    %3197 = vmatpush.bf16.msra.mxu0 %v2888
    %3198 = vmatpush.bf16.msra.mxu0 %v2886
    %3199 = vmatpush.bf16.msra.mxu0 %v2884
    %3200 = vmatpush.bf16.msra.mxu0 %v2882
    %3201 = vmatpush.bf16.msra.mxu0 %v2880
    %3202 = vmatpush.bf16.msra.mxu0 %v2878
    %3203 = vmatpush.bf16.msra.mxu0 %v2876
    %3204 = vmatmul.bf16.gmra.mxu0 %v2500
    %v3205 = vpop.f32.mrf.mxu0
    %v3206 = vadd.f32 %v3187, %v3205
    %v3207 = vpop.f32.mrf.mxu0
    %v3208 = vadd.f32 %v3189, %v3207
    %3209 = vmatmul.bf16.gmra.mxu0 %v2506
    %v3210 = vpop.f32.mrf.mxu0
    %v3211 = vadd.f32 %v3192, %v3210
    %v3212 = vpop.f32.mrf.mxu0
    %v3213 = vadd.f32 %v3194, %v3212
    %3214 = vdwg.mxu0
    %v3215 = vld [vmem:[#allocation11 + $0x3] ss:$0 sm:$0xff]
    %v3216 = vmax.f32 %v3092, %v3206
    %v3217 = vmax.f32 %v3094, %v3208
    %v3218 = vmax.f32 %v3097, %v3211
    %v3219 = vmax.f32 %v3099, %v3213
    %v3220 = vadd.f32 %v3216, %v3215
    %v3221 = vadd.f32 %v3217, %v3215
    %v3222 = vadd.f32 %v3218, %v3215
    %v3223 = vadd.f32 %v3219, %v3215
    %v3224 = vmax.f32 %v3220, 0.0
    %v3225 = vmax.f32 %v3221, 0.0
    %v3226 = vmax.f32 %v3222, 0.0
    %v3227 = vmax.f32 %v3223, 0.0
    %3228 = vst [vmem:[#allocation5] sm:$0xff] %v3224
    %3229 = vst [vmem:[#allocation5 + $0x8] sm:$0xff] %v3225
    %3230 = vst [vmem:[#allocation5 + $0x10] sm:$0xff] %v3226
    %3231 = vst [vmem:[#allocation5 + $0x18] sm:$0xff] %v3227
    %v3232 = vld [vmem:[#allocation5] ss:$2 sm:$0xff]
    %s3233 = scalar_lea.vmem [#allocation5], 16
    %v3234 = vld [vmem:[%s3233] ss:$2 sm:$0xff]
    %v3235 = vld [vmem:[%s1806] ss:$2 sm:$0xff]
    %v3236 = vld [vmem:[%s1808] ss:$2 sm:$0xff]
    %v3237 = vmax.f32 %v3232, %v3235
    %v3238 = vmax.f32 %v3234, %v3236
    %3239 = vst [vmem:[#allocation4 + $0x8] sm:$0xff] %v3237
    %v3241 = vrot.slane %v3237, 7
    %3243 = vst [vmem:[#allocation4] sm:$0xfe] %v3241
    %3244 = vst [vmem:[#allocation4] sm:$0x1] 0.0
    %v3245 = vrot.slane %v3237, 1
    %3247 = vst [vmem:[#allocation4 + $0x10] sm:$0x7f] %v3245
    %3248 = vst [vmem:[#allocation4 + $0x17] sm:$0x1] 0.0
    %3249 = vst [vmem:[#allocation4 + $0x38] sm:$0xff] %v3238
    %v3251 = vrot.slane %v3238, 7
    %3253 = vst [vmem:[#allocation4 + $0x30] sm:$0xfe] %v3251
    %3254 = vst [vmem:[#allocation4 + $0x30] sm:$0x1] 0.0
    %v3255 = vrot.slane %v3238, 1
    %3257 = vst [vmem:[#allocation4 + $0x40] sm:$0x7f] %v3255
    %3258 = vst [vmem:[#allocation4 + $0x47] sm:$0x1] 0.0
    %v3259 = vld [vmem:[#allocation6 + $0x900] sm:$0xff]
    %v3260 = vld [vmem:[#allocation6 + $0x908] sm:$0xff]
    %v3261 = vld [vmem:[#allocation6 + $0x910] sm:$0xff]
    %v3262 = vld [vmem:[#allocation6 + $0x918] sm:$0xff]
    %v3263 = vld [vmem:[#allocation6 + $0x920] sm:$0xff]
    %v3264 = vld [vmem:[#allocation6 + $0x928] sm:$0xff]
    %v3265 = vld [vmem:[#allocation6 + $0x930] sm:$0xff]
    %v3266 = vld [vmem:[#allocation6 + $0x938] sm:$0xff]
    %v3267 = vld [vmem:[#allocation6 + $0x940] sm:$0xff]
    %v3268 = vld [vmem:[#allocation6 + $0x948] sm:$0xff]
    %v3269 = vld [vmem:[#allocation6 + $0x950] sm:$0xff]
    %v3270 = vld [vmem:[#allocation6 + $0x958] sm:$0xff]
    %v3271 = vld [vmem:[#allocation6 + $0x960] sm:$0xff]
    %v3272 = vld [vmem:[#allocation6 + $0x968] sm:$0xff]
    %v3273 = vld [vmem:[#allocation6 + $0x970] sm:$0xff]
    %v3274 = vld [vmem:[#allocation6 + $0x978] sm:$0xff]
    %v3275 = vld [vmem:[#allocation6 + $0x980] sm:$0xff]
    %v3276 = vld [vmem:[#allocation6 + $0x988] sm:$0xff]
    %v3277 = vld [vmem:[#allocation6 + $0x990] sm:$0xff]
    %v3278 = vld [vmem:[#allocation6 + $0x998] sm:$0xff]
    %v3279 = vld [vmem:[#allocation6 + $0x9a0] sm:$0xff]
    %v3280 = vld [vmem:[#allocation6 + $0x9a8] sm:$0xff]
    %v3281 = vld [vmem:[#allocation6 + $0x9b0] sm:$0xff]
    %v3282 = vld [vmem:[#allocation6 + $0x9b8] sm:$0xff]
    %v3283 = vld [vmem:[#allocation6 + $0x9c0] sm:$0xff]
    %v3284 = vld [vmem:[#allocation6 + $0x9c8] sm:$0xff]
    %v3285 = vld [vmem:[#allocation6 + $0x9d0] sm:$0xff]
    %v3286 = vld [vmem:[#allocation6 + $0x9d8] sm:$0xff]
    %v3287 = vld [vmem:[#allocation6 + $0x9e0] sm:$0xff]
    %v3288 = vld [vmem:[#allocation6 + $0x9e8] sm:$0xff]
    %v3289 = vld [vmem:[#allocation6 + $0x9f0] sm:$0xff]
    %v3290 = vld [vmem:[#allocation6 + $0x9f8] sm:$0xff]
    %v3291 = vld [vmem:[#allocation6 + $0xa00] sm:$0xff]
    %v3292 = vld [vmem:[#allocation6 + $0xa08] sm:$0xff]
    %v3293 = vld [vmem:[#allocation6 + $0xa10] sm:$0xff]
    %v3294 = vld [vmem:[#allocation6 + $0xa18] sm:$0xff]
    %v3295 = vld [vmem:[#allocation6 + $0xa20] sm:$0xff]
    %v3296 = vld [vmem:[#allocation6 + $0xa28] sm:$0xff]
    %v3297 = vld [vmem:[#allocation6 + $0xa30] sm:$0xff]
    %v3298 = vld [vmem:[#allocation6 + $0xa38] sm:$0xff]
    %v3299 = vld [vmem:[#allocation6 + $0xa40] sm:$0xff]
    %v3300 = vld [vmem:[#allocation6 + $0xa48] sm:$0xff]
    %v3301 = vld [vmem:[#allocation6 + $0xa50] sm:$0xff]
    %v3302 = vld [vmem:[#allocation6 + $0xa58] sm:$0xff]
    %v3303 = vld [vmem:[#allocation6 + $0xa60] sm:$0xff]
    %v3304 = vld [vmem:[#allocation6 + $0xa68] sm:$0xff]
    %v3305 = vld [vmem:[#allocation6 + $0xa70] sm:$0xff]
    %v3306 = vld [vmem:[#allocation6 + $0xa78] sm:$0xff]
    %v3307 = vld [vmem:[#allocation4] sm:$0xff]
    %v3308 = vld [vmem:[#allocation4 + $0x8] sm:$0xff]
    %v3309 = vld [vmem:[#allocation4 + $0x10] sm:$0xff]
    %v3310 = vld [vmem:[#allocation4 + $0x30] sm:$0xff]
    %v3311 = vld [vmem:[#allocation4 + $0x38] sm:$0xff]
    %v3312 = vld [vmem:[#allocation4 + $0x40] sm:$0xff]
    %v3313 = vpack.c.bf16 %v3310, %v3307
    %v3314 = vpack.c.bf16 %v3311, %v3308
    %v3315 = vpack.c.bf16 %v3312, %v3309
    %s3316 = scalar_lea.vmem [#allocation11], 4
    %v3317 = vld [vmem:[%s3316] ss:$8 sm:$0x3]
    %v3319 = vperm.slane %v3317, 0
    %v3320 = vperm.slane %v3317, 1
    %v3371 = vunpack.c.l.b16 %v3259
    %v3372 = vunpack.c.h.b16 %v3259
    %v3373 = vunpack.c.l.b16 %v3260
    %v3374 = vunpack.c.h.b16 %v3260
    %v3375 = vunpack.c.l.b16 %v3261
    %v3376 = vunpack.c.h.b16 %v3261
    %v3377 = vunpack.c.l.b16 %v3262
    %v3378 = vunpack.c.h.b16 %v3262
    %v3379 = vunpack.c.l.b16 %v3263
    %v3380 = vunpack.c.h.b16 %v3263
    %v3381 = vunpack.c.l.b16 %v3264
    %v3382 = vunpack.c.h.b16 %v3264
    %v3383 = vunpack.c.l.b16 %v3265
    %v3384 = vunpack.c.h.b16 %v3265
    %v3385 = vunpack.c.l.b16 %v3266
    %v3386 = vunpack.c.h.b16 %v3266
    %v3387 = vunpack.c.l.b16 %v3267
    %v3388 = vunpack.c.h.b16 %v3267
    %v3389 = vunpack.c.l.b16 %v3268
    %v3390 = vunpack.c.h.b16 %v3268
    %v3391 = vunpack.c.l.b16 %v3269
    %v3392 = vunpack.c.h.b16 %v3269
    %v3393 = vunpack.c.l.b16 %v3270
    %v3394 = vunpack.c.h.b16 %v3270
    %v3395 = vunpack.c.l.b16 %v3271
    %v3396 = vunpack.c.h.b16 %v3271
    %v3397 = vunpack.c.l.b16 %v3272
    %v3398 = vunpack.c.h.b16 %v3272
    %v3399 = vunpack.c.l.b16 %v3273
    %v3400 = vunpack.c.h.b16 %v3273
    %v3401 = vunpack.c.l.b16 %v3274
    %v3402 = vunpack.c.h.b16 %v3274
    %v3403 = vunpack.c.l.b16 %v3275
    %v3404 = vunpack.c.h.b16 %v3275
    %v3405 = vunpack.c.l.b16 %v3276
    %v3406 = vunpack.c.h.b16 %v3276
    %v3407 = vunpack.c.l.b16 %v3277
    %v3408 = vunpack.c.h.b16 %v3277
    %v3409 = vunpack.c.l.b16 %v3278
    %v3410 = vunpack.c.h.b16 %v3278
    %v3411 = vunpack.c.l.b16 %v3279
    %v3412 = vunpack.c.h.b16 %v3279
    %v3413 = vunpack.c.l.b16 %v3280
    %v3414 = vunpack.c.h.b16 %v3280
    %v3415 = vunpack.c.l.b16 %v3281
    %v3416 = vunpack.c.h.b16 %v3281
    %v3417 = vunpack.c.l.b16 %v3282
    %v3418 = vunpack.c.h.b16 %v3282
    %v3419 = vunpack.c.l.b16 %v3283
    %v3420 = vunpack.c.h.b16 %v3283
    %v3421 = vunpack.c.l.b16 %v3284
    %v3422 = vunpack.c.h.b16 %v3284
    %v3423 = vunpack.c.l.b16 %v3285
    %v3424 = vunpack.c.h.b16 %v3285
    %v3425 = vunpack.c.l.b16 %v3286
    %v3426 = vunpack.c.h.b16 %v3286
    %v3427 = vunpack.c.l.b16 %v3287
    %v3428 = vunpack.c.h.b16 %v3287
    %v3429 = vunpack.c.l.b16 %v3288
    %v3430 = vunpack.c.h.b16 %v3288
    %v3431 = vunpack.c.l.b16 %v3289
    %v3432 = vunpack.c.h.b16 %v3289
    %v3433 = vunpack.c.l.b16 %v3290
    %v3434 = vunpack.c.h.b16 %v3290
    %v3435 = vunpack.c.l.b16 %v3291
    %v3436 = vunpack.c.h.b16 %v3291
    %v3437 = vunpack.c.l.b16 %v3292
    %v3438 = vunpack.c.h.b16 %v3292
    %v3439 = vunpack.c.l.b16 %v3293
    %v3440 = vunpack.c.h.b16 %v3293
    %v3441 = vunpack.c.l.b16 %v3294
    %v3442 = vunpack.c.h.b16 %v3294
    %v3443 = vunpack.c.l.b16 %v3295
    %v3444 = vunpack.c.h.b16 %v3295
    %v3445 = vunpack.c.l.b16 %v3296
    %v3446 = vunpack.c.h.b16 %v3296
    %v3447 = vunpack.c.l.b16 %v3297
    %v3448 = vunpack.c.h.b16 %v3297
    %v3449 = vunpack.c.l.b16 %v3298
    %v3450 = vunpack.c.h.b16 %v3298
    %v3451 = vunpack.c.l.b16 %v3299
    %v3452 = vunpack.c.h.b16 %v3299
    %v3453 = vunpack.c.l.b16 %v3300
    %v3454 = vunpack.c.h.b16 %v3300
    %v3455 = vunpack.c.l.b16 %v3301
    %v3456 = vunpack.c.h.b16 %v3301
    %v3457 = vunpack.c.l.b16 %v3302
    %v3458 = vunpack.c.h.b16 %v3302
    %v3459 = vunpack.c.l.b16 %v3303
    %v3460 = vunpack.c.h.b16 %v3303
    %v3461 = vunpack.c.l.b16 %v3304
    %v3462 = vunpack.c.h.b16 %v3304
    %v3463 = vunpack.c.l.b16 %v3305
    %v3464 = vunpack.c.h.b16 %v3305
    %v3465 = vunpack.c.l.b16 %v3306
    %v3466 = vunpack.c.h.b16 %v3306
    %v3467 = vpack.c.b16 %v3373, %v3371
    %v3468 = vpack.c.b16 %v3374, %v3372
    %v3469 = vpack.c.b16 %v3377, %v3375
    %v3470 = vpack.c.b16 %v3378, %v3376
    %v3471 = vpack.c.b16 %v3381, %v3379
    %v3472 = vpack.c.b16 %v3382, %v3380
    %v3473 = vpack.c.b16 %v3385, %v3383
    %v3474 = vpack.c.b16 %v3386, %v3384
    %v3475 = vpack.c.b16 %v3389, %v3387
    %v3476 = vpack.c.b16 %v3390, %v3388
    %v3477 = vpack.c.b16 %v3393, %v3391
    %v3478 = vpack.c.b16 %v3394, %v3392
    %v3479 = vpack.c.b16 %v3397, %v3395
    %v3480 = vpack.c.b16 %v3398, %v3396
    %v3481 = vpack.c.b16 %v3401, %v3399
    %v3482 = vpack.c.b16 %v3402, %v3400
    %v3483 = vpack.c.b16 %v3405, %v3403
    %v3484 = vpack.c.b16 %v3406, %v3404
    %v3485 = vpack.c.b16 %v3409, %v3407
    %v3486 = vpack.c.b16 %v3410, %v3408
    %v3487 = vpack.c.b16 %v3413, %v3411
    %v3488 = vpack.c.b16 %v3414, %v3412
    %v3489 = vpack.c.b16 %v3417, %v3415
    %v3490 = vpack.c.b16 %v3418, %v3416
    %v3491 = vpack.c.b16 %v3421, %v3419
    %v3492 = vpack.c.b16 %v3422, %v3420
    %v3493 = vpack.c.b16 %v3425, %v3423
    %v3494 = vpack.c.b16 %v3426, %v3424
    %v3495 = vpack.c.b16 %v3429, %v3427
    %v3496 = vpack.c.b16 %v3430, %v3428
    %v3497 = vpack.c.b16 %v3433, %v3431
    %v3498 = vpack.c.b16 %v3434, %v3432
    %v3499 = vpack.c.b16 %v3437, %v3435
    %v3500 = vpack.c.b16 %v3438, %v3436
    %v3501 = vpack.c.b16 %v3441, %v3439
    %v3502 = vpack.c.b16 %v3442, %v3440
    %v3503 = vpack.c.b16 %v3445, %v3443
    %v3504 = vpack.c.b16 %v3446, %v3444
    %v3505 = vpack.c.b16 %v3449, %v3447
    %v3506 = vpack.c.b16 %v3450, %v3448
    %v3507 = vpack.c.b16 %v3453, %v3451
    %v3508 = vpack.c.b16 %v3454, %v3452
    %v3509 = vpack.c.b16 %v3457, %v3455
    %v3510 = vpack.c.b16 %v3458, %v3456
    %v3511 = vpack.c.b16 %v3461, %v3459
    %v3512 = vpack.c.b16 %v3462, %v3460
    %v3513 = vpack.c.b16 %v3465, %v3463
    %v3514 = vpack.c.b16 %v3466, %v3464
    %3563 = vmatpush.bf16.msra.mxu0 %v3481
    %3564 = vmatpush.bf16.msra.mxu0 %v3479
    %3565 = vmatpush.bf16.msra.mxu0 %v3477
    %3566 = vmatpush.bf16.msra.mxu0 %v3475
    %3567 = vmatpush.bf16.msra.mxu0 %v3473
    %3568 = vmatpush.bf16.msra.mxu0 %v3471
    %3569 = vmatpush.bf16.msra.mxu0 %v3469
    %3570 = vmatpush.bf16.msra.mxu0 %v3467
    %3571 = vmatmul.bf16.gmra.mxu0 %v3313
    %v3572 = vpop.f32.mrf.mxu0
    %v3573 = vadd.f32 %v3319, %v3572
    %v3574 = vpop.f32.mrf.mxu0
    %v3575 = vadd.f32 %v3319, %v3574
    %3576 = vdwg.mxu0
    %3577 = vmatpush.bf16.msra.mxu0 %v3497
    %3578 = vmatpush.bf16.msra.mxu0 %v3495
    %3579 = vmatpush.bf16.msra.mxu0 %v3493
    %3580 = vmatpush.bf16.msra.mxu0 %v3491
    %3581 = vmatpush.bf16.msra.mxu0 %v3489
    %3582 = vmatpush.bf16.msra.mxu0 %v3487
    %3583 = vmatpush.bf16.msra.mxu0 %v3485
    %3584 = vmatpush.bf16.msra.mxu0 %v3483
    %3585 = vmatmul.bf16.gmra.mxu0 %v3314
    %v3586 = vpop.f32.mrf.mxu0
    %v3587 = vadd.f32 %v3573, %v3586
    %v3588 = vpop.f32.mrf.mxu0
    %v3589 = vadd.f32 %v3575, %v3588
    %3590 = vdwg.mxu0
    %3591 = vmatpush.bf16.msra.mxu0 %v3513
    %3592 = vmatpush.bf16.msra.mxu0 %v3511
    %3593 = vmatpush.bf16.msra.mxu0 %v3509
    %3594 = vmatpush.bf16.msra.mxu0 %v3507
    %3595 = vmatpush.bf16.msra.mxu0 %v3505
    %3596 = vmatpush.bf16.msra.mxu0 %v3503
    %3597 = vmatpush.bf16.msra.mxu0 %v3501
    %3598 = vmatpush.bf16.msra.mxu0 %v3499
    %3599 = vmatmul.bf16.gmra.mxu0 %v3315
    %v3600 = vpop.f32.mrf.mxu0
    %v3601 = vadd.f32 %v3587, %v3600
    %v3602 = vpop.f32.mrf.mxu0
    %v3603 = vadd.f32 %v3589, %v3602
    %3604 = vdwg.mxu0
    %3605 = vmatpush.bf16.msra.mxu0 %v3482
    %3606 = vmatpush.bf16.msra.mxu0 %v3480
    %3607 = vmatpush.bf16.msra.mxu0 %v3478
    %3608 = vmatpush.bf16.msra.mxu0 %v3476
    %3609 = vmatpush.bf16.msra.mxu0 %v3474
    %3610 = vmatpush.bf16.msra.mxu0 %v3472
    %3611 = vmatpush.bf16.msra.mxu0 %v3470
    %3612 = vmatpush.bf16.msra.mxu0 %v3468
    %3613 = vmatmul.bf16.gmra.mxu0 %v3313
    %v3614 = vpop.f32.mrf.mxu0
    %v3615 = vadd.f32 %v3320, %v3614
    %v3616 = vpop.f32.mrf.mxu0
    %v3617 = vadd.f32 %v3320, %v3616
    %3618 = vdwg.mxu0
    %3619 = vmatpush.bf16.msra.mxu0 %v3498
    %3620 = vmatpush.bf16.msra.mxu0 %v3496
    %3621 = vmatpush.bf16.msra.mxu0 %v3494
    %3622 = vmatpush.bf16.msra.mxu0 %v3492
    %3623 = vmatpush.bf16.msra.mxu0 %v3490
    %3624 = vmatpush.bf16.msra.mxu0 %v3488
    %3625 = vmatpush.bf16.msra.mxu0 %v3486
    %3626 = vmatpush.bf16.msra.mxu0 %v3484
    %3627 = vmatmul.bf16.gmra.mxu0 %v3314
    %v3628 = vpop.f32.mrf.mxu0
    %v3629 = vadd.f32 %v3615, %v3628
    %v3630 = vpop.f32.mrf.mxu0
    %v3631 = vadd.f32 %v3617, %v3630
    %3632 = vdwg.mxu0
    %3633 = vmatpush.bf16.msra.mxu0 %v3514
    %3634 = vmatpush.bf16.msra.mxu0 %v3512
    %3635 = vmatpush.bf16.msra.mxu0 %v3510
    %3636 = vmatpush.bf16.msra.mxu0 %v3508
    %3637 = vmatpush.bf16.msra.mxu0 %v3506
    %3638 = vmatpush.bf16.msra.mxu0 %v3504
    %3639 = vmatpush.bf16.msra.mxu0 %v3502
    %3640 = vmatpush.bf16.msra.mxu0 %v3500
    %3641 = vmatmul.bf16.gmra.mxu0 %v3315
    %v3642 = vpop.f32.mrf.mxu0
    %v3643 = vadd.f32 %v3629, %v3642
    %v3644 = vpop.f32.mrf.mxu0
    %v3645 = vadd.f32 %v3631, %v3644
    %3646 = vdwg.mxu0
    %v3647 = vmax.f32 %v3601, 0.0
    %v3648 = vmax.f32 %v3643, 0.0
    %v3649 = vmax.f32 %v3603, 0.0
    %v3650 = vmax.f32 %v3645, 0.0
    %3651 = vst [vmem:[#allocation4 + $0x10] sm:$0xff] %v3647
    %3652 = vst [vmem:[#allocation4 + $0x18] sm:$0xff] %v3648
    %v3655 = vrot.slane %v3647, 7
    %v3656 = vrot.slane %v3648, 7
    %3659 = vst [vmem:[#allocation4] sm:$0xfe] %v3655
    %3660 = vst [vmem:[#allocation4 + $0x8] sm:$0xfe] %v3656
    %3661 = vst.msk [vmem:[#allocation4] ss:$8 sm:$0x3] %vm651, 0.0
    %3662 = vst.msk [vmem:[#allocation4] ss:$8 sm:$0x0] %vm651, 0.0
    %v3663 = vrot.slane %v3647, 1
    %v3664 = vrot.slane %v3648, 1
    %3667 = vst [vmem:[#allocation4 + $0x20] sm:$0x7f] %v3663
    %3668 = vst [vmem:[#allocation4 + $0x28] sm:$0x7f] %v3664
    %s3669 = scalar_lea.vmem [#allocation4], 39
    %3670 = vst.msk [vmem:[%s3669] ss:$8 sm:$0x3] %vm651, 0.0
    %3671 = vst.msk [vmem:[%s3669] ss:$8 sm:$0x0] %vm651, 0.0
    %3672 = vst [vmem:[#allocation4 + $0x40] sm:$0xff] %v3649
    %3673 = vst [vmem:[#allocation4 + $0x48] sm:$0xff] %v3650
    %v3676 = vrot.slane %v3649, 7
    %v3677 = vrot.slane %v3650, 7
    %3680 = vst [vmem:[#allocation4 + $0x30] sm:$0xfe] %v3676
    %3681 = vst [vmem:[#allocation4 + $0x38] sm:$0xfe] %v3677
    %s3682 = scalar_lea.vmem [#allocation4], 48
    %3683 = vst.msk [vmem:[%s3682] ss:$8 sm:$0x3] %vm651, 0.0
    %3684 = vst.msk [vmem:[%s3682] ss:$8 sm:$0x0] %vm651, 0.0
    %v3685 = vrot.slane %v3649, 1
    %v3686 = vrot.slane %v3650, 1
    %3689 = vst [vmem:[#allocation4 + $0x50] sm:$0x7f] %v3685
    %3690 = vst [vmem:[#allocation4 + $0x58] sm:$0x7f] %v3686
    %3691 = vst.msk [vmem:[%s2331] ss:$8 sm:$0x3] %vm651, 0.0
    %3692 = vst.msk [vmem:[%s2331] ss:$8 sm:$0x0] %vm651, 0.0
    %s3693 = smul.u32 4, 576
    %s3694 = smul.u32 %s3693, 2
    %s3695 = sshll.u32 %s3694, 4
    %3696 = dma.done [#allocation3], %s3695
    %v3697 = vld [vmem:[#allocation2] sm:$0xff]
    %v3698 = vld [vmem:[#allocation2 + $0x8] sm:$0xff]
    %v3699 = vld [vmem:[#allocation2 + $0x10] sm:$0xff]
    %v3700 = vld [vmem:[#allocation2 + $0x18] sm:$0xff]
    %v3701 = vld [vmem:[#allocation2 + $0x20] sm:$0xff]
    %v3702 = vld [vmem:[#allocation2 + $0x28] sm:$0xff]
    %v3703 = vld [vmem:[#allocation2 + $0x30] sm:$0xff]
    %v3704 = vld [vmem:[#allocation2 + $0x38] sm:$0xff]
    %v3705 = vld [vmem:[#allocation2 + $0x40] sm:$0xff]
    %v3706 = vld [vmem:[#allocation2 + $0x48] sm:$0xff]
    %v3707 = vld [vmem:[#allocation2 + $0x50] sm:$0xff]
    %v3708 = vld [vmem:[#allocation2 + $0x58] sm:$0xff]
    %v3709 = vld [vmem:[#allocation2 + $0x60] sm:$0xff]
    %v3710 = vld [vmem:[#allocation2 + $0x68] sm:$0xff]
    %v3711 = vld [vmem:[#allocation2 + $0x70] sm:$0xff]
    %v3712 = vld [vmem:[#allocation2 + $0x78] sm:$0xff]
    %v3713 = vld [vmem:[#allocation2 + $0x80] sm:$0xff]
    %v3714 = vld [vmem:[#allocation2 + $0x88] sm:$0xff]
    %v3715 = vld [vmem:[#allocation2 + $0x90] sm:$0xff]
    %v3716 = vld [vmem:[#allocation2 + $0x98] sm:$0xff]
    %v3717 = vld [vmem:[#allocation2 + $0xa0] sm:$0xff]
    %v3718 = vld [vmem:[#allocation2 + $0xa8] sm:$0xff]
    %v3719 = vld [vmem:[#allocation2 + $0xb0] sm:$0xff]
    %v3720 = vld [vmem:[#allocation2 + $0xb8] sm:$0xff]
    %v3721 = vld [vmem:[#allocation2 + $0xc0] sm:$0xff]
    %v3722 = vld [vmem:[#allocation2 + $0xc8] sm:$0xff]
    %v3723 = vld [vmem:[#allocation2 + $0xd0] sm:$0xff]
    %v3724 = vld [vmem:[#allocation2 + $0xd8] sm:$0xff]
    %v3725 = vld [vmem:[#allocation2 + $0xe0] sm:$0xff]
    %v3726 = vld [vmem:[#allocation2 + $0xe8] sm:$0xff]
    %v3727 = vld [vmem:[#allocation2 + $0xf0] sm:$0xff]
    %v3728 = vld [vmem:[#allocation2 + $0xf8] sm:$0xff]
    %v3729 = vld [vmem:[#allocation2 + $0x100] sm:$0xff]
    %v3730 = vld [vmem:[#allocation2 + $0x108] sm:$0xff]
    %v3731 = vld [vmem:[#allocation2 + $0x110] sm:$0xff]
    %v3732 = vld [vmem:[#allocation2 + $0x118] sm:$0xff]
    %v3733 = vld [vmem:[#allocation2 + $0x120] sm:$0xff]
    %v3734 = vld [vmem:[#allocation2 + $0x128] sm:$0xff]
    %v3735 = vld [vmem:[#allocation2 + $0x130] sm:$0xff]
    %v3736 = vld [vmem:[#allocation2 + $0x138] sm:$0xff]
    %v3737 = vld [vmem:[#allocation2 + $0x140] sm:$0xff]
    %v3738 = vld [vmem:[#allocation2 + $0x148] sm:$0xff]
    %v3739 = vld [vmem:[#allocation2 + $0x150] sm:$0xff]
    %v3740 = vld [vmem:[#allocation2 + $0x158] sm:$0xff]
    %v3741 = vld [vmem:[#allocation2 + $0x160] sm:$0xff]
    %v3742 = vld [vmem:[#allocation2 + $0x168] sm:$0xff]
    %v3743 = vld [vmem:[#allocation2 + $0x170] sm:$0xff]
    %v3744 = vld [vmem:[#allocation2 + $0x178] sm:$0xff]
    %v3745 = vld [vmem:[#allocation2 + $0x180] sm:$0xff]
    %v3746 = vld [vmem:[#allocation2 + $0x188] sm:$0xff]
    %v3747 = vld [vmem:[#allocation2 + $0x190] sm:$0xff]
    %v3748 = vld [vmem:[#allocation2 + $0x198] sm:$0xff]
    %v3749 = vld [vmem:[#allocation2 + $0x1a0] sm:$0xff]
    %v3750 = vld [vmem:[#allocation2 + $0x1a8] sm:$0xff]
    %v3751 = vld [vmem:[#allocation2 + $0x1b0] sm:$0xff]
    %v3752 = vld [vmem:[#allocation2 + $0x1b8] sm:$0xff]
    %v3753 = vld [vmem:[#allocation2 + $0x1c0] sm:$0xff]
    %v3754 = vld [vmem:[#allocation2 + $0x1c8] sm:$0xff]
    %v3755 = vld [vmem:[#allocation2 + $0x1d0] sm:$0xff]
    %v3756 = vld [vmem:[#allocation2 + $0x1d8] sm:$0xff]
    %v3757 = vld [vmem:[#allocation2 + $0x1e0] sm:$0xff]
    %v3758 = vld [vmem:[#allocation2 + $0x1e8] sm:$0xff]
    %v3759 = vld [vmem:[#allocation2 + $0x1f0] sm:$0xff]
    %v3760 = vld [vmem:[#allocation2 + $0x1f8] sm:$0xff]
    %v3761 = vld [vmem:[#allocation2 + $0x200] sm:$0xff]
    %v3762 = vld [vmem:[#allocation2 + $0x208] sm:$0xff]
    %v3763 = vld [vmem:[#allocation2 + $0x210] sm:$0xff]
    %v3764 = vld [vmem:[#allocation2 + $0x218] sm:$0xff]
    %v3765 = vld [vmem:[#allocation2 + $0x220] sm:$0xff]
    %v3766 = vld [vmem:[#allocation2 + $0x228] sm:$0xff]
    %v3767 = vld [vmem:[#allocation2 + $0x230] sm:$0xff]
    %v3768 = vld [vmem:[#allocation2 + $0x238] sm:$0xff]
    %v3769 = vld [vmem:[#allocation2 + $0x240] sm:$0xff]
    %v3770 = vld [vmem:[#allocation2 + $0x248] sm:$0xff]
    %v3771 = vld [vmem:[#allocation2 + $0x250] sm:$0xff]
    %v3772 = vld [vmem:[#allocation2 + $0x258] sm:$0xff]
    %v3773 = vld [vmem:[#allocation2 + $0x260] sm:$0xff]
    %v3774 = vld [vmem:[#allocation2 + $0x268] sm:$0xff]
    %v3775 = vld [vmem:[#allocation2 + $0x270] sm:$0xff]
    %v3776 = vld [vmem:[#allocation2 + $0x278] sm:$0xff]
    %v3777 = vld [vmem:[#allocation2 + $0x280] sm:$0xff]
    %v3778 = vld [vmem:[#allocation2 + $0x288] sm:$0xff]
    %v3779 = vld [vmem:[#allocation2 + $0x290] sm:$0xff]
    %v3780 = vld [vmem:[#allocation2 + $0x298] sm:$0xff]
    %v3781 = vld [vmem:[#allocation2 + $0x2a0] sm:$0xff]
    %v3782 = vld [vmem:[#allocation2 + $0x2a8] sm:$0xff]
    %v3783 = vld [vmem:[#allocation2 + $0x2b0] sm:$0xff]
    %v3784 = vld [vmem:[#allocation2 + $0x2b8] sm:$0xff]
    %v3785 = vld [vmem:[#allocation2 + $0x2c0] sm:$0xff]
    %v3786 = vld [vmem:[#allocation2 + $0x2c8] sm:$0xff]
    %v3787 = vld [vmem:[#allocation2 + $0x2d0] sm:$0xff]
    %v3788 = vld [vmem:[#allocation2 + $0x2d8] sm:$0xff]
    %v3789 = vld [vmem:[#allocation2 + $0x2e0] sm:$0xff]
    %v3790 = vld [vmem:[#allocation2 + $0x2e8] sm:$0xff]
    %v3791 = vld [vmem:[#allocation2 + $0x2f0] sm:$0xff]
    %v3792 = vld [vmem:[#allocation2 + $0x2f8] sm:$0xff]
    %v3793 = vld [vmem:[#allocation4] sm:$0xff]
    %v3794 = vld [vmem:[#allocation4 + $0x8] sm:$0xff]
    %v3795 = vld [vmem:[#allocation4 + $0x10] sm:$0xff]
    %v3796 = vld [vmem:[#allocation4 + $0x18] sm:$0xff]
    %v3797 = vld [vmem:[#allocation4 + $0x20] sm:$0xff]
    %v3798 = vld [vmem:[#allocation4 + $0x28] sm:$0xff]
    %v3799 = vld [vmem:[#allocation4 + $0x30] sm:$0xff]
    %v3800 = vld [vmem:[#allocation4 + $0x38] sm:$0xff]
    %v3801 = vld [vmem:[#allocation4 + $0x40] sm:$0xff]
    %v3802 = vld [vmem:[#allocation4 + $0x48] sm:$0xff]
    %v3803 = vld [vmem:[#allocation4 + $0x50] sm:$0xff]
    %v3804 = vld [vmem:[#allocation4 + $0x58] sm:$0xff]
    %v3805 = vpack.c.bf16 %v3799, %v3793
    %v3806 = vpack.c.bf16 %v3800, %v3794
    %v3807 = vpack.c.bf16 %v3801, %v3795
    %v3808 = vpack.c.bf16 %v3802, %v3796
    %v3809 = vpack.c.bf16 %v3803, %v3797
    %v3810 = vpack.c.bf16 %v3804, %v3798
    %s3811 = scalar_lea.vmem [#allocation11], 5
    %v3812 = vld [vmem:[%s3811] ss:$8 sm:$0x3]
    %v3814 = vperm.slane %v3812, 0
    %v3815 = vperm.slane %v3812, 1
    %v3914 = vunpack.c.l.b16 %v3697
    %v3915 = vunpack.c.h.b16 %v3697
    %v3916 = vunpack.c.l.b16 %v3698
    %v3917 = vunpack.c.h.b16 %v3698
    %v3918 = vunpack.c.l.b16 %v3699
    %v3919 = vunpack.c.h.b16 %v3699
    %v3920 = vunpack.c.l.b16 %v3700
    %v3921 = vunpack.c.h.b16 %v3700
    %v3922 = vunpack.c.l.b16 %v3701
    %v3923 = vunpack.c.h.b16 %v3701
    %v3924 = vunpack.c.l.b16 %v3702
    %v3925 = vunpack.c.h.b16 %v3702
    %v3926 = vunpack.c.l.b16 %v3703
    %v3927 = vunpack.c.h.b16 %v3703
    %v3928 = vunpack.c.l.b16 %v3704
    %v3929 = vunpack.c.h.b16 %v3704
    %v3930 = vunpack.c.l.b16 %v3705
    %v3931 = vunpack.c.h.b16 %v3705
    %v3932 = vunpack.c.l.b16 %v3706
    %v3933 = vunpack.c.h.b16 %v3706
    %v3934 = vunpack.c.l.b16 %v3707
    %v3935 = vunpack.c.h.b16 %v3707
    %v3936 = vunpack.c.l.b16 %v3708
    %v3937 = vunpack.c.h.b16 %v3708
    %v3938 = vunpack.c.l.b16 %v3709
    %v3939 = vunpack.c.h.b16 %v3709
    %v3940 = vunpack.c.l.b16 %v3710
    %v3941 = vunpack.c.h.b16 %v3710
    %v3942 = vunpack.c.l.b16 %v3711
    %v3943 = vunpack.c.h.b16 %v3711
    %v3944 = vunpack.c.l.b16 %v3712
    %v3945 = vunpack.c.h.b16 %v3712
    %v3946 = vunpack.c.l.b16 %v3713
    %v3947 = vunpack.c.h.b16 %v3713
    %v3948 = vunpack.c.l.b16 %v3714
    %v3949 = vunpack.c.h.b16 %v3714
    %v3950 = vunpack.c.l.b16 %v3715
    %v3951 = vunpack.c.h.b16 %v3715
    %v3952 = vunpack.c.l.b16 %v3716
    %v3953 = vunpack.c.h.b16 %v3716
    %v3954 = vunpack.c.l.b16 %v3717
    %v3955 = vunpack.c.h.b16 %v3717
    %v3956 = vunpack.c.l.b16 %v3718
    %v3957 = vunpack.c.h.b16 %v3718
    %v3958 = vunpack.c.l.b16 %v3719
    %v3959 = vunpack.c.h.b16 %v3719
    %v3960 = vunpack.c.l.b16 %v3720
    %v3961 = vunpack.c.h.b16 %v3720
    %v3962 = vunpack.c.l.b16 %v3721
    %v3963 = vunpack.c.h.b16 %v3721
    %v3964 = vunpack.c.l.b16 %v3722
    %v3965 = vunpack.c.h.b16 %v3722
    %v3966 = vunpack.c.l.b16 %v3723
    %v3967 = vunpack.c.h.b16 %v3723
    %v3968 = vunpack.c.l.b16 %v3724
    %v3969 = vunpack.c.h.b16 %v3724
    %v3970 = vunpack.c.l.b16 %v3725
    %v3971 = vunpack.c.h.b16 %v3725
    %v3972 = vunpack.c.l.b16 %v3726
    %v3973 = vunpack.c.h.b16 %v3726
    %v3974 = vunpack.c.l.b16 %v3727
    %v3975 = vunpack.c.h.b16 %v3727
    %v3976 = vunpack.c.l.b16 %v3728
    %v3977 = vunpack.c.h.b16 %v3728
    %v3978 = vunpack.c.l.b16 %v3729
    %v3979 = vunpack.c.h.b16 %v3729
    %v3980 = vunpack.c.l.b16 %v3730
    %v3981 = vunpack.c.h.b16 %v3730
    %v3982 = vunpack.c.l.b16 %v3731
    %v3983 = vunpack.c.h.b16 %v3731
    %v3984 = vunpack.c.l.b16 %v3732
    %v3985 = vunpack.c.h.b16 %v3732
    %v3986 = vunpack.c.l.b16 %v3733
    %v3987 = vunpack.c.h.b16 %v3733
    %v3988 = vunpack.c.l.b16 %v3734
    %v3989 = vunpack.c.h.b16 %v3734
    %v3990 = vunpack.c.l.b16 %v3735
    %v3991 = vunpack.c.h.b16 %v3735
    %v3992 = vunpack.c.l.b16 %v3736
    %v3993 = vunpack.c.h.b16 %v3736
    %v3994 = vunpack.c.l.b16 %v3737
    %v3995 = vunpack.c.h.b16 %v3737
    %v3996 = vunpack.c.l.b16 %v3738
    %v3997 = vunpack.c.h.b16 %v3738
    %v3998 = vunpack.c.l.b16 %v3739
    %v3999 = vunpack.c.h.b16 %v3739
    %v4000 = vunpack.c.l.b16 %v3740
    %v4001 = vunpack.c.h.b16 %v3740
    %v4002 = vunpack.c.l.b16 %v3741
    %v4003 = vunpack.c.h.b16 %v3741
    %v4004 = vunpack.c.l.b16 %v3742
    %v4005 = vunpack.c.h.b16 %v3742
    %v4006 = vunpack.c.l.b16 %v3743
    %v4007 = vunpack.c.h.b16 %v3743
    %v4008 = vunpack.c.l.b16 %v3744
    %v4009 = vunpack.c.h.b16 %v3744
    %v4010 = vunpack.c.l.b16 %v3745
    %v4011 = vunpack.c.h.b16 %v3745
    %v4012 = vunpack.c.l.b16 %v3746
    %v4013 = vunpack.c.h.b16 %v3746
    %v4014 = vunpack.c.l.b16 %v3747
    %v4015 = vunpack.c.h.b16 %v3747
    %v4016 = vunpack.c.l.b16 %v3748
    %v4017 = vunpack.c.h.b16 %v3748
    %v4018 = vunpack.c.l.b16 %v3749
    %v4019 = vunpack.c.h.b16 %v3749
    %v4020 = vunpack.c.l.b16 %v3750
    %v4021 = vunpack.c.h.b16 %v3750
    %v4022 = vunpack.c.l.b16 %v3751
    %v4023 = vunpack.c.h.b16 %v3751
    %v4024 = vunpack.c.l.b16 %v3752
    %v4025 = vunpack.c.h.b16 %v3752
    %v4026 = vunpack.c.l.b16 %v3753
    %v4027 = vunpack.c.h.b16 %v3753
    %v4028 = vunpack.c.l.b16 %v3754
    %v4029 = vunpack.c.h.b16 %v3754
    %v4030 = vunpack.c.l.b16 %v3755
    %v4031 = vunpack.c.h.b16 %v3755
    %v4032 = vunpack.c.l.b16 %v3756
    %v4033 = vunpack.c.h.b16 %v3756
    %v4034 = vunpack.c.l.b16 %v3757
    %v4035 = vunpack.c.h.b16 %v3757
    %v4036 = vunpack.c.l.b16 %v3758
    %v4037 = vunpack.c.h.b16 %v3758
    %v4038 = vunpack.c.l.b16 %v3759
    %v4039 = vunpack.c.h.b16 %v3759
    %v4040 = vunpack.c.l.b16 %v3760
    %v4041 = vunpack.c.h.b16 %v3760
    %v4042 = vunpack.c.l.b16 %v3761
    %v4043 = vunpack.c.h.b16 %v3761
    %v4044 = vunpack.c.l.b16 %v3762
    %v4045 = vunpack.c.h.b16 %v3762
    %v4046 = vunpack.c.l.b16 %v3763
    %v4047 = vunpack.c.h.b16 %v3763
    %v4048 = vunpack.c.l.b16 %v3764
    %v4049 = vunpack.c.h.b16 %v3764
    %v4050 = vunpack.c.l.b16 %v3765
    %v4051 = vunpack.c.h.b16 %v3765
    %v4052 = vunpack.c.l.b16 %v3766
    %v4053 = vunpack.c.h.b16 %v3766
    %v4054 = vunpack.c.l.b16 %v3767
    %v4055 = vunpack.c.h.b16 %v3767
    %v4056 = vunpack.c.l.b16 %v3768
    %v4057 = vunpack.c.h.b16 %v3768
    %v4058 = vunpack.c.l.b16 %v3769
    %v4059 = vunpack.c.h.b16 %v3769
    %v4060 = vunpack.c.l.b16 %v3770
    %v4061 = vunpack.c.h.b16 %v3770
    %v4062 = vunpack.c.l.b16 %v3771
    %v4063 = vunpack.c.h.b16 %v3771
    %v4064 = vunpack.c.l.b16 %v3772
    %v4065 = vunpack.c.h.b16 %v3772
    %v4066 = vunpack.c.l.b16 %v3773
    %v4067 = vunpack.c.h.b16 %v3773
    %v4068 = vunpack.c.l.b16 %v3774
    %v4069 = vunpack.c.h.b16 %v3774
    %v4070 = vunpack.c.l.b16 %v3775
    %v4071 = vunpack.c.h.b16 %v3775
    %v4072 = vunpack.c.l.b16 %v3776
    %v4073 = vunpack.c.h.b16 %v3776
    %v4074 = vunpack.c.l.b16 %v3777
    %v4075 = vunpack.c.h.b16 %v3777
    %v4076 = vunpack.c.l.b16 %v3778
    %v4077 = vunpack.c.h.b16 %v3778
    %v4078 = vunpack.c.l.b16 %v3779
    %v4079 = vunpack.c.h.b16 %v3779
    %v4080 = vunpack.c.l.b16 %v3780
    %v4081 = vunpack.c.h.b16 %v3780
    %v4082 = vunpack.c.l.b16 %v3781
    %v4083 = vunpack.c.h.b16 %v3781
    %v4084 = vunpack.c.l.b16 %v3782
    %v4085 = vunpack.c.h.b16 %v3782
    %v4086 = vunpack.c.l.b16 %v3783
    %v4087 = vunpack.c.h.b16 %v3783
    %v4088 = vunpack.c.l.b16 %v3784
    %v4089 = vunpack.c.h.b16 %v3784
    %v4090 = vunpack.c.l.b16 %v3785
    %v4091 = vunpack.c.h.b16 %v3785
    %v4092 = vunpack.c.l.b16 %v3786
    %v4093 = vunpack.c.h.b16 %v3786
    %v4094 = vunpack.c.l.b16 %v3787
    %v4095 = vunpack.c.h.b16 %v3787
    %v4096 = vunpack.c.l.b16 %v3788
    %v4097 = vunpack.c.h.b16 %v3788
    %v4098 = vunpack.c.l.b16 %v3789
    %v4099 = vunpack.c.h.b16 %v3789
    %v4100 = vunpack.c.l.b16 %v3790
    %v4101 = vunpack.c.h.b16 %v3790
    %v4102 = vunpack.c.l.b16 %v3791
    %v4103 = vunpack.c.h.b16 %v3791
    %v4104 = vunpack.c.l.b16 %v3792
    %v4105 = vunpack.c.h.b16 %v3792
    %v4106 = vpack.c.b16 %v3916, %v3914
    %v4107 = vpack.c.b16 %v3917, %v3915
    %v4108 = vpack.c.b16 %v3920, %v3918
    %v4109 = vpack.c.b16 %v3921, %v3919
    %v4110 = vpack.c.b16 %v3924, %v3922
    %v4111 = vpack.c.b16 %v3925, %v3923
    %v4112 = vpack.c.b16 %v3928, %v3926
    %v4113 = vpack.c.b16 %v3929, %v3927
    %v4114 = vpack.c.b16 %v3932, %v3930
    %v4115 = vpack.c.b16 %v3933, %v3931
    %v4116 = vpack.c.b16 %v3936, %v3934
    %v4117 = vpack.c.b16 %v3937, %v3935
    %v4118 = vpack.c.b16 %v3940, %v3938
    %v4119 = vpack.c.b16 %v3941, %v3939
    %v4120 = vpack.c.b16 %v3944, %v3942
    %v4121 = vpack.c.b16 %v3945, %v3943
    %v4122 = vpack.c.b16 %v3948, %v3946
    %v4123 = vpack.c.b16 %v3949, %v3947
    %v4124 = vpack.c.b16 %v3952, %v3950
    %v4125 = vpack.c.b16 %v3953, %v3951
    %v4126 = vpack.c.b16 %v3956, %v3954
    %v4127 = vpack.c.b16 %v3957, %v3955
    %v4128 = vpack.c.b16 %v3960, %v3958
    %v4129 = vpack.c.b16 %v3961, %v3959
    %v4130 = vpack.c.b16 %v3964, %v3962
    %v4131 = vpack.c.b16 %v3965, %v3963
    %v4132 = vpack.c.b16 %v3968, %v3966
    %v4133 = vpack.c.b16 %v3969, %v3967
    %v4134 = vpack.c.b16 %v3972, %v3970
    %v4135 = vpack.c.b16 %v3973, %v3971
    %v4136 = vpack.c.b16 %v3976, %v3974
    %v4137 = vpack.c.b16 %v3977, %v3975
    %v4138 = vpack.c.b16 %v3980, %v3978
    %v4139 = vpack.c.b16 %v3981, %v3979
    %v4140 = vpack.c.b16 %v3984, %v3982
    %v4141 = vpack.c.b16 %v3985, %v3983
    %v4142 = vpack.c.b16 %v3988, %v3986
    %v4143 = vpack.c.b16 %v3989, %v3987
    %v4144 = vpack.c.b16 %v3992, %v3990
    %v4145 = vpack.c.b16 %v3993, %v3991
    %v4146 = vpack.c.b16 %v3996, %v3994
    %v4147 = vpack.c.b16 %v3997, %v3995
    %v4148 = vpack.c.b16 %v4000, %v3998
    %v4149 = vpack.c.b16 %v4001, %v3999
    %v4150 = vpack.c.b16 %v4004, %v4002
    %v4151 = vpack.c.b16 %v4005, %v4003
    %v4152 = vpack.c.b16 %v4008, %v4006
    %v4153 = vpack.c.b16 %v4009, %v4007
    %v4154 = vpack.c.b16 %v4012, %v4010
    %v4155 = vpack.c.b16 %v4013, %v4011
    %v4156 = vpack.c.b16 %v4016, %v4014
    %v4157 = vpack.c.b16 %v4017, %v4015
    %v4158 = vpack.c.b16 %v4020, %v4018
    %v4159 = vpack.c.b16 %v4021, %v4019
    %v4160 = vpack.c.b16 %v4024, %v4022
    %v4161 = vpack.c.b16 %v4025, %v4023
    %v4162 = vpack.c.b16 %v4028, %v4026
    %v4163 = vpack.c.b16 %v4029, %v4027
    %v4164 = vpack.c.b16 %v4032, %v4030
    %v4165 = vpack.c.b16 %v4033, %v4031
    %v4166 = vpack.c.b16 %v4036, %v4034
    %v4167 = vpack.c.b16 %v4037, %v4035
    %v4168 = vpack.c.b16 %v4040, %v4038
    %v4169 = vpack.c.b16 %v4041, %v4039
    %v4170 = vpack.c.b16 %v4044, %v4042
    %v4171 = vpack.c.b16 %v4045, %v4043
    %v4172 = vpack.c.b16 %v4048, %v4046
    %v4173 = vpack.c.b16 %v4049, %v4047
    %v4174 = vpack.c.b16 %v4052, %v4050
    %v4175 = vpack.c.b16 %v4053, %v4051
    %v4176 = vpack.c.b16 %v4056, %v4054
    %v4177 = vpack.c.b16 %v4057, %v4055
    %v4178 = vpack.c.b16 %v4060, %v4058
    %v4179 = vpack.c.b16 %v4061, %v4059
    %v4180 = vpack.c.b16 %v4064, %v4062
    %v4181 = vpack.c.b16 %v4065, %v4063
    %v4182 = vpack.c.b16 %v4068, %v4066
    %v4183 = vpack.c.b16 %v4069, %v4067
    %v4184 = vpack.c.b16 %v4072, %v4070
    %v4185 = vpack.c.b16 %v4073, %v4071
    %v4186 = vpack.c.b16 %v4076, %v4074
    %v4187 = vpack.c.b16 %v4077, %v4075
    %v4188 = vpack.c.b16 %v4080, %v4078
    %v4189 = vpack.c.b16 %v4081, %v4079
    %v4190 = vpack.c.b16 %v4084, %v4082
    %v4191 = vpack.c.b16 %v4085, %v4083
    %v4192 = vpack.c.b16 %v4088, %v4086
    %v4193 = vpack.c.b16 %v4089, %v4087
    %v4194 = vpack.c.b16 %v4092, %v4090
    %v4195 = vpack.c.b16 %v4093, %v4091
    %v4196 = vpack.c.b16 %v4096, %v4094
    %v4197 = vpack.c.b16 %v4097, %v4095
    %v4198 = vpack.c.b16 %v4100, %v4098
    %v4199 = vpack.c.b16 %v4101, %v4099
    %v4200 = vpack.c.b16 %v4104, %v4102
    %v4201 = vpack.c.b16 %v4105, %v4103
    %4298 = vmatpush.bf16.msra.mxu0 %v4120
    %4299 = vmatpush.bf16.msra.mxu0 %v4118
    %4300 = vmatpush.bf16.msra.mxu0 %v4116
    %4301 = vmatpush.bf16.msra.mxu0 %v4114
    %4302 = vmatpush.bf16.msra.mxu0 %v4112
    %4303 = vmatpush.bf16.msra.mxu0 %v4110
    %4304 = vmatpush.bf16.msra.mxu0 %v4108
    %4305 = vmatpush.bf16.msra.mxu0 %v4106
    %4306 = vmatmul.bf16.gmra.mxu0 %v3805
    %v4307 = vpop.f32.mrf.mxu0
    %v4308 = vadd.f32 %v3814, %v4307
    %v4309 = vpop.f32.mrf.mxu0
    %v4310 = vadd.f32 %v3814, %v4309
    %4311 = vdwg.mxu0
    %4312 = vmatpush.bf16.msra.mxu0 %v4136
    %4313 = vmatpush.bf16.msra.mxu0 %v4134
    %4314 = vmatpush.bf16.msra.mxu0 %v4132
    %4315 = vmatpush.bf16.msra.mxu0 %v4130
    %4316 = vmatpush.bf16.msra.mxu0 %v4128
    %4317 = vmatpush.bf16.msra.mxu0 %v4126
    %4318 = vmatpush.bf16.msra.mxu0 %v4124
    %4319 = vmatpush.bf16.msra.mxu0 %v4122
    %4320 = vmatmul.bf16.gmra.mxu0 %v3806
    %v4321 = vpop.f32.mrf.mxu0
    %v4322 = vadd.f32 %v4308, %v4321
    %v4323 = vpop.f32.mrf.mxu0
    %v4324 = vadd.f32 %v4310, %v4323
    %4325 = vdwg.mxu0
    %4326 = vmatpush.bf16.msra.mxu0 %v4152
    %4327 = vmatpush.bf16.msra.mxu0 %v4150
    %4328 = vmatpush.bf16.msra.mxu0 %v4148
    %4329 = vmatpush.bf16.msra.mxu0 %v4146
    %4330 = vmatpush.bf16.msra.mxu0 %v4144
    %4331 = vmatpush.bf16.msra.mxu0 %v4142
    %4332 = vmatpush.bf16.msra.mxu0 %v4140
    %4333 = vmatpush.bf16.msra.mxu0 %v4138
    %4334 = vmatmul.bf16.gmra.mxu0 %v3807
    %v4335 = vpop.f32.mrf.mxu0
    %v4336 = vadd.f32 %v4322, %v4335
    %v4337 = vpop.f32.mrf.mxu0
    %v4338 = vadd.f32 %v4324, %v4337
    %4339 = vdwg.mxu0
    %4340 = vmatpush.bf16.msra.mxu0 %v4168
    %4341 = vmatpush.bf16.msra.mxu0 %v4166
    %4342 = vmatpush.bf16.msra.mxu0 %v4164
    %4343 = vmatpush.bf16.msra.mxu0 %v4162
    %4344 = vmatpush.bf16.msra.mxu0 %v4160
    %4345 = vmatpush.bf16.msra.mxu0 %v4158
    %4346 = vmatpush.bf16.msra.mxu0 %v4156
    %4347 = vmatpush.bf16.msra.mxu0 %v4154
    %4348 = vmatmul.bf16.gmra.mxu0 %v3808
    %v4349 = vpop.f32.mrf.mxu0
    %v4350 = vadd.f32 %v4336, %v4349
    %v4351 = vpop.f32.mrf.mxu0
    %v4352 = vadd.f32 %v4338, %v4351
    %4353 = vdwg.mxu0
    %4354 = vmatpush.bf16.msra.mxu0 %v4184
    %4355 = vmatpush.bf16.msra.mxu0 %v4182
    %4356 = vmatpush.bf16.msra.mxu0 %v4180
    %4357 = vmatpush.bf16.msra.mxu0 %v4178
    %4358 = vmatpush.bf16.msra.mxu0 %v4176
    %4359 = vmatpush.bf16.msra.mxu0 %v4174
    %4360 = vmatpush.bf16.msra.mxu0 %v4172
    %4361 = vmatpush.bf16.msra.mxu0 %v4170
    %4362 = vmatmul.bf16.gmra.mxu0 %v3809
    %v4363 = vpop.f32.mrf.mxu0
    %v4364 = vadd.f32 %v4350, %v4363
    %v4365 = vpop.f32.mrf.mxu0
    %v4366 = vadd.f32 %v4352, %v4365
    %4367 = vdwg.mxu0
    %4368 = vmatpush.bf16.msra.mxu0 %v4200
    %4369 = vmatpush.bf16.msra.mxu0 %v4198
    %4370 = vmatpush.bf16.msra.mxu0 %v4196
    %4371 = vmatpush.bf16.msra.mxu0 %v4194
    %4372 = vmatpush.bf16.msra.mxu0 %v4192
    %4373 = vmatpush.bf16.msra.mxu0 %v4190
    %4374 = vmatpush.bf16.msra.mxu0 %v4188
    %4375 = vmatpush.bf16.msra.mxu0 %v4186
    %4376 = vmatmul.bf16.gmra.mxu0 %v3810
    %v4377 = vpop.f32.mrf.mxu0
    %v4378 = vadd.f32 %v4364, %v4377
    %v4379 = vpop.f32.mrf.mxu0
    %v4380 = vadd.f32 %v4366, %v4379
    %4381 = vdwg.mxu0
    %4382 = vmatpush.bf16.msra.mxu0 %v4121
    %4383 = vmatpush.bf16.msra.mxu0 %v4119
    %4384 = vmatpush.bf16.msra.mxu0 %v4117
    %4385 = vmatpush.bf16.msra.mxu0 %v4115
    %4386 = vmatpush.bf16.msra.mxu0 %v4113
    %4387 = vmatpush.bf16.msra.mxu0 %v4111
    %4388 = vmatpush.bf16.msra.mxu0 %v4109
    %4389 = vmatpush.bf16.msra.mxu0 %v4107
    %4390 = vmatmul.bf16.gmra.mxu0 %v3805
    %v4391 = vpop.f32.mrf.mxu0
    %v4392 = vadd.f32 %v3815, %v4391
    %v4393 = vpop.f32.mrf.mxu0
    %v4394 = vadd.f32 %v3815, %v4393
    %4395 = vdwg.mxu0
    %4396 = vmatpush.bf16.msra.mxu0 %v4137
    %4397 = vmatpush.bf16.msra.mxu0 %v4135
    %4398 = vmatpush.bf16.msra.mxu0 %v4133
    %4399 = vmatpush.bf16.msra.mxu0 %v4131
    %4400 = vmatpush.bf16.msra.mxu0 %v4129
    %4401 = vmatpush.bf16.msra.mxu0 %v4127
    %4402 = vmatpush.bf16.msra.mxu0 %v4125
    %4403 = vmatpush.bf16.msra.mxu0 %v4123
    %4404 = vmatmul.bf16.gmra.mxu0 %v3806
    %v4405 = vpop.f32.mrf.mxu0
    %v4406 = vadd.f32 %v4392, %v4405
    %v4407 = vpop.f32.mrf.mxu0
    %v4408 = vadd.f32 %v4394, %v4407
    %4409 = vdwg.mxu0
    %4410 = vmatpush.bf16.msra.mxu0 %v4153
    %4411 = vmatpush.bf16.msra.mxu0 %v4151
    %4412 = vmatpush.bf16.msra.mxu0 %v4149
    %4413 = vmatpush.bf16.msra.mxu0 %v4147
    %4414 = vmatpush.bf16.msra.mxu0 %v4145
    %4415 = vmatpush.bf16.msra.mxu0 %v4143
    %4416 = vmatpush.bf16.msra.mxu0 %v4141
    %4417 = vmatpush.bf16.msra.mxu0 %v4139
    %4418 = vmatmul.bf16.gmra.mxu0 %v3807
    %v4419 = vpop.f32.mrf.mxu0
    %v4420 = vadd.f32 %v4406, %v4419
    %v4421 = vpop.f32.mrf.mxu0
    %v4422 = vadd.f32 %v4408, %v4421
    %4423 = vdwg.mxu0
    %4424 = vmatpush.bf16.msra.mxu0 %v4169
    %4425 = vmatpush.bf16.msra.mxu0 %v4167
    %4426 = vmatpush.bf16.msra.mxu0 %v4165
    %4427 = vmatpush.bf16.msra.mxu0 %v4163
    %4428 = vmatpush.bf16.msra.mxu0 %v4161
    %4429 = vmatpush.bf16.msra.mxu0 %v4159
    %4430 = vmatpush.bf16.msra.mxu0 %v4157
    %4431 = vmatpush.bf16.msra.mxu0 %v4155
    %4432 = vmatmul.bf16.gmra.mxu0 %v3808
    %v4433 = vpop.f32.mrf.mxu0
    %v4434 = vadd.f32 %v4420, %v4433
    %v4435 = vpop.f32.mrf.mxu0
    %v4436 = vadd.f32 %v4422, %v4435
    %4437 = vdwg.mxu0
    %4438 = vmatpush.bf16.msra.mxu0 %v4185
    %4439 = vmatpush.bf16.msra.mxu0 %v4183
    %4440 = vmatpush.bf16.msra.mxu0 %v4181
    %4441 = vmatpush.bf16.msra.mxu0 %v4179
    %4442 = vmatpush.bf16.msra.mxu0 %v4177
    %4443 = vmatpush.bf16.msra.mxu0 %v4175
    %4444 = vmatpush.bf16.msra.mxu0 %v4173
    %4445 = vmatpush.bf16.msra.mxu0 %v4171
    %4446 = vmatmul.bf16.gmra.mxu0 %v3809
    %v4447 = vpop.f32.mrf.mxu0
    %v4448 = vadd.f32 %v4434, %v4447
    %v4449 = vpop.f32.mrf.mxu0
    %v4450 = vadd.f32 %v4436, %v4449
    %4451 = vdwg.mxu0
    %4452 = vmatpush.bf16.msra.mxu0 %v4201
    %4453 = vmatpush.bf16.msra.mxu0 %v4199
    %4454 = vmatpush.bf16.msra.mxu0 %v4197
    %4455 = vmatpush.bf16.msra.mxu0 %v4195
    %4456 = vmatpush.bf16.msra.mxu0 %v4193
    %4457 = vmatpush.bf16.msra.mxu0 %v4191
    %4458 = vmatpush.bf16.msra.mxu0 %v4189
    %4459 = vmatpush.bf16.msra.mxu0 %v4187
    %4460 = vmatmul.bf16.gmra.mxu0 %v3810
    %v4461 = vpop.f32.mrf.mxu0
    %v4462 = vadd.f32 %v4448, %v4461
    %v4463 = vpop.f32.mrf.mxu0
    %v4464 = vadd.f32 %v4450, %v4463
    %4465 = vdwg.mxu0
    %v4466 = vmax.f32 %v4378, 0.0
    %v4467 = vmax.f32 %v4462, 0.0
    %v4468 = vmax.f32 %v4380, 0.0
    %v4469 = vmax.f32 %v4464, 0.0
    %4470 = vst [vmem:[#allocation4 + $0x10] sm:$0xff] %v4466
    %4471 = vst [vmem:[#allocation4 + $0x18] sm:$0xff] %v4467
    %v4474 = vrot.slane %v4466, 7
    %v4475 = vrot.slane %v4467, 7
    %4478 = vst [vmem:[#allocation4] sm:$0xfe] %v4474
    %4479 = vst [vmem:[#allocation4 + $0x8] sm:$0xfe] %v4475
    %4480 = vst.msk [vmem:[#allocation4] ss:$8 sm:$0x3] %vm651, 0.0
    %4481 = vst.msk [vmem:[#allocation4] ss:$8 sm:$0x0] %vm651, 0.0
    %v4482 = vrot.slane %v4466, 1
    %v4483 = vrot.slane %v4467, 1
    %4486 = vst [vmem:[#allocation4 + $0x20] sm:$0x7f] %v4482
    %4487 = vst [vmem:[#allocation4 + $0x28] sm:$0x7f] %v4483
    %4488 = vst.msk [vmem:[%s3669] ss:$8 sm:$0x3] %vm651, 0.0
    %4489 = vst.msk [vmem:[%s3669] ss:$8 sm:$0x0] %vm651, 0.0
    %4490 = vst [vmem:[#allocation4 + $0x40] sm:$0xff] %v4468
    %4491 = vst [vmem:[#allocation4 + $0x48] sm:$0xff] %v4469
    %v4494 = vrot.slane %v4468, 7
    %v4495 = vrot.slane %v4469, 7
    %4498 = vst [vmem:[#allocation4 + $0x30] sm:$0xfe] %v4494
    %4499 = vst [vmem:[#allocation4 + $0x38] sm:$0xfe] %v4495
    %4500 = vst.msk [vmem:[%s3682] ss:$8 sm:$0x3] %vm651, 0.0
    %4501 = vst.msk [vmem:[%s3682] ss:$8 sm:$0x0] %vm651, 0.0
    %v4502 = vrot.slane %v4468, 1
    %v4503 = vrot.slane %v4469, 1
    %4506 = vst [vmem:[#allocation4 + $0x50] sm:$0x7f] %v4502
    %4507 = vst [vmem:[#allocation4 + $0x58] sm:$0x7f] %v4503
    %4508 = vst.msk [vmem:[%s2331] ss:$8 sm:$0x3] %vm651, 0.0
    %4509 = vst.msk [vmem:[%s2331] ss:$8 sm:$0x0] %vm651, 0.0
    %v4510 = vld [vmem:[#allocation2 + $0x300] sm:$0xff]
    %v4511 = vld [vmem:[#allocation2 + $0x308] sm:$0xff]
    %v4512 = vld [vmem:[#allocation2 + $0x310] sm:$0xff]
    %v4513 = vld [vmem:[#allocation2 + $0x318] sm:$0xff]
    %v4514 = vld [vmem:[#allocation2 + $0x320] sm:$0xff]
    %v4515 = vld [vmem:[#allocation2 + $0x328] sm:$0xff]
    %v4516 = vld [vmem:[#allocation2 + $0x330] sm:$0xff]
    %v4517 = vld [vmem:[#allocation2 + $0x338] sm:$0xff]
    %v4518 = vld [vmem:[#allocation2 + $0x340] sm:$0xff]
    %v4519 = vld [vmem:[#allocation2 + $0x348] sm:$0xff]
    %v4520 = vld [vmem:[#allocation2 + $0x350] sm:$0xff]
    %v4521 = vld [vmem:[#allocation2 + $0x358] sm:$0xff]
    %v4522 = vld [vmem:[#allocation2 + $0x360] sm:$0xff]
    %v4523 = vld [vmem:[#allocation2 + $0x368] sm:$0xff]
    %v4524 = vld [vmem:[#allocation2 + $0x370] sm:$0xff]
    %v4525 = vld [vmem:[#allocation2 + $0x378] sm:$0xff]
    %v4526 = vld [vmem:[#allocation2 + $0x380] sm:$0xff]
    %v4527 = vld [vmem:[#allocation2 + $0x388] sm:$0xff]
    %v4528 = vld [vmem:[#allocation2 + $0x390] sm:$0xff]
    %v4529 = vld [vmem:[#allocation2 + $0x398] sm:$0xff]
    %v4530 = vld [vmem:[#allocation2 + $0x3a0] sm:$0xff]
    %v4531 = vld [vmem:[#allocation2 + $0x3a8] sm:$0xff]
    %v4532 = vld [vmem:[#allocation2 + $0x3b0] sm:$0xff]
    %v4533 = vld [vmem:[#allocation2 + $0x3b8] sm:$0xff]
    %v4534 = vld [vmem:[#allocation2 + $0x3c0] sm:$0xff]
    %v4535 = vld [vmem:[#allocation2 + $0x3c8] sm:$0xff]
    %v4536 = vld [vmem:[#allocation2 + $0x3d0] sm:$0xff]
    %v4537 = vld [vmem:[#allocation2 + $0x3d8] sm:$0xff]
    %v4538 = vld [vmem:[#allocation2 + $0x3e0] sm:$0xff]
    %v4539 = vld [vmem:[#allocation2 + $0x3e8] sm:$0xff]
    %v4540 = vld [vmem:[#allocation2 + $0x3f0] sm:$0xff]
    %v4541 = vld [vmem:[#allocation2 + $0x3f8] sm:$0xff]
    %v4542 = vld [vmem:[#allocation2 + $0x400] sm:$0xff]
    %v4543 = vld [vmem:[#allocation2 + $0x408] sm:$0xff]
    %v4544 = vld [vmem:[#allocation2 + $0x410] sm:$0xff]
    %v4545 = vld [vmem:[#allocation2 + $0x418] sm:$0xff]
    %v4546 = vld [vmem:[#allocation2 + $0x420] sm:$0xff]
    %v4547 = vld [vmem:[#allocation2 + $0x428] sm:$0xff]
    %v4548 = vld [vmem:[#allocation2 + $0x430] sm:$0xff]
    %v4549 = vld [vmem:[#allocation2 + $0x438] sm:$0xff]
    %v4550 = vld [vmem:[#allocation2 + $0x440] sm:$0xff]
    %v4551 = vld [vmem:[#allocation2 + $0x448] sm:$0xff]
    %v4552 = vld [vmem:[#allocation2 + $0x450] sm:$0xff]
    %v4553 = vld [vmem:[#allocation2 + $0x458] sm:$0xff]
    %v4554 = vld [vmem:[#allocation2 + $0x460] sm:$0xff]
    %v4555 = vld [vmem:[#allocation2 + $0x468] sm:$0xff]
    %v4556 = vld [vmem:[#allocation2 + $0x470] sm:$0xff]
    %v4557 = vld [vmem:[#allocation2 + $0x478] sm:$0xff]
    %v4558 = vld [vmem:[#allocation2 + $0x480] sm:$0xff]
    %v4559 = vld [vmem:[#allocation2 + $0x488] sm:$0xff]
    %v4560 = vld [vmem:[#allocation2 + $0x490] sm:$0xff]
    %v4561 = vld [vmem:[#allocation2 + $0x498] sm:$0xff]
    %v4562 = vld [vmem:[#allocation2 + $0x4a0] sm:$0xff]
    %v4563 = vld [vmem:[#allocation2 + $0x4a8] sm:$0xff]
    %v4564 = vld [vmem:[#allocation2 + $0x4b0] sm:$0xff]
    %v4565 = vld [vmem:[#allocation2 + $0x4b8] sm:$0xff]
    %v4566 = vld [vmem:[#allocation2 + $0x4c0] sm:$0xff]
    %v4567 = vld [vmem:[#allocation2 + $0x4c8] sm:$0xff]
    %v4568 = vld [vmem:[#allocation2 + $0x4d0] sm:$0xff]
    %v4569 = vld [vmem:[#allocation2 + $0x4d8] sm:$0xff]
    %v4570 = vld [vmem:[#allocation2 + $0x4e0] sm:$0xff]
    %v4571 = vld [vmem:[#allocation2 + $0x4e8] sm:$0xff]
    %v4572 = vld [vmem:[#allocation2 + $0x4f0] sm:$0xff]
    %v4573 = vld [vmem:[#allocation2 + $0x4f8] sm:$0xff]
    %v4574 = vld [vmem:[#allocation2 + $0x500] sm:$0xff]
    %v4575 = vld [vmem:[#allocation2 + $0x508] sm:$0xff]
    %v4576 = vld [vmem:[#allocation2 + $0x510] sm:$0xff]
    %v4577 = vld [vmem:[#allocation2 + $0x518] sm:$0xff]
    %v4578 = vld [vmem:[#allocation2 + $0x520] sm:$0xff]
    %v4579 = vld [vmem:[#allocation2 + $0x528] sm:$0xff]
    %v4580 = vld [vmem:[#allocation2 + $0x530] sm:$0xff]
    %v4581 = vld [vmem:[#allocation2 + $0x538] sm:$0xff]
    %v4582 = vld [vmem:[#allocation2 + $0x540] sm:$0xff]
    %v4583 = vld [vmem:[#allocation2 + $0x548] sm:$0xff]
    %v4584 = vld [vmem:[#allocation2 + $0x550] sm:$0xff]
    %v4585 = vld [vmem:[#allocation2 + $0x558] sm:$0xff]
    %v4586 = vld [vmem:[#allocation2 + $0x560] sm:$0xff]
    %v4587 = vld [vmem:[#allocation2 + $0x568] sm:$0xff]
    %v4588 = vld [vmem:[#allocation2 + $0x570] sm:$0xff]
    %v4589 = vld [vmem:[#allocation2 + $0x578] sm:$0xff]
    %v4590 = vld [vmem:[#allocation2 + $0x580] sm:$0xff]
    %v4591 = vld [vmem:[#allocation2 + $0x588] sm:$0xff]
    %v4592 = vld [vmem:[#allocation2 + $0x590] sm:$0xff]
    %v4593 = vld [vmem:[#allocation2 + $0x598] sm:$0xff]
    %v4594 = vld [vmem:[#allocation2 + $0x5a0] sm:$0xff]
    %v4595 = vld [vmem:[#allocation2 + $0x5a8] sm:$0xff]
    %v4596 = vld [vmem:[#allocation2 + $0x5b0] sm:$0xff]
    %v4597 = vld [vmem:[#allocation2 + $0x5b8] sm:$0xff]
    %v4598 = vld [vmem:[#allocation2 + $0x5c0] sm:$0xff]
    %v4599 = vld [vmem:[#allocation2 + $0x5c8] sm:$0xff]
    %v4600 = vld [vmem:[#allocation2 + $0x5d0] sm:$0xff]
    %v4601 = vld [vmem:[#allocation2 + $0x5d8] sm:$0xff]
    %v4602 = vld [vmem:[#allocation2 + $0x5e0] sm:$0xff]
    %v4603 = vld [vmem:[#allocation2 + $0x5e8] sm:$0xff]
    %v4604 = vld [vmem:[#allocation2 + $0x5f0] sm:$0xff]
    %v4605 = vld [vmem:[#allocation2 + $0x5f8] sm:$0xff]
    %v4606 = vld [vmem:[#allocation4] sm:$0xff]
    %v4607 = vld [vmem:[#allocation4 + $0x8] sm:$0xff]
    %v4608 = vld [vmem:[#allocation4 + $0x10] sm:$0xff]
    %v4609 = vld [vmem:[#allocation4 + $0x18] sm:$0xff]
    %v4610 = vld [vmem:[#allocation4 + $0x20] sm:$0xff]
    %v4611 = vld [vmem:[#allocation4 + $0x28] sm:$0xff]
    %v4612 = vld [vmem:[#allocation4 + $0x30] sm:$0xff]
    %v4613 = vld [vmem:[#allocation4 + $0x38] sm:$0xff]
    %v4614 = vld [vmem:[#allocation4 + $0x40] sm:$0xff]
    %v4615 = vld [vmem:[#allocation4 + $0x48] sm:$0xff]
    %v4616 = vld [vmem:[#allocation4 + $0x50] sm:$0xff]
    %v4617 = vld [vmem:[#allocation4 + $0x58] sm:$0xff]
    %v4618 = vpack.c.bf16 %v4612, %v4606
    %v4619 = vpack.c.bf16 %v4613, %v4607
    %v4620 = vpack.c.bf16 %v4614, %v4608
    %v4621 = vpack.c.bf16 %v4615, %v4609
    %v4622 = vpack.c.bf16 %v4616, %v4610
    %v4623 = vpack.c.bf16 %v4617, %v4611
    %v4720 = vunpack.c.l.b16 %v4510
    %v4721 = vunpack.c.h.b16 %v4510
    %v4722 = vunpack.c.l.b16 %v4511
    %v4723 = vunpack.c.h.b16 %v4511
    %v4724 = vunpack.c.l.b16 %v4512
    %v4725 = vunpack.c.h.b16 %v4512
    %v4726 = vunpack.c.l.b16 %v4513
    %v4727 = vunpack.c.h.b16 %v4513
    %v4728 = vunpack.c.l.b16 %v4514
    %v4729 = vunpack.c.h.b16 %v4514
    %v4730 = vunpack.c.l.b16 %v4515
    %v4731 = vunpack.c.h.b16 %v4515
    %v4732 = vunpack.c.l.b16 %v4516
    %v4733 = vunpack.c.h.b16 %v4516
    %v4734 = vunpack.c.l.b16 %v4517
    %v4735 = vunpack.c.h.b16 %v4517
    %v4736 = vunpack.c.l.b16 %v4518
    %v4737 = vunpack.c.h.b16 %v4518
    %v4738 = vunpack.c.l.b16 %v4519
    %v4739 = vunpack.c.h.b16 %v4519
    %v4740 = vunpack.c.l.b16 %v4520
    %v4741 = vunpack.c.h.b16 %v4520
    %v4742 = vunpack.c.l.b16 %v4521
    %v4743 = vunpack.c.h.b16 %v4521
    %v4744 = vunpack.c.l.b16 %v4522
    %v4745 = vunpack.c.h.b16 %v4522
    %v4746 = vunpack.c.l.b16 %v4523
    %v4747 = vunpack.c.h.b16 %v4523
    %v4748 = vunpack.c.l.b16 %v4524
    %v4749 = vunpack.c.h.b16 %v4524
    %v4750 = vunpack.c.l.b16 %v4525
    %v4751 = vunpack.c.h.b16 %v4525
    %v4752 = vunpack.c.l.b16 %v4526
    %v4753 = vunpack.c.h.b16 %v4526
    %v4754 = vunpack.c.l.b16 %v4527
    %v4755 = vunpack.c.h.b16 %v4527
    %v4756 = vunpack.c.l.b16 %v4528
    %v4757 = vunpack.c.h.b16 %v4528
    %v4758 = vunpack.c.l.b16 %v4529
    %v4759 = vunpack.c.h.b16 %v4529
    %v4760 = vunpack.c.l.b16 %v4530
    %v4761 = vunpack.c.h.b16 %v4530
    %v4762 = vunpack.c.l.b16 %v4531
    %v4763 = vunpack.c.h.b16 %v4531
    %v4764 = vunpack.c.l.b16 %v4532
    %v4765 = vunpack.c.h.b16 %v4532
    %v4766 = vunpack.c.l.b16 %v4533
    %v4767 = vunpack.c.h.b16 %v4533
    %v4768 = vunpack.c.l.b16 %v4534
    %v4769 = vunpack.c.h.b16 %v4534
    %v4770 = vunpack.c.l.b16 %v4535
    %v4771 = vunpack.c.h.b16 %v4535
    %v4772 = vunpack.c.l.b16 %v4536
    %v4773 = vunpack.c.h.b16 %v4536
    %v4774 = vunpack.c.l.b16 %v4537
    %v4775 = vunpack.c.h.b16 %v4537
    %v4776 = vunpack.c.l.b16 %v4538
    %v4777 = vunpack.c.h.b16 %v4538
    %v4778 = vunpack.c.l.b16 %v4539
    %v4779 = vunpack.c.h.b16 %v4539
    %v4780 = vunpack.c.l.b16 %v4540
    %v4781 = vunpack.c.h.b16 %v4540
    %v4782 = vunpack.c.l.b16 %v4541
    %v4783 = vunpack.c.h.b16 %v4541
    %v4784 = vunpack.c.l.b16 %v4542
    %v4785 = vunpack.c.h.b16 %v4542
    %v4786 = vunpack.c.l.b16 %v4543
    %v4787 = vunpack.c.h.b16 %v4543
    %v4788 = vunpack.c.l.b16 %v4544
    %v4789 = vunpack.c.h.b16 %v4544
    %v4790 = vunpack.c.l.b16 %v4545
    %v4791 = vunpack.c.h.b16 %v4545
    %v4792 = vunpack.c.l.b16 %v4546
    %v4793 = vunpack.c.h.b16 %v4546
    %v4794 = vunpack.c.l.b16 %v4547
    %v4795 = vunpack.c.h.b16 %v4547
    %v4796 = vunpack.c.l.b16 %v4548
    %v4797 = vunpack.c.h.b16 %v4548
    %v4798 = vunpack.c.l.b16 %v4549
    %v4799 = vunpack.c.h.b16 %v4549
    %v4800 = vunpack.c.l.b16 %v4550
    %v4801 = vunpack.c.h.b16 %v4550
    %v4802 = vunpack.c.l.b16 %v4551
    %v4803 = vunpack.c.h.b16 %v4551
    %v4804 = vunpack.c.l.b16 %v4552
    %v4805 = vunpack.c.h.b16 %v4552
    %v4806 = vunpack.c.l.b16 %v4553
    %v4807 = vunpack.c.h.b16 %v4553
    %v4808 = vunpack.c.l.b16 %v4554
    %v4809 = vunpack.c.h.b16 %v4554
    %v4810 = vunpack.c.l.b16 %v4555
    %v4811 = vunpack.c.h.b16 %v4555
    %v4812 = vunpack.c.l.b16 %v4556
    %v4813 = vunpack.c.h.b16 %v4556
    %v4814 = vunpack.c.l.b16 %v4557
    %v4815 = vunpack.c.h.b16 %v4557
    %v4816 = vunpack.c.l.b16 %v4558
    %v4817 = vunpack.c.h.b16 %v4558
    %v4818 = vunpack.c.l.b16 %v4559
    %v4819 = vunpack.c.h.b16 %v4559
    %v4820 = vunpack.c.l.b16 %v4560
    %v4821 = vunpack.c.h.b16 %v4560
    %v4822 = vunpack.c.l.b16 %v4561
    %v4823 = vunpack.c.h.b16 %v4561
    %v4824 = vunpack.c.l.b16 %v4562
    %v4825 = vunpack.c.h.b16 %v4562
    %v4826 = vunpack.c.l.b16 %v4563
    %v4827 = vunpack.c.h.b16 %v4563
    %v4828 = vunpack.c.l.b16 %v4564
    %v4829 = vunpack.c.h.b16 %v4564
    %v4830 = vunpack.c.l.b16 %v4565
    %v4831 = vunpack.c.h.b16 %v4565
    %v4832 = vunpack.c.l.b16 %v4566
    %v4833 = vunpack.c.h.b16 %v4566
    %v4834 = vunpack.c.l.b16 %v4567
    %v4835 = vunpack.c.h.b16 %v4567
    %v4836 = vunpack.c.l.b16 %v4568
    %v4837 = vunpack.c.h.b16 %v4568
    %v4838 = vunpack.c.l.b16 %v4569
    %v4839 = vunpack.c.h.b16 %v4569
    %v4840 = vunpack.c.l.b16 %v4570
    %v4841 = vunpack.c.h.b16 %v4570
    %v4842 = vunpack.c.l.b16 %v4571
    %v4843 = vunpack.c.h.b16 %v4571
    %v4844 = vunpack.c.l.b16 %v4572
    %v4845 = vunpack.c.h.b16 %v4572
    %v4846 = vunpack.c.l.b16 %v4573
    %v4847 = vunpack.c.h.b16 %v4573
    %v4848 = vunpack.c.l.b16 %v4574
    %v4849 = vunpack.c.h.b16 %v4574
    %v4850 = vunpack.c.l.b16 %v4575
    %v4851 = vunpack.c.h.b16 %v4575
    %v4852 = vunpack.c.l.b16 %v4576
    %v4853 = vunpack.c.h.b16 %v4576
    %v4854 = vunpack.c.l.b16 %v4577
    %v4855 = vunpack.c.h.b16 %v4577
    %v4856 = vunpack.c.l.b16 %v4578
    %v4857 = vunpack.c.h.b16 %v4578
    %v4858 = vunpack.c.l.b16 %v4579
    %v4859 = vunpack.c.h.b16 %v4579
    %v4860 = vunpack.c.l.b16 %v4580
    %v4861 = vunpack.c.h.b16 %v4580
    %v4862 = vunpack.c.l.b16 %v4581
    %v4863 = vunpack.c.h.b16 %v4581
    %v4864 = vunpack.c.l.b16 %v4582
    %v4865 = vunpack.c.h.b16 %v4582
    %v4866 = vunpack.c.l.b16 %v4583
    %v4867 = vunpack.c.h.b16 %v4583
    %v4868 = vunpack.c.l.b16 %v4584
    %v4869 = vunpack.c.h.b16 %v4584
    %v4870 = vunpack.c.l.b16 %v4585
    %v4871 = vunpack.c.h.b16 %v4585
    %v4872 = vunpack.c.l.b16 %v4586
    %v4873 = vunpack.c.h.b16 %v4586
    %v4874 = vunpack.c.l.b16 %v4587
    %v4875 = vunpack.c.h.b16 %v4587
    %v4876 = vunpack.c.l.b16 %v4588
    %v4877 = vunpack.c.h.b16 %v4588
    %v4878 = vunpack.c.l.b16 %v4589
    %v4879 = vunpack.c.h.b16 %v4589
    %v4880 = vunpack.c.l.b16 %v4590
    %v4881 = vunpack.c.h.b16 %v4590
    %v4882 = vunpack.c.l.b16 %v4591
    %v4883 = vunpack.c.h.b16 %v4591
    %v4884 = vunpack.c.l.b16 %v4592
    %v4885 = vunpack.c.h.b16 %v4592
    %v4886 = vunpack.c.l.b16 %v4593
    %v4887 = vunpack.c.h.b16 %v4593
    %v4888 = vunpack.c.l.b16 %v4594
    %v4889 = vunpack.c.h.b16 %v4594
    %v4890 = vunpack.c.l.b16 %v4595
    %v4891 = vunpack.c.h.b16 %v4595
    %v4892 = vunpack.c.l.b16 %v4596
    %v4893 = vunpack.c.h.b16 %v4596
    %v4894 = vunpack.c.l.b16 %v4597
    %v4895 = vunpack.c.h.b16 %v4597
    %v4896 = vunpack.c.l.b16 %v4598
    %v4897 = vunpack.c.h.b16 %v4598
    %v4898 = vunpack.c.l.b16 %v4599
    %v4899 = vunpack.c.h.b16 %v4599
    %v4900 = vunpack.c.l.b16 %v4600
    %v4901 = vunpack.c.h.b16 %v4600
    %v4902 = vunpack.c.l.b16 %v4601
    %v4903 = vunpack.c.h.b16 %v4601
    %v4904 = vunpack.c.l.b16 %v4602
    %v4905 = vunpack.c.h.b16 %v4602
    %v4906 = vunpack.c.l.b16 %v4603
    %v4907 = vunpack.c.h.b16 %v4603
    %v4908 = vunpack.c.l.b16 %v4604
    %v4909 = vunpack.c.h.b16 %v4604
    %v4910 = vunpack.c.l.b16 %v4605
    %v4911 = vunpack.c.h.b16 %v4605
    %v4912 = vpack.c.b16 %v4722, %v4720
    %v4913 = vpack.c.b16 %v4723, %v4721
    %v4914 = vpack.c.b16 %v4726, %v4724
    %v4915 = vpack.c.b16 %v4727, %v4725
    %v4916 = vpack.c.b16 %v4730, %v4728
    %v4917 = vpack.c.b16 %v4731, %v4729
    %v4918 = vpack.c.b16 %v4734, %v4732
    %v4919 = vpack.c.b16 %v4735, %v4733
    %v4920 = vpack.c.b16 %v4738, %v4736
    %v4921 = vpack.c.b16 %v4739, %v4737
    %v4922 = vpack.c.b16 %v4742, %v4740
    %v4923 = vpack.c.b16 %v4743, %v4741
    %v4924 = vpack.c.b16 %v4746, %v4744
    %v4925 = vpack.c.b16 %v4747, %v4745
    %v4926 = vpack.c.b16 %v4750, %v4748
    %v4927 = vpack.c.b16 %v4751, %v4749
    %v4928 = vpack.c.b16 %v4754, %v4752
    %v4929 = vpack.c.b16 %v4755, %v4753
    %v4930 = vpack.c.b16 %v4758, %v4756
    %v4931 = vpack.c.b16 %v4759, %v4757
    %v4932 = vpack.c.b16 %v4762, %v4760
    %v4933 = vpack.c.b16 %v4763, %v4761
    %v4934 = vpack.c.b16 %v4766, %v4764
    %v4935 = vpack.c.b16 %v4767, %v4765
    %v4936 = vpack.c.b16 %v4770, %v4768
    %v4937 = vpack.c.b16 %v4771, %v4769
    %v4938 = vpack.c.b16 %v4774, %v4772
    %v4939 = vpack.c.b16 %v4775, %v4773
    %v4940 = vpack.c.b16 %v4778, %v4776
    %v4941 = vpack.c.b16 %v4779, %v4777
    %v4942 = vpack.c.b16 %v4782, %v4780
    %v4943 = vpack.c.b16 %v4783, %v4781
    %v4944 = vpack.c.b16 %v4786, %v4784
    %v4945 = vpack.c.b16 %v4787, %v4785
    %v4946 = vpack.c.b16 %v4790, %v4788
    %v4947 = vpack.c.b16 %v4791, %v4789
    %v4948 = vpack.c.b16 %v4794, %v4792
    %v4949 = vpack.c.b16 %v4795, %v4793
    %v4950 = vpack.c.b16 %v4798, %v4796
    %v4951 = vpack.c.b16 %v4799, %v4797
    %v4952 = vpack.c.b16 %v4802, %v4800
    %v4953 = vpack.c.b16 %v4803, %v4801
    %v4954 = vpack.c.b16 %v4806, %v4804
    %v4955 = vpack.c.b16 %v4807, %v4805
    %v4956 = vpack.c.b16 %v4810, %v4808
    %v4957 = vpack.c.b16 %v4811, %v4809
    %v4958 = vpack.c.b16 %v4814, %v4812
    %v4959 = vpack.c.b16 %v4815, %v4813
    %v4960 = vpack.c.b16 %v4818, %v4816
    %v4961 = vpack.c.b16 %v4819, %v4817
    %v4962 = vpack.c.b16 %v4822, %v4820
    %v4963 = vpack.c.b16 %v4823, %v4821
    %v4964 = vpack.c.b16 %v4826, %v4824
    %v4965 = vpack.c.b16 %v4827, %v4825
    %v4966 = vpack.c.b16 %v4830, %v4828
    %v4967 = vpack.c.b16 %v4831, %v4829
    %v4968 = vpack.c.b16 %v4834, %v4832
    %v4969 = vpack.c.b16 %v4835, %v4833
    %v4970 = vpack.c.b16 %v4838, %v4836
    %v4971 = vpack.c.b16 %v4839, %v4837
    %v4972 = vpack.c.b16 %v4842, %v4840
    %v4973 = vpack.c.b16 %v4843, %v4841
    %v4974 = vpack.c.b16 %v4846, %v4844
    %v4975 = vpack.c.b16 %v4847, %v4845
    %v4976 = vpack.c.b16 %v4850, %v4848
    %v4977 = vpack.c.b16 %v4851, %v4849
    %v4978 = vpack.c.b16 %v4854, %v4852
    %v4979 = vpack.c.b16 %v4855, %v4853
    %v4980 = vpack.c.b16 %v4858, %v4856
    %v4981 = vpack.c.b16 %v4859, %v4857
    %v4982 = vpack.c.b16 %v4862, %v4860
    %v4983 = vpack.c.b16 %v4863, %v4861
    %v4984 = vpack.c.b16 %v4866, %v4864
    %v4985 = vpack.c.b16 %v4867, %v4865
    %v4986 = vpack.c.b16 %v4870, %v4868
    %v4987 = vpack.c.b16 %v4871, %v4869
    %v4988 = vpack.c.b16 %v4874, %v4872
    %v4989 = vpack.c.b16 %v4875, %v4873
    %v4990 = vpack.c.b16 %v4878, %v4876
    %v4991 = vpack.c.b16 %v4879, %v4877
    %v4992 = vpack.c.b16 %v4882, %v4880
    %v4993 = vpack.c.b16 %v4883, %v4881
    %v4994 = vpack.c.b16 %v4886, %v4884
    %v4995 = vpack.c.b16 %v4887, %v4885
    %v4996 = vpack.c.b16 %v4890, %v4888
    %v4997 = vpack.c.b16 %v4891, %v4889
    %v4998 = vpack.c.b16 %v4894, %v4892
    %v4999 = vpack.c.b16 %v4895, %v4893
    %v5000 = vpack.c.b16 %v4898, %v4896
    %v5001 = vpack.c.b16 %v4899, %v4897
    %v5002 = vpack.c.b16 %v4902, %v4900
    %v5003 = vpack.c.b16 %v4903, %v4901
    %v5004 = vpack.c.b16 %v4906, %v4904
    %v5005 = vpack.c.b16 %v4907, %v4905
    %v5006 = vpack.c.b16 %v4910, %v4908
    %v5007 = vpack.c.b16 %v4911, %v4909
    %5104 = vmatpush.bf16.msra.mxu0 %v4926
    %5105 = vmatpush.bf16.msra.mxu0 %v4924
    %5106 = vmatpush.bf16.msra.mxu0 %v4922
    %5107 = vmatpush.bf16.msra.mxu0 %v4920
    %5108 = vmatpush.bf16.msra.mxu0 %v4918
    %5109 = vmatpush.bf16.msra.mxu0 %v4916
    %5110 = vmatpush.bf16.msra.mxu0 %v4914
    %5111 = vmatpush.bf16.msra.mxu0 %v4912
    %5112 = vmatmul.bf16.gmra.mxu0 %v4618
    %v5113 = vpop.f32.mrf.mxu0
    %v5114 = vadd.f32 0.0, %v5113
    %v5115 = vpop.f32.mrf.mxu0
    %v5116 = vadd.f32 0.0, %v5115
    %5117 = vdwg.mxu0
    %5118 = vmatpush.bf16.msra.mxu0 %v4942
    %5119 = vmatpush.bf16.msra.mxu0 %v4940
    %5120 = vmatpush.bf16.msra.mxu0 %v4938
    %5121 = vmatpush.bf16.msra.mxu0 %v4936
    %5122 = vmatpush.bf16.msra.mxu0 %v4934
    %5123 = vmatpush.bf16.msra.mxu0 %v4932
    %5124 = vmatpush.bf16.msra.mxu0 %v4930
    %5125 = vmatpush.bf16.msra.mxu0 %v4928
    %5126 = vmatmul.bf16.gmra.mxu0 %v4619
    %v5127 = vpop.f32.mrf.mxu0
    %v5128 = vadd.f32 %v5114, %v5127
    %v5129 = vpop.f32.mrf.mxu0
    %v5130 = vadd.f32 %v5116, %v5129
    %5131 = vdwg.mxu0
    %5132 = vmatpush.bf16.msra.mxu0 %v4958
    %5133 = vmatpush.bf16.msra.mxu0 %v4956
    %5134 = vmatpush.bf16.msra.mxu0 %v4954
    %5135 = vmatpush.bf16.msra.mxu0 %v4952
    %5136 = vmatpush.bf16.msra.mxu0 %v4950
    %5137 = vmatpush.bf16.msra.mxu0 %v4948
    %5138 = vmatpush.bf16.msra.mxu0 %v4946
    %5139 = vmatpush.bf16.msra.mxu0 %v4944
    %5140 = vmatmul.bf16.gmra.mxu0 %v4620
    %v5141 = vpop.f32.mrf.mxu0
    %v5142 = vadd.f32 %v5128, %v5141
    %v5143 = vpop.f32.mrf.mxu0
    %v5144 = vadd.f32 %v5130, %v5143
    %5145 = vdwg.mxu0
    %5146 = vmatpush.bf16.msra.mxu0 %v4974
    %5147 = vmatpush.bf16.msra.mxu0 %v4972
    %5148 = vmatpush.bf16.msra.mxu0 %v4970
    %5149 = vmatpush.bf16.msra.mxu0 %v4968
    %5150 = vmatpush.bf16.msra.mxu0 %v4966
    %5151 = vmatpush.bf16.msra.mxu0 %v4964
    %5152 = vmatpush.bf16.msra.mxu0 %v4962
    %5153 = vmatpush.bf16.msra.mxu0 %v4960
    %5154 = vmatmul.bf16.gmra.mxu0 %v4621
    %v5155 = vpop.f32.mrf.mxu0
    %v5156 = vadd.f32 %v5142, %v5155
    %v5157 = vpop.f32.mrf.mxu0
    %v5158 = vadd.f32 %v5144, %v5157
    %5159 = vdwg.mxu0
    %5160 = vmatpush.bf16.msra.mxu0 %v4990
    %5161 = vmatpush.bf16.msra.mxu0 %v4988
    %5162 = vmatpush.bf16.msra.mxu0 %v4986
    %5163 = vmatpush.bf16.msra.mxu0 %v4984
    %5164 = vmatpush.bf16.msra.mxu0 %v4982
    %5165 = vmatpush.bf16.msra.mxu0 %v4980
    %5166 = vmatpush.bf16.msra.mxu0 %v4978
    %5167 = vmatpush.bf16.msra.mxu0 %v4976
    %5168 = vmatmul.bf16.gmra.mxu0 %v4622
    %v5169 = vpop.f32.mrf.mxu0
    %v5170 = vadd.f32 %v5156, %v5169
    %v5171 = vpop.f32.mrf.mxu0
    %v5172 = vadd.f32 %v5158, %v5171
    %5173 = vdwg.mxu0
    %5174 = vmatpush.bf16.msra.mxu0 %v5006
    %5175 = vmatpush.bf16.msra.mxu0 %v5004
    %5176 = vmatpush.bf16.msra.mxu0 %v5002
    %5177 = vmatpush.bf16.msra.mxu0 %v5000
    %5178 = vmatpush.bf16.msra.mxu0 %v4998
    %5179 = vmatpush.bf16.msra.mxu0 %v4996
    %5180 = vmatpush.bf16.msra.mxu0 %v4994
    %5181 = vmatpush.bf16.msra.mxu0 %v4992
    %5182 = vmatmul.bf16.gmra.mxu0 %v4623
    %v5183 = vpop.f32.mrf.mxu0
    %v5184 = vadd.f32 %v5170, %v5183
    %v5185 = vpop.f32.mrf.mxu0
    %v5186 = vadd.f32 %v5172, %v5185
    %5187 = vdwg.mxu0
    %5188 = vmatpush.bf16.msra.mxu0 %v4927
    %5189 = vmatpush.bf16.msra.mxu0 %v4925
    %5190 = vmatpush.bf16.msra.mxu0 %v4923
    %5191 = vmatpush.bf16.msra.mxu0 %v4921
    %5192 = vmatpush.bf16.msra.mxu0 %v4919
    %5193 = vmatpush.bf16.msra.mxu0 %v4917
    %5194 = vmatpush.bf16.msra.mxu0 %v4915
    %5195 = vmatpush.bf16.msra.mxu0 %v4913
    %5196 = vmatmul.bf16.gmra.mxu0 %v4618
    %v5197 = vpop.f32.mrf.mxu0
    %v5198 = vadd.f32 0.0, %v5197
    %v5199 = vpop.f32.mrf.mxu0
    %v5200 = vadd.f32 0.0, %v5199
    %5201 = vdwg.mxu0
    %5202 = vmatpush.bf16.msra.mxu0 %v4943
    %5203 = vmatpush.bf16.msra.mxu0 %v4941
    %5204 = vmatpush.bf16.msra.mxu0 %v4939
    %5205 = vmatpush.bf16.msra.mxu0 %v4937
    %5206 = vmatpush.bf16.msra.mxu0 %v4935
    %5207 = vmatpush.bf16.msra.mxu0 %v4933
    %5208 = vmatpush.bf16.msra.mxu0 %v4931
    %5209 = vmatpush.bf16.msra.mxu0 %v4929
    %5210 = vmatmul.bf16.gmra.mxu0 %v4619
    %v5211 = vpop.f32.mrf.mxu0
    %v5212 = vadd.f32 %v5198, %v5211
    %v5213 = vpop.f32.mrf.mxu0
    %v5214 = vadd.f32 %v5200, %v5213
    %5215 = vdwg.mxu0
    %5216 = vmatpush.bf16.msra.mxu0 %v4959
    %5217 = vmatpush.bf16.msra.mxu0 %v4957
    %5218 = vmatpush.bf16.msra.mxu0 %v4955
    %5219 = vmatpush.bf16.msra.mxu0 %v4953
    %5220 = vmatpush.bf16.msra.mxu0 %v4951
    %5221 = vmatpush.bf16.msra.mxu0 %v4949
    %5222 = vmatpush.bf16.msra.mxu0 %v4947
    %5223 = vmatpush.bf16.msra.mxu0 %v4945
    %5224 = vmatmul.bf16.gmra.mxu0 %v4620
    %v5225 = vpop.f32.mrf.mxu0
    %v5226 = vadd.f32 %v5212, %v5225
    %v5227 = vpop.f32.mrf.mxu0
    %v5228 = vadd.f32 %v5214, %v5227
    %5229 = vdwg.mxu0
    %5230 = vmatpush.bf16.msra.mxu0 %v4975
    %5231 = vmatpush.bf16.msra.mxu0 %v4973
    %5232 = vmatpush.bf16.msra.mxu0 %v4971
    %5233 = vmatpush.bf16.msra.mxu0 %v4969
    %5234 = vmatpush.bf16.msra.mxu0 %v4967
    %5235 = vmatpush.bf16.msra.mxu0 %v4965
    %5236 = vmatpush.bf16.msra.mxu0 %v4963
    %5237 = vmatpush.bf16.msra.mxu0 %v4961
    %5238 = vmatmul.bf16.gmra.mxu0 %v4621
    %v5239 = vpop.f32.mrf.mxu0
    %v5240 = vadd.f32 %v5226, %v5239
    %v5241 = vpop.f32.mrf.mxu0
    %v5242 = vadd.f32 %v5228, %v5241
    %5243 = vdwg.mxu0
    %5244 = vmatpush.bf16.msra.mxu0 %v4991
    %5245 = vmatpush.bf16.msra.mxu0 %v4989
    %5246 = vmatpush.bf16.msra.mxu0 %v4987
    %5247 = vmatpush.bf16.msra.mxu0 %v4985
    %5248 = vmatpush.bf16.msra.mxu0 %v4983
    %5249 = vmatpush.bf16.msra.mxu0 %v4981
    %5250 = vmatpush.bf16.msra.mxu0 %v4979
    %5251 = vmatpush.bf16.msra.mxu0 %v4977
    %5252 = vmatmul.bf16.gmra.mxu0 %v4622
    %v5253 = vpop.f32.mrf.mxu0
    %v5254 = vadd.f32 %v5240, %v5253
    %v5255 = vpop.f32.mrf.mxu0
    %v5256 = vadd.f32 %v5242, %v5255
    %5257 = vdwg.mxu0
    %5258 = vmatpush.bf16.msra.mxu0 %v5007
    %5259 = vmatpush.bf16.msra.mxu0 %v5005
    %5260 = vmatpush.bf16.msra.mxu0 %v5003
    %5261 = vmatpush.bf16.msra.mxu0 %v5001
    %5262 = vmatpush.bf16.msra.mxu0 %v4999
    %5263 = vmatpush.bf16.msra.mxu0 %v4997
    %5264 = vmatpush.bf16.msra.mxu0 %v4995
    %5265 = vmatpush.bf16.msra.mxu0 %v4993
    %5266 = vmatmul.bf16.gmra.mxu0 %v4623
    %v5267 = vpop.f32.mrf.mxu0
    %v5268 = vadd.f32 %v5254, %v5267
    %v5269 = vpop.f32.mrf.mxu0
    %v5270 = vadd.f32 %v5256, %v5269
    %5271 = vdwg.mxu0
    %v5272 = vld [vmem:[#allocation11 + $0x6] ss:$0 sm:$0xff]
    %v5273 = vmax.f32 %v5184, %v5268
    %v5274 = vmax.f32 %v5186, %v5270
    %v5275 = vadd.f32 %v5273, %v5272
    %v5276 = vadd.f32 %v5274, %v5272
    %v5277 = vmax.f32 %v5275, 0.0
    %v5278 = vmax.f32 %v5276, 0.0
    %5279 = vst [vmem:[#allocation5] sm:$0xff] %v5277
    %5280 = vst [vmem:[#allocation5 + $0x8] sm:$0xff] %v5278
    %v5281 = vld [vmem:[#allocation5] ss:$2 sm:$0xff]
    %v5282 = vld [vmem:[%s1806] ss:$2 sm:$0xff]
    %v5283 = vmax.f32 %v5281, %v5282
    %5284 = vst [vmem:[#allocation4 + $0x8] sm:$0xf] %v5283
    %v5286 = vrot.slane %v5283, 7
    %5288 = vst [vmem:[#allocation4] sm:$0xe] %v5286
    %5289 = vst [vmem:[#allocation4] sm:$0x1] 0.0
    %v5290 = vrot.slane %v5283, 1
    %5292 = vst [vmem:[#allocation4 + $0x10] sm:$0x7] %v5290
    %5293 = vst [vmem:[#allocation4 + $0x13] sm:$0x1] 0.0
    %5294 = vst [vmem:[#allocation4 + $0x8] sm:$0xf0] %v5283
    %5295 = vst [vmem:[#allocation4] sm:$0xe0] %v5286
    %5296 = vst [vmem:[#allocation4 + $0x4] sm:$0x1] 0.0
    %5297 = vst [vmem:[#allocation4 + $0x10] sm:$0x70] %v5290
    %5298 = vst [vmem:[#allocation4 + $0x17] sm:$0x1] 0.0
    %v5299 = vld [vmem:[#allocation2 + $0x600] sm:$0xff]
    %v5300 = vld [vmem:[#allocation2 + $0x608] sm:$0xff]
    %v5301 = vld [vmem:[#allocation2 + $0x610] sm:$0xff]
    %v5302 = vld [vmem:[#allocation2 + $0x618] sm:$0xff]
    %v5303 = vld [vmem:[#allocation2 + $0x620] sm:$0xff]
    %v5304 = vld [vmem:[#allocation2 + $0x628] sm:$0xff]
    %v5305 = vld [vmem:[#allocation2 + $0x630] sm:$0xff]
    %v5306 = vld [vmem:[#allocation2 + $0x638] sm:$0xff]
    %v5307 = vld [vmem:[#allocation2 + $0x640] sm:$0xff]
    %v5308 = vld [vmem:[#allocation2 + $0x648] sm:$0xff]
    %v5309 = vld [vmem:[#allocation2 + $0x650] sm:$0xff]
    %v5310 = vld [vmem:[#allocation2 + $0x658] sm:$0xff]
    %v5311 = vld [vmem:[#allocation2 + $0x660] sm:$0xff]
    %v5312 = vld [vmem:[#allocation2 + $0x668] sm:$0xff]
    %v5313 = vld [vmem:[#allocation2 + $0x670] sm:$0xff]
    %v5314 = vld [vmem:[#allocation2 + $0x678] sm:$0xff]
    %v5315 = vld [vmem:[#allocation2 + $0x680] sm:$0xff]
    %v5316 = vld [vmem:[#allocation2 + $0x688] sm:$0xff]
    %v5317 = vld [vmem:[#allocation2 + $0x690] sm:$0xff]
    %v5318 = vld [vmem:[#allocation2 + $0x698] sm:$0xff]
    %v5319 = vld [vmem:[#allocation2 + $0x6a0] sm:$0xff]
    %v5320 = vld [vmem:[#allocation2 + $0x6a8] sm:$0xff]
    %v5321 = vld [vmem:[#allocation2 + $0x6b0] sm:$0xff]
    %v5322 = vld [vmem:[#allocation2 + $0x6b8] sm:$0xff]
    %v5323 = vld [vmem:[#allocation2 + $0x6c0] sm:$0xff]
    %v5324 = vld [vmem:[#allocation2 + $0x6c8] sm:$0xff]
    %v5325 = vld [vmem:[#allocation2 + $0x6d0] sm:$0xff]
    %v5326 = vld [vmem:[#allocation2 + $0x6d8] sm:$0xff]
    %v5327 = vld [vmem:[#allocation2 + $0x6e0] sm:$0xff]
    %v5328 = vld [vmem:[#allocation2 + $0x6e8] sm:$0xff]
    %v5329 = vld [vmem:[#allocation2 + $0x6f0] sm:$0xff]
    %v5330 = vld [vmem:[#allocation2 + $0x6f8] sm:$0xff]
    %v5331 = vld [vmem:[#allocation2 + $0x700] sm:$0xff]
    %v5332 = vld [vmem:[#allocation2 + $0x708] sm:$0xff]
    %v5333 = vld [vmem:[#allocation2 + $0x710] sm:$0xff]
    %v5334 = vld [vmem:[#allocation2 + $0x718] sm:$0xff]
    %v5335 = vld [vmem:[#allocation2 + $0x720] sm:$0xff]
    %v5336 = vld [vmem:[#allocation2 + $0x728] sm:$0xff]
    %v5337 = vld [vmem:[#allocation2 + $0x730] sm:$0xff]
    %v5338 = vld [vmem:[#allocation2 + $0x738] sm:$0xff]
    %v5339 = vld [vmem:[#allocation2 + $0x740] sm:$0xff]
    %v5340 = vld [vmem:[#allocation2 + $0x748] sm:$0xff]
    %v5341 = vld [vmem:[#allocation2 + $0x750] sm:$0xff]
    %v5342 = vld [vmem:[#allocation2 + $0x758] sm:$0xff]
    %v5343 = vld [vmem:[#allocation2 + $0x760] sm:$0xff]
    %v5344 = vld [vmem:[#allocation2 + $0x768] sm:$0xff]
    %v5345 = vld [vmem:[#allocation2 + $0x770] sm:$0xff]
    %v5346 = vld [vmem:[#allocation2 + $0x778] sm:$0xff]
    %v5347 = vld [vmem:[#allocation4] sm:$0xff]
    %v5348 = vld [vmem:[#allocation4 + $0x8] sm:$0xff]
    %v5349 = vld [vmem:[#allocation4 + $0x10] sm:$0xff]
    %v5350 = vpack.c.bf16 %v5347, %v5347
    %v5351 = vpack.c.bf16 %v5348, %v5348
    %v5352 = vpack.c.bf16 %v5349, %v5349
    %s5353 = scalar_lea.vmem [#allocation11], 7
    %v5354 = vld [vmem:[%s5353] ss:$8 sm:$0x3]
    %v5356 = vperm.slane %v5354, 0
    %v5357 = vperm.slane %v5354, 1
    %v5408 = vunpack.c.l.b16 %v5299
    %v5409 = vunpack.c.h.b16 %v5299
    %v5410 = vunpack.c.l.b16 %v5300
    %v5411 = vunpack.c.h.b16 %v5300
    %v5412 = vunpack.c.l.b16 %v5301
    %v5413 = vunpack.c.h.b16 %v5301
    %v5414 = vunpack.c.l.b16 %v5302
    %v5415 = vunpack.c.h.b16 %v5302
    %v5416 = vunpack.c.l.b16 %v5303
    %v5417 = vunpack.c.h.b16 %v5303
    %v5418 = vunpack.c.l.b16 %v5304
    %v5419 = vunpack.c.h.b16 %v5304
    %v5420 = vunpack.c.l.b16 %v5305
    %v5421 = vunpack.c.h.b16 %v5305
    %v5422 = vunpack.c.l.b16 %v5306
    %v5423 = vunpack.c.h.b16 %v5306
    %v5424 = vunpack.c.l.b16 %v5307
    %v5425 = vunpack.c.h.b16 %v5307
    %v5426 = vunpack.c.l.b16 %v5308
    %v5427 = vunpack.c.h.b16 %v5308
    %v5428 = vunpack.c.l.b16 %v5309
    %v5429 = vunpack.c.h.b16 %v5309
    %v5430 = vunpack.c.l.b16 %v5310
    %v5431 = vunpack.c.h.b16 %v5310
    %v5432 = vunpack.c.l.b16 %v5311
    %v5433 = vunpack.c.h.b16 %v5311
    %v5434 = vunpack.c.l.b16 %v5312
    %v5435 = vunpack.c.h.b16 %v5312
    %v5436 = vunpack.c.l.b16 %v5313
    %v5437 = vunpack.c.h.b16 %v5313
    %v5438 = vunpack.c.l.b16 %v5314
    %v5439 = vunpack.c.h.b16 %v5314
    %v5440 = vunpack.c.l.b16 %v5315
    %v5441 = vunpack.c.h.b16 %v5315
    %v5442 = vunpack.c.l.b16 %v5316
    %v5443 = vunpack.c.h.b16 %v5316
    %v5444 = vunpack.c.l.b16 %v5317
    %v5445 = vunpack.c.h.b16 %v5317
    %v5446 = vunpack.c.l.b16 %v5318
    %v5447 = vunpack.c.h.b16 %v5318
    %v5448 = vunpack.c.l.b16 %v5319
    %v5449 = vunpack.c.h.b16 %v5319
    %v5450 = vunpack.c.l.b16 %v5320
    %v5451 = vunpack.c.h.b16 %v5320
    %v5452 = vunpack.c.l.b16 %v5321
    %v5453 = vunpack.c.h.b16 %v5321
    %v5454 = vunpack.c.l.b16 %v5322
    %v5455 = vunpack.c.h.b16 %v5322
    %v5456 = vunpack.c.l.b16 %v5323
    %v5457 = vunpack.c.h.b16 %v5323
    %v5458 = vunpack.c.l.b16 %v5324
    %v5459 = vunpack.c.h.b16 %v5324
    %v5460 = vunpack.c.l.b16 %v5325
    %v5461 = vunpack.c.h.b16 %v5325
    %v5462 = vunpack.c.l.b16 %v5326
    %v5463 = vunpack.c.h.b16 %v5326
    %v5464 = vunpack.c.l.b16 %v5327
    %v5465 = vunpack.c.h.b16 %v5327
    %v5466 = vunpack.c.l.b16 %v5328
    %v5467 = vunpack.c.h.b16 %v5328
    %v5468 = vunpack.c.l.b16 %v5329
    %v5469 = vunpack.c.h.b16 %v5329
    %v5470 = vunpack.c.l.b16 %v5330
    %v5471 = vunpack.c.h.b16 %v5330
    %v5472 = vunpack.c.l.b16 %v5331
    %v5473 = vunpack.c.h.b16 %v5331
    %v5474 = vunpack.c.l.b16 %v5332
    %v5475 = vunpack.c.h.b16 %v5332
    %v5476 = vunpack.c.l.b16 %v5333
    %v5477 = vunpack.c.h.b16 %v5333
    %v5478 = vunpack.c.l.b16 %v5334
    %v5479 = vunpack.c.h.b16 %v5334
    %v5480 = vunpack.c.l.b16 %v5335
    %v5481 = vunpack.c.h.b16 %v5335
    %v5482 = vunpack.c.l.b16 %v5336
    %v5483 = vunpack.c.h.b16 %v5336
    %v5484 = vunpack.c.l.b16 %v5337
    %v5485 = vunpack.c.h.b16 %v5337
    %v5486 = vunpack.c.l.b16 %v5338
    %v5487 = vunpack.c.h.b16 %v5338
    %v5488 = vunpack.c.l.b16 %v5339
    %v5489 = vunpack.c.h.b16 %v5339
    %v5490 = vunpack.c.l.b16 %v5340
    %v5491 = vunpack.c.h.b16 %v5340
    %v5492 = vunpack.c.l.b16 %v5341
    %v5493 = vunpack.c.h.b16 %v5341
    %v5494 = vunpack.c.l.b16 %v5342
    %v5495 = vunpack.c.h.b16 %v5342
    %v5496 = vunpack.c.l.b16 %v5343
    %v5497 = vunpack.c.h.b16 %v5343
    %v5498 = vunpack.c.l.b16 %v5344
    %v5499 = vunpack.c.h.b16 %v5344
    %v5500 = vunpack.c.l.b16 %v5345
    %v5501 = vunpack.c.h.b16 %v5345
    %v5502 = vunpack.c.l.b16 %v5346
    %v5503 = vunpack.c.h.b16 %v5346
    %v5504 = vpack.c.b16 %v5410, %v5408
    %v5505 = vpack.c.b16 %v5411, %v5409
    %v5506 = vpack.c.b16 %v5414, %v5412
    %v5507 = vpack.c.b16 %v5415, %v5413
    %v5508 = vpack.c.b16 %v5418, %v5416
    %v5509 = vpack.c.b16 %v5419, %v5417
    %v5510 = vpack.c.b16 %v5422, %v5420
    %v5511 = vpack.c.b16 %v5423, %v5421
    %v5512 = vpack.c.b16 %v5426, %v5424
    %v5513 = vpack.c.b16 %v5427, %v5425
    %v5514 = vpack.c.b16 %v5430, %v5428
    %v5515 = vpack.c.b16 %v5431, %v5429
    %v5516 = vpack.c.b16 %v5434, %v5432
    %v5517 = vpack.c.b16 %v5435, %v5433
    %v5518 = vpack.c.b16 %v5438, %v5436
    %v5519 = vpack.c.b16 %v5439, %v5437
    %v5520 = vpack.c.b16 %v5442, %v5440
    %v5521 = vpack.c.b16 %v5443, %v5441
    %v5522 = vpack.c.b16 %v5446, %v5444
    %v5523 = vpack.c.b16 %v5447, %v5445
    %v5524 = vpack.c.b16 %v5450, %v5448
    %v5525 = vpack.c.b16 %v5451, %v5449
    %v5526 = vpack.c.b16 %v5454, %v5452
    %v5527 = vpack.c.b16 %v5455, %v5453
    %v5528 = vpack.c.b16 %v5458, %v5456
    %v5529 = vpack.c.b16 %v5459, %v5457
    %v5530 = vpack.c.b16 %v5462, %v5460
    %v5531 = vpack.c.b16 %v5463, %v5461
    %v5532 = vpack.c.b16 %v5466, %v5464
    %v5533 = vpack.c.b16 %v5467, %v5465
    %v5534 = vpack.c.b16 %v5470, %v5468
    %v5535 = vpack.c.b16 %v5471, %v5469
    %v5536 = vpack.c.b16 %v5474, %v5472
    %v5537 = vpack.c.b16 %v5475, %v5473
    %v5538 = vpack.c.b16 %v5478, %v5476
    %v5539 = vpack.c.b16 %v5479, %v5477
    %v5540 = vpack.c.b16 %v5482, %v5480
    %v5541 = vpack.c.b16 %v5483, %v5481
    %v5542 = vpack.c.b16 %v5486, %v5484
    %v5543 = vpack.c.b16 %v5487, %v5485
    %v5544 = vpack.c.b16 %v5490, %v5488
    %v5545 = vpack.c.b16 %v5491, %v5489
    %v5546 = vpack.c.b16 %v5494, %v5492
    %v5547 = vpack.c.b16 %v5495, %v5493
    %v5548 = vpack.c.b16 %v5498, %v5496
    %v5549 = vpack.c.b16 %v5499, %v5497
    %v5550 = vpack.c.b16 %v5502, %v5500
    %v5551 = vpack.c.b16 %v5503, %v5501
    %5600 = vmatpush.bf16.msra.mxu0 %v5518
    %5601 = vmatpush.bf16.msra.mxu0 %v5516
    %5602 = vmatpush.bf16.msra.mxu0 %v5514
    %5603 = vmatpush.bf16.msra.mxu0 %v5512
    %5604 = vmatpush.bf16.msra.mxu0 %v5510
    %5605 = vmatpush.bf16.msra.mxu0 %v5508
    %5606 = vmatpush.bf16.msra.mxu0 %v5506
    %5607 = vmatpush.bf16.msra.mxu0 %v5504
    %5608 = vmatmul.bf16.gmra.mxu0 %v5350
    %v5609 = vpop.f32.mrf.mxu0
    %v5610 = vadd.f32 %v5356, %v5609
    %v5611 = vpop.f32.mrf.mxu0
    %5612 = vdwg.mxu0
    %5613 = vmatpush.bf16.msra.mxu0 %v5534
    %5614 = vmatpush.bf16.msra.mxu0 %v5532
    %5615 = vmatpush.bf16.msra.mxu0 %v5530
    %5616 = vmatpush.bf16.msra.mxu0 %v5528
    %5617 = vmatpush.bf16.msra.mxu0 %v5526
    %5618 = vmatpush.bf16.msra.mxu0 %v5524
    %5619 = vmatpush.bf16.msra.mxu0 %v5522
    %5620 = vmatpush.bf16.msra.mxu0 %v5520
    %5621 = vmatmul.bf16.gmra.mxu0 %v5351
    %v5622 = vpop.f32.mrf.mxu0
    %v5623 = vadd.f32 %v5610, %v5622
    %v5624 = vpop.f32.mrf.mxu0
    %5625 = vdwg.mxu0
    %5626 = vmatpush.bf16.msra.mxu0 %v5550
    %5627 = vmatpush.bf16.msra.mxu0 %v5548
    %5628 = vmatpush.bf16.msra.mxu0 %v5546
    %5629 = vmatpush.bf16.msra.mxu0 %v5544
    %5630 = vmatpush.bf16.msra.mxu0 %v5542
    %5631 = vmatpush.bf16.msra.mxu0 %v5540
    %5632 = vmatpush.bf16.msra.mxu0 %v5538
    %5633 = vmatpush.bf16.msra.mxu0 %v5536
    %5634 = vmatmul.bf16.gmra.mxu0 %v5352
    %v5635 = vpop.f32.mrf.mxu0
    %v5636 = vadd.f32 %v5623, %v5635
    %v5637 = vpop.f32.mrf.mxu0
    %5638 = vdwg.mxu0
    %5639 = vmatpush.bf16.msra.mxu0 %v5519
    %5640 = vmatpush.bf16.msra.mxu0 %v5517
    %5641 = vmatpush.bf16.msra.mxu0 %v5515
    %5642 = vmatpush.bf16.msra.mxu0 %v5513
    %5643 = vmatpush.bf16.msra.mxu0 %v5511
    %5644 = vmatpush.bf16.msra.mxu0 %v5509
    %5645 = vmatpush.bf16.msra.mxu0 %v5507
    %5646 = vmatpush.bf16.msra.mxu0 %v5505
    %5647 = vmatmul.bf16.gmra.mxu0 %v5350
    %v5648 = vpop.f32.mrf.mxu0
    %v5649 = vadd.f32 %v5357, %v5648
    %v5650 = vpop.f32.mrf.mxu0
    %5651 = vdwg.mxu0
    %5652 = vmatpush.bf16.msra.mxu0 %v5535
    %5653 = vmatpush.bf16.msra.mxu0 %v5533
    %5654 = vmatpush.bf16.msra.mxu0 %v5531
    %5655 = vmatpush.bf16.msra.mxu0 %v5529
    %5656 = vmatpush.bf16.msra.mxu0 %v5527
    %5657 = vmatpush.bf16.msra.mxu0 %v5525
    %5658 = vmatpush.bf16.msra.mxu0 %v5523
    %5659 = vmatpush.bf16.msra.mxu0 %v5521
    %5660 = vmatmul.bf16.gmra.mxu0 %v5351
    %v5661 = vpop.f32.mrf.mxu0
    %v5662 = vadd.f32 %v5649, %v5661
    %v5663 = vpop.f32.mrf.mxu0
    %5664 = vdwg.mxu0
    %5665 = vmatpush.bf16.msra.mxu0 %v5551
    %5666 = vmatpush.bf16.msra.mxu0 %v5549
    %5667 = vmatpush.bf16.msra.mxu0 %v5547
    %5668 = vmatpush.bf16.msra.mxu0 %v5545
    %5669 = vmatpush.bf16.msra.mxu0 %v5543
    %5670 = vmatpush.bf16.msra.mxu0 %v5541
    %5671 = vmatpush.bf16.msra.mxu0 %v5539
    %5672 = vmatpush.bf16.msra.mxu0 %v5537
    %5673 = vmatmul.bf16.gmra.mxu0 %v5352
    %v5674 = vpop.f32.mrf.mxu0
    %v5675 = vadd.f32 %v5662, %v5674
    %v5676 = vpop.f32.mrf.mxu0
    %5677 = vdwg.mxu0
    %v5678 = vmax.f32 %v5636, 0.0
    %v5679 = vmax.f32 %v5675, 0.0
    %5680 = vst [vmem:[#allocation4 + $0x10] sm:$0xf] %v5678
    %5681 = vst [vmem:[#allocation4 + $0x18] sm:$0xf] %v5679
    %v5684 = vrot.slane %v5678, 7
    %v5685 = vrot.slane %v5679, 7
    %5688 = vst [vmem:[#allocation4] sm:$0xe] %v5684
    %5689 = vst [vmem:[#allocation4 + $0x8] sm:$0xe] %v5685
    %5690 = vst.msk [vmem:[#allocation4] ss:$8 sm:$0x3] %vm651, 0.0
    %5691 = vst.msk [vmem:[#allocation4] ss:$8 sm:$0x0] %vm651, 0.0
    %v5692 = vrot.slane %v5678, 1
    %v5693 = vrot.slane %v5679, 1
    %5696 = vst [vmem:[#allocation4 + $0x20] sm:$0x7] %v5692
    %5697 = vst [vmem:[#allocation4 + $0x28] sm:$0x7] %v5693
    %s5698 = scalar_lea.vmem [#allocation4], 35
    %5699 = vst.msk [vmem:[%s5698] ss:$8 sm:$0x3] %vm651, 0.0
    %5700 = vst.msk [vmem:[%s5698] ss:$8 sm:$0x0] %vm651, 0.0
    %5701 = vst [vmem:[#allocation4 + $0x10] sm:$0xf0] %v5678
    %5702 = vst [vmem:[#allocation4 + $0x18] sm:$0xf0] %v5679
    %5703 = vst [vmem:[#allocation4] sm:$0xe0] %v5684
    %5704 = vst [vmem:[#allocation4 + $0x8] sm:$0xe0] %v5685
    %s5705 = scalar_lea.vmem [#allocation4], 4
    %5706 = vst.msk [vmem:[%s5705] ss:$8 sm:$0x3] %vm651, 0.0
    %5707 = vst.msk [vmem:[%s5705] ss:$8 sm:$0x0] %vm651, 0.0
    %5708 = vst [vmem:[#allocation4 + $0x20] sm:$0x70] %v5692
    %5709 = vst [vmem:[#allocation4 + $0x28] sm:$0x70] %v5693
    %5710 = vst.msk [vmem:[%s3669] ss:$8 sm:$0x3] %vm651, 0.0
    %5711 = vst.msk [vmem:[%s3669] ss:$8 sm:$0x0] %vm651, 0.0
    %v5712 = vld [vmem:[#allocation2 + $0x780] sm:$0xff]
    %v5713 = vld [vmem:[#allocation2 + $0x788] sm:$0xff]
    %v5714 = vld [vmem:[#allocation2 + $0x790] sm:$0xff]
    %v5715 = vld [vmem:[#allocation2 + $0x798] sm:$0xff]
    %v5716 = vld [vmem:[#allocation2 + $0x7a0] sm:$0xff]
    %v5717 = vld [vmem:[#allocation2 + $0x7a8] sm:$0xff]
    %v5718 = vld [vmem:[#allocation2 + $0x7b0] sm:$0xff]
    %v5719 = vld [vmem:[#allocation2 + $0x7b8] sm:$0xff]
    %v5720 = vld [vmem:[#allocation2 + $0x7c0] sm:$0xff]
    %v5721 = vld [vmem:[#allocation2 + $0x7c8] sm:$0xff]
    %v5722 = vld [vmem:[#allocation2 + $0x7d0] sm:$0xff]
    %v5723 = vld [vmem:[#allocation2 + $0x7d8] sm:$0xff]
    %v5724 = vld [vmem:[#allocation2 + $0x7e0] sm:$0xff]
    %v5725 = vld [vmem:[#allocation2 + $0x7e8] sm:$0xff]
    %v5726 = vld [vmem:[#allocation2 + $0x7f0] sm:$0xff]
    %v5727 = vld [vmem:[#allocation2 + $0x7f8] sm:$0xff]
    %v5728 = vld [vmem:[#allocation2 + $0x800] sm:$0xff]
    %v5729 = vld [vmem:[#allocation2 + $0x808] sm:$0xff]
    %v5730 = vld [vmem:[#allocation2 + $0x810] sm:$0xff]
    %v5731 = vld [vmem:[#allocation2 + $0x818] sm:$0xff]
    %v5732 = vld [vmem:[#allocation2 + $0x820] sm:$0xff]
    %v5733 = vld [vmem:[#allocation2 + $0x828] sm:$0xff]
    %v5734 = vld [vmem:[#allocation2 + $0x830] sm:$0xff]
    %v5735 = vld [vmem:[#allocation2 + $0x838] sm:$0xff]
    %v5736 = vld [vmem:[#allocation2 + $0x840] sm:$0xff]
    %v5737 = vld [vmem:[#allocation2 + $0x848] sm:$0xff]
    %v5738 = vld [vmem:[#allocation2 + $0x850] sm:$0xff]
    %v5739 = vld [vmem:[#allocation2 + $0x858] sm:$0xff]
    %v5740 = vld [vmem:[#allocation2 + $0x860] sm:$0xff]
    %v5741 = vld [vmem:[#allocation2 + $0x868] sm:$0xff]
    %v5742 = vld [vmem:[#allocation2 + $0x870] sm:$0xff]
    %v5743 = vld [vmem:[#allocation2 + $0x878] sm:$0xff]
    %v5744 = vld [vmem:[#allocation2 + $0x880] sm:$0xff]
    %v5745 = vld [vmem:[#allocation2 + $0x888] sm:$0xff]
    %v5746 = vld [vmem:[#allocation2 + $0x890] sm:$0xff]
    %v5747 = vld [vmem:[#allocation2 + $0x898] sm:$0xff]
    %v5748 = vld [vmem:[#allocation2 + $0x8a0] sm:$0xff]
    %v5749 = vld [vmem:[#allocation2 + $0x8a8] sm:$0xff]
    %v5750 = vld [vmem:[#allocation2 + $0x8b0] sm:$0xff]
    %v5751 = vld [vmem:[#allocation2 + $0x8b8] sm:$0xff]
    %v5752 = vld [vmem:[#allocation2 + $0x8c0] sm:$0xff]
    %v5753 = vld [vmem:[#allocation2 + $0x8c8] sm:$0xff]
    %v5754 = vld [vmem:[#allocation2 + $0x8d0] sm:$0xff]
    %v5755 = vld [vmem:[#allocation2 + $0x8d8] sm:$0xff]
    %v5756 = vld [vmem:[#allocation2 + $0x8e0] sm:$0xff]
    %v5757 = vld [vmem:[#allocation2 + $0x8e8] sm:$0xff]
    %v5758 = vld [vmem:[#allocation2 + $0x8f0] sm:$0xff]
    %v5759 = vld [vmem:[#allocation2 + $0x8f8] sm:$0xff]
    %v5760 = vld [vmem:[#allocation2 + $0x900] sm:$0xff]
    %v5761 = vld [vmem:[#allocation2 + $0x908] sm:$0xff]
    %v5762 = vld [vmem:[#allocation2 + $0x910] sm:$0xff]
    %v5763 = vld [vmem:[#allocation2 + $0x918] sm:$0xff]
    %v5764 = vld [vmem:[#allocation2 + $0x920] sm:$0xff]
    %v5765 = vld [vmem:[#allocation2 + $0x928] sm:$0xff]
    %v5766 = vld [vmem:[#allocation2 + $0x930] sm:$0xff]
    %v5767 = vld [vmem:[#allocation2 + $0x938] sm:$0xff]
    %v5768 = vld [vmem:[#allocation2 + $0x940] sm:$0xff]
    %v5769 = vld [vmem:[#allocation2 + $0x948] sm:$0xff]
    %v5770 = vld [vmem:[#allocation2 + $0x950] sm:$0xff]
    %v5771 = vld [vmem:[#allocation2 + $0x958] sm:$0xff]
    %v5772 = vld [vmem:[#allocation2 + $0x960] sm:$0xff]
    %v5773 = vld [vmem:[#allocation2 + $0x968] sm:$0xff]
    %v5774 = vld [vmem:[#allocation2 + $0x970] sm:$0xff]
    %v5775 = vld [vmem:[#allocation2 + $0x978] sm:$0xff]
    %v5776 = vld [vmem:[#allocation2 + $0x980] sm:$0xff]
    %v5777 = vld [vmem:[#allocation2 + $0x988] sm:$0xff]
    %v5778 = vld [vmem:[#allocation2 + $0x990] sm:$0xff]
    %v5779 = vld [vmem:[#allocation2 + $0x998] sm:$0xff]
    %v5780 = vld [vmem:[#allocation2 + $0x9a0] sm:$0xff]
    %v5781 = vld [vmem:[#allocation2 + $0x9a8] sm:$0xff]
    %v5782 = vld [vmem:[#allocation2 + $0x9b0] sm:$0xff]
    %v5783 = vld [vmem:[#allocation2 + $0x9b8] sm:$0xff]
    %v5784 = vld [vmem:[#allocation2 + $0x9c0] sm:$0xff]
    %v5785 = vld [vmem:[#allocation2 + $0x9c8] sm:$0xff]
    %v5786 = vld [vmem:[#allocation2 + $0x9d0] sm:$0xff]
    %v5787 = vld [vmem:[#allocation2 + $0x9d8] sm:$0xff]
    %v5788 = vld [vmem:[#allocation2 + $0x9e0] sm:$0xff]
    %v5789 = vld [vmem:[#allocation2 + $0x9e8] sm:$0xff]
    %v5790 = vld [vmem:[#allocation2 + $0x9f0] sm:$0xff]
    %v5791 = vld [vmem:[#allocation2 + $0x9f8] sm:$0xff]
    %v5792 = vld [vmem:[#allocation2 + $0xa00] sm:$0xff]
    %v5793 = vld [vmem:[#allocation2 + $0xa08] sm:$0xff]
    %v5794 = vld [vmem:[#allocation2 + $0xa10] sm:$0xff]
    %v5795 = vld [vmem:[#allocation2 + $0xa18] sm:$0xff]
    %v5796 = vld [vmem:[#allocation2 + $0xa20] sm:$0xff]
    %v5797 = vld [vmem:[#allocation2 + $0xa28] sm:$0xff]
    %v5798 = vld [vmem:[#allocation2 + $0xa30] sm:$0xff]
    %v5799 = vld [vmem:[#allocation2 + $0xa38] sm:$0xff]
    %v5800 = vld [vmem:[#allocation2 + $0xa40] sm:$0xff]
    %v5801 = vld [vmem:[#allocation2 + $0xa48] sm:$0xff]
    %v5802 = vld [vmem:[#allocation2 + $0xa50] sm:$0xff]
    %v5803 = vld [vmem:[#allocation2 + $0xa58] sm:$0xff]
    %v5804 = vld [vmem:[#allocation2 + $0xa60] sm:$0xff]
    %v5805 = vld [vmem:[#allocation2 + $0xa68] sm:$0xff]
    %v5806 = vld [vmem:[#allocation2 + $0xa70] sm:$0xff]
    %v5807 = vld [vmem:[#allocation2 + $0xa78] sm:$0xff]
    %v5808 = vld [vmem:[#allocation4] sm:$0xff]
    %v5809 = vld [vmem:[#allocation4 + $0x8] sm:$0xff]
    %v5810 = vld [vmem:[#allocation4 + $0x10] sm:$0xff]
    %v5811 = vld [vmem:[#allocation4 + $0x18] sm:$0xff]
    %v5812 = vld [vmem:[#allocation4 + $0x20] sm:$0xff]
    %v5813 = vld [vmem:[#allocation4 + $0x28] sm:$0xff]
    %v5814 = vpack.c.bf16 %v5808, %v5808
    %v5815 = vpack.c.bf16 %v5809, %v5809
    %v5816 = vpack.c.bf16 %v5810, %v5810
    %v5817 = vpack.c.bf16 %v5811, %v5811
    %v5818 = vpack.c.bf16 %v5812, %v5812
    %v5819 = vpack.c.bf16 %v5813, %v5813
    %s5820 = scalar_lea.vmem [#allocation11], 16
    %v5821 = vld [vmem:[%s5820] ss:$8 sm:$0x3]
    %v5823 = vperm.slane %v5821, 0
    %v5824 = vperm.slane %v5821, 1
    %v5923 = vunpack.c.l.b16 %v5712
    %v5924 = vunpack.c.h.b16 %v5712
    %v5925 = vunpack.c.l.b16 %v5713
    %v5926 = vunpack.c.h.b16 %v5713
    %v5927 = vunpack.c.l.b16 %v5714
    %v5928 = vunpack.c.h.b16 %v5714
    %v5929 = vunpack.c.l.b16 %v5715
    %v5930 = vunpack.c.h.b16 %v5715
    %v5931 = vunpack.c.l.b16 %v5716
    %v5932 = vunpack.c.h.b16 %v5716
    %v5933 = vunpack.c.l.b16 %v5717
    %v5934 = vunpack.c.h.b16 %v5717
    %v5935 = vunpack.c.l.b16 %v5718
    %v5936 = vunpack.c.h.b16 %v5718
    %v5937 = vunpack.c.l.b16 %v5719
    %v5938 = vunpack.c.h.b16 %v5719
    %v5939 = vunpack.c.l.b16 %v5720
    %v5940 = vunpack.c.h.b16 %v5720
    %v5941 = vunpack.c.l.b16 %v5721
    %v5942 = vunpack.c.h.b16 %v5721
    %v5943 = vunpack.c.l.b16 %v5722
    %v5944 = vunpack.c.h.b16 %v5722
    %v5945 = vunpack.c.l.b16 %v5723
    %v5946 = vunpack.c.h.b16 %v5723
    %v5947 = vunpack.c.l.b16 %v5724
    %v5948 = vunpack.c.h.b16 %v5724
    %v5949 = vunpack.c.l.b16 %v5725
    %v5950 = vunpack.c.h.b16 %v5725
    %v5951 = vunpack.c.l.b16 %v5726
    %v5952 = vunpack.c.h.b16 %v5726
    %v5953 = vunpack.c.l.b16 %v5727
    %v5954 = vunpack.c.h.b16 %v5727
    %v5955 = vunpack.c.l.b16 %v5728
    %v5956 = vunpack.c.h.b16 %v5728
    %v5957 = vunpack.c.l.b16 %v5729
    %v5958 = vunpack.c.h.b16 %v5729
    %v5959 = vunpack.c.l.b16 %v5730
    %v5960 = vunpack.c.h.b16 %v5730
    %v5961 = vunpack.c.l.b16 %v5731
    %v5962 = vunpack.c.h.b16 %v5731
    %v5963 = vunpack.c.l.b16 %v5732
    %v5964 = vunpack.c.h.b16 %v5732
    %v5965 = vunpack.c.l.b16 %v5733
    %v5966 = vunpack.c.h.b16 %v5733
    %v5967 = vunpack.c.l.b16 %v5734
    %v5968 = vunpack.c.h.b16 %v5734
    %v5969 = vunpack.c.l.b16 %v5735
    %v5970 = vunpack.c.h.b16 %v5735
    %v5971 = vunpack.c.l.b16 %v5736
    %v5972 = vunpack.c.h.b16 %v5736
    %v5973 = vunpack.c.l.b16 %v5737
    %v5974 = vunpack.c.h.b16 %v5737
    %v5975 = vunpack.c.l.b16 %v5738
    %v5976 = vunpack.c.h.b16 %v5738
    %v5977 = vunpack.c.l.b16 %v5739
    %v5978 = vunpack.c.h.b16 %v5739
    %v5979 = vunpack.c.l.b16 %v5740
    %v5980 = vunpack.c.h.b16 %v5740
    %v5981 = vunpack.c.l.b16 %v5741
    %v5982 = vunpack.c.h.b16 %v5741
    %v5983 = vunpack.c.l.b16 %v5742
    %v5984 = vunpack.c.h.b16 %v5742
    %v5985 = vunpack.c.l.b16 %v5743
    %v5986 = vunpack.c.h.b16 %v5743
    %v5987 = vunpack.c.l.b16 %v5744
    %v5988 = vunpack.c.h.b16 %v5744
    %v5989 = vunpack.c.l.b16 %v5745
    %v5990 = vunpack.c.h.b16 %v5745
    %v5991 = vunpack.c.l.b16 %v5746
    %v5992 = vunpack.c.h.b16 %v5746
    %v5993 = vunpack.c.l.b16 %v5747
    %v5994 = vunpack.c.h.b16 %v5747
    %v5995 = vunpack.c.l.b16 %v5748
    %v5996 = vunpack.c.h.b16 %v5748
    %v5997 = vunpack.c.l.b16 %v5749
    %v5998 = vunpack.c.h.b16 %v5749
    %v5999 = vunpack.c.l.b16 %v5750
    %v6000 = vunpack.c.h.b16 %v5750
    %v6001 = vunpack.c.l.b16 %v5751
    %v6002 = vunpack.c.h.b16 %v5751
    %v6003 = vunpack.c.l.b16 %v5752
    %v6004 = vunpack.c.h.b16 %v5752
    %v6005 = vunpack.c.l.b16 %v5753
    %v6006 = vunpack.c.h.b16 %v5753
    %v6007 = vunpack.c.l.b16 %v5754
    %v6008 = vunpack.c.h.b16 %v5754
    %v6009 = vunpack.c.l.b16 %v5755
    %v6010 = vunpack.c.h.b16 %v5755
    %v6011 = vunpack.c.l.b16 %v5756
    %v6012 = vunpack.c.h.b16 %v5756
    %v6013 = vunpack.c.l.b16 %v5757
    %v6014 = vunpack.c.h.b16 %v5757
    %v6015 = vunpack.c.l.b16 %v5758
    %v6016 = vunpack.c.h.b16 %v5758
    %v6017 = vunpack.c.l.b16 %v5759
    %v6018 = vunpack.c.h.b16 %v5759
    %v6019 = vunpack.c.l.b16 %v5760
    %v6020 = vunpack.c.h.b16 %v5760
    %v6021 = vunpack.c.l.b16 %v5761
    %v6022 = vunpack.c.h.b16 %v5761
    %v6023 = vunpack.c.l.b16 %v5762
    %v6024 = vunpack.c.h.b16 %v5762
    %v6025 = vunpack.c.l.b16 %v5763
    %v6026 = vunpack.c.h.b16 %v5763
    %v6027 = vunpack.c.l.b16 %v5764
    %v6028 = vunpack.c.h.b16 %v5764
    %v6029 = vunpack.c.l.b16 %v5765
    %v6030 = vunpack.c.h.b16 %v5765
    %v6031 = vunpack.c.l.b16 %v5766
    %v6032 = vunpack.c.h.b16 %v5766
    %v6033 = vunpack.c.l.b16 %v5767
    %v6034 = vunpack.c.h.b16 %v5767
    %v6035 = vunpack.c.l.b16 %v5768
    %v6036 = vunpack.c.h.b16 %v5768
    %v6037 = vunpack.c.l.b16 %v5769
    %v6038 = vunpack.c.h.b16 %v5769
    %v6039 = vunpack.c.l.b16 %v5770
    %v6040 = vunpack.c.h.b16 %v5770
    %v6041 = vunpack.c.l.b16 %v5771
    %v6042 = vunpack.c.h.b16 %v5771
    %v6043 = vunpack.c.l.b16 %v5772
    %v6044 = vunpack.c.h.b16 %v5772
    %v6045 = vunpack.c.l.b16 %v5773
    %v6046 = vunpack.c.h.b16 %v5773
    %v6047 = vunpack.c.l.b16 %v5774
    %v6048 = vunpack.c.h.b16 %v5774
    %v6049 = vunpack.c.l.b16 %v5775
    %v6050 = vunpack.c.h.b16 %v5775
    %v6051 = vunpack.c.l.b16 %v5776
    %v6052 = vunpack.c.h.b16 %v5776
    %v6053 = vunpack.c.l.b16 %v5777
    %v6054 = vunpack.c.h.b16 %v5777
    %v6055 = vunpack.c.l.b16 %v5778
    %v6056 = vunpack.c.h.b16 %v5778
    %v6057 = vunpack.c.l.b16 %v5779
    %v6058 = vunpack.c.h.b16 %v5779
    %v6059 = vunpack.c.l.b16 %v5780
    %v6060 = vunpack.c.h.b16 %v5780
    %v6061 = vunpack.c.l.b16 %v5781
    %v6062 = vunpack.c.h.b16 %v5781
    %v6063 = vunpack.c.l.b16 %v5782
    %v6064 = vunpack.c.h.b16 %v5782
    %v6065 = vunpack.c.l.b16 %v5783
    %v6066 = vunpack.c.h.b16 %v5783
    %v6067 = vunpack.c.l.b16 %v5784
    %v6068 = vunpack.c.h.b16 %v5784
    %v6069 = vunpack.c.l.b16 %v5785
    %v6070 = vunpack.c.h.b16 %v5785
    %v6071 = vunpack.c.l.b16 %v5786
    %v6072 = vunpack.c.h.b16 %v5786
    %v6073 = vunpack.c.l.b16 %v5787
    %v6074 = vunpack.c.h.b16 %v5787
    %v6075 = vunpack.c.l.b16 %v5788
    %v6076 = vunpack.c.h.b16 %v5788
    %v6077 = vunpack.c.l.b16 %v5789
    %v6078 = vunpack.c.h.b16 %v5789
    %v6079 = vunpack.c.l.b16 %v5790
    %v6080 = vunpack.c.h.b16 %v5790
    %v6081 = vunpack.c.l.b16 %v5791
    %v6082 = vunpack.c.h.b16 %v5791
    %v6083 = vunpack.c.l.b16 %v5792
    %v6084 = vunpack.c.h.b16 %v5792
    %v6085 = vunpack.c.l.b16 %v5793
    %v6086 = vunpack.c.h.b16 %v5793
    %v6087 = vunpack.c.l.b16 %v5794
    %v6088 = vunpack.c.h.b16 %v5794
    %v6089 = vunpack.c.l.b16 %v5795
    %v6090 = vunpack.c.h.b16 %v5795
    %v6091 = vunpack.c.l.b16 %v5796
    %v6092 = vunpack.c.h.b16 %v5796
    %v6093 = vunpack.c.l.b16 %v5797
    %v6094 = vunpack.c.h.b16 %v5797
    %v6095 = vunpack.c.l.b16 %v5798
    %v6096 = vunpack.c.h.b16 %v5798
    %v6097 = vunpack.c.l.b16 %v5799
    %v6098 = vunpack.c.h.b16 %v5799
    %v6099 = vunpack.c.l.b16 %v5800
    %v6100 = vunpack.c.h.b16 %v5800
    %v6101 = vunpack.c.l.b16 %v5801
    %v6102 = vunpack.c.h.b16 %v5801
    %v6103 = vunpack.c.l.b16 %v5802
    %v6104 = vunpack.c.h.b16 %v5802
    %v6105 = vunpack.c.l.b16 %v5803
    %v6106 = vunpack.c.h.b16 %v5803
    %v6107 = vunpack.c.l.b16 %v5804
    %v6108 = vunpack.c.h.b16 %v5804
    %v6109 = vunpack.c.l.b16 %v5805
    %v6110 = vunpack.c.h.b16 %v5805
    %v6111 = vunpack.c.l.b16 %v5806
    %v6112 = vunpack.c.h.b16 %v5806
    %v6113 = vunpack.c.l.b16 %v5807
    %v6114 = vunpack.c.h.b16 %v5807
    %v6115 = vpack.c.b16 %v5925, %v5923
    %v6116 = vpack.c.b16 %v5926, %v5924
    %v6117 = vpack.c.b16 %v5929, %v5927
    %v6118 = vpack.c.b16 %v5930, %v5928
    %v6119 = vpack.c.b16 %v5933, %v5931
    %v6120 = vpack.c.b16 %v5934, %v5932
    %v6121 = vpack.c.b16 %v5937, %v5935
    %v6122 = vpack.c.b16 %v5938, %v5936
    %v6123 = vpack.c.b16 %v5941, %v5939
    %v6124 = vpack.c.b16 %v5942, %v5940
    %v6125 = vpack.c.b16 %v5945, %v5943
    %v6126 = vpack.c.b16 %v5946, %v5944
    %v6127 = vpack.c.b16 %v5949, %v5947
    %v6128 = vpack.c.b16 %v5950, %v5948
    %v6129 = vpack.c.b16 %v5953, %v5951
    %v6130 = vpack.c.b16 %v5954, %v5952
    %v6131 = vpack.c.b16 %v5957, %v5955
    %v6132 = vpack.c.b16 %v5958, %v5956
    %v6133 = vpack.c.b16 %v5961, %v5959
    %v6134 = vpack.c.b16 %v5962, %v5960
    %v6135 = vpack.c.b16 %v5965, %v5963
    %v6136 = vpack.c.b16 %v5966, %v5964
    %v6137 = vpack.c.b16 %v5969, %v5967
    %v6138 = vpack.c.b16 %v5970, %v5968
    %v6139 = vpack.c.b16 %v5973, %v5971
    %v6140 = vpack.c.b16 %v5974, %v5972
    %v6141 = vpack.c.b16 %v5977, %v5975
    %v6142 = vpack.c.b16 %v5978, %v5976
    %v6143 = vpack.c.b16 %v5981, %v5979
    %v6144 = vpack.c.b16 %v5982, %v5980
    %v6145 = vpack.c.b16 %v5985, %v5983
    %v6146 = vpack.c.b16 %v5986, %v5984
    %v6147 = vpack.c.b16 %v5989, %v5987
    %v6148 = vpack.c.b16 %v5990, %v5988
    %v6149 = vpack.c.b16 %v5993, %v5991
    %v6150 = vpack.c.b16 %v5994, %v5992
    %v6151 = vpack.c.b16 %v5997, %v5995
    %v6152 = vpack.c.b16 %v5998, %v5996
    %v6153 = vpack.c.b16 %v6001, %v5999
    %v6154 = vpack.c.b16 %v6002, %v6000
    %v6155 = vpack.c.b16 %v6005, %v6003
    %v6156 = vpack.c.b16 %v6006, %v6004
    %v6157 = vpack.c.b16 %v6009, %v6007
    %v6158 = vpack.c.b16 %v6010, %v6008
    %v6159 = vpack.c.b16 %v6013, %v6011
    %v6160 = vpack.c.b16 %v6014, %v6012
    %v6161 = vpack.c.b16 %v6017, %v6015
    %v6162 = vpack.c.b16 %v6018, %v6016
    %v6163 = vpack.c.b16 %v6021, %v6019
    %v6164 = vpack.c.b16 %v6022, %v6020
    %v6165 = vpack.c.b16 %v6025, %v6023
    %v6166 = vpack.c.b16 %v6026, %v6024
    %v6167 = vpack.c.b16 %v6029, %v6027
    %v6168 = vpack.c.b16 %v6030, %v6028
    %v6169 = vpack.c.b16 %v6033, %v6031
    %v6170 = vpack.c.b16 %v6034, %v6032
    %v6171 = vpack.c.b16 %v6037, %v6035
    %v6172 = vpack.c.b16 %v6038, %v6036
    %v6173 = vpack.c.b16 %v6041, %v6039
    %v6174 = vpack.c.b16 %v6042, %v6040
    %v6175 = vpack.c.b16 %v6045, %v6043
    %v6176 = vpack.c.b16 %v6046, %v6044
    %v6177 = vpack.c.b16 %v6049, %v6047
    %v6178 = vpack.c.b16 %v6050, %v6048
    %v6179 = vpack.c.b16 %v6053, %v6051
    %v6180 = vpack.c.b16 %v6054, %v6052
    %v6181 = vpack.c.b16 %v6057, %v6055
    %v6182 = vpack.c.b16 %v6058, %v6056
    %v6183 = vpack.c.b16 %v6061, %v6059
    %v6184 = vpack.c.b16 %v6062, %v6060
    %v6185 = vpack.c.b16 %v6065, %v6063
    %v6186 = vpack.c.b16 %v6066, %v6064
    %v6187 = vpack.c.b16 %v6069, %v6067
    %v6188 = vpack.c.b16 %v6070, %v6068
    %v6189 = vpack.c.b16 %v6073, %v6071
    %v6190 = vpack.c.b16 %v6074, %v6072
    %v6191 = vpack.c.b16 %v6077, %v6075
    %v6192 = vpack.c.b16 %v6078, %v6076
    %v6193 = vpack.c.b16 %v6081, %v6079
    %v6194 = vpack.c.b16 %v6082, %v6080
    %v6195 = vpack.c.b16 %v6085, %v6083
    %v6196 = vpack.c.b16 %v6086, %v6084
    %v6197 = vpack.c.b16 %v6089, %v6087
    %v6198 = vpack.c.b16 %v6090, %v6088
    %v6199 = vpack.c.b16 %v6093, %v6091
    %v6200 = vpack.c.b16 %v6094, %v6092
    %v6201 = vpack.c.b16 %v6097, %v6095
    %v6202 = vpack.c.b16 %v6098, %v6096
    %v6203 = vpack.c.b16 %v6101, %v6099
    %v6204 = vpack.c.b16 %v6102, %v6100
    %v6205 = vpack.c.b16 %v6105, %v6103
    %v6206 = vpack.c.b16 %v6106, %v6104
    %v6207 = vpack.c.b16 %v6109, %v6107
    %v6208 = vpack.c.b16 %v6110, %v6108
    %v6209 = vpack.c.b16 %v6113, %v6111
    %v6210 = vpack.c.b16 %v6114, %v6112
    %6307 = vmatpush.bf16.msra.mxu0 %v6129
    %6308 = vmatpush.bf16.msra.mxu0 %v6127
    %6309 = vmatpush.bf16.msra.mxu0 %v6125
    %6310 = vmatpush.bf16.msra.mxu0 %v6123
    %6311 = vmatpush.bf16.msra.mxu0 %v6121
    %6312 = vmatpush.bf16.msra.mxu0 %v6119
    %6313 = vmatpush.bf16.msra.mxu0 %v6117
    %6314 = vmatpush.bf16.msra.mxu0 %v6115
    %6315 = vmatmul.bf16.gmra.mxu0 %v5814
    %v6316 = vpop.f32.mrf.mxu0
    %v6317 = vadd.f32 %v5823, %v6316
    %v6318 = vpop.f32.mrf.mxu0
    %6319 = vdwg.mxu0
    %6320 = vmatpush.bf16.msra.mxu0 %v6145
    %6321 = vmatpush.bf16.msra.mxu0 %v6143
    %6322 = vmatpush.bf16.msra.mxu0 %v6141
    %6323 = vmatpush.bf16.msra.mxu0 %v6139
    %6324 = vmatpush.bf16.msra.mxu0 %v6137
    %6325 = vmatpush.bf16.msra.mxu0 %v6135
    %6326 = vmatpush.bf16.msra.mxu0 %v6133
    %6327 = vmatpush.bf16.msra.mxu0 %v6131
    %6328 = vmatmul.bf16.gmra.mxu0 %v5815
    %v6329 = vpop.f32.mrf.mxu0
    %v6330 = vadd.f32 %v6317, %v6329
    %v6331 = vpop.f32.mrf.mxu0
    %6332 = vdwg.mxu0
    %6333 = vmatpush.bf16.msra.mxu0 %v6161
    %6334 = vmatpush.bf16.msra.mxu0 %v6159
    %6335 = vmatpush.bf16.msra.mxu0 %v6157
    %6336 = vmatpush.bf16.msra.mxu0 %v6155
    %6337 = vmatpush.bf16.msra.mxu0 %v6153
    %6338 = vmatpush.bf16.msra.mxu0 %v6151
    %6339 = vmatpush.bf16.msra.mxu0 %v6149
    %6340 = vmatpush.bf16.msra.mxu0 %v6147
    %6341 = vmatmul.bf16.gmra.mxu0 %v5816
    %v6342 = vpop.f32.mrf.mxu0
    %v6343 = vadd.f32 %v6330, %v6342
    %v6344 = vpop.f32.mrf.mxu0
    %6345 = vdwg.mxu0
    %6346 = vmatpush.bf16.msra.mxu0 %v6177
    %6347 = vmatpush.bf16.msra.mxu0 %v6175
    %6348 = vmatpush.bf16.msra.mxu0 %v6173
    %6349 = vmatpush.bf16.msra.mxu0 %v6171
    %6350 = vmatpush.bf16.msra.mxu0 %v6169
    %6351 = vmatpush.bf16.msra.mxu0 %v6167
    %6352 = vmatpush.bf16.msra.mxu0 %v6165
    %6353 = vmatpush.bf16.msra.mxu0 %v6163
    %6354 = vmatmul.bf16.gmra.mxu0 %v5817
    %v6355 = vpop.f32.mrf.mxu0
    %v6356 = vadd.f32 %v6343, %v6355
    %v6357 = vpop.f32.mrf.mxu0
    %6358 = vdwg.mxu0
    %6359 = vmatpush.bf16.msra.mxu0 %v6193
    %6360 = vmatpush.bf16.msra.mxu0 %v6191
    %6361 = vmatpush.bf16.msra.mxu0 %v6189
    %6362 = vmatpush.bf16.msra.mxu0 %v6187
    %6363 = vmatpush.bf16.msra.mxu0 %v6185
    %6364 = vmatpush.bf16.msra.mxu0 %v6183
    %6365 = vmatpush.bf16.msra.mxu0 %v6181
    %6366 = vmatpush.bf16.msra.mxu0 %v6179
    %6367 = vmatmul.bf16.gmra.mxu0 %v5818
    %v6368 = vpop.f32.mrf.mxu0
    %v6369 = vadd.f32 %v6356, %v6368
    %v6370 = vpop.f32.mrf.mxu0
    %6371 = vdwg.mxu0
    %6372 = vmatpush.bf16.msra.mxu0 %v6209
    %6373 = vmatpush.bf16.msra.mxu0 %v6207
    %6374 = vmatpush.bf16.msra.mxu0 %v6205
    %6375 = vmatpush.bf16.msra.mxu0 %v6203
    %6376 = vmatpush.bf16.msra.mxu0 %v6201
    %6377 = vmatpush.bf16.msra.mxu0 %v6199
    %6378 = vmatpush.bf16.msra.mxu0 %v6197
    %6379 = vmatpush.bf16.msra.mxu0 %v6195
    %6380 = vmatmul.bf16.gmra.mxu0 %v5819
    %v6381 = vpop.f32.mrf.mxu0
    %v6382 = vadd.f32 %v6369, %v6381
    %v6383 = vpop.f32.mrf.mxu0
    %6384 = vdwg.mxu0
    %6385 = vmatpush.bf16.msra.mxu0 %v6130
    %6386 = vmatpush.bf16.msra.mxu0 %v6128
    %6387 = vmatpush.bf16.msra.mxu0 %v6126
    %6388 = vmatpush.bf16.msra.mxu0 %v6124
    %6389 = vmatpush.bf16.msra.mxu0 %v6122
    %6390 = vmatpush.bf16.msra.mxu0 %v6120
    %6391 = vmatpush.bf16.msra.mxu0 %v6118
    %6392 = vmatpush.bf16.msra.mxu0 %v6116
    %6393 = vmatmul.bf16.gmra.mxu0 %v5814
    %v6394 = vpop.f32.mrf.mxu0
    %v6395 = vadd.f32 %v5824, %v6394
    %v6396 = vpop.f32.mrf.mxu0
    %6397 = vdwg.mxu0
    %6398 = vmatpush.bf16.msra.mxu0 %v6146
    %6399 = vmatpush.bf16.msra.mxu0 %v6144
    %6400 = vmatpush.bf16.msra.mxu0 %v6142
    %6401 = vmatpush.bf16.msra.mxu0 %v6140
    %6402 = vmatpush.bf16.msra.mxu0 %v6138
    %6403 = vmatpush.bf16.msra.mxu0 %v6136
    %6404 = vmatpush.bf16.msra.mxu0 %v6134
    %6405 = vmatpush.bf16.msra.mxu0 %v6132
    %6406 = vmatmul.bf16.gmra.mxu0 %v5815
    %v6407 = vpop.f32.mrf.mxu0
    %v6408 = vadd.f32 %v6395, %v6407
    %v6409 = vpop.f32.mrf.mxu0
    %6410 = vdwg.mxu0
    %6411 = vmatpush.bf16.msra.mxu0 %v6162
    %6412 = vmatpush.bf16.msra.mxu0 %v6160
    %6413 = vmatpush.bf16.msra.mxu0 %v6158
    %6414 = vmatpush.bf16.msra.mxu0 %v6156
    %6415 = vmatpush.bf16.msra.mxu0 %v6154
    %6416 = vmatpush.bf16.msra.mxu0 %v6152
    %6417 = vmatpush.bf16.msra.mxu0 %v6150
    %6418 = vmatpush.bf16.msra.mxu0 %v6148
    %6419 = vmatmul.bf16.gmra.mxu0 %v5816
    %v6420 = vpop.f32.mrf.mxu0
    %v6421 = vadd.f32 %v6408, %v6420
    %v6422 = vpop.f32.mrf.mxu0
    %6423 = vdwg.mxu0
    %6424 = vmatpush.bf16.msra.mxu0 %v6178
    %6425 = vmatpush.bf16.msra.mxu0 %v6176
    %6426 = vmatpush.bf16.msra.mxu0 %v6174
    %6427 = vmatpush.bf16.msra.mxu0 %v6172
    %6428 = vmatpush.bf16.msra.mxu0 %v6170
    %6429 = vmatpush.bf16.msra.mxu0 %v6168
    %6430 = vmatpush.bf16.msra.mxu0 %v6166
    %6431 = vmatpush.bf16.msra.mxu0 %v6164
    %6432 = vmatmul.bf16.gmra.mxu0 %v5817
    %v6433 = vpop.f32.mrf.mxu0
    %v6434 = vadd.f32 %v6421, %v6433
    %v6435 = vpop.f32.mrf.mxu0
    %6436 = vdwg.mxu0
    %6437 = vmatpush.bf16.msra.mxu0 %v6194
    %6438 = vmatpush.bf16.msra.mxu0 %v6192
    %6439 = vmatpush.bf16.msra.mxu0 %v6190
    %6440 = vmatpush.bf16.msra.mxu0 %v6188
    %6441 = vmatpush.bf16.msra.mxu0 %v6186
    %6442 = vmatpush.bf16.msra.mxu0 %v6184
    %6443 = vmatpush.bf16.msra.mxu0 %v6182
    %6444 = vmatpush.bf16.msra.mxu0 %v6180
    %6445 = vmatmul.bf16.gmra.mxu0 %v5818
    %v6446 = vpop.f32.mrf.mxu0
    %v6447 = vadd.f32 %v6434, %v6446
    %v6448 = vpop.f32.mrf.mxu0
    %6449 = vdwg.mxu0
    %6450 = vmatpush.bf16.msra.mxu0 %v6210
    %6451 = vmatpush.bf16.msra.mxu0 %v6208
    %6452 = vmatpush.bf16.msra.mxu0 %v6206
    %6453 = vmatpush.bf16.msra.mxu0 %v6204
    %6454 = vmatpush.bf16.msra.mxu0 %v6202
    %6455 = vmatpush.bf16.msra.mxu0 %v6200
    %6456 = vmatpush.bf16.msra.mxu0 %v6198
    %6457 = vmatpush.bf16.msra.mxu0 %v6196
    %6458 = vmatmul.bf16.gmra.mxu0 %v5819
    %v6459 = vpop.f32.mrf.mxu0
    %v6460 = vadd.f32 %v6447, %v6459
    %v6461 = vpop.f32.mrf.mxu0
    %6462 = vdwg.mxu0
    %v6463 = vmax.f32 %v6382, 0.0
    %v6464 = vmax.f32 %v6460, 0.0
    %6465 = vst [vmem:[#allocation4 + $0x10] sm:$0xf] %v6463
    %6466 = vst [vmem:[#allocation4 + $0x18] sm:$0xf] %v6464
    %v6469 = vrot.slane %v6463, 7
    %v6470 = vrot.slane %v6464, 7
    %6473 = vst [vmem:[#allocation4] sm:$0xe] %v6469
    %6474 = vst [vmem:[#allocation4 + $0x8] sm:$0xe] %v6470
    %6475 = vst.msk [vmem:[#allocation4] ss:$8 sm:$0x3] %vm651, 0.0
    %6476 = vst.msk [vmem:[#allocation4] ss:$8 sm:$0x0] %vm651, 0.0
    %v6477 = vrot.slane %v6463, 1
    %v6478 = vrot.slane %v6464, 1
    %6481 = vst [vmem:[#allocation4 + $0x20] sm:$0x7] %v6477
    %6482 = vst [vmem:[#allocation4 + $0x28] sm:$0x7] %v6478
    %6483 = vst.msk [vmem:[%s5698] ss:$8 sm:$0x3] %vm651, 0.0
    %6484 = vst.msk [vmem:[%s5698] ss:$8 sm:$0x0] %vm651, 0.0
    %6485 = vst [vmem:[#allocation4 + $0x10] sm:$0xf0] %v6463
    %6486 = vst [vmem:[#allocation4 + $0x18] sm:$0xf0] %v6464
    %6487 = vst [vmem:[#allocation4] sm:$0xe0] %v6469
    %6488 = vst [vmem:[#allocation4 + $0x8] sm:$0xe0] %v6470
    %6489 = vst.msk [vmem:[%s5705] ss:$8 sm:$0x3] %vm651, 0.0
    %6490 = vst.msk [vmem:[%s5705] ss:$8 sm:$0x0] %vm651, 0.0
    %6491 = vst [vmem:[#allocation4 + $0x20] sm:$0x70] %v6477
    %6492 = vst [vmem:[#allocation4 + $0x28] sm:$0x70] %v6478
    %6493 = vst.msk [vmem:[%s3669] ss:$8 sm:$0x3] %vm651, 0.0
    %6494 = vst.msk [vmem:[%s3669] ss:$8 sm:$0x0] %vm651, 0.0
    %v6495 = vld [vmem:[#allocation2 + $0xa80] sm:$0xff]
    %v6496 = vld [vmem:[#allocation2 + $0xa88] sm:$0xff]
    %v6497 = vld [vmem:[#allocation2 + $0xa90] sm:$0xff]
    %v6498 = vld [vmem:[#allocation2 + $0xa98] sm:$0xff]
    %v6499 = vld [vmem:[#allocation2 + $0xaa0] sm:$0xff]
    %v6500 = vld [vmem:[#allocation2 + $0xaa8] sm:$0xff]
    %v6501 = vld [vmem:[#allocation2 + $0xab0] sm:$0xff]
    %v6502 = vld [vmem:[#allocation2 + $0xab8] sm:$0xff]
    %v6503 = vld [vmem:[#allocation2 + $0xac0] sm:$0xff]
    %v6504 = vld [vmem:[#allocation2 + $0xac8] sm:$0xff]
    %v6505 = vld [vmem:[#allocation2 + $0xad0] sm:$0xff]
    %v6506 = vld [vmem:[#allocation2 + $0xad8] sm:$0xff]
    %v6507 = vld [vmem:[#allocation2 + $0xae0] sm:$0xff]
    %v6508 = vld [vmem:[#allocation2 + $0xae8] sm:$0xff]
    %v6509 = vld [vmem:[#allocation2 + $0xaf0] sm:$0xff]
    %v6510 = vld [vmem:[#allocation2 + $0xaf8] sm:$0xff]
    %v6511 = vld [vmem:[#allocation2 + $0xb00] sm:$0xff]
    %v6512 = vld [vmem:[#allocation2 + $0xb08] sm:$0xff]
    %v6513 = vld [vmem:[#allocation2 + $0xb10] sm:$0xff]
    %v6514 = vld [vmem:[#allocation2 + $0xb18] sm:$0xff]
    %v6515 = vld [vmem:[#allocation2 + $0xb20] sm:$0xff]
    %v6516 = vld [vmem:[#allocation2 + $0xb28] sm:$0xff]
    %v6517 = vld [vmem:[#allocation2 + $0xb30] sm:$0xff]
    %v6518 = vld [vmem:[#allocation2 + $0xb38] sm:$0xff]
    %v6519 = vld [vmem:[#allocation2 + $0xb40] sm:$0xff]
    %v6520 = vld [vmem:[#allocation2 + $0xb48] sm:$0xff]
    %v6521 = vld [vmem:[#allocation2 + $0xb50] sm:$0xff]
    %v6522 = vld [vmem:[#allocation2 + $0xb58] sm:$0xff]
    %v6523 = vld [vmem:[#allocation2 + $0xb60] sm:$0xff]
    %v6524 = vld [vmem:[#allocation2 + $0xb68] sm:$0xff]
    %v6525 = vld [vmem:[#allocation2 + $0xb70] sm:$0xff]
    %v6526 = vld [vmem:[#allocation2 + $0xb78] sm:$0xff]
    %v6527 = vld [vmem:[#allocation2 + $0xb80] sm:$0xff]
    %v6528 = vld [vmem:[#allocation2 + $0xb88] sm:$0xff]
    %v6529 = vld [vmem:[#allocation2 + $0xb90] sm:$0xff]
    %v6530 = vld [vmem:[#allocation2 + $0xb98] sm:$0xff]
    %v6531 = vld [vmem:[#allocation2 + $0xba0] sm:$0xff]
    %v6532 = vld [vmem:[#allocation2 + $0xba8] sm:$0xff]
    %v6533 = vld [vmem:[#allocation2 + $0xbb0] sm:$0xff]
    %v6534 = vld [vmem:[#allocation2 + $0xbb8] sm:$0xff]
    %v6535 = vld [vmem:[#allocation2 + $0xbc0] sm:$0xff]
    %v6536 = vld [vmem:[#allocation2 + $0xbc8] sm:$0xff]
    %v6537 = vld [vmem:[#allocation2 + $0xbd0] sm:$0xff]
    %v6538 = vld [vmem:[#allocation2 + $0xbd8] sm:$0xff]
    %v6539 = vld [vmem:[#allocation2 + $0xbe0] sm:$0xff]
    %v6540 = vld [vmem:[#allocation2 + $0xbe8] sm:$0xff]
    %v6541 = vld [vmem:[#allocation2 + $0xbf0] sm:$0xff]
    %v6542 = vld [vmem:[#allocation2 + $0xbf8] sm:$0xff]
    %v6543 = vld [vmem:[#allocation2 + $0xc00] sm:$0xff]
    %v6544 = vld [vmem:[#allocation2 + $0xc08] sm:$0xff]
    %v6545 = vld [vmem:[#allocation2 + $0xc10] sm:$0xff]
    %v6546 = vld [vmem:[#allocation2 + $0xc18] sm:$0xff]
    %v6547 = vld [vmem:[#allocation2 + $0xc20] sm:$0xff]
    %v6548 = vld [vmem:[#allocation2 + $0xc28] sm:$0xff]
    %v6549 = vld [vmem:[#allocation2 + $0xc30] sm:$0xff]
    %v6550 = vld [vmem:[#allocation2 + $0xc38] sm:$0xff]
    %v6551 = vld [vmem:[#allocation2 + $0xc40] sm:$0xff]
    %v6552 = vld [vmem:[#allocation2 + $0xc48] sm:$0xff]
    %v6553 = vld [vmem:[#allocation2 + $0xc50] sm:$0xff]
    %v6554 = vld [vmem:[#allocation2 + $0xc58] sm:$0xff]
    %v6555 = vld [vmem:[#allocation2 + $0xc60] sm:$0xff]
    %v6556 = vld [vmem:[#allocation2 + $0xc68] sm:$0xff]
    %v6557 = vld [vmem:[#allocation2 + $0xc70] sm:$0xff]
    %v6558 = vld [vmem:[#allocation2 + $0xc78] sm:$0xff]
    %v6559 = vld [vmem:[#allocation2 + $0xc80] sm:$0xff]
    %v6560 = vld [vmem:[#allocation2 + $0xc88] sm:$0xff]
    %v6561 = vld [vmem:[#allocation2 + $0xc90] sm:$0xff]
    %v6562 = vld [vmem:[#allocation2 + $0xc98] sm:$0xff]
    %v6563 = vld [vmem:[#allocation2 + $0xca0] sm:$0xff]
    %v6564 = vld [vmem:[#allocation2 + $0xca8] sm:$0xff]
    %v6565 = vld [vmem:[#allocation2 + $0xcb0] sm:$0xff]
    %v6566 = vld [vmem:[#allocation2 + $0xcb8] sm:$0xff]
    %v6567 = vld [vmem:[#allocation2 + $0xcc0] sm:$0xff]
    %v6568 = vld [vmem:[#allocation2 + $0xcc8] sm:$0xff]
    %v6569 = vld [vmem:[#allocation2 + $0xcd0] sm:$0xff]
    %v6570 = vld [vmem:[#allocation2 + $0xcd8] sm:$0xff]
    %v6571 = vld [vmem:[#allocation2 + $0xce0] sm:$0xff]
    %v6572 = vld [vmem:[#allocation2 + $0xce8] sm:$0xff]
    %v6573 = vld [vmem:[#allocation2 + $0xcf0] sm:$0xff]
    %v6574 = vld [vmem:[#allocation2 + $0xcf8] sm:$0xff]
    %v6575 = vld [vmem:[#allocation2 + $0xd00] sm:$0xff]
    %v6576 = vld [vmem:[#allocation2 + $0xd08] sm:$0xff]
    %v6577 = vld [vmem:[#allocation2 + $0xd10] sm:$0xff]
    %v6578 = vld [vmem:[#allocation2 + $0xd18] sm:$0xff]
    %v6579 = vld [vmem:[#allocation2 + $0xd20] sm:$0xff]
    %v6580 = vld [vmem:[#allocation2 + $0xd28] sm:$0xff]
    %v6581 = vld [vmem:[#allocation2 + $0xd30] sm:$0xff]
    %v6582 = vld [vmem:[#allocation2 + $0xd38] sm:$0xff]
    %v6583 = vld [vmem:[#allocation2 + $0xd40] sm:$0xff]
    %v6584 = vld [vmem:[#allocation2 + $0xd48] sm:$0xff]
    %v6585 = vld [vmem:[#allocation2 + $0xd50] sm:$0xff]
    %v6586 = vld [vmem:[#allocation2 + $0xd58] sm:$0xff]
    %v6587 = vld [vmem:[#allocation2 + $0xd60] sm:$0xff]
    %v6588 = vld [vmem:[#allocation2 + $0xd68] sm:$0xff]
    %v6589 = vld [vmem:[#allocation2 + $0xd70] sm:$0xff]
    %v6590 = vld [vmem:[#allocation2 + $0xd78] sm:$0xff]
    %v6591 = vld [vmem:[#allocation4] sm:$0xff]
    %v6592 = vld [vmem:[#allocation4 + $0x8] sm:$0xff]
    %v6593 = vld [vmem:[#allocation4 + $0x10] sm:$0xff]
    %v6594 = vld [vmem:[#allocation4 + $0x18] sm:$0xff]
    %v6595 = vld [vmem:[#allocation4 + $0x20] sm:$0xff]
    %v6596 = vld [vmem:[#allocation4 + $0x28] sm:$0xff]
    %v6597 = vpack.c.bf16 %v6591, %v6591
    %v6598 = vpack.c.bf16 %v6592, %v6592
    %v6599 = vpack.c.bf16 %v6593, %v6593
    %v6600 = vpack.c.bf16 %v6594, %v6594
    %v6601 = vpack.c.bf16 %v6595, %v6595
    %v6602 = vpack.c.bf16 %v6596, %v6596
    %v6699 = vunpack.c.l.b16 %v6495
    %v6700 = vunpack.c.h.b16 %v6495
    %v6701 = vunpack.c.l.b16 %v6496
    %v6702 = vunpack.c.h.b16 %v6496
    %v6703 = vunpack.c.l.b16 %v6497
    %v6704 = vunpack.c.h.b16 %v6497
    %v6705 = vunpack.c.l.b16 %v6498
    %v6706 = vunpack.c.h.b16 %v6498
    %v6707 = vunpack.c.l.b16 %v6499
    %v6708 = vunpack.c.h.b16 %v6499
    %v6709 = vunpack.c.l.b16 %v6500
    %v6710 = vunpack.c.h.b16 %v6500
    %v6711 = vunpack.c.l.b16 %v6501
    %v6712 = vunpack.c.h.b16 %v6501
    %v6713 = vunpack.c.l.b16 %v6502
    %v6714 = vunpack.c.h.b16 %v6502
    %v6715 = vunpack.c.l.b16 %v6503
    %v6716 = vunpack.c.h.b16 %v6503
    %v6717 = vunpack.c.l.b16 %v6504
    %v6718 = vunpack.c.h.b16 %v6504
    %v6719 = vunpack.c.l.b16 %v6505
    %v6720 = vunpack.c.h.b16 %v6505
    %v6721 = vunpack.c.l.b16 %v6506
    %v6722 = vunpack.c.h.b16 %v6506
    %v6723 = vunpack.c.l.b16 %v6507
    %v6724 = vunpack.c.h.b16 %v6507
    %v6725 = vunpack.c.l.b16 %v6508
    %v6726 = vunpack.c.h.b16 %v6508
    %v6727 = vunpack.c.l.b16 %v6509
    %v6728 = vunpack.c.h.b16 %v6509
    %v6729 = vunpack.c.l.b16 %v6510
    %v6730 = vunpack.c.h.b16 %v6510
    %v6731 = vunpack.c.l.b16 %v6511
    %v6732 = vunpack.c.h.b16 %v6511
    %v6733 = vunpack.c.l.b16 %v6512
    %v6734 = vunpack.c.h.b16 %v6512
    %v6735 = vunpack.c.l.b16 %v6513
    %v6736 = vunpack.c.h.b16 %v6513
    %v6737 = vunpack.c.l.b16 %v6514
    %v6738 = vunpack.c.h.b16 %v6514
    %v6739 = vunpack.c.l.b16 %v6515
    %v6740 = vunpack.c.h.b16 %v6515
    %v6741 = vunpack.c.l.b16 %v6516
    %v6742 = vunpack.c.h.b16 %v6516
    %v6743 = vunpack.c.l.b16 %v6517
    %v6744 = vunpack.c.h.b16 %v6517
    %v6745 = vunpack.c.l.b16 %v6518
    %v6746 = vunpack.c.h.b16 %v6518
    %v6747 = vunpack.c.l.b16 %v6519
    %v6748 = vunpack.c.h.b16 %v6519
    %v6749 = vunpack.c.l.b16 %v6520
    %v6750 = vunpack.c.h.b16 %v6520
    %v6751 = vunpack.c.l.b16 %v6521
    %v6752 = vunpack.c.h.b16 %v6521
    %v6753 = vunpack.c.l.b16 %v6522
    %v6754 = vunpack.c.h.b16 %v6522
    %v6755 = vunpack.c.l.b16 %v6523
    %v6756 = vunpack.c.h.b16 %v6523
    %v6757 = vunpack.c.l.b16 %v6524
    %v6758 = vunpack.c.h.b16 %v6524
    %v6759 = vunpack.c.l.b16 %v6525
    %v6760 = vunpack.c.h.b16 %v6525
    %v6761 = vunpack.c.l.b16 %v6526
    %v6762 = vunpack.c.h.b16 %v6526
    %v6763 = vunpack.c.l.b16 %v6527
    %v6764 = vunpack.c.h.b16 %v6527
    %v6765 = vunpack.c.l.b16 %v6528
    %v6766 = vunpack.c.h.b16 %v6528
    %v6767 = vunpack.c.l.b16 %v6529
    %v6768 = vunpack.c.h.b16 %v6529
    %v6769 = vunpack.c.l.b16 %v6530
    %v6770 = vunpack.c.h.b16 %v6530
    %v6771 = vunpack.c.l.b16 %v6531
    %v6772 = vunpack.c.h.b16 %v6531
    %v6773 = vunpack.c.l.b16 %v6532
    %v6774 = vunpack.c.h.b16 %v6532
    %v6775 = vunpack.c.l.b16 %v6533
    %v6776 = vunpack.c.h.b16 %v6533
    %v6777 = vunpack.c.l.b16 %v6534
    %v6778 = vunpack.c.h.b16 %v6534
    %v6779 = vunpack.c.l.b16 %v6535
    %v6780 = vunpack.c.h.b16 %v6535
    %v6781 = vunpack.c.l.b16 %v6536
    %v6782 = vunpack.c.h.b16 %v6536
    %v6783 = vunpack.c.l.b16 %v6537
    %v6784 = vunpack.c.h.b16 %v6537
    %v6785 = vunpack.c.l.b16 %v6538
    %v6786 = vunpack.c.h.b16 %v6538
    %v6787 = vunpack.c.l.b16 %v6539
    %v6788 = vunpack.c.h.b16 %v6539
    %v6789 = vunpack.c.l.b16 %v6540
    %v6790 = vunpack.c.h.b16 %v6540
    %v6791 = vunpack.c.l.b16 %v6541
    %v6792 = vunpack.c.h.b16 %v6541
    %v6793 = vunpack.c.l.b16 %v6542
    %v6794 = vunpack.c.h.b16 %v6542
    %v6795 = vunpack.c.l.b16 %v6543
    %v6796 = vunpack.c.h.b16 %v6543
    %v6797 = vunpack.c.l.b16 %v6544
    %v6798 = vunpack.c.h.b16 %v6544
    %v6799 = vunpack.c.l.b16 %v6545
    %v6800 = vunpack.c.h.b16 %v6545
    %v6801 = vunpack.c.l.b16 %v6546
    %v6802 = vunpack.c.h.b16 %v6546
    %v6803 = vunpack.c.l.b16 %v6547
    %v6804 = vunpack.c.h.b16 %v6547
    %v6805 = vunpack.c.l.b16 %v6548
    %v6806 = vunpack.c.h.b16 %v6548
    %v6807 = vunpack.c.l.b16 %v6549
    %v6808 = vunpack.c.h.b16 %v6549
    %v6809 = vunpack.c.l.b16 %v6550
    %v6810 = vunpack.c.h.b16 %v6550
    %v6811 = vunpack.c.l.b16 %v6551
    %v6812 = vunpack.c.h.b16 %v6551
    %v6813 = vunpack.c.l.b16 %v6552
    %v6814 = vunpack.c.h.b16 %v6552
    %v6815 = vunpack.c.l.b16 %v6553
    %v6816 = vunpack.c.h.b16 %v6553
    %v6817 = vunpack.c.l.b16 %v6554
    %v6818 = vunpack.c.h.b16 %v6554
    %v6819 = vunpack.c.l.b16 %v6555
    %v6820 = vunpack.c.h.b16 %v6555
    %v6821 = vunpack.c.l.b16 %v6556
    %v6822 = vunpack.c.h.b16 %v6556
    %v6823 = vunpack.c.l.b16 %v6557
    %v6824 = vunpack.c.h.b16 %v6557
    %v6825 = vunpack.c.l.b16 %v6558
    %v6826 = vunpack.c.h.b16 %v6558
    %v6827 = vunpack.c.l.b16 %v6559
    %v6828 = vunpack.c.h.b16 %v6559
    %v6829 = vunpack.c.l.b16 %v6560
    %v6830 = vunpack.c.h.b16 %v6560
    %v6831 = vunpack.c.l.b16 %v6561
    %v6832 = vunpack.c.h.b16 %v6561
    %v6833 = vunpack.c.l.b16 %v6562
    %v6834 = vunpack.c.h.b16 %v6562
    %v6835 = vunpack.c.l.b16 %v6563
    %v6836 = vunpack.c.h.b16 %v6563
    %v6837 = vunpack.c.l.b16 %v6564
    %v6838 = vunpack.c.h.b16 %v6564
    %v6839 = vunpack.c.l.b16 %v6565
    %v6840 = vunpack.c.h.b16 %v6565
    %v6841 = vunpack.c.l.b16 %v6566
    %v6842 = vunpack.c.h.b16 %v6566
    %v6843 = vunpack.c.l.b16 %v6567
    %v6844 = vunpack.c.h.b16 %v6567
    %v6845 = vunpack.c.l.b16 %v6568
    %v6846 = vunpack.c.h.b16 %v6568
    %v6847 = vunpack.c.l.b16 %v6569
    %v6848 = vunpack.c.h.b16 %v6569
    %v6849 = vunpack.c.l.b16 %v6570
    %v6850 = vunpack.c.h.b16 %v6570
    %v6851 = vunpack.c.l.b16 %v6571
    %v6852 = vunpack.c.h.b16 %v6571
    %v6853 = vunpack.c.l.b16 %v6572
    %v6854 = vunpack.c.h.b16 %v6572
    %v6855 = vunpack.c.l.b16 %v6573
    %v6856 = vunpack.c.h.b16 %v6573
    %v6857 = vunpack.c.l.b16 %v6574
    %v6858 = vunpack.c.h.b16 %v6574
    %v6859 = vunpack.c.l.b16 %v6575
    %v6860 = vunpack.c.h.b16 %v6575
    %v6861 = vunpack.c.l.b16 %v6576
    %v6862 = vunpack.c.h.b16 %v6576
    %v6863 = vunpack.c.l.b16 %v6577
    %v6864 = vunpack.c.h.b16 %v6577
    %v6865 = vunpack.c.l.b16 %v6578
    %v6866 = vunpack.c.h.b16 %v6578
    %v6867 = vunpack.c.l.b16 %v6579
    %v6868 = vunpack.c.h.b16 %v6579
    %v6869 = vunpack.c.l.b16 %v6580
    %v6870 = vunpack.c.h.b16 %v6580
    %v6871 = vunpack.c.l.b16 %v6581
    %v6872 = vunpack.c.h.b16 %v6581
    %v6873 = vunpack.c.l.b16 %v6582
    %v6874 = vunpack.c.h.b16 %v6582
    %v6875 = vunpack.c.l.b16 %v6583
    %v6876 = vunpack.c.h.b16 %v6583
    %v6877 = vunpack.c.l.b16 %v6584
    %v6878 = vunpack.c.h.b16 %v6584
    %v6879 = vunpack.c.l.b16 %v6585
    %v6880 = vunpack.c.h.b16 %v6585
    %v6881 = vunpack.c.l.b16 %v6586
    %v6882 = vunpack.c.h.b16 %v6586
    %v6883 = vunpack.c.l.b16 %v6587
    %v6884 = vunpack.c.h.b16 %v6587
    %v6885 = vunpack.c.l.b16 %v6588
    %v6886 = vunpack.c.h.b16 %v6588
    %v6887 = vunpack.c.l.b16 %v6589
    %v6888 = vunpack.c.h.b16 %v6589
    %v6889 = vunpack.c.l.b16 %v6590
    %v6890 = vunpack.c.h.b16 %v6590
    %v6891 = vpack.c.b16 %v6701, %v6699
    %v6892 = vpack.c.b16 %v6702, %v6700
    %v6893 = vpack.c.b16 %v6705, %v6703
    %v6894 = vpack.c.b16 %v6706, %v6704
    %v6895 = vpack.c.b16 %v6709, %v6707
    %v6896 = vpack.c.b16 %v6710, %v6708
    %v6897 = vpack.c.b16 %v6713, %v6711
    %v6898 = vpack.c.b16 %v6714, %v6712
    %v6899 = vpack.c.b16 %v6717, %v6715
    %v6900 = vpack.c.b16 %v6718, %v6716
    %v6901 = vpack.c.b16 %v6721, %v6719
    %v6902 = vpack.c.b16 %v6722, %v6720
    %v6903 = vpack.c.b16 %v6725, %v6723
    %v6904 = vpack.c.b16 %v6726, %v6724
    %v6905 = vpack.c.b16 %v6729, %v6727
    %v6906 = vpack.c.b16 %v6730, %v6728
    %v6907 = vpack.c.b16 %v6733, %v6731
    %v6908 = vpack.c.b16 %v6734, %v6732
    %v6909 = vpack.c.b16 %v6737, %v6735
    %v6910 = vpack.c.b16 %v6738, %v6736
    %v6911 = vpack.c.b16 %v6741, %v6739
    %v6912 = vpack.c.b16 %v6742, %v6740
    %v6913 = vpack.c.b16 %v6745, %v6743
    %v6914 = vpack.c.b16 %v6746, %v6744
    %v6915 = vpack.c.b16 %v6749, %v6747
    %v6916 = vpack.c.b16 %v6750, %v6748
    %v6917 = vpack.c.b16 %v6753, %v6751
    %v6918 = vpack.c.b16 %v6754, %v6752
    %v6919 = vpack.c.b16 %v6757, %v6755
    %v6920 = vpack.c.b16 %v6758, %v6756
    %v6921 = vpack.c.b16 %v6761, %v6759
    %v6922 = vpack.c.b16 %v6762, %v6760
    %v6923 = vpack.c.b16 %v6765, %v6763
    %v6924 = vpack.c.b16 %v6766, %v6764
    %v6925 = vpack.c.b16 %v6769, %v6767
    %v6926 = vpack.c.b16 %v6770, %v6768
    %v6927 = vpack.c.b16 %v6773, %v6771
    %v6928 = vpack.c.b16 %v6774, %v6772
    %v6929 = vpack.c.b16 %v6777, %v6775
    %v6930 = vpack.c.b16 %v6778, %v6776
    %v6931 = vpack.c.b16 %v6781, %v6779
    %v6932 = vpack.c.b16 %v6782, %v6780
    %v6933 = vpack.c.b16 %v6785, %v6783
    %v6934 = vpack.c.b16 %v6786, %v6784
    %v6935 = vpack.c.b16 %v6789, %v6787
    %v6936 = vpack.c.b16 %v6790, %v6788
    %v6937 = vpack.c.b16 %v6793, %v6791
    %v6938 = vpack.c.b16 %v6794, %v6792
    %v6939 = vpack.c.b16 %v6797, %v6795
    %v6940 = vpack.c.b16 %v6798, %v6796
    %v6941 = vpack.c.b16 %v6801, %v6799
    %v6942 = vpack.c.b16 %v6802, %v6800
    %v6943 = vpack.c.b16 %v6805, %v6803
    %v6944 = vpack.c.b16 %v6806, %v6804
    %v6945 = vpack.c.b16 %v6809, %v6807
    %v6946 = vpack.c.b16 %v6810, %v6808
    %v6947 = vpack.c.b16 %v6813, %v6811
    %v6948 = vpack.c.b16 %v6814, %v6812
    %v6949 = vpack.c.b16 %v6817, %v6815
    %v6950 = vpack.c.b16 %v6818, %v6816
    %v6951 = vpack.c.b16 %v6821, %v6819
    %v6952 = vpack.c.b16 %v6822, %v6820
    %v6953 = vpack.c.b16 %v6825, %v6823
    %v6954 = vpack.c.b16 %v6826, %v6824
    %v6955 = vpack.c.b16 %v6829, %v6827
    %v6956 = vpack.c.b16 %v6830, %v6828
    %v6957 = vpack.c.b16 %v6833, %v6831
    %v6958 = vpack.c.b16 %v6834, %v6832
    %v6959 = vpack.c.b16 %v6837, %v6835
    %v6960 = vpack.c.b16 %v6838, %v6836
    %v6961 = vpack.c.b16 %v6841, %v6839
    %v6962 = vpack.c.b16 %v6842, %v6840
    %v6963 = vpack.c.b16 %v6845, %v6843
    %v6964 = vpack.c.b16 %v6846, %v6844
    %v6965 = vpack.c.b16 %v6849, %v6847
    %v6966 = vpack.c.b16 %v6850, %v6848
    %v6967 = vpack.c.b16 %v6853, %v6851
    %v6968 = vpack.c.b16 %v6854, %v6852
    %v6969 = vpack.c.b16 %v6857, %v6855
    %v6970 = vpack.c.b16 %v6858, %v6856
    %v6971 = vpack.c.b16 %v6861, %v6859
    %v6972 = vpack.c.b16 %v6862, %v6860
    %v6973 = vpack.c.b16 %v6865, %v6863
    %v6974 = vpack.c.b16 %v6866, %v6864
    %v6975 = vpack.c.b16 %v6869, %v6867
    %v6976 = vpack.c.b16 %v6870, %v6868
    %v6977 = vpack.c.b16 %v6873, %v6871
    %v6978 = vpack.c.b16 %v6874, %v6872
    %v6979 = vpack.c.b16 %v6877, %v6875
    %v6980 = vpack.c.b16 %v6878, %v6876
    %v6981 = vpack.c.b16 %v6881, %v6879
    %v6982 = vpack.c.b16 %v6882, %v6880
    %v6983 = vpack.c.b16 %v6885, %v6883
    %v6984 = vpack.c.b16 %v6886, %v6884
    %v6985 = vpack.c.b16 %v6889, %v6887
    %v6986 = vpack.c.b16 %v6890, %v6888
    %7083 = vmatpush.bf16.msra.mxu0 %v6905
    %7084 = vmatpush.bf16.msra.mxu0 %v6903
    %7085 = vmatpush.bf16.msra.mxu0 %v6901
    %7086 = vmatpush.bf16.msra.mxu0 %v6899
    %7087 = vmatpush.bf16.msra.mxu0 %v6897
    %7088 = vmatpush.bf16.msra.mxu0 %v6895
    %7089 = vmatpush.bf16.msra.mxu0 %v6893
    %7090 = vmatpush.bf16.msra.mxu0 %v6891
    %7091 = vmatmul.bf16.gmra.mxu0 %v6597
    %v7092 = vpop.f32.mrf.mxu0
    %v7093 = vadd.f32 0.0, %v7092
    %v7094 = vpop.f32.mrf.mxu0
    %7095 = vdwg.mxu0
    %7096 = vmatpush.bf16.msra.mxu0 %v6921
    %7097 = vmatpush.bf16.msra.mxu0 %v6919
    %7098 = vmatpush.bf16.msra.mxu0 %v6917
    %7099 = vmatpush.bf16.msra.mxu0 %v6915
    %7100 = vmatpush.bf16.msra.mxu0 %v6913
    %7101 = vmatpush.bf16.msra.mxu0 %v6911
    %7102 = vmatpush.bf16.msra.mxu0 %v6909
    %7103 = vmatpush.bf16.msra.mxu0 %v6907
    %7104 = vmatmul.bf16.gmra.mxu0 %v6598
    %v7105 = vpop.f32.mrf.mxu0
    %v7106 = vadd.f32 %v7093, %v7105
    %v7107 = vpop.f32.mrf.mxu0
    %7108 = vdwg.mxu0
    %7109 = vmatpush.bf16.msra.mxu0 %v6937
    %7110 = vmatpush.bf16.msra.mxu0 %v6935
    %7111 = vmatpush.bf16.msra.mxu0 %v6933
    %7112 = vmatpush.bf16.msra.mxu0 %v6931
    %7113 = vmatpush.bf16.msra.mxu0 %v6929
    %7114 = vmatpush.bf16.msra.mxu0 %v6927
    %7115 = vmatpush.bf16.msra.mxu0 %v6925
    %7116 = vmatpush.bf16.msra.mxu0 %v6923
    %7117 = vmatmul.bf16.gmra.mxu0 %v6599
    %v7118 = vpop.f32.mrf.mxu0
    %v7119 = vadd.f32 %v7106, %v7118
    %v7120 = vpop.f32.mrf.mxu0
    %7121 = vdwg.mxu0
    %7122 = vmatpush.bf16.msra.mxu0 %v6953
    %7123 = vmatpush.bf16.msra.mxu0 %v6951
    %7124 = vmatpush.bf16.msra.mxu0 %v6949
    %7125 = vmatpush.bf16.msra.mxu0 %v6947
    %7126 = vmatpush.bf16.msra.mxu0 %v6945
    %7127 = vmatpush.bf16.msra.mxu0 %v6943
    %7128 = vmatpush.bf16.msra.mxu0 %v6941
    %7129 = vmatpush.bf16.msra.mxu0 %v6939
    %7130 = vmatmul.bf16.gmra.mxu0 %v6600
    %v7131 = vpop.f32.mrf.mxu0
    %v7132 = vadd.f32 %v7119, %v7131
    %v7133 = vpop.f32.mrf.mxu0
    %7134 = vdwg.mxu0
    %7135 = vmatpush.bf16.msra.mxu0 %v6969
    %7136 = vmatpush.bf16.msra.mxu0 %v6967
    %7137 = vmatpush.bf16.msra.mxu0 %v6965
    %7138 = vmatpush.bf16.msra.mxu0 %v6963
    %7139 = vmatpush.bf16.msra.mxu0 %v6961
    %7140 = vmatpush.bf16.msra.mxu0 %v6959
    %7141 = vmatpush.bf16.msra.mxu0 %v6957
    %7142 = vmatpush.bf16.msra.mxu0 %v6955
    %7143 = vmatmul.bf16.gmra.mxu0 %v6601
    %v7144 = vpop.f32.mrf.mxu0
    %v7145 = vadd.f32 %v7132, %v7144
    %v7146 = vpop.f32.mrf.mxu0
    %7147 = vdwg.mxu0
    %7148 = vmatpush.bf16.msra.mxu0 %v6985
    %7149 = vmatpush.bf16.msra.mxu0 %v6983
    %7150 = vmatpush.bf16.msra.mxu0 %v6981
    %7151 = vmatpush.bf16.msra.mxu0 %v6979
    %7152 = vmatpush.bf16.msra.mxu0 %v6977
    %7153 = vmatpush.bf16.msra.mxu0 %v6975
    %7154 = vmatpush.bf16.msra.mxu0 %v6973
    %7155 = vmatpush.bf16.msra.mxu0 %v6971
    %7156 = vmatmul.bf16.gmra.mxu0 %v6602
    %v7157 = vpop.f32.mrf.mxu0
    %v7158 = vadd.f32 %v7145, %v7157
    %v7159 = vpop.f32.mrf.mxu0
    %7160 = vdwg.mxu0
    %7161 = vmatpush.bf16.msra.mxu0 %v6906
    %7162 = vmatpush.bf16.msra.mxu0 %v6904
    %7163 = vmatpush.bf16.msra.mxu0 %v6902
    %7164 = vmatpush.bf16.msra.mxu0 %v6900
    %7165 = vmatpush.bf16.msra.mxu0 %v6898
    %7166 = vmatpush.bf16.msra.mxu0 %v6896
    %7167 = vmatpush.bf16.msra.mxu0 %v6894
    %7168 = vmatpush.bf16.msra.mxu0 %v6892
    %7169 = vmatmul.bf16.gmra.mxu0 %v6597
    %v7170 = vpop.f32.mrf.mxu0
    %v7171 = vadd.f32 0.0, %v7170
    %v7172 = vpop.f32.mrf.mxu0
    %7173 = vdwg.mxu0
    %7174 = vmatpush.bf16.msra.mxu0 %v6922
    %7175 = vmatpush.bf16.msra.mxu0 %v6920
    %7176 = vmatpush.bf16.msra.mxu0 %v6918
    %7177 = vmatpush.bf16.msra.mxu0 %v6916
    %7178 = vmatpush.bf16.msra.mxu0 %v6914
    %7179 = vmatpush.bf16.msra.mxu0 %v6912
    %7180 = vmatpush.bf16.msra.mxu0 %v6910
    %7181 = vmatpush.bf16.msra.mxu0 %v6908
    %7182 = vmatmul.bf16.gmra.mxu0 %v6598
    %v7183 = vpop.f32.mrf.mxu0
    %v7184 = vadd.f32 %v7171, %v7183
    %v7185 = vpop.f32.mrf.mxu0
    %7186 = vdwg.mxu0
    %7187 = vmatpush.bf16.msra.mxu0 %v6938
    %7188 = vmatpush.bf16.msra.mxu0 %v6936
    %7189 = vmatpush.bf16.msra.mxu0 %v6934
    %7190 = vmatpush.bf16.msra.mxu0 %v6932
    %7191 = vmatpush.bf16.msra.mxu0 %v6930
    %7192 = vmatpush.bf16.msra.mxu0 %v6928
    %7193 = vmatpush.bf16.msra.mxu0 %v6926
    %7194 = vmatpush.bf16.msra.mxu0 %v6924
    %7195 = vmatmul.bf16.gmra.mxu0 %v6599
    %v7196 = vpop.f32.mrf.mxu0
    %v7197 = vadd.f32 %v7184, %v7196
    %v7198 = vpop.f32.mrf.mxu0
    %7199 = vdwg.mxu0
    %7200 = vmatpush.bf16.msra.mxu0 %v6954
    %7201 = vmatpush.bf16.msra.mxu0 %v6952
    %7202 = vmatpush.bf16.msra.mxu0 %v6950
    %7203 = vmatpush.bf16.msra.mxu0 %v6948
    %7204 = vmatpush.bf16.msra.mxu0 %v6946
    %7205 = vmatpush.bf16.msra.mxu0 %v6944
    %7206 = vmatpush.bf16.msra.mxu0 %v6942
    %7207 = vmatpush.bf16.msra.mxu0 %v6940
    %7208 = vmatmul.bf16.gmra.mxu0 %v6600
    %v7209 = vpop.f32.mrf.mxu0
    %v7210 = vadd.f32 %v7197, %v7209
    %v7211 = vpop.f32.mrf.mxu0
    %7212 = vdwg.mxu0
    %7213 = vmatpush.bf16.msra.mxu0 %v6970
    %7214 = vmatpush.bf16.msra.mxu0 %v6968
    %7215 = vmatpush.bf16.msra.mxu0 %v6966
    %7216 = vmatpush.bf16.msra.mxu0 %v6964
    %7217 = vmatpush.bf16.msra.mxu0 %v6962
    %7218 = vmatpush.bf16.msra.mxu0 %v6960
    %7219 = vmatpush.bf16.msra.mxu0 %v6958
    %7220 = vmatpush.bf16.msra.mxu0 %v6956
    %7221 = vmatmul.bf16.gmra.mxu0 %v6601
    %v7222 = vpop.f32.mrf.mxu0
    %v7223 = vadd.f32 %v7210, %v7222
    %v7224 = vpop.f32.mrf.mxu0
    %7225 = vdwg.mxu0
    %7226 = vmatpush.bf16.msra.mxu0 %v6986
    %7227 = vmatpush.bf16.msra.mxu0 %v6984
    %7228 = vmatpush.bf16.msra.mxu0 %v6982
    %7229 = vmatpush.bf16.msra.mxu0 %v6980
    %7230 = vmatpush.bf16.msra.mxu0 %v6978
    %7231 = vmatpush.bf16.msra.mxu0 %v6976
    %7232 = vmatpush.bf16.msra.mxu0 %v6974
    %7233 = vmatpush.bf16.msra.mxu0 %v6972
    %7234 = vmatmul.bf16.gmra.mxu0 %v6602
    %v7235 = vpop.f32.mrf.mxu0
    %v7236 = vadd.f32 %v7223, %v7235
    %v7237 = vpop.f32.mrf.mxu0
    %7238 = vdwg.mxu0
    %v7239 = vld [vmem:[#allocation11 + $0x11] ss:$0 sm:$0xff]
    %v7240 = vmax.f32 %v7158, %v7236
    %v7241 = vadd.f32 %v7240, %v7239
    %v7242 = vmax.f32 %v7241, 0.0
    %7243 = vst [vmem:[#allocation5] sm:$0xff] %v7242
    %v7244 = vld [vmem:[#allocation5] ss:$2 sm:$0xf]
    %v7245 = vld [vmem:[%s1806] ss:$2 sm:$0xf]
    %v7246 = vmax.f32 %v7244, %v7245
    %7247 = vst [vmem:[#allocation4 + $0x8] sm:$0x3] %v7246
    %7248 = vst [vmem:[#allocation4 + $0x1] sm:$0x1] %v7246
    %7249 = vst [vmem:[#allocation4] sm:$0x1] 0.0
    %v7251 = vrot.slane %v7246, 1
    %7253 = vst [vmem:[#allocation4 + $0x10] sm:$0x1] %v7251
    %7254 = vst [vmem:[#allocation4 + $0x11] sm:$0x1] 0.0
    %7255 = vst [vmem:[#allocation4 + $0x8] sm:$0xc] %v7246
    %v7256 = vrot.slane %v7246, 2
    %7258 = vst [vmem:[#allocation4 + $0x3] sm:$0x1] %v7256
    %7259 = vst [vmem:[#allocation4 + $0x2] sm:$0x1] 0.0
    %v7260 = vrot.slane %v7246, 3
    %7262 = vst [vmem:[#allocation4 + $0x12] sm:$0x1] %v7260
    %7263 = vst [vmem:[#allocation4 + $0x13] sm:$0x1] 0.0
    %v7264 = vld [vmem:[#allocation2 + $0xd80] sm:$0xf]
    %v7265 = vld [vmem:[#allocation2 + $0xd88] sm:$0xf]
    %v7266 = vld [vmem:[#allocation2 + $0xd90] sm:$0xf]
    %v7267 = vld [vmem:[#allocation2 + $0xd98] sm:$0xf]
    %v7268 = vld [vmem:[#allocation2 + $0xda0] sm:$0xf]
    %v7269 = vld [vmem:[#allocation2 + $0xda8] sm:$0xf]
    %v7270 = vld [vmem:[#allocation2 + $0xdb0] sm:$0xf]
    %v7271 = vld [vmem:[#allocation2 + $0xdb8] sm:$0xf]
    %v7272 = vld [vmem:[#allocation2 + $0xdc0] sm:$0xf]
    %v7273 = vld [vmem:[#allocation2 + $0xdc8] sm:$0xf]
    %v7274 = vld [vmem:[#allocation2 + $0xdd0] sm:$0xf]
    %v7275 = vld [vmem:[#allocation2 + $0xdd8] sm:$0xf]
    %v7276 = vld [vmem:[#allocation2 + $0xde0] sm:$0xf]
    %v7277 = vld [vmem:[#allocation2 + $0xde8] sm:$0xf]
    %v7278 = vld [vmem:[#allocation2 + $0xdf0] sm:$0xf]
    %v7279 = vld [vmem:[#allocation2 + $0xdf8] sm:$0xf]
    %v7280 = vld [vmem:[#allocation2 + $0xe00] sm:$0xf]
    %v7281 = vld [vmem:[#allocation2 + $0xe08] sm:$0xf]
    %v7282 = vld [vmem:[#allocation2 + $0xe10] sm:$0xf]
    %v7283 = vld [vmem:[#allocation2 + $0xe18] sm:$0xf]
    %v7284 = vld [vmem:[#allocation2 + $0xe20] sm:$0xf]
    %v7285 = vld [vmem:[#allocation2 + $0xe28] sm:$0xf]
    %v7286 = vld [vmem:[#allocation2 + $0xe30] sm:$0xf]
    %v7287 = vld [vmem:[#allocation2 + $0xe38] sm:$0xf]
    %v7288 = vld [vmem:[#allocation2 + $0xe40] sm:$0xf]
    %v7289 = vld [vmem:[#allocation2 + $0xe48] sm:$0xf]
    %v7290 = vld [vmem:[#allocation2 + $0xe50] sm:$0xf]
    %v7291 = vld [vmem:[#allocation2 + $0xe58] sm:$0xf]
    %v7292 = vld [vmem:[#allocation2 + $0xe60] sm:$0xf]
    %v7293 = vld [vmem:[#allocation2 + $0xe68] sm:$0xf]
    %v7294 = vld [vmem:[#allocation2 + $0xe70] sm:$0xf]
    %v7295 = vld [vmem:[#allocation2 + $0xe78] sm:$0xf]
    %v7296 = vld [vmem:[#allocation2 + $0xe80] sm:$0xf]
    %v7297 = vld [vmem:[#allocation2 + $0xe88] sm:$0xf]
    %v7298 = vld [vmem:[#allocation2 + $0xe90] sm:$0xf]
    %v7299 = vld [vmem:[#allocation2 + $0xe98] sm:$0xf]
    %v7300 = vld [vmem:[#allocation2 + $0xea0] sm:$0xf]
    %v7301 = vld [vmem:[#allocation2 + $0xea8] sm:$0xf]
    %v7302 = vld [vmem:[#allocation2 + $0xeb0] sm:$0xf]
    %v7303 = vld [vmem:[#allocation2 + $0xeb8] sm:$0xf]
    %v7304 = vld [vmem:[#allocation2 + $0xec0] sm:$0xf]
    %v7305 = vld [vmem:[#allocation2 + $0xec8] sm:$0xf]
    %v7306 = vld [vmem:[#allocation2 + $0xed0] sm:$0xf]
    %v7307 = vld [vmem:[#allocation2 + $0xed8] sm:$0xf]
    %v7308 = vld [vmem:[#allocation2 + $0xee0] sm:$0xf]
    %v7309 = vld [vmem:[#allocation2 + $0xee8] sm:$0xf]
    %v7310 = vld [vmem:[#allocation2 + $0xef0] sm:$0xf]
    %v7311 = vld [vmem:[#allocation2 + $0xef8] sm:$0xf]
    %v7312 = vld [vmem:[#allocation4] sm:$0xf]
    %v7313 = vld [vmem:[#allocation4 + $0x8] sm:$0xf]
    %v7314 = vld [vmem:[#allocation4 + $0x10] sm:$0xf]
    %v7315 = vpack.c.bf16 %v7312, %v7312
    %v7316 = vpack.c.bf16 %v7313, %v7313
    %v7317 = vpack.c.bf16 %v7314, %v7314
    %v7318 = vld [vmem:[#allocation11 + $0x12] ss:$0 sm:$0xff]
    %v7367 = vunpack.c.l.b16 %v7264
    %v7368 = vunpack.c.l.b16 %v7265
    %v7369 = vunpack.c.l.b16 %v7266
    %v7370 = vunpack.c.l.b16 %v7267
    %v7371 = vunpack.c.l.b16 %v7268
    %v7372 = vunpack.c.l.b16 %v7269
    %v7373 = vunpack.c.l.b16 %v7270
    %v7374 = vunpack.c.l.b16 %v7271
    %v7375 = vunpack.c.l.b16 %v7272
    %v7376 = vunpack.c.l.b16 %v7273
    %v7377 = vunpack.c.l.b16 %v7274
    %v7378 = vunpack.c.l.b16 %v7275
    %v7379 = vunpack.c.l.b16 %v7276
    %v7380 = vunpack.c.l.b16 %v7277
    %v7381 = vunpack.c.l.b16 %v7278
    %v7382 = vunpack.c.l.b16 %v7279
    %v7383 = vunpack.c.l.b16 %v7280
    %v7384 = vunpack.c.l.b16 %v7281
    %v7385 = vunpack.c.l.b16 %v7282
    %v7386 = vunpack.c.l.b16 %v7283
    %v7387 = vunpack.c.l.b16 %v7284
    %v7388 = vunpack.c.l.b16 %v7285
    %v7389 = vunpack.c.l.b16 %v7286
    %v7390 = vunpack.c.l.b16 %v7287
    %v7391 = vunpack.c.l.b16 %v7288
    %v7392 = vunpack.c.l.b16 %v7289
    %v7393 = vunpack.c.l.b16 %v7290
    %v7394 = vunpack.c.l.b16 %v7291
    %v7395 = vunpack.c.l.b16 %v7292
    %v7396 = vunpack.c.l.b16 %v7293
    %v7397 = vunpack.c.l.b16 %v7294
    %v7398 = vunpack.c.l.b16 %v7295
    %v7399 = vunpack.c.l.b16 %v7296
    %v7400 = vunpack.c.l.b16 %v7297
    %v7401 = vunpack.c.l.b16 %v7298
    %v7402 = vunpack.c.l.b16 %v7299
    %v7403 = vunpack.c.l.b16 %v7300
    %v7404 = vunpack.c.l.b16 %v7301
    %v7405 = vunpack.c.l.b16 %v7302
    %v7406 = vunpack.c.l.b16 %v7303
    %v7407 = vunpack.c.l.b16 %v7304
    %v7408 = vunpack.c.l.b16 %v7305
    %v7409 = vunpack.c.l.b16 %v7306
    %v7410 = vunpack.c.l.b16 %v7307
    %v7411 = vunpack.c.l.b16 %v7308
    %v7412 = vunpack.c.l.b16 %v7309
    %v7413 = vunpack.c.l.b16 %v7310
    %v7414 = vunpack.c.l.b16 %v7311
    %v7415 = vpack.c.b16 %v7368, %v7367
    %v7416 = vpack.c.b16 %v7370, %v7369
    %v7417 = vpack.c.b16 %v7372, %v7371
    %v7418 = vpack.c.b16 %v7374, %v7373
    %v7419 = vpack.c.b16 %v7376, %v7375
    %v7420 = vpack.c.b16 %v7378, %v7377
    %v7421 = vpack.c.b16 %v7380, %v7379
    %v7422 = vpack.c.b16 %v7382, %v7381
    %v7423 = vpack.c.b16 %v7384, %v7383
    %v7424 = vpack.c.b16 %v7386, %v7385
    %v7425 = vpack.c.b16 %v7388, %v7387
    %v7426 = vpack.c.b16 %v7390, %v7389
    %v7427 = vpack.c.b16 %v7392, %v7391
    %v7428 = vpack.c.b16 %v7394, %v7393
    %v7429 = vpack.c.b16 %v7396, %v7395
    %v7430 = vpack.c.b16 %v7398, %v7397
    %v7431 = vpack.c.b16 %v7400, %v7399
    %v7432 = vpack.c.b16 %v7402, %v7401
    %v7433 = vpack.c.b16 %v7404, %v7403
    %v7434 = vpack.c.b16 %v7406, %v7405
    %v7435 = vpack.c.b16 %v7408, %v7407
    %v7436 = vpack.c.b16 %v7410, %v7409
    %v7437 = vpack.c.b16 %v7412, %v7411
    %v7438 = vpack.c.b16 %v7414, %v7413
    %7463 = vmatpush.bf16.msra.mxu0 %v7422
    %7464 = vmatpush.bf16.msra.mxu0 %v7421
    %7465 = vmatpush.bf16.msra.mxu0 %v7420
    %7466 = vmatpush.bf16.msra.mxu0 %v7419
    %7467 = vmatpush.bf16.msra.mxu0 %v7418
    %7468 = vmatpush.bf16.msra.mxu0 %v7417
    %7469 = vmatpush.bf16.msra.mxu0 %v7416
    %7470 = vmatpush.bf16.msra.mxu0 %v7415
    %7471 = vmatmul.bf16.gmra.mxu0 %v7315
    %v7472 = vpop.f32.mrf.mxu0
    %v7473 = vadd.f32 %v7318, %v7472
    %v7474 = vpop.f32.mrf.mxu0
    %7475 = vdwg.mxu0
    %7476 = vmatpush.bf16.msra.mxu0 %v7430
    %7477 = vmatpush.bf16.msra.mxu0 %v7429
    %7478 = vmatpush.bf16.msra.mxu0 %v7428
    %7479 = vmatpush.bf16.msra.mxu0 %v7427
    %7480 = vmatpush.bf16.msra.mxu0 %v7426
    %7481 = vmatpush.bf16.msra.mxu0 %v7425
    %7482 = vmatpush.bf16.msra.mxu0 %v7424
    %7483 = vmatpush.bf16.msra.mxu0 %v7423
    %7484 = vmatmul.bf16.gmra.mxu0 %v7316
    %v7485 = vpop.f32.mrf.mxu0
    %v7486 = vadd.f32 %v7473, %v7485
    %v7487 = vpop.f32.mrf.mxu0
    %7488 = vdwg.mxu0
    %7489 = vmatpush.bf16.msra.mxu0 %v7438
    %7490 = vmatpush.bf16.msra.mxu0 %v7437
    %7491 = vmatpush.bf16.msra.mxu0 %v7436
    %7492 = vmatpush.bf16.msra.mxu0 %v7435
    %7493 = vmatpush.bf16.msra.mxu0 %v7434
    %7494 = vmatpush.bf16.msra.mxu0 %v7433
    %7495 = vmatpush.bf16.msra.mxu0 %v7432
    %7496 = vmatpush.bf16.msra.mxu0 %v7431
    %7497 = vmatmul.bf16.gmra.mxu0 %v7317
    %v7498 = vpop.f32.mrf.mxu0
    %v7499 = vadd.f32 %v7486, %v7498
    %v7500 = vpop.f32.mrf.mxu0
    %7501 = vdwg.mxu0
    %v7502 = vmax.f32 %v7499, 0.0
    %7503 = vst [vmem:[#allocation4 + $0x8] sm:$0x3] %v7502
    %7504 = vst [vmem:[#allocation4 + $0x1] sm:$0x1] %v7502
    %7505 = vst [vmem:[#allocation4] sm:$0x1] 0.0
    %v7507 = vrot.slane %v7502, 1
    %7509 = vst [vmem:[#allocation4 + $0x10] sm:$0x1] %v7507
    %7510 = vst [vmem:[#allocation4 + $0x11] sm:$0x1] 0.0
    %7511 = vst [vmem:[#allocation4 + $0x8] sm:$0xc] %v7502
    %v7512 = vrot.slane %v7502, 2
    %7514 = vst [vmem:[#allocation4 + $0x3] sm:$0x1] %v7512
    %7515 = vst [vmem:[#allocation4 + $0x2] sm:$0x1] 0.0
    %v7516 = vrot.slane %v7502, 3
    %7518 = vst [vmem:[#allocation4 + $0x12] sm:$0x1] %v7516
    %7519 = vst [vmem:[#allocation4 + $0x13] sm:$0x1] 0.0
    %v7520 = vld [vmem:[#allocation2 + $0xf00] sm:$0xf]
    %v7521 = vld [vmem:[#allocation2 + $0xf08] sm:$0xf]
    %v7522 = vld [vmem:[#allocation2 + $0xf10] sm:$0xf]
    %v7523 = vld [vmem:[#allocation2 + $0xf18] sm:$0xf]
    %v7524 = vld [vmem:[#allocation2 + $0xf20] sm:$0xf]
    %v7525 = vld [vmem:[#allocation2 + $0xf28] sm:$0xf]
    %v7526 = vld [vmem:[#allocation2 + $0xf30] sm:$0xf]
    %v7527 = vld [vmem:[#allocation2 + $0xf38] sm:$0xf]
    %v7528 = vld [vmem:[#allocation2 + $0xf40] sm:$0xf]
    %v7529 = vld [vmem:[#allocation2 + $0xf48] sm:$0xf]
    %v7530 = vld [vmem:[#allocation2 + $0xf50] sm:$0xf]
    %v7531 = vld [vmem:[#allocation2 + $0xf58] sm:$0xf]
    %v7532 = vld [vmem:[#allocation2 + $0xf60] sm:$0xf]
    %v7533 = vld [vmem:[#allocation2 + $0xf68] sm:$0xf]
    %v7534 = vld [vmem:[#allocation2 + $0xf70] sm:$0xf]
    %v7535 = vld [vmem:[#allocation2 + $0xf78] sm:$0xf]
    %v7536 = vld [vmem:[#allocation2 + $0xf80] sm:$0xf]
    %v7537 = vld [vmem:[#allocation2 + $0xf88] sm:$0xf]
    %v7538 = vld [vmem:[#allocation2 + $0xf90] sm:$0xf]
    %v7539 = vld [vmem:[#allocation2 + $0xf98] sm:$0xf]
    %v7540 = vld [vmem:[#allocation2 + $0xfa0] sm:$0xf]
    %v7541 = vld [vmem:[#allocation2 + $0xfa8] sm:$0xf]
    %v7542 = vld [vmem:[#allocation2 + $0xfb0] sm:$0xf]
    %v7543 = vld [vmem:[#allocation2 + $0xfb8] sm:$0xf]
    %v7544 = vld [vmem:[#allocation2 + $0xfc0] sm:$0xf]
    %v7545 = vld [vmem:[#allocation2 + $0xfc8] sm:$0xf]
    %v7546 = vld [vmem:[#allocation2 + $0xfd0] sm:$0xf]
    %v7547 = vld [vmem:[#allocation2 + $0xfd8] sm:$0xf]
    %v7548 = vld [vmem:[#allocation2 + $0xfe0] sm:$0xf]
    %v7549 = vld [vmem:[#allocation2 + $0xfe8] sm:$0xf]
    %v7550 = vld [vmem:[#allocation2 + $0xff0] sm:$0xf]
    %v7551 = vld [vmem:[#allocation2 + $0xff8] sm:$0xf]
    %v7552 = vld [vmem:[#allocation2 + $0x1000] sm:$0xf]
    %v7553 = vld [vmem:[#allocation2 + $0x1008] sm:$0xf]
    %v7554 = vld [vmem:[#allocation2 + $0x1010] sm:$0xf]
    %v7555 = vld [vmem:[#allocation2 + $0x1018] sm:$0xf]
    %v7556 = vld [vmem:[#allocation2 + $0x1020] sm:$0xf]
    %v7557 = vld [vmem:[#allocation2 + $0x1028] sm:$0xf]
    %v7558 = vld [vmem:[#allocation2 + $0x1030] sm:$0xf]
    %v7559 = vld [vmem:[#allocation2 + $0x1038] sm:$0xf]
    %v7560 = vld [vmem:[#allocation2 + $0x1040] sm:$0xf]
    %v7561 = vld [vmem:[#allocation2 + $0x1048] sm:$0xf]
    %v7562 = vld [vmem:[#allocation2 + $0x1050] sm:$0xf]
    %v7563 = vld [vmem:[#allocation2 + $0x1058] sm:$0xf]
    %v7564 = vld [vmem:[#allocation2 + $0x1060] sm:$0xf]
    %v7565 = vld [vmem:[#allocation2 + $0x1068] sm:$0xf]
    %v7566 = vld [vmem:[#allocation2 + $0x1070] sm:$0xf]
    %v7567 = vld [vmem:[#allocation2 + $0x1078] sm:$0xf]
    %v7568 = vld [vmem:[#allocation4] sm:$0xf]
    %v7569 = vld [vmem:[#allocation4 + $0x8] sm:$0xf]
    %v7570 = vld [vmem:[#allocation4 + $0x10] sm:$0xf]
    %v7571 = vpack.c.bf16 %v7568, %v7568
    %v7572 = vpack.c.bf16 %v7569, %v7569
    %v7573 = vpack.c.bf16 %v7570, %v7570
    %v7574 = vld [vmem:[#allocation11 + $0x13] ss:$0 sm:$0xff]
    %v7623 = vunpack.c.l.b16 %v7520
    %v7624 = vunpack.c.l.b16 %v7521
    %v7625 = vunpack.c.l.b16 %v7522
    %v7626 = vunpack.c.l.b16 %v7523
    %v7627 = vunpack.c.l.b16 %v7524
    %v7628 = vunpack.c.l.b16 %v7525
    %v7629 = vunpack.c.l.b16 %v7526
    %v7630 = vunpack.c.l.b16 %v7527
    %v7631 = vunpack.c.l.b16 %v7528
    %v7632 = vunpack.c.l.b16 %v7529
    %v7633 = vunpack.c.l.b16 %v7530
    %v7634 = vunpack.c.l.b16 %v7531
    %v7635 = vunpack.c.l.b16 %v7532
    %v7636 = vunpack.c.l.b16 %v7533
    %v7637 = vunpack.c.l.b16 %v7534
    %v7638 = vunpack.c.l.b16 %v7535
    %v7639 = vunpack.c.l.b16 %v7536
    %v7640 = vunpack.c.l.b16 %v7537
    %v7641 = vunpack.c.l.b16 %v7538
    %v7642 = vunpack.c.l.b16 %v7539
    %v7643 = vunpack.c.l.b16 %v7540
    %v7644 = vunpack.c.l.b16 %v7541
    %v7645 = vunpack.c.l.b16 %v7542
    %v7646 = vunpack.c.l.b16 %v7543
    %v7647 = vunpack.c.l.b16 %v7544
    %v7648 = vunpack.c.l.b16 %v7545
    %v7649 = vunpack.c.l.b16 %v7546
    %v7650 = vunpack.c.l.b16 %v7547
    %v7651 = vunpack.c.l.b16 %v7548
    %v7652 = vunpack.c.l.b16 %v7549
    %v7653 = vunpack.c.l.b16 %v7550
    %v7654 = vunpack.c.l.b16 %v7551
    %v7655 = vunpack.c.l.b16 %v7552
    %v7656 = vunpack.c.l.b16 %v7553
    %v7657 = vunpack.c.l.b16 %v7554
    %v7658 = vunpack.c.l.b16 %v7555
    %v7659 = vunpack.c.l.b16 %v7556
    %v7660 = vunpack.c.l.b16 %v7557
    %v7661 = vunpack.c.l.b16 %v7558
    %v7662 = vunpack.c.l.b16 %v7559
    %v7663 = vunpack.c.l.b16 %v7560
    %v7664 = vunpack.c.l.b16 %v7561
    %v7665 = vunpack.c.l.b16 %v7562
    %v7666 = vunpack.c.l.b16 %v7563
    %v7667 = vunpack.c.l.b16 %v7564
    %v7668 = vunpack.c.l.b16 %v7565
    %v7669 = vunpack.c.l.b16 %v7566
    %v7670 = vunpack.c.l.b16 %v7567
    %v7671 = vpack.c.b16 %v7624, %v7623
    %v7672 = vpack.c.b16 %v7626, %v7625
    %v7673 = vpack.c.b16 %v7628, %v7627
    %v7674 = vpack.c.b16 %v7630, %v7629
    %v7675 = vpack.c.b16 %v7632, %v7631
    %v7676 = vpack.c.b16 %v7634, %v7633
    %v7677 = vpack.c.b16 %v7636, %v7635
    %v7678 = vpack.c.b16 %v7638, %v7637
    %v7679 = vpack.c.b16 %v7640, %v7639
    %v7680 = vpack.c.b16 %v7642, %v7641
    %v7681 = vpack.c.b16 %v7644, %v7643
    %v7682 = vpack.c.b16 %v7646, %v7645
    %v7683 = vpack.c.b16 %v7648, %v7647
    %v7684 = vpack.c.b16 %v7650, %v7649
    %v7685 = vpack.c.b16 %v7652, %v7651
    %v7686 = vpack.c.b16 %v7654, %v7653
    %v7687 = vpack.c.b16 %v7656, %v7655
    %v7688 = vpack.c.b16 %v7658, %v7657
    %v7689 = vpack.c.b16 %v7660, %v7659
    %v7690 = vpack.c.b16 %v7662, %v7661
    %v7691 = vpack.c.b16 %v7664, %v7663
    %v7692 = vpack.c.b16 %v7666, %v7665
    %v7693 = vpack.c.b16 %v7668, %v7667
    %v7694 = vpack.c.b16 %v7670, %v7669
    %7719 = vmatpush.bf16.msra.mxu0 %v7678
    %7720 = vmatpush.bf16.msra.mxu0 %v7677
    %7721 = vmatpush.bf16.msra.mxu0 %v7676
    %7722 = vmatpush.bf16.msra.mxu0 %v7675
    %7723 = vmatpush.bf16.msra.mxu0 %v7674
    %7724 = vmatpush.bf16.msra.mxu0 %v7673
    %7725 = vmatpush.bf16.msra.mxu0 %v7672
    %7726 = vmatpush.bf16.msra.mxu0 %v7671
    %7727 = vmatmul.bf16.gmra.mxu0 %v7571
    %v7728 = vpop.f32.mrf.mxu0
    %v7729 = vadd.f32 %v7574, %v7728
    %v7730 = vpop.f32.mrf.mxu0
    %7731 = vdwg.mxu0
    %7732 = vmatpush.bf16.msra.mxu0 %v7686
    %7733 = vmatpush.bf16.msra.mxu0 %v7685
    %7734 = vmatpush.bf16.msra.mxu0 %v7684
    %7735 = vmatpush.bf16.msra.mxu0 %v7683
    %7736 = vmatpush.bf16.msra.mxu0 %v7682
    %7737 = vmatpush.bf16.msra.mxu0 %v7681
    %7738 = vmatpush.bf16.msra.mxu0 %v7680
    %7739 = vmatpush.bf16.msra.mxu0 %v7679
    %7740 = vmatmul.bf16.gmra.mxu0 %v7572
    %v7741 = vpop.f32.mrf.mxu0
    %v7742 = vadd.f32 %v7729, %v7741
    %v7743 = vpop.f32.mrf.mxu0
    %7744 = vdwg.mxu0
    %7745 = vmatpush.bf16.msra.mxu0 %v7694
    %7746 = vmatpush.bf16.msra.mxu0 %v7693
    %7747 = vmatpush.bf16.msra.mxu0 %v7692
    %7748 = vmatpush.bf16.msra.mxu0 %v7691
    %7749 = vmatpush.bf16.msra.mxu0 %v7690
    %7750 = vmatpush.bf16.msra.mxu0 %v7689
    %7751 = vmatpush.bf16.msra.mxu0 %v7688
    %7752 = vmatpush.bf16.msra.mxu0 %v7687
    %7753 = vmatmul.bf16.gmra.mxu0 %v7573
    %v7754 = vpop.f32.mrf.mxu0
    %v7755 = vadd.f32 %v7742, %v7754
    %v7756 = vpop.f32.mrf.mxu0
    %7757 = vdwg.mxu0
    %v7758 = vmax.f32 %v7755, 0.0
    %7759 = vst [vmem:[#allocation4 + $0x8] sm:$0x3] %v7758
    %7760 = vst [vmem:[#allocation4 + $0x1] sm:$0x1] %v7758
    %7761 = vst [vmem:[#allocation4] sm:$0x1] 0.0
    %v7763 = vrot.slane %v7758, 1
    %7765 = vst [vmem:[#allocation4 + $0x10] sm:$0x1] %v7763
    %7766 = vst [vmem:[#allocation4 + $0x11] sm:$0x1] 0.0
    %7767 = vst [vmem:[#allocation4 + $0x8] sm:$0xc] %v7758
    %v7768 = vrot.slane %v7758, 2
    %7770 = vst [vmem:[#allocation4 + $0x3] sm:$0x1] %v7768
    %7771 = vst [vmem:[#allocation4 + $0x2] sm:$0x1] 0.0
    %v7772 = vrot.slane %v7758, 3
    %7774 = vst [vmem:[#allocation4 + $0x12] sm:$0x1] %v7772
    %7775 = vst [vmem:[#allocation4 + $0x13] sm:$0x1] 0.0
    %v7776 = vld [vmem:[#allocation2 + $0x1080] sm:$0xf]
    %v7777 = vld [vmem:[#allocation2 + $0x1088] sm:$0xf]
    %v7778 = vld [vmem:[#allocation2 + $0x1090] sm:$0xf]
    %v7779 = vld [vmem:[#allocation2 + $0x1098] sm:$0xf]
    %v7780 = vld [vmem:[#allocation2 + $0x10a0] sm:$0xf]
    %v7781 = vld [vmem:[#allocation2 + $0x10a8] sm:$0xf]
    %v7782 = vld [vmem:[#allocation2 + $0x10b0] sm:$0xf]
    %v7783 = vld [vmem:[#allocation2 + $0x10b8] sm:$0xf]
    %v7784 = vld [vmem:[#allocation2 + $0x10c0] sm:$0xf]
    %v7785 = vld [vmem:[#allocation2 + $0x10c8] sm:$0xf]
    %v7786 = vld [vmem:[#allocation2 + $0x10d0] sm:$0xf]
    %v7787 = vld [vmem:[#allocation2 + $0x10d8] sm:$0xf]
    %v7788 = vld [vmem:[#allocation2 + $0x10e0] sm:$0xf]
    %v7789 = vld [vmem:[#allocation2 + $0x10e8] sm:$0xf]
    %v7790 = vld [vmem:[#allocation2 + $0x10f0] sm:$0xf]
    %v7791 = vld [vmem:[#allocation2 + $0x10f8] sm:$0xf]
    %v7792 = vld [vmem:[#allocation2 + $0x1100] sm:$0xf]
    %v7793 = vld [vmem:[#allocation2 + $0x1108] sm:$0xf]
    %v7794 = vld [vmem:[#allocation2 + $0x1110] sm:$0xf]
    %v7795 = vld [vmem:[#allocation2 + $0x1118] sm:$0xf]
    %v7796 = vld [vmem:[#allocation2 + $0x1120] sm:$0xf]
    %v7797 = vld [vmem:[#allocation2 + $0x1128] sm:$0xf]
    %v7798 = vld [vmem:[#allocation2 + $0x1130] sm:$0xf]
    %v7799 = vld [vmem:[#allocation2 + $0x1138] sm:$0xf]
    %v7800 = vld [vmem:[#allocation2 + $0x1140] sm:$0xf]
    %v7801 = vld [vmem:[#allocation2 + $0x1148] sm:$0xf]
    %v7802 = vld [vmem:[#allocation2 + $0x1150] sm:$0xf]
    %v7803 = vld [vmem:[#allocation2 + $0x1158] sm:$0xf]
    %v7804 = vld [vmem:[#allocation2 + $0x1160] sm:$0xf]
    %v7805 = vld [vmem:[#allocation2 + $0x1168] sm:$0xf]
    %v7806 = vld [vmem:[#allocation2 + $0x1170] sm:$0xf]
    %v7807 = vld [vmem:[#allocation2 + $0x1178] sm:$0xf]
    %v7808 = vld [vmem:[#allocation2 + $0x1180] sm:$0xf]
    %v7809 = vld [vmem:[#allocation2 + $0x1188] sm:$0xf]
    %v7810 = vld [vmem:[#allocation2 + $0x1190] sm:$0xf]
    %v7811 = vld [vmem:[#allocation2 + $0x1198] sm:$0xf]
    %v7812 = vld [vmem:[#allocation2 + $0x11a0] sm:$0xf]
    %v7813 = vld [vmem:[#allocation2 + $0x11a8] sm:$0xf]
    %v7814 = vld [vmem:[#allocation2 + $0x11b0] sm:$0xf]
    %v7815 = vld [vmem:[#allocation2 + $0x11b8] sm:$0xf]
    %v7816 = vld [vmem:[#allocation2 + $0x11c0] sm:$0xf]
    %v7817 = vld [vmem:[#allocation2 + $0x11c8] sm:$0xf]
    %v7818 = vld [vmem:[#allocation2 + $0x11d0] sm:$0xf]
    %v7819 = vld [vmem:[#allocation2 + $0x11d8] sm:$0xf]
    %v7820 = vld [vmem:[#allocation2 + $0x11e0] sm:$0xf]
    %v7821 = vld [vmem:[#allocation2 + $0x11e8] sm:$0xf]
    %v7822 = vld [vmem:[#allocation2 + $0x11f0] sm:$0xf]
    %v7823 = vld [vmem:[#allocation2 + $0x11f8] sm:$0xf]
    %v7824 = vld [vmem:[#allocation4] sm:$0xf]
    %v7825 = vld [vmem:[#allocation4 + $0x8] sm:$0xf]
    %v7826 = vld [vmem:[#allocation4 + $0x10] sm:$0xf]
    %v7827 = vpack.c.bf16 %v7824, %v7824
    %v7828 = vpack.c.bf16 %v7825, %v7825
    %v7829 = vpack.c.bf16 %v7826, %v7826
    %v7878 = vunpack.c.l.b16 %v7776
    %v7879 = vunpack.c.l.b16 %v7777
    %v7880 = vunpack.c.l.b16 %v7778
    %v7881 = vunpack.c.l.b16 %v7779
    %v7882 = vunpack.c.l.b16 %v7780
    %v7883 = vunpack.c.l.b16 %v7781
    %v7884 = vunpack.c.l.b16 %v7782
    %v7885 = vunpack.c.l.b16 %v7783
    %v7886 = vunpack.c.l.b16 %v7784
    %v7887 = vunpack.c.l.b16 %v7785
    %v7888 = vunpack.c.l.b16 %v7786
    %v7889 = vunpack.c.l.b16 %v7787
    %v7890 = vunpack.c.l.b16 %v7788
    %v7891 = vunpack.c.l.b16 %v7789
    %v7892 = vunpack.c.l.b16 %v7790
    %v7893 = vunpack.c.l.b16 %v7791
    %v7894 = vunpack.c.l.b16 %v7792
    %v7895 = vunpack.c.l.b16 %v7793
    %v7896 = vunpack.c.l.b16 %v7794
    %v7897 = vunpack.c.l.b16 %v7795
    %v7898 = vunpack.c.l.b16 %v7796
    %v7899 = vunpack.c.l.b16 %v7797
    %v7900 = vunpack.c.l.b16 %v7798
    %v7901 = vunpack.c.l.b16 %v7799
    %v7902 = vunpack.c.l.b16 %v7800
    %v7903 = vunpack.c.l.b16 %v7801
    %v7904 = vunpack.c.l.b16 %v7802
    %v7905 = vunpack.c.l.b16 %v7803
    %v7906 = vunpack.c.l.b16 %v7804
    %v7907 = vunpack.c.l.b16 %v7805
    %v7908 = vunpack.c.l.b16 %v7806
    %v7909 = vunpack.c.l.b16 %v7807
    %v7910 = vunpack.c.l.b16 %v7808
    %v7911 = vunpack.c.l.b16 %v7809
    %v7912 = vunpack.c.l.b16 %v7810
    %v7913 = vunpack.c.l.b16 %v7811
    %v7914 = vunpack.c.l.b16 %v7812
    %v7915 = vunpack.c.l.b16 %v7813
    %v7916 = vunpack.c.l.b16 %v7814
    %v7917 = vunpack.c.l.b16 %v7815
    %v7918 = vunpack.c.l.b16 %v7816
    %v7919 = vunpack.c.l.b16 %v7817
    %v7920 = vunpack.c.l.b16 %v7818
    %v7921 = vunpack.c.l.b16 %v7819
    %v7922 = vunpack.c.l.b16 %v7820
    %v7923 = vunpack.c.l.b16 %v7821
    %v7924 = vunpack.c.l.b16 %v7822
    %v7925 = vunpack.c.l.b16 %v7823
    %v7926 = vpack.c.b16 %v7879, %v7878
    %v7927 = vpack.c.b16 %v7881, %v7880
    %v7928 = vpack.c.b16 %v7883, %v7882
    %v7929 = vpack.c.b16 %v7885, %v7884
    %v7930 = vpack.c.b16 %v7887, %v7886
    %v7931 = vpack.c.b16 %v7889, %v7888
    %v7932 = vpack.c.b16 %v7891, %v7890
    %v7933 = vpack.c.b16 %v7893, %v7892
    %v7934 = vpack.c.b16 %v7895, %v7894
    %v7935 = vpack.c.b16 %v7897, %v7896
    %v7936 = vpack.c.b16 %v7899, %v7898
    %v7937 = vpack.c.b16 %v7901, %v7900
    %v7938 = vpack.c.b16 %v7903, %v7902
    %v7939 = vpack.c.b16 %v7905, %v7904
    %v7940 = vpack.c.b16 %v7907, %v7906
    %v7941 = vpack.c.b16 %v7909, %v7908
    %v7942 = vpack.c.b16 %v7911, %v7910
    %v7943 = vpack.c.b16 %v7913, %v7912
    %v7944 = vpack.c.b16 %v7915, %v7914
    %v7945 = vpack.c.b16 %v7917, %v7916
    %v7946 = vpack.c.b16 %v7919, %v7918
    %v7947 = vpack.c.b16 %v7921, %v7920
    %v7948 = vpack.c.b16 %v7923, %v7922
    %v7949 = vpack.c.b16 %v7925, %v7924
    %7974 = vmatpush.bf16.msra.mxu0 %v7933
    %7975 = vmatpush.bf16.msra.mxu0 %v7932
    %7976 = vmatpush.bf16.msra.mxu0 %v7931
    %7977 = vmatpush.bf16.msra.mxu0 %v7930
    %7978 = vmatpush.bf16.msra.mxu0 %v7929
    %7979 = vmatpush.bf16.msra.mxu0 %v7928
    %7980 = vmatpush.bf16.msra.mxu0 %v7927
    %7981 = vmatpush.bf16.msra.mxu0 %v7926
    %7982 = vmatmul.bf16.gmra.mxu0 %v7827
    %v7983 = vpop.f32.mrf.mxu0
    %v7984 = vadd.f32 0.0, %v7983
    %v7985 = vpop.f32.mrf.mxu0
    %7986 = vdwg.mxu0
    %7987 = vmatpush.bf16.msra.mxu0 %v7941
    %7988 = vmatpush.bf16.msra.mxu0 %v7940
    %7989 = vmatpush.bf16.msra.mxu0 %v7939
    %7990 = vmatpush.bf16.msra.mxu0 %v7938
    %7991 = vmatpush.bf16.msra.mxu0 %v7937
    %7992 = vmatpush.bf16.msra.mxu0 %v7936
    %7993 = vmatpush.bf16.msra.mxu0 %v7935
    %7994 = vmatpush.bf16.msra.mxu0 %v7934
    %7995 = vmatmul.bf16.gmra.mxu0 %v7828
    %v7996 = vpop.f32.mrf.mxu0
    %v7997 = vadd.f32 %v7984, %v7996
    %v7998 = vpop.f32.mrf.mxu0
    %7999 = vdwg.mxu0
    %8000 = vmatpush.bf16.msra.mxu0 %v7949
    %8001 = vmatpush.bf16.msra.mxu0 %v7948
    %8002 = vmatpush.bf16.msra.mxu0 %v7947
    %8003 = vmatpush.bf16.msra.mxu0 %v7946
    %8004 = vmatpush.bf16.msra.mxu0 %v7945
    %8005 = vmatpush.bf16.msra.mxu0 %v7944
    %8006 = vmatpush.bf16.msra.mxu0 %v7943
    %8007 = vmatpush.bf16.msra.mxu0 %v7942
    %8008 = vmatmul.bf16.gmra.mxu0 %v7829
    %v8009 = vpop.f32.mrf.mxu0
    %v8010 = vadd.f32 %v7997, %v8009
    %v8011 = vpop.f32.mrf.mxu0
    %8012 = vdwg.mxu0
    %v8013 = vld [vmem:[#allocation11 + $0x14] ss:$0 sm:$0xff]
    %8015 = vrot.lane.b32.xlu0 %v8010, 64
    %v8016 = vpop.permute.xlu0 %8015
    %v8018 = vmax.f32 %v8010, %v8016
    %v8019 = vadd.f32 %v8018, %v8013
    %v8020 = vmax.f32 %v8019, 0.0
    %vm8021 = vcmask 519168
    %8022 = vst.msk [vmem:[#allocation5] sm:$0xf] %vm8021, %v8020
    %v8023 = vld [vmem:[#allocation5] ss:$2 sm:$0x3]
    %v8024 = vld [vmem:[%s1806] ss:$2 sm:$0x3]
    %v8025 = vmax.f32 %v8023, %v8024
    %v8026 = vpack.c.bf16 %v8025, %v8025
    %v8027 = vld [vmem:[#allocation9] sm:$0xf]
    %v8028 = vld [vmem:[#allocation9 + $0x4] sm:$0xf]
    %v8029 = vld [vmem:[#allocation9 + $0x8] sm:$0xf]
    %v8030 = vld [vmem:[#allocation9 + $0xc] sm:$0xf]
    %v8031 = vld [vmem:[#allocation9 + $0x10] sm:$0xf]
    %v8032 = vld [vmem:[#allocation9 + $0x14] sm:$0xf]
    %v8033 = vld [vmem:[#allocation9 + $0x18] sm:$0xf]
    %v8034 = vld [vmem:[#allocation9 + $0x1c] sm:$0xf]
    %v8035 = vld [vmem:[#allocation11 + $0x15] ss:$0 sm:$0xff]
    %v8044 = vunpack.c.l.b16 %v8027
    %v8045 = vunpack.c.l.b16 %v8028
    %v8046 = vunpack.c.l.b16 %v8029
    %v8047 = vunpack.c.l.b16 %v8030
    %v8048 = vunpack.c.l.b16 %v8031
    %v8049 = vunpack.c.l.b16 %v8032
    %v8050 = vunpack.c.l.b16 %v8033
    %v8051 = vunpack.c.l.b16 %v8034
    %v8052 = vpack.c.b16 %v8045, %v8044
    %v8053 = vpack.c.b16 %v8047, %v8046
    %v8054 = vpack.c.b16 %v8049, %v8048
    %v8055 = vpack.c.b16 %v8051, %v8050
    %vm8060 = vcmask 523264
    %v8062 = vsel %vm8060, %v8026, 0
    %8064 = vmatpush.bf16.msra.mxu0 0
    %8065 = vmatpush.bf16.msra.mxu0 0
    %8066 = vmatpush.bf16.msra.mxu0 0
    %8067 = vmatpush.bf16.msra.mxu0 0
    %8068 = vmatpush.bf16.msra.mxu0 %v8055
    %8069 = vmatpush.bf16.msra.mxu0 %v8054
    %8070 = vmatpush.bf16.msra.mxu0 %v8053
    %8071 = vmatpush.bf16.msra.mxu0 %v8052
    %8072 = vmatmul.bf16.gmra.mxu0 %v8062
    %v8073 = vpop.f32.mrf.mxu0
    %v8074 = vadd.f32 %v8035, %v8073
    %v8075 = vpop.f32.mrf.mxu0
    %8076 = vdwg.mxu0
    %v8077 = vmax.f32 %v8074, 0.0
    %v8078 = vpack.c.bf16 %v8077, %v8077
    %v8079 = vld [vmem:[#allocation9 + $0x20] sm:$0xf]
    %v8080 = vld [vmem:[#allocation9 + $0x24] sm:$0xf]
    %v8081 = vld [vmem:[#allocation9 + $0x28] sm:$0xf]
    %v8082 = vld [vmem:[#allocation9 + $0x2c] sm:$0xf]
    %v8083 = vld [vmem:[#allocation9 + $0x30] sm:$0xf]
    %v8084 = vld [vmem:[#allocation9 + $0x34] sm:$0xf]
    %v8085 = vld [vmem:[#allocation9 + $0x38] sm:$0xf]
    %v8086 = vld [vmem:[#allocation9 + $0x3c] sm:$0xf]
    %v8087 = vld [vmem:[#allocation9 + $0x40] sm:$0xf]
    %v8088 = vld [vmem:[#allocation9 + $0x44] sm:$0xf]
    %v8089 = vld [vmem:[#allocation9 + $0x48] sm:$0xf]
    %v8090 = vld [vmem:[#allocation9 + $0x4c] sm:$0xf]
    %v8091 = vld [vmem:[#allocation9 + $0x50] sm:$0xf]
    %v8092 = vld [vmem:[#allocation9 + $0x54] sm:$0xf]
    %v8093 = vld [vmem:[#allocation9 + $0x58] sm:$0xf]
    %v8094 = vld [vmem:[#allocation9 + $0x5c] sm:$0xf]
    %v8095 = vld [vmem:[#allocation11 + $0x16] ss:$0 sm:$0xff]
    %v8112 = vunpack.c.l.b16 %v8079
    %v8113 = vunpack.c.l.b16 %v8080
    %v8114 = vunpack.c.l.b16 %v8081
    %v8115 = vunpack.c.l.b16 %v8082
    %v8116 = vunpack.c.l.b16 %v8083
    %v8117 = vunpack.c.l.b16 %v8084
    %v8118 = vunpack.c.l.b16 %v8085
    %v8119 = vunpack.c.l.b16 %v8086
    %v8120 = vunpack.c.l.b16 %v8087
    %v8121 = vunpack.c.l.b16 %v8088
    %v8122 = vunpack.c.l.b16 %v8089
    %v8123 = vunpack.c.l.b16 %v8090
    %v8124 = vunpack.c.l.b16 %v8091
    %v8125 = vunpack.c.l.b16 %v8092
    %v8126 = vunpack.c.l.b16 %v8093
    %v8127 = vunpack.c.l.b16 %v8094
    %v8128 = vpack.c.b16 %v8113, %v8112
    %v8129 = vpack.c.b16 %v8115, %v8114
    %v8130 = vpack.c.b16 %v8117, %v8116
    %v8131 = vpack.c.b16 %v8119, %v8118
    %v8132 = vpack.c.b16 %v8121, %v8120
    %v8133 = vpack.c.b16 %v8123, %v8122
    %v8134 = vpack.c.b16 %v8125, %v8124
    %v8135 = vpack.c.b16 %v8127, %v8126
    %8144 = vmatpush.bf16.msra.mxu0 %v8135
    %8145 = vmatpush.bf16.msra.mxu0 %v8134
    %8146 = vmatpush.bf16.msra.mxu0 %v8133
    %8147 = vmatpush.bf16.msra.mxu0 %v8132
    %8148 = vmatpush.bf16.msra.mxu0 %v8131
    %8149 = vmatpush.bf16.msra.mxu0 %v8130
    %8150 = vmatpush.bf16.msra.mxu0 %v8129
    %8151 = vmatpush.bf16.msra.mxu0 %v8128
    %8152 = vmatmul.bf16.gmra.mxu0 %v8078
    %v8153 = vpop.f32.mrf.mxu0
    %v8154 = vadd.f32 %v8095, %v8153
    %v8155 = vpop.f32.mrf.mxu0
    %8156 = vdwg.mxu0
    %v8157 = vmax.f32 %v8154, 0.0
    %v8158 = vpack.c.bf16 %v8157, %v8157
    %v8159 = vld [vmem:[#allocation9 + $0x60] sm:$0xf]
    %v8160 = vld [vmem:[#allocation9 + $0x64] sm:$0xf]
    %v8161 = vld [vmem:[#allocation9 + $0x68] sm:$0xf]
    %v8162 = vld [vmem:[#allocation9 + $0x6c] sm:$0xf]
    %v8163 = vld [vmem:[#allocation9 + $0x70] sm:$0xf]
    %v8164 = vld [vmem:[#allocation9 + $0x74] sm:$0xf]
    %v8165 = vld [vmem:[#allocation9 + $0x78] sm:$0xf]
    %v8166 = vld [vmem:[#allocation9 + $0x7c] sm:$0xf]
    %v8167 = vld [vmem:[#allocation9 + $0x80] sm:$0xf]
    %v8168 = vld [vmem:[#allocation9 + $0x84] sm:$0xf]
    %v8169 = vld [vmem:[#allocation9 + $0x88] sm:$0xf]
    %v8170 = vld [vmem:[#allocation9 + $0x8c] sm:$0xf]
    %v8171 = vld [vmem:[#allocation9 + $0x90] sm:$0xf]
    %v8172 = vld [vmem:[#allocation9 + $0x94] sm:$0xf]
    %v8173 = vld [vmem:[#allocation9 + $0x98] sm:$0xf]
    %v8174 = vld [vmem:[#allocation9 + $0x9c] sm:$0xf]
    %v8175 = vld [vmem:[#allocation11 + $0x17] ss:$0 sm:$0xff]
    %v8192 = vunpack.c.l.b16 %v8159
    %v8193 = vunpack.c.l.b16 %v8160
    %v8194 = vunpack.c.l.b16 %v8161
    %v8195 = vunpack.c.l.b16 %v8162
    %v8196 = vunpack.c.l.b16 %v8163
    %v8197 = vunpack.c.l.b16 %v8164
    %v8198 = vunpack.c.l.b16 %v8165
    %v8199 = vunpack.c.l.b16 %v8166
    %v8200 = vunpack.c.l.b16 %v8167
    %v8201 = vunpack.c.l.b16 %v8168
    %v8202 = vunpack.c.l.b16 %v8169
    %v8203 = vunpack.c.l.b16 %v8170
    %v8204 = vunpack.c.l.b16 %v8171
    %v8205 = vunpack.c.l.b16 %v8172
    %v8206 = vunpack.c.l.b16 %v8173
    %v8207 = vunpack.c.l.b16 %v8174
    %v8208 = vpack.c.b16 %v8193, %v8192
    %v8209 = vpack.c.b16 %v8195, %v8194
    %v8210 = vpack.c.b16 %v8197, %v8196
    %v8211 = vpack.c.b16 %v8199, %v8198
    %v8212 = vpack.c.b16 %v8201, %v8200
    %v8213 = vpack.c.b16 %v8203, %v8202
    %v8214 = vpack.c.b16 %v8205, %v8204
    %v8215 = vpack.c.b16 %v8207, %v8206
    %8224 = vmatpush.bf16.msra.mxu0 %v8215
    %8225 = vmatpush.bf16.msra.mxu0 %v8214
    %8226 = vmatpush.bf16.msra.mxu0 %v8213
    %8227 = vmatpush.bf16.msra.mxu0 %v8212
    %8228 = vmatpush.bf16.msra.mxu0 %v8211
    %8229 = vmatpush.bf16.msra.mxu0 %v8210
    %8230 = vmatpush.bf16.msra.mxu0 %v8209
    %8231 = vmatpush.bf16.msra.mxu0 %v8208
    %8232 = vmatmul.bf16.gmra.mxu0 %v8158
    %v8233 = vpop.f32.mrf.mxu0
    %v8234 = vadd.f32 %v8175, %v8233
    %v8235 = vpop.f32.mrf.mxu0
    %8236 = vdwg.mxu0
    %8237 = vst [vmem:[#allocation12] sm:$0x1] %v8234
    %s8238 = scalar_lea.vmem [#allocation12], 1
    %8239 = vst [vmem:[%s8238 - $0x1] sm:$0x2] %v8234
    // Predicated region
    $region34: #{vgg_forward.1} parent=1 // pred_check
      _
    $region35: #{vgg_forward.1} parent=1 // pred_check_branch
      %8241 = sbr.rel (0) target = $region37
    $region36: #{vgg_forward.1} parent=1 // pred_region
      %8243 = vsyncadd [#allocation8], 0
      %s8244 = sshll.u32 [#allocation12], 4
      %s8245 = int_to_ptr.vmem [resolvable:$true] %s8244
      %s8246 = sshll.u32 %s5, 4
      %s8247 = int_to_ptr.hbm [resolvable:$true] %s8246
      %8252 = dma.vmem_to_hbm [thread:$0]  %s8245, 32, %s8247, [#allocation8], 16, 16, 1
    $region37: #{vgg_forward.1} parent=1 // pred_fallthru
      _
    // Predicated region
    $region38: #{vgg_forward.1} parent=1 // pred_check
      _
    $region39: #{vgg_forward.1} parent=1 // pred_check_branch
      %8254 = sbr.rel (0) target = $region41
    $region40: #{vgg_forward.1} parent=1 // pred_region
      %8256 = dma.done [#allocation8], 32
    $region41: #{vgg_forward.1} parent=1 // pred_fallthru
      _
    %8257 = vsyncpa [#allocation7], 1
    %8258 = vsyncpa [#allocation10], 1
    %8259 = vsyncpa [#allocation8], 1
  %8260 = vsyncmov [#allocation3]
  %s8261 = vpop.sfrf %8260
  %p8262 = scmp.eq.s32.totalorder %s8261, 0
  %p8263 = pneg %p8262
  %8265 = shalt.err (%p8263)

</llo_original>
